<compile_context>
chip_gen: v7x
topology: tpu7x:2x2x1
jax: 0.10.0
libtpu: 0.0.40
codegen_flags: <defaults>
</compile_context>

<pallas_src>
import math

import jax
import jax.numpy as jnp
from jax.experimental import pallas as pl
from jax.experimental.pallas import tpu as pltpu

# ---- small config consistent with the module constructor ----
EMBED = 32        # embed_size
DEPTH = 2         # depth
HIDDEN = 64       # hidden_dim (FFN + projection inner dim)
NHEAD = 4         # nhead
HEAD_DIM = EMBED // NHEAD
SEQ = 8
BATCH = 2
TOKENS = BATCH * SEQ
LN_EPS = 1e-5


def _layernorm(x, gamma, beta):
    mu = jnp.mean(x, axis=-1, keepdims=True)
    var = jnp.mean((x - mu) ** 2, axis=-1, keepdims=True)
    return (x - mu) * jax.lax.rsqrt(var + LN_EPS) * gamma + beta


def _gelu(x):
    # TODO(synk): PyTorch nn.GELU default is the exact erf GELU; tanh approximation used here.
    return jax.nn.gelu(x, approximate=True)


def _transformer_kernel(x_ref,
                        wq_ref, wk_ref, wv_ref, bq_ref, bk_ref, bv_ref,
                        wo_ref, bo_ref,
                        ln1g_ref, ln1b_ref, ln2g_ref, ln2b_ref,
                        w1_ref, b1_ref, w2_ref, b2_ref,
                        pw1_ref, pb1_ref, plng_ref, plnb_ref, pw2_ref, pb2_ref,
                        out_ref):
    x = x_ref[...].astype(jnp.float32)                       # (TOKENS, EMBED)

    # ---- encoder stack (post-LN transformer encoder layers, static depth) ----
    for l in range(DEPTH):
        # Per-head projections over all batch-folded rows.
        # Weights are already (in, out) and per-head; 1/sqrt(head_dim) folded into wq/bq.
        q_h, k_h, v_h = [], [], []
        for h in range(NHEAD):
            q_h.append(jnp.dot(x, wq_ref[l, h], preferred_element_type=jnp.float32) + bq_ref[l, h])
            k_h.append(jnp.dot(x, wk_ref[l, h], preferred_element_type=jnp.float32) + bk_ref[l, h])
            v_h.append(jnp.dot(x, wv_ref[l, h], preferred_element_type=jnp.float32) + bv_ref[l, h])

        # Attention is per original batch element: static (batch, head) loops; output
        # projection folded per head so no lane-axis concatenation is needed.
        per_batch = []
        for b in range(BATCH):
            r0 = b * SEQ
            acc = jnp.zeros((SEQ, EMBED), jnp.float32)
            for h in range(NHEAD):
                qb = q_h[h][r0:r0 + SEQ]                      # (SEQ, HD), sublane-aligned slice
                kb = k_h[h][r0:r0 + SEQ]
                vb = v_h[h][r0:r0 + SEQ]
                # q @ k^T via contraction of the last dims (no materialized transpose)
                s = jax.lax.dot_general(qb, kb, (((1,), (1,)), ((), ())),
                                        preferred_element_type=jnp.float32)
                s = s - jnp.max(s, axis=-1, keepdims=True)
                p = jnp.exp(s)
                p = p * pl.reciprocal(jnp.sum(p, axis=-1, keepdims=True), approx=True)
                ctx = jnp.dot(p, vb, preferred_element_type=jnp.float32)          # (SEQ, HD)
                acc = acc + jnp.dot(ctx, wo_ref[l, h], preferred_element_type=jnp.float32)
            per_batch.append(acc)
        attn = jnp.concatenate(per_batch, axis=0) + bo_ref[l]                     # (TOKENS, EMBED)

        x = _layernorm(x + attn, ln1g_ref[l], ln1b_ref[l])

        # feed-forward block
        h1 = _gelu(jnp.dot(x, w1_ref[l], preferred_element_type=jnp.float32) + b1_ref[l])
        ff = jnp.dot(h1, w2_ref[l], preferred_element_type=jnp.float32) + b2_ref[l]
        x = _layernorm(x + ff, ln2g_ref[l], ln2b_ref[l])

    # ---- projection head: Linear -> LayerNorm -> GELU -> Linear ----
    h = jnp.dot(x, pw1_ref[...], preferred_element_type=jnp.float32) + pb1_ref[0]
    h = _gelu(_layernorm(h, plng_ref[0], plnb_ref[0]))
    y = jnp.dot(h, pw2_ref[...], preferred_element_type=jnp.float32) + pb2_ref[0]

    out_ref[...] = y.astype(out_ref.dtype)


def _prep_params(p):
    """Host-side layout plumbing: transpose to (in, out), split QKV/wo per head,
    fold the attention scale into the Q projection."""
    scale = 1.0 / math.sqrt(HEAD_DIM)
    wqkv, bqkv = p["wqkv"], p["bqkv"]                 # (D, 3E, E), (D, 3E)

    def split_heads(w):                               # w: (D, E_out, E_in) PyTorch layout
        wt = jnp.transpose(w, (0, 2, 1))              # (D, E_in, E_out)
        return jnp.transpose(wt.reshape(DEPTH, EMBED, NHEAD, HEAD_DIM), (0, 2, 1, 3))
        # -> (D, NHEAD, E_in, HD)

    wq = split_heads(wqkv[:, :EMBED, :]) * scale
    wk = split_heads(wqkv[:, EMBED:2 * EMBED, :])
    wv = split_heads(wqkv[:, 2 * EMBED:, :])
    bq = bqkv[:, :EMBED].reshape(DEPTH, NHEAD, HEAD_DIM) * scale
    bk = bqkv[:, EMBED:2 * EMBED].reshape(DEPTH, NHEAD, HEAD_DIM)
    bv = bqkv[:, 2 * EMBED:].reshape(DEPTH, NHEAD, HEAD_DIM)

    # wo_h[l, h] = wo[l][:, h*HD:(h+1)*HD].T  -> attn = sum_h ctx_h @ wo_h[l, h]
    wo_h = jnp.transpose(p["wo"], (0, 2, 1)).reshape(DEPTH, NHEAD, HEAD_DIM, EMBED)

    w1t = jnp.transpose(p["w1"], (0, 2, 1))           # (D, E, H)
    w2t = jnp.transpose(p["w2"], (0, 2, 1))           # (D, H, E)
    pw1t = p["pw1"].T                                 # (E, H)
    pw2t = p["pw2"].T                                 # (H, E)

    return [wq, wk, wv, bq, bk, bv,
            wo_h, p["bo"],
            p["ln1g"], p["ln1b"], p["ln2g"], p["ln2b"],
            w1t, p["b1"], w2t, p["b2"],
            pw1t, p["pb1"], p["plng"], p["plnb"], pw2t, p["pb2"]]


def transformer_with_projection(x, params):
    weights = _prep_params(params)
    x2d = x.reshape(TOKENS, EMBED)                    # fold batch into rows (free reshape)
    # Single invocation, no grid: every operand is one whole VMEM-resident block
    # (~tens of KB total), so there is no per-grid-step pipeline overhead.
    y2d = pl.pallas_call(
        _transformer_kernel,
        out_shape=jax.ShapeDtypeStruct((TOKENS, EMBED), jnp.float32),
    )(x2d, *weights)
    return y2d.reshape(BATCH, SEQ, EMBED)


def init_params(key):
    ks = jax.random.split(key, 12)

    def nrm(k, shape, scale=0.02):
        return jax.random.normal(k, shape, jnp.float32) * scale

    return {
        # per-layer attention (stacked along depth), PyTorch (out, in) layout
        "wqkv": nrm(ks[0], (DEPTH, 3 * EMBED, EMBED)),
        "bqkv": nrm(ks[1], (DEPTH, 3 * EMBED)),
        "wo":   nrm(ks[2], (DEPTH, EMBED, EMBED)),
        "bo":   nrm(ks[3], (DEPTH, EMBED)),
        "ln1g": jnp.ones((DEPTH, EMBED), jnp.float32),
        "ln1b": jnp.zeros((DEPTH, EMBED), jnp.float32),
        "ln2g": jnp.ones((DEPTH, EMBED), jnp.float32),
        "ln2b": jnp.zeros((DEPTH, EMBED), jnp.float32),
        # per-layer feed-forward
        "w1": nrm(ks[4], (DEPTH, HIDDEN, EMBED)),
        "b1": nrm(ks[5], (DEPTH, HIDDEN)),
        "w2": nrm(ks[6], (DEPTH, EMBED, HIDDEN)),
        "b2": nrm(ks[7], (DEPTH, EMBED)),
        # projection head
        "pw1":  nrm(ks[8], (HIDDEN, EMBED)),
        "pb1":  nrm(ks[9], (1, HIDDEN)),
        "plng": jnp.ones((1, HIDDEN), jnp.float32),
        "plnb": jnp.zeros((1, HIDDEN), jnp.float32),
        "pw2":  nrm(ks[10], (EMBED, HIDDEN)),
        "pb2":  nrm(ks[11], (1, EMBED)),
    }


def reference_forward(x, p):
    """Pure-JAX reference mirroring the module math (for correctness check)."""
    outs = []
    for b in range(BATCH):
        xb = x[b]
        for l in range(DEPTH):
            qkv = xb @ p["wqkv"][l].T + p["bqkv"][l]
            q, k, v = qkv[:, :EMBED], qkv[:, EMBED:2 * EMBED], qkv[:, 2 * EMBED:]
            heads = []
            for h in range(NHEAD):
                sl = slice(h * HEAD_DIM, (h + 1) * HEAD_DIM)
                s = (q[:, sl] @ k[:, sl].T) / math.sqrt(HEAD_DIM)
                pw = jax.nn.softmax(s, axis=-1)
                heads.append(pw @ v[:, sl])
            ctx = jnp.concatenate(heads, axis=-1)
            xb = _layernorm(xb + ctx @ p["wo"][l].T + p["bo"][l], p["ln1g"][l], p["ln1b"][l])
            ff = _gelu(xb @ p["w1"][l].T + p["b1"][l]) @ p["w2"][l].T + p["b2"][l]
            xb = _layernorm(xb + ff, p["ln2g"][l], p["ln2b"][l])
        h = xb @ p["pw1"].T + p["pb1"][0]
        h = _gelu(_layernorm(h, p["plng"][0], p["plnb"][0]))
        outs.append(h @ p["pw2"].T + p["pb2"][0])
    return jnp.stack(outs)


if __name__ == "__main__":
    key = jax.random.PRNGKey(0)
    kx, kp = jax.random.split(key)
    x = jax.random.normal(kx, (BATCH, SEQ, EMBED), jnp.float32)
    params = init_params(kp)

    out = jax.block_until_ready(transformer_with_projection(x, params))
    ref = reference_forward(x, params)

    assert out.shape == (BATCH, SEQ, EMBED)
    # 2e-3 tolerance: the only kernel/reference math delta is the EUP approximate
    # reciprocal in the softmax normalization.
    if not bool(jnp.allclose(out, ref, atol=2e-3, rtol=2e-3)):
        raise AssertionError("Pallas kernel output mismatch vs JAX reference")

    print("KERNEL_OK")
</pallas_src>

<mosaic_0001>
module attributes {stable_mosaic.version = 11 : i64} {
  func.func @_transformer_kernel(%arg0: memref<16x32xf32, #tpu.memory_space<vmem>>, %arg1: memref<2x4x32x8xf32, #tpu.memory_space<vmem>>, %arg2: memref<2x4x32x8xf32, #tpu.memory_space<vmem>>, %arg3: memref<2x4x32x8xf32, #tpu.memory_space<vmem>>, %arg4: memref<2x4x8xf32, #tpu.memory_space<vmem>>, %arg5: memref<2x4x8xf32, #tpu.memory_space<vmem>>, %arg6: memref<2x4x8xf32, #tpu.memory_space<vmem>>, %arg7: memref<2x4x8x32xf32, #tpu.memory_space<vmem>>, %arg8: memref<2x32xf32, #tpu.memory_space<vmem>>, %arg9: memref<2x32xf32, #tpu.memory_space<vmem>>, %arg10: memref<2x32xf32, #tpu.memory_space<vmem>>, %arg11: memref<2x32xf32, #tpu.memory_space<vmem>>, %arg12: memref<2x32xf32, #tpu.memory_space<vmem>>, %arg13: memref<2x32x64xf32, #tpu.memory_space<vmem>>, %arg14: memref<2x64xf32, #tpu.memory_space<vmem>>, %arg15: memref<2x64x32xf32, #tpu.memory_space<vmem>>, %arg16: memref<2x32xf32, #tpu.memory_space<vmem>>, %arg17: memref<32x64xf32, #tpu.memory_space<vmem>>, %arg18: memref<1x64xf32, #tpu.memory_space<vmem>>, %arg19: memref<1x64xf32, #tpu.memory_space<vmem>>, %arg20: memref<1x64xf32, #tpu.memory_space<vmem>>, %arg21: memref<64x32xf32, #tpu.memory_space<vmem>>, %arg22: memref<1x32xf32, #tpu.memory_space<vmem>>, %arg23: memref<16x32xf32, #tpu.memory_space<vmem>>) attributes {dimension_semantics = [], scalar_prefetch = 0 : i64, scratch_operands = 0 : i64, tpu.core_type = #tpu.core_type<tc>} {
    %c0 = arith.constant 0 : index
    %c0_0 = arith.constant 0 : index
    %0 = vector.load %arg0[%c0, %c0_0] : memref<16x32xf32, #tpu.memory_space<vmem>>, vector<16x32xf32>
    %c0_1 = arith.constant 0 : index
    %c0_2 = arith.constant 0 : index
    %c0_3 = arith.constant 0 : index
    %c0_4 = arith.constant 0 : index
    %1 = vector.load %arg1[%c0_1, %c0_2, %c0_3, %c0_4] : memref<2x4x32x8xf32, #tpu.memory_space<vmem>>, vector<1x1x32x8xf32>
    %2 = vector.shape_cast %1 : vector<1x1x32x8xf32> to vector<32x8xf32>
    %cst = arith.constant dense<0.000000e+00> : vector<16x8xf32>
    %3 = tpu.matmul %0, %2, %cst {dimension_numbers = #tpu.dot_dimension_numbers<[1], [0], [0], [1], [0, 0, 1, 1], [], []>} : vector<16x32xf32>, vector<32x8xf32>, vector<16x8xf32> -> vector<16x8xf32>
    %c0_5 = arith.constant 0 : index
    %c0_6 = arith.constant 0 : index
    %c0_7 = arith.constant 0 : index
    %4 = vector.load %arg4[%c0_5, %c0_6, %c0_7] : memref<2x4x8xf32, #tpu.memory_space<vmem>>, vector<1x1x8xf32>
    %5 = vector.shape_cast %4 : vector<1x1x8xf32> to vector<8xf32>
    %6 = vector.shape_cast %5 : vector<8xf32> to vector<1x8xf32>
    %7 = vector.broadcast %6 : vector<1x8xf32> to vector<16x8xf32>
    %8 = arith.addf %3, %7 : vector<16x8xf32>
    %c0_8 = arith.constant 0 : index
    %c0_9 = arith.constant 0 : index
    %c0_10 = arith.constant 0 : index
    %c0_11 = arith.constant 0 : index
    %9 = vector.load %arg2[%c0_8, %c0_9, %c0_10, %c0_11] : memref<2x4x32x8xf32, #tpu.memory_space<vmem>>, vector<1x1x32x8xf32>
    %10 = vector.shape_cast %9 : vector<1x1x32x8xf32> to vector<32x8xf32>
    %cst_12 = arith.constant dense<0.000000e+00> : vector<16x8xf32>
    %11 = tpu.matmul %0, %10, %cst_12 {dimension_numbers = #tpu.dot_dimension_numbers<[1], [0], [0], [1], [0, 0, 1, 1], [], []>} : vector<16x32xf32>, vector<32x8xf32>, vector<16x8xf32> -> vector<16x8xf32>
    %c0_13 = arith.constant 0 : index
    %c0_14 = arith.constant 0 : index
    %c0_15 = arith.constant 0 : index
    %12 = vector.load %arg5[%c0_13, %c0_14, %c0_15] : memref<2x4x8xf32, #tpu.memory_space<vmem>>, vector<1x1x8xf32>
    %13 = vector.shape_cast %12 : vector<1x1x8xf32> to vector<8xf32>
    %14 = vector.shape_cast %13 : vector<8xf32> to vector<1x8xf32>
    %15 = vector.broadcast %14 : vector<1x8xf32> to vector<16x8xf32>
    %16 = arith.addf %11, %15 : vector<16x8xf32>
    %c0_16 = arith.constant 0 : index
    %c0_17 = arith.constant 0 : index
    %c0_18 = arith.constant 0 : index
    %c0_19 = arith.constant 0 : index
    %17 = vector.load %arg3[%c0_16, %c0_17, %c0_18, %c0_19] : memref<2x4x32x8xf32, #tpu.memory_space<vmem>>, vector<1x1x32x8xf32>
    %18 = vector.shape_cast %17 : vector<1x1x32x8xf32> to vector<32x8xf32>
    %cst_20 = arith.constant dense<0.000000e+00> : vector<16x8xf32>
    %19 = tpu.matmul %0, %18, %cst_20 {dimension_numbers = #tpu.dot_dimension_numbers<[1], [0], [0], [1], [0, 0, 1, 1], [], []>} : vector<16x32xf32>, vector<32x8xf32>, vector<16x8xf32> -> vector<16x8xf32>
    %c0_21 = arith.constant 0 : index
    %c0_22 = arith.constant 0 : index
    %c0_23 = arith.constant 0 : index
    %20 = vector.load %arg6[%c0_21, %c0_22, %c0_23] : memref<2x4x8xf32, #tpu.memory_space<vmem>>, vector<1x1x8xf32>
    %21 = vector.shape_cast %20 : vector<1x1x8xf32> to vector<8xf32>
    %22 = vector.shape_cast %21 : vector<8xf32> to vector<1x8xf32>
    %23 = vector.broadcast %22 : vector<1x8xf32> to vector<16x8xf32>
    %24 = arith.addf %19, %23 : vector<16x8xf32>
    %c0_24 = arith.constant 0 : index
    %c1 = arith.constant 1 : index
    %c0_25 = arith.constant 0 : index
    %c0_26 = arith.constant 0 : index
    %25 = vector.load %arg1[%c0_24, %c1, %c0_25, %c0_26] : memref<2x4x32x8xf32, #tpu.memory_space<vmem>>, vector<1x1x32x8xf32>
    %26 = vector.shape_cast %25 : vector<1x1x32x8xf32> to vector<32x8xf32>
    %cst_27 = arith.constant dense<0.000000e+00> : vector<16x8xf32>
    %27 = tpu.matmul %0, %26, %cst_27 {dimension_numbers = #tpu.dot_dimension_numbers<[1], [0], [0], [1], [0, 0, 1, 1], [], []>} : vector<16x32xf32>, vector<32x8xf32>, vector<16x8xf32> -> vector<16x8xf32>
    %c0_28 = arith.constant 0 : index
    %c1_29 = arith.constant 1 : index
    %c0_30 = arith.constant 0 : index
    %28 = vector.load %arg4[%c0_28, %c1_29, %c0_30] : memref<2x4x8xf32, #tpu.memory_space<vmem>>, vector<1x1x8xf32>
    %29 = vector.shape_cast %28 : vector<1x1x8xf32> to vector<8xf32>
    %30 = vector.shape_cast %29 : vector<8xf32> to vector<1x8xf32>
    %31 = vector.broadcast %30 : vector<1x8xf32> to vector<16x8xf32>
    %32 = arith.addf %27, %31 : vector<16x8xf32>
    %c0_31 = arith.constant 0 : index
    %c1_32 = arith.constant 1 : index
    %c0_33 = arith.constant 0 : index
    %c0_34 = arith.constant 0 : index
    %33 = vector.load %arg2[%c0_31, %c1_32, %c0_33, %c0_34] : memref<2x4x32x8xf32, #tpu.memory_space<vmem>>, vector<1x1x32x8xf32>
    %34 = vector.shape_cast %33 : vector<1x1x32x8xf32> to vector<32x8xf32>
    %cst_35 = arith.constant dense<0.000000e+00> : vector<16x8xf32>
    %35 = tpu.matmul %0, %34, %cst_35 {dimension_numbers = #tpu.dot_dimension_numbers<[1], [0], [0], [1], [0, 0, 1, 1], [], []>} : vector<16x32xf32>, vector<32x8xf32>, vector<16x8xf32> -> vector<16x8xf32>
    %c0_36 = arith.constant 0 : index
    %c1_37 = arith.constant 1 : index
    %c0_38 = arith.constant 0 : index
    %36 = vector.load %arg5[%c0_36, %c1_37, %c0_38] : memref<2x4x8xf32, #tpu.memory_space<vmem>>, vector<1x1x8xf32>
    %37 = vector.shape_cast %36 : vector<1x1x8xf32> to vector<8xf32>
    %38 = vector.shape_cast %37 : vector<8xf32> to vector<1x8xf32>
    %39 = vector.broadcast %38 : vector<1x8xf32> to vector<16x8xf32>
    %40 = arith.addf %35, %39 : vector<16x8xf32>
    %c0_39 = arith.constant 0 : index
    %c1_40 = arith.constant 1 : index
    %c0_41 = arith.constant 0 : index
    %c0_42 = arith.constant 0 : index
    %41 = vector.load %arg3[%c0_39, %c1_40, %c0_41, %c0_42] : memref<2x4x32x8xf32, #tpu.memory_space<vmem>>, vector<1x1x32x8xf32>
    %42 = vector.shape_cast %41 : vector<1x1x32x8xf32> to vector<32x8xf32>
    %cst_43 = arith.constant dense<0.000000e+00> : vector<16x8xf32>
    %43 = tpu.matmul %0, %42, %cst_43 {dimension_numbers = #tpu.dot_dimension_numbers<[1], [0], [0], [1], [0, 0, 1, 1], [], []>} : vector<16x32xf32>, vector<32x8xf32>, vector<16x8xf32> -> vector<16x8xf32>
    %c0_44 = arith.constant 0 : index
    %c1_45 = arith.constant 1 : index
    %c0_46 = arith.constant 0 : index
    %44 = vector.load %arg6[%c0_44, %c1_45, %c0_46] : memref<2x4x8xf32, #tpu.memory_space<vmem>>, vector<1x1x8xf32>
    %45 = vector.shape_cast %44 : vector<1x1x8xf32> to vector<8xf32>
    %46 = vector.shape_cast %45 : vector<8xf32> to vector<1x8xf32>
    %47 = vector.broadcast %46 : vector<1x8xf32> to vector<16x8xf32>
    %48 = arith.addf %43, %47 : vector<16x8xf32>
    %c0_47 = arith.constant 0 : index
    %c2 = arith.constant 2 : index
    %c0_48 = arith.constant 0 : index
    %c0_49 = arith.constant 0 : index
    %49 = vector.load %arg1[%c0_47, %c2, %c0_48, %c0_49] : memref<2x4x32x8xf32, #tpu.memory_space<vmem>>, vector<1x1x32x8xf32>
    %50 = vector.shape_cast %49 : vector<1x1x32x8xf32> to vector<32x8xf32>
    %cst_50 = arith.constant dense<0.000000e+00> : vector<16x8xf32>
    %51 = tpu.matmul %0, %50, %cst_50 {dimension_numbers = #tpu.dot_dimension_numbers<[1], [0], [0], [1], [0, 0, 1, 1], [], []>} : vector<16x32xf32>, vector<32x8xf32>, vector<16x8xf32> -> vector<16x8xf32>
    %c0_51 = arith.constant 0 : index
    %c2_52 = arith.constant 2 : index
    %c0_53 = arith.constant 0 : index
    %52 = vector.load %arg4[%c0_51, %c2_52, %c0_53] : memref<2x4x8xf32, #tpu.memory_space<vmem>>, vector<1x1x8xf32>
    %53 = vector.shape_cast %52 : vector<1x1x8xf32> to vector<8xf32>
    %54 = vector.shape_cast %53 : vector<8xf32> to vector<1x8xf32>
    %55 = vector.broadcast %54 : vector<1x8xf32> to vector<16x8xf32>
    %56 = arith.addf %51, %55 : vector<16x8xf32>
    %c0_54 = arith.constant 0 : index
    %c2_55 = arith.constant 2 : index
    %c0_56 = arith.constant 0 : index
    %c0_57 = arith.constant 0 : index
    %57 = vector.load %arg2[%c0_54, %c2_55, %c0_56, %c0_57] : memref<2x4x32x8xf32, #tpu.memory_space<vmem>>, vector<1x1x32x8xf32>
    %58 = vector.shape_cast %57 : vector<1x1x32x8xf32> to vector<32x8xf32>
    %cst_58 = arith.constant dense<0.000000e+00> : vector<16x8xf32>
    %59 = tpu.matmul %0, %58, %cst_58 {dimension_numbers = #tpu.dot_dimension_numbers<[1], [0], [0], [1], [0, 0, 1, 1], [], []>} : vector<16x32xf32>, vector<32x8xf32>, vector<16x8xf32> -> vector<16x8xf32>
    %c0_59 = arith.constant 0 : index
    %c2_60 = arith.constant 2 : index
    %c0_61 = arith.constant 0 : index
    %60 = vector.load %arg5[%c0_59, %c2_60, %c0_61] : memref<2x4x8xf32, #tpu.memory_space<vmem>>, vector<1x1x8xf32>
    %61 = vector.shape_cast %60 : vector<1x1x8xf32> to vector<8xf32>
    %62 = vector.shape_cast %61 : vector<8xf32> to vector<1x8xf32>
    %63 = vector.broadcast %62 : vector<1x8xf32> to vector<16x8xf32>
    %64 = arith.addf %59, %63 : vector<16x8xf32>
    %c0_62 = arith.constant 0 : index
    %c2_63 = arith.constant 2 : index
    %c0_64 = arith.constant 0 : index
    %c0_65 = arith.constant 0 : index
    %65 = vector.load %arg3[%c0_62, %c2_63, %c0_64, %c0_65] : memref<2x4x32x8xf32, #tpu.memory_space<vmem>>, vector<1x1x32x8xf32>
    %66 = vector.shape_cast %65 : vector<1x1x32x8xf32> to vector<32x8xf32>
    %cst_66 = arith.constant dense<0.000000e+00> : vector<16x8xf32>
    %67 = tpu.matmul %0, %66, %cst_66 {dimension_numbers = #tpu.dot_dimension_numbers<[1], [0], [0], [1], [0, 0, 1, 1], [], []>} : vector<16x32xf32>, vector<32x8xf32>, vector<16x8xf32> -> vector<16x8xf32>
    %c0_67 = arith.constant 0 : index
    %c2_68 = arith.constant 2 : index
    %c0_69 = arith.constant 0 : index
    %68 = vector.load %arg6[%c0_67, %c2_68, %c0_69] : memref<2x4x8xf32, #tpu.memory_space<vmem>>, vector<1x1x8xf32>
    %69 = vector.shape_cast %68 : vector<1x1x8xf32> to vector<8xf32>
    %70 = vector.shape_cast %69 : vector<8xf32> to vector<1x8xf32>
    %71 = vector.broadcast %70 : vector<1x8xf32> to vector<16x8xf32>
    %72 = arith.addf %67, %71 : vector<16x8xf32>
    %c0_70 = arith.constant 0 : index
    %c3 = arith.constant 3 : index
    %c0_71 = arith.constant 0 : index
    %c0_72 = arith.constant 0 : index
    %73 = vector.load %arg1[%c0_70, %c3, %c0_71, %c0_72] : memref<2x4x32x8xf32, #tpu.memory_space<vmem>>, vector<1x1x32x8xf32>
    %74 = vector.shape_cast %73 : vector<1x1x32x8xf32> to vector<32x8xf32>
    %cst_73 = arith.constant dense<0.000000e+00> : vector<16x8xf32>
    %75 = tpu.matmul %0, %74, %cst_73 {dimension_numbers = #tpu.dot_dimension_numbers<[1], [0], [0], [1], [0, 0, 1, 1], [], []>} : vector<16x32xf32>, vector<32x8xf32>, vector<16x8xf32> -> vector<16x8xf32>
    %c0_74 = arith.constant 0 : index
    %c3_75 = arith.constant 3 : index
    %c0_76 = arith.constant 0 : index
    %76 = vector.load %arg4[%c0_74, %c3_75, %c0_76] : memref<2x4x8xf32, #tpu.memory_space<vmem>>, vector<1x1x8xf32>
    %77 = vector.shape_cast %76 : vector<1x1x8xf32> to vector<8xf32>
    %78 = vector.shape_cast %77 : vector<8xf32> to vector<1x8xf32>
    %79 = vector.broadcast %78 : vector<1x8xf32> to vector<16x8xf32>
    %80 = arith.addf %75, %79 : vector<16x8xf32>
    %c0_77 = arith.constant 0 : index
    %c3_78 = arith.constant 3 : index
    %c0_79 = arith.constant 0 : index
    %c0_80 = arith.constant 0 : index
    %81 = vector.load %arg2[%c0_77, %c3_78, %c0_79, %c0_80] : memref<2x4x32x8xf32, #tpu.memory_space<vmem>>, vector<1x1x32x8xf32>
    %82 = vector.shape_cast %81 : vector<1x1x32x8xf32> to vector<32x8xf32>
    %cst_81 = arith.constant dense<0.000000e+00> : vector<16x8xf32>
    %83 = tpu.matmul %0, %82, %cst_81 {dimension_numbers = #tpu.dot_dimension_numbers<[1], [0], [0], [1], [0, 0, 1, 1], [], []>} : vector<16x32xf32>, vector<32x8xf32>, vector<16x8xf32> -> vector<16x8xf32>
    %c0_82 = arith.constant 0 : index
    %c3_83 = arith.constant 3 : index
    %c0_84 = arith.constant 0 : index
    %84 = vector.load %arg5[%c0_82, %c3_83, %c0_84] : memref<2x4x8xf32, #tpu.memory_space<vmem>>, vector<1x1x8xf32>
    %85 = vector.shape_cast %84 : vector<1x1x8xf32> to vector<8xf32>
    %86 = vector.shape_cast %85 : vector<8xf32> to vector<1x8xf32>
    %87 = vector.broadcast %86 : vector<1x8xf32> to vector<16x8xf32>
    %88 = arith.addf %83, %87 : vector<16x8xf32>
    %c0_85 = arith.constant 0 : index
    %c3_86 = arith.constant 3 : index
    %c0_87 = arith.constant 0 : index
    %c0_88 = arith.constant 0 : index
    %89 = vector.load %arg3[%c0_85, %c3_86, %c0_87, %c0_88] : memref<2x4x32x8xf32, #tpu.memory_space<vmem>>, vector<1x1x32x8xf32>
    %90 = vector.shape_cast %89 : vector<1x1x32x8xf32> to vector<32x8xf32>
    %cst_89 = arith.constant dense<0.000000e+00> : vector<16x8xf32>
    %91 = tpu.matmul %0, %90, %cst_89 {dimension_numbers = #tpu.dot_dimension_numbers<[1], [0], [0], [1], [0, 0, 1, 1], [], []>} : vector<16x32xf32>, vector<32x8xf32>, vector<16x8xf32> -> vector<16x8xf32>
    %c0_90 = arith.constant 0 : index
    %c3_91 = arith.constant 3 : index
    %c0_92 = arith.constant 0 : index
    %92 = vector.load %arg6[%c0_90, %c3_91, %c0_92] : memref<2x4x8xf32, #tpu.memory_space<vmem>>, vector<1x1x8xf32>
    %93 = vector.shape_cast %92 : vector<1x1x8xf32> to vector<8xf32>
    %94 = vector.shape_cast %93 : vector<8xf32> to vector<1x8xf32>
    %95 = vector.broadcast %94 : vector<1x8xf32> to vector<16x8xf32>
    %96 = arith.addf %91, %95 : vector<16x8xf32>
    %cst_93 = arith.constant 0.000000e+00 : f32
    %97 = vector.broadcast %cst_93 : f32 to vector<8x32xf32>
    %98 = vector.extract_strided_slice %8 {offsets = [0, 0], sizes = [8, 8], strides = [1, 1]} : vector<16x8xf32> to vector<8x8xf32>
    %99 = vector.extract_strided_slice %16 {offsets = [0, 0], sizes = [8, 8], strides = [1, 1]} : vector<16x8xf32> to vector<8x8xf32>
    %100 = vector.extract_strided_slice %24 {offsets = [0, 0], sizes = [8, 8], strides = [1, 1]} : vector<16x8xf32> to vector<8x8xf32>
    %cst_94 = arith.constant dense<0.000000e+00> : vector<8x8xf32>
    %101 = tpu.matmul %98, %99, %cst_94 {dimension_numbers = #tpu.dot_dimension_numbers<[1], [1], [0], [0], [0, 0, 1, 0], [], []>} : vector<8x8xf32>, vector<8x8xf32>, vector<8x8xf32> -> vector<8x8xf32>
    %cst_95 = arith.constant dense<0xFF800000> : vector<8xf32>
    %102 = vector.multi_reduction <maximumf>, %101, %cst_95 [1] : vector<8x8xf32> to vector<8xf32>
    %103 = vector.shape_cast %102 : vector<8xf32> to vector<8x1xf32>
    %104 = vector.broadcast %103 : vector<8x1xf32> to vector<8x8xf32>
    %105 = arith.subf %101, %104 : vector<8x8xf32>
    %106 = math.exp %105 : vector<8x8xf32>
    %cst_96 = arith.constant dense<0.000000e+00> : vector<8xf32>
    %107 = vector.multi_reduction <add>, %106, %cst_96 [1] : vector<8x8xf32> to vector<8xf32>
    %108 = vector.shape_cast %107 : vector<8xf32> to vector<8x1xf32>
    %109 = tpu.reciprocal %108 {approx = true} : vector<8x1xf32> -> vector<8x1xf32>
    %110 = vector.broadcast %109 : vector<8x1xf32> to vector<8x8xf32>
    %111 = arith.mulf %106, %110 : vector<8x8xf32>
    %cst_97 = arith.constant dense<0.000000e+00> : vector<8x8xf32>
    %112 = tpu.matmul %111, %100, %cst_97 {dimension_numbers = #tpu.dot_dimension_numbers<[1], [0], [0], [1], [0, 0, 1, 1], [], []>} : vector<8x8xf32>, vector<8x8xf32>, vector<8x8xf32> -> vector<8x8xf32>
    %c0_98 = arith.constant 0 : index
    %c0_99 = arith.constant 0 : index
    %c0_100 = arith.constant 0 : index
    %c0_101 = arith.constant 0 : index
    %113 = vector.load %arg7[%c0_98, %c0_99, %c0_100, %c0_101] : memref<2x4x8x32xf32, #tpu.memory_space<vmem>>, vector<1x1x8x32xf32>
    %114 = vector.shape_cast %113 : vector<1x1x8x32xf32> to vector<8x32xf32>
    %cst_102 = arith.constant dense<0.000000e+00> : vector<8x32xf32>
    %115 = tpu.matmul %112, %114, %cst_102 {dimension_numbers = #tpu.dot_dimension_numbers<[1], [0], [0], [1], [0, 0, 1, 1], [], []>} : vector<8x8xf32>, vector<8x32xf32>, vector<8x32xf32> -> vector<8x32xf32>
    %116 = arith.addf %97, %115 : vector<8x32xf32>
    %117 = vector.extract_strided_slice %32 {offsets = [0, 0], sizes = [8, 8], strides = [1, 1]} : vector<16x8xf32> to vector<8x8xf32>
    %118 = vector.extract_strided_slice %40 {offsets = [0, 0], sizes = [8, 8], strides = [1, 1]} : vector<16x8xf32> to vector<8x8xf32>
    %119 = vector.extract_strided_slice %48 {offsets = [0, 0], sizes = [8, 8], strides = [1, 1]} : vector<16x8xf32> to vector<8x8xf32>
    %cst_103 = arith.constant dense<0.000000e+00> : vector<8x8xf32>
    %120 = tpu.matmul %117, %118, %cst_103 {dimension_numbers = #tpu.dot_dimension_numbers<[1], [1], [0], [0], [0, 0, 1, 0], [], []>} : vector<8x8xf32>, vector<8x8xf32>, vector<8x8xf32> -> vector<8x8xf32>
    %cst_104 = arith.constant dense<0xFF800000> : vector<8xf32>
    %121 = vector.multi_reduction <maximumf>, %120, %cst_104 [1] : vector<8x8xf32> to vector<8xf32>
    %122 = vector.shape_cast %121 : vector<8xf32> to vector<8x1xf32>
    %123 = vector.broadcast %122 : vector<8x1xf32> to vector<8x8xf32>
    %124 = arith.subf %120, %123 : vector<8x8xf32>
    %125 = math.exp %124 : vector<8x8xf32>
    %cst_105 = arith.constant dense<0.000000e+00> : vector<8xf32>
    %126 = vector.multi_reduction <add>, %125, %cst_105 [1] : vector<8x8xf32> to vector<8xf32>
    %127 = vector.shape_cast %126 : vector<8xf32> to vector<8x1xf32>
    %128 = tpu.reciprocal %127 {approx = true} : vector<8x1xf32> -> vector<8x1xf32>
    %129 = vector.broadcast %128 : vector<8x1xf32> to vector<8x8xf32>
    %130 = arith.mulf %125, %129 : vector<8x8xf32>
    %cst_106 = arith.constant dense<0.000000e+00> : vector<8x8xf32>
    %131 = tpu.matmul %130, %119, %cst_106 {dimension_numbers = #tpu.dot_dimension_numbers<[1], [0], [0], [1], [0, 0, 1, 1], [], []>} : vector<8x8xf32>, vector<8x8xf32>, vector<8x8xf32> -> vector<8x8xf32>
    %c0_107 = arith.constant 0 : index
    %c1_108 = arith.constant 1 : index
    %c0_109 = arith.constant 0 : index
    %c0_110 = arith.constant 0 : index
    %132 = vector.load %arg7[%c0_107, %c1_108, %c0_109, %c0_110] : memref<2x4x8x32xf32, #tpu.memory_space<vmem>>, vector<1x1x8x32xf32>
    %133 = vector.shape_cast %132 : vector<1x1x8x32xf32> to vector<8x32xf32>
    %cst_111 = arith.constant dense<0.000000e+00> : vector<8x32xf32>
    %134 = tpu.matmul %131, %133, %cst_111 {dimension_numbers = #tpu.dot_dimension_numbers<[1], [0], [0], [1], [0, 0, 1, 1], [], []>} : vector<8x8xf32>, vector<8x32xf32>, vector<8x32xf32> -> vector<8x32xf32>
    %135 = arith.addf %116, %134 : vector<8x32xf32>
    %136 = vector.extract_strided_slice %56 {offsets = [0, 0], sizes = [8, 8], strides = [1, 1]} : vector<16x8xf32> to vector<8x8xf32>
    %137 = vector.extract_strided_slice %64 {offsets = [0, 0], sizes = [8, 8], strides = [1, 1]} : vector<16x8xf32> to vector<8x8xf32>
    %138 = vector.extract_strided_slice %72 {offsets = [0, 0], sizes = [8, 8], strides = [1, 1]} : vector<16x8xf32> to vector<8x8xf32>
    %cst_112 = arith.constant dense<0.000000e+00> : vector<8x8xf32>
    %139 = tpu.matmul %136, %137, %cst_112 {dimension_numbers = #tpu.dot_dimension_numbers<[1], [1], [0], [0], [0, 0, 1, 0], [], []>} : vector<8x8xf32>, vector<8x8xf32>, vector<8x8xf32> -> vector<8x8xf32>
    %cst_113 = arith.constant dense<0xFF800000> : vector<8xf32>
    %140 = vector.multi_reduction <maximumf>, %139, %cst_113 [1] : vector<8x8xf32> to vector<8xf32>
    %141 = vector.shape_cast %140 : vector<8xf32> to vector<8x1xf32>
    %142 = vector.broadcast %141 : vector<8x1xf32> to vector<8x8xf32>
    %143 = arith.subf %139, %142 : vector<8x8xf32>
    %144 = math.exp %143 : vector<8x8xf32>
    %cst_114 = arith.constant dense<0.000000e+00> : vector<8xf32>
    %145 = vector.multi_reduction <add>, %144, %cst_114 [1] : vector<8x8xf32> to vector<8xf32>
    %146 = vector.shape_cast %145 : vector<8xf32> to vector<8x1xf32>
    %147 = tpu.reciprocal %146 {approx = true} : vector<8x1xf32> -> vector<8x1xf32>
    %148 = vector.broadcast %147 : vector<8x1xf32> to vector<8x8xf32>
    %149 = arith.mulf %144, %148 : vector<8x8xf32>
    %cst_115 = arith.constant dense<0.000000e+00> : vector<8x8xf32>
    %150 = tpu.matmul %149, %138, %cst_115 {dimension_numbers = #tpu.dot_dimension_numbers<[1], [0], [0], [1], [0, 0, 1, 1], [], []>} : vector<8x8xf32>, vector<8x8xf32>, vector<8x8xf32> -> vector<8x8xf32>
    %c0_116 = arith.constant 0 : index
    %c2_117 = arith.constant 2 : index
    %c0_118 = arith.constant 0 : index
    %c0_119 = arith.constant 0 : index
    %151 = vector.load %arg7[%c0_116, %c2_117, %c0_118, %c0_119] : memref<2x4x8x32xf32, #tpu.memory_space<vmem>>, vector<1x1x8x32xf32>
    %152 = vector.shape_cast %151 : vector<1x1x8x32xf32> to vector<8x32xf32>
    %cst_120 = arith.constant dense<0.000000e+00> : vector<8x32xf32>
    %153 = tpu.matmul %150, %152, %cst_120 {dimension_numbers = #tpu.dot_dimension_numbers<[1], [0], [0], [1], [0, 0, 1, 1], [], []>} : vector<8x8xf32>, vector<8x32xf32>, vector<8x32xf32> -> vector<8x32xf32>
    %154 = arith.addf %135, %153 : vector<8x32xf32>
    %155 = vector.extract_strided_slice %80 {offsets = [0, 0], sizes = [8, 8], strides = [1, 1]} : vector<16x8xf32> to vector<8x8xf32>
    %156 = vector.extract_strided_slice %88 {offsets = [0, 0], sizes = [8, 8], strides = [1, 1]} : vector<16x8xf32> to vector<8x8xf32>
    %157 = vector.extract_strided_slice %96 {offsets = [0, 0], sizes = [8, 8], strides = [1, 1]} : vector<16x8xf32> to vector<8x8xf32>
    %cst_121 = arith.constant dense<0.000000e+00> : vector<8x8xf32>
    %158 = tpu.matmul %155, %156, %cst_121 {dimension_numbers = #tpu.dot_dimension_numbers<[1], [1], [0], [0], [0, 0, 1, 0], [], []>} : vector<8x8xf32>, vector<8x8xf32>, vector<8x8xf32> -> vector<8x8xf32>
    %cst_122 = arith.constant dense<0xFF800000> : vector<8xf32>
    %159 = vector.multi_reduction <maximumf>, %158, %cst_122 [1] : vector<8x8xf32> to vector<8xf32>
    %160 = vector.shape_cast %159 : vector<8xf32> to vector<8x1xf32>
    %161 = vector.broadcast %160 : vector<8x1xf32> to vector<8x8xf32>
    %162 = arith.subf %158, %161 : vector<8x8xf32>
    %163 = math.exp %162 : vector<8x8xf32>
    %cst_123 = arith.constant dense<0.000000e+00> : vector<8xf32>
    %164 = vector.multi_reduction <add>, %163, %cst_123 [1] : vector<8x8xf32> to vector<8xf32>
    %165 = vector.shape_cast %164 : vector<8xf32> to vector<8x1xf32>
    %166 = tpu.reciprocal %165 {approx = true} : vector<8x1xf32> -> vector<8x1xf32>
    %167 = vector.broadcast %166 : vector<8x1xf32> to vector<8x8xf32>
    %168 = arith.mulf %163, %167 : vector<8x8xf32>
    %cst_124 = arith.constant dense<0.000000e+00> : vector<8x8xf32>
    %169 = tpu.matmul %168, %157, %cst_124 {dimension_numbers = #tpu.dot_dimension_numbers<[1], [0], [0], [1], [0, 0, 1, 1], [], []>} : vector<8x8xf32>, vector<8x8xf32>, vector<8x8xf32> -> vector<8x8xf32>
    %c0_125 = arith.constant 0 : index
    %c3_126 = arith.constant 3 : index
    %c0_127 = arith.constant 0 : index
    %c0_128 = arith.constant 0 : index
    %170 = vector.load %arg7[%c0_125, %c3_126, %c0_127, %c0_128] : memref<2x4x8x32xf32, #tpu.memory_space<vmem>>, vector<1x1x8x32xf32>
    %171 = vector.shape_cast %170 : vector<1x1x8x32xf32> to vector<8x32xf32>
    %cst_129 = arith.constant dense<0.000000e+00> : vector<8x32xf32>
    %172 = tpu.matmul %169, %171, %cst_129 {dimension_numbers = #tpu.dot_dimension_numbers<[1], [0], [0], [1], [0, 0, 1, 1], [], []>} : vector<8x8xf32>, vector<8x32xf32>, vector<8x32xf32> -> vector<8x32xf32>
    %173 = arith.addf %154, %172 : vector<8x32xf32>
    %cst_130 = arith.constant 0.000000e+00 : f32
    %174 = vector.broadcast %cst_130 : f32 to vector<8x32xf32>
    %175 = vector.extract_strided_slice %8 {offsets = [8, 0], sizes = [8, 8], strides = [1, 1]} : vector<16x8xf32> to vector<8x8xf32>
    %176 = vector.extract_strided_slice %16 {offsets = [8, 0], sizes = [8, 8], strides = [1, 1]} : vector<16x8xf32> to vector<8x8xf32>
    %177 = vector.extract_strided_slice %24 {offsets = [8, 0], sizes = [8, 8], strides = [1, 1]} : vector<16x8xf32> to vector<8x8xf32>
    %cst_131 = arith.constant dense<0.000000e+00> : vector<8x8xf32>
    %178 = tpu.matmul %175, %176, %cst_131 {dimension_numbers = #tpu.dot_dimension_numbers<[1], [1], [0], [0], [0, 0, 1, 0], [], []>} : vector<8x8xf32>, vector<8x8xf32>, vector<8x8xf32> -> vector<8x8xf32>
    %cst_132 = arith.constant dense<0xFF800000> : vector<8xf32>
    %179 = vector.multi_reduction <maximumf>, %178, %cst_132 [1] : vector<8x8xf32> to vector<8xf32>
    %180 = vector.shape_cast %179 : vector<8xf32> to vector<8x1xf32>
    %181 = vector.broadcast %180 : vector<8x1xf32> to vector<8x8xf32>
    %182 = arith.subf %178, %181 : vector<8x8xf32>
    %183 = math.exp %182 : vector<8x8xf32>
    %cst_133 = arith.constant dense<0.000000e+00> : vector<8xf32>
    %184 = vector.multi_reduction <add>, %183, %cst_133 [1] : vector<8x8xf32> to vector<8xf32>
    %185 = vector.shape_cast %184 : vector<8xf32> to vector<8x1xf32>
    %186 = tpu.reciprocal %185 {approx = true} : vector<8x1xf32> -> vector<8x1xf32>
    %187 = vector.broadcast %186 : vector<8x1xf32> to vector<8x8xf32>
    %188 = arith.mulf %183, %187 : vector<8x8xf32>
    %cst_134 = arith.constant dense<0.000000e+00> : vector<8x8xf32>
    %189 = tpu.matmul %188, %177, %cst_134 {dimension_numbers = #tpu.dot_dimension_numbers<[1], [0], [0], [1], [0, 0, 1, 1], [], []>} : vector<8x8xf32>, vector<8x8xf32>, vector<8x8xf32> -> vector<8x8xf32>
    %c0_135 = arith.constant 0 : index
    %c0_136 = arith.constant 0 : index
    %c0_137 = arith.constant 0 : index
    %c0_138 = arith.constant 0 : index
    %190 = vector.load %arg7[%c0_135, %c0_136, %c0_137, %c0_138] : memref<2x4x8x32xf32, #tpu.memory_space<vmem>>, vector<1x1x8x32xf32>
    %191 = vector.shape_cast %190 : vector<1x1x8x32xf32> to vector<8x32xf32>
    %cst_139 = arith.constant dense<0.000000e+00> : vector<8x32xf32>
    %192 = tpu.matmul %189, %191, %cst_139 {dimension_numbers = #tpu.dot_dimension_numbers<[1], [0], [0], [1], [0, 0, 1, 1], [], []>} : vector<8x8xf32>, vector<8x32xf32>, vector<8x32xf32> -> vector<8x32xf32>
    %193 = arith.addf %174, %192 : vector<8x32xf32>
    %194 = vector.extract_strided_slice %32 {offsets = [8, 0], sizes = [8, 8], strides = [1, 1]} : vector<16x8xf32> to vector<8x8xf32>
    %195 = vector.extract_strided_slice %40 {offsets = [8, 0], sizes = [8, 8], strides = [1, 1]} : vector<16x8xf32> to vector<8x8xf32>
    %196 = vector.extract_strided_slice %48 {offsets = [8, 0], sizes = [8, 8], strides = [1, 1]} : vector<16x8xf32> to vector<8x8xf32>
    %cst_140 = arith.constant dense<0.000000e+00> : vector<8x8xf32>
    %197 = tpu.matmul %194, %195, %cst_140 {dimension_numbers = #tpu.dot_dimension_numbers<[1], [1], [0], [0], [0, 0, 1, 0], [], []>} : vector<8x8xf32>, vector<8x8xf32>, vector<8x8xf32> -> vector<8x8xf32>
    %cst_141 = arith.constant dense<0xFF800000> : vector<8xf32>
    %198 = vector.multi_reduction <maximumf>, %197, %cst_141 [1] : vector<8x8xf32> to vector<8xf32>
    %199 = vector.shape_cast %198 : vector<8xf32> to vector<8x1xf32>
    %200 = vector.broadcast %199 : vector<8x1xf32> to vector<8x8xf32>
    %201 = arith.subf %197, %200 : vector<8x8xf32>
    %202 = math.exp %201 : vector<8x8xf32>
    %cst_142 = arith.constant dense<0.000000e+00> : vector<8xf32>
    %203 = vector.multi_reduction <add>, %202, %cst_142 [1] : vector<8x8xf32> to vector<8xf32>
    %204 = vector.shape_cast %203 : vector<8xf32> to vector<8x1xf32>
    %205 = tpu.reciprocal %204 {approx = true} : vector<8x1xf32> -> vector<8x1xf32>
    %206 = vector.broadcast %205 : vector<8x1xf32> to vector<8x8xf32>
    %207 = arith.mulf %202, %206 : vector<8x8xf32>
    %cst_143 = arith.constant dense<0.000000e+00> : vector<8x8xf32>
    %208 = tpu.matmul %207, %196, %cst_143 {dimension_numbers = #tpu.dot_dimension_numbers<[1], [0], [0], [1], [0, 0, 1, 1], [], []>} : vector<8x8xf32>, vector<8x8xf32>, vector<8x8xf32> -> vector<8x8xf32>
    %c0_144 = arith.constant 0 : index
    %c1_145 = arith.constant 1 : index
    %c0_146 = arith.constant 0 : index
    %c0_147 = arith.constant 0 : index
    %209 = vector.load %arg7[%c0_144, %c1_145, %c0_146, %c0_147] : memref<2x4x8x32xf32, #tpu.memory_space<vmem>>, vector<1x1x8x32xf32>
    %210 = vector.shape_cast %209 : vector<1x1x8x32xf32> to vector<8x32xf32>
    %cst_148 = arith.constant dense<0.000000e+00> : vector<8x32xf32>
    %211 = tpu.matmul %208, %210, %cst_148 {dimension_numbers = #tpu.dot_dimension_numbers<[1], [0], [0], [1], [0, 0, 1, 1], [], []>} : vector<8x8xf32>, vector<8x32xf32>, vector<8x32xf32> -> vector<8x32xf32>
    %212 = arith.addf %193, %211 : vector<8x32xf32>
    %213 = vector.extract_strided_slice %56 {offsets = [8, 0], sizes = [8, 8], strides = [1, 1]} : vector<16x8xf32> to vector<8x8xf32>
    %214 = vector.extract_strided_slice %64 {offsets = [8, 0], sizes = [8, 8], strides = [1, 1]} : vector<16x8xf32> to vector<8x8xf32>
    %215 = vector.extract_strided_slice %72 {offsets = [8, 0], sizes = [8, 8], strides = [1, 1]} : vector<16x8xf32> to vector<8x8xf32>
    %cst_149 = arith.constant dense<0.000000e+00> : vector<8x8xf32>
    %216 = tpu.matmul %213, %214, %cst_149 {dimension_numbers = #tpu.dot_dimension_numbers<[1], [1], [0], [0], [0, 0, 1, 0], [], []>} : vector<8x8xf32>, vector<8x8xf32>, vector<8x8xf32> -> vector<8x8xf32>
    %cst_150 = arith.constant dense<0xFF800000> : vector<8xf32>
    %217 = vector.multi_reduction <maximumf>, %216, %cst_150 [1] : vector<8x8xf32> to vector<8xf32>
    %218 = vector.shape_cast %217 : vector<8xf32> to vector<8x1xf32>
    %219 = vector.broadcast %218 : vector<8x1xf32> to vector<8x8xf32>
    %220 = arith.subf %216, %219 : vector<8x8xf32>
    %221 = math.exp %220 : vector<8x8xf32>
    %cst_151 = arith.constant dense<0.000000e+00> : vector<8xf32>
    %222 = vector.multi_reduction <add>, %221, %cst_151 [1] : vector<8x8xf32> to vector<8xf32>
    %223 = vector.shape_cast %222 : vector<8xf32> to vector<8x1xf32>
    %224 = tpu.reciprocal %223 {approx = true} : vector<8x1xf32> -> vector<8x1xf32>
    %225 = vector.broadcast %224 : vector<8x1xf32> to vector<8x8xf32>
    %226 = arith.mulf %221, %225 : vector<8x8xf32>
    %cst_152 = arith.constant dense<0.000000e+00> : vector<8x8xf32>
    %227 = tpu.matmul %226, %215, %cst_152 {dimension_numbers = #tpu.dot_dimension_numbers<[1], [0], [0], [1], [0, 0, 1, 1], [], []>} : vector<8x8xf32>, vector<8x8xf32>, vector<8x8xf32> -> vector<8x8xf32>
    %c0_153 = arith.constant 0 : index
    %c2_154 = arith.constant 2 : index
    %c0_155 = arith.constant 0 : index
    %c0_156 = arith.constant 0 : index
    %228 = vector.load %arg7[%c0_153, %c2_154, %c0_155, %c0_156] : memref<2x4x8x32xf32, #tpu.memory_space<vmem>>, vector<1x1x8x32xf32>
    %229 = vector.shape_cast %228 : vector<1x1x8x32xf32> to vector<8x32xf32>
    %cst_157 = arith.constant dense<0.000000e+00> : vector<8x32xf32>
    %230 = tpu.matmul %227, %229, %cst_157 {dimension_numbers = #tpu.dot_dimension_numbers<[1], [0], [0], [1], [0, 0, 1, 1], [], []>} : vector<8x8xf32>, vector<8x32xf32>, vector<8x32xf32> -> vector<8x32xf32>
    %231 = arith.addf %212, %230 : vector<8x32xf32>
    %232 = vector.extract_strided_slice %80 {offsets = [8, 0], sizes = [8, 8], strides = [1, 1]} : vector<16x8xf32> to vector<8x8xf32>
    %233 = vector.extract_strided_slice %88 {offsets = [8, 0], sizes = [8, 8], strides = [1, 1]} : vector<16x8xf32> to vector<8x8xf32>
    %234 = vector.extract_strided_slice %96 {offsets = [8, 0], sizes = [8, 8], strides = [1, 1]} : vector<16x8xf32> to vector<8x8xf32>
    %cst_158 = arith.constant dense<0.000000e+00> : vector<8x8xf32>
    %235 = tpu.matmul %232, %233, %cst_158 {dimension_numbers = #tpu.dot_dimension_numbers<[1], [1], [0], [0], [0, 0, 1, 0], [], []>} : vector<8x8xf32>, vector<8x8xf32>, vector<8x8xf32> -> vector<8x8xf32>
    %cst_159 = arith.constant dense<0xFF800000> : vector<8xf32>
    %236 = vector.multi_reduction <maximumf>, %235, %cst_159 [1] : vector<8x8xf32> to vector<8xf32>
    %237 = vector.shape_cast %236 : vector<8xf32> to vector<8x1xf32>
    %238 = vector.broadcast %237 : vector<8x1xf32> to vector<8x8xf32>
    %239 = arith.subf %235, %238 : vector<8x8xf32>
    %240 = math.exp %239 : vector<8x8xf32>
    %cst_160 = arith.constant dense<0.000000e+00> : vector<8xf32>
    %241 = vector.multi_reduction <add>, %240, %cst_160 [1] : vector<8x8xf32> to vector<8xf32>
    %242 = vector.shape_cast %241 : vector<8xf32> to vector<8x1xf32>
    %243 = tpu.reciprocal %242 {approx = true} : vector<8x1xf32> -> vector<8x1xf32>
    %244 = vector.broadcast %243 : vector<8x1xf32> to vector<8x8xf32>
    %245 = arith.mulf %240, %244 : vector<8x8xf32>
    %cst_161 = arith.constant dense<0.000000e+00> : vector<8x8xf32>
    %246 = tpu.matmul %245, %234, %cst_161 {dimension_numbers = #tpu.dot_dimension_numbers<[1], [0], [0], [1], [0, 0, 1, 1], [], []>} : vector<8x8xf32>, vector<8x8xf32>, vector<8x8xf32> -> vector<8x8xf32>
    %c0_162 = arith.constant 0 : index
    %c3_163 = arith.constant 3 : index
    %c0_164 = arith.constant 0 : index
    %c0_165 = arith.constant 0 : index
    %247 = vector.load %arg7[%c0_162, %c3_163, %c0_164, %c0_165] : memref<2x4x8x32xf32, #tpu.memory_space<vmem>>, vector<1x1x8x32xf32>
    %248 = vector.shape_cast %247 : vector<1x1x8x32xf32> to vector<8x32xf32>
    %cst_166 = arith.constant dense<0.000000e+00> : vector<8x32xf32>
    %249 = tpu.matmul %246, %248, %cst_166 {dimension_numbers = #tpu.dot_dimension_numbers<[1], [0], [0], [1], [0, 0, 1, 1], [], []>} : vector<8x8xf32>, vector<8x32xf32>, vector<8x32xf32> -> vector<8x32xf32>
    %250 = arith.addf %231, %249 : vector<8x32xf32>
    %251 = tpu.concatenate %173, %250 in 0 : vector<8x32xf32>, vector<8x32xf32> -> vector<16x32xf32>
    %c0_167 = arith.constant 0 : index
    %c0_168 = arith.constant 0 : index
    %252 = vector.load %arg8[%c0_167, %c0_168] : memref<2x32xf32, #tpu.memory_space<vmem>>, vector<1x32xf32>
    %253 = vector.shape_cast %252 : vector<1x32xf32> to vector<32xf32>
    %254 = vector.shape_cast %253 : vector<32xf32> to vector<1x32xf32>
    %255 = vector.broadcast %254 : vector<1x32xf32> to vector<16x32xf32>
    %256 = arith.addf %251, %255 : vector<16x32xf32>
    %257 = arith.addf %0, %256 : vector<16x32xf32>
    %c0_169 = arith.constant 0 : index
    %c0_170 = arith.constant 0 : index
    %258 = vector.load %arg9[%c0_169, %c0_170] : memref<2x32xf32, #tpu.memory_space<vmem>>, vector<1x32xf32>
    %259 = vector.shape_cast %258 : vector<1x32xf32> to vector<32xf32>
    %c0_171 = arith.constant 0 : index
    %c0_172 = arith.constant 0 : index
    %260 = vector.load %arg10[%c0_171, %c0_172] : memref<2x32xf32, #tpu.memory_space<vmem>>, vector<1x32xf32>
    %261 = vector.shape_cast %260 : vector<1x32xf32> to vector<32xf32>
    %cst_173 = arith.constant dense<0.000000e+00> : vector<16xf32>
    %262 = vector.multi_reduction <add>, %257, %cst_173 [1] : vector<16x32xf32> to vector<16xf32>
    %263 = vector.shape_cast %262 : vector<16xf32> to vector<16x1xf32>
    %cst_174 = arith.constant 3.200000e+01 : f32
    %264 = vector.broadcast %cst_174 : f32 to vector<16x1xf32>
    %265 = arith.divf %263, %264 : vector<16x1xf32>
    %266 = vector.broadcast %265 : vector<16x1xf32> to vector<16x32xf32>
    %267 = arith.subf %257, %266 : vector<16x32xf32>
    %268 = arith.mulf %267, %267 : vector<16x32xf32>
    %cst_175 = arith.constant dense<0.000000e+00> : vector<16xf32>
    %269 = vector.multi_reduction <add>, %268, %cst_175 [1] : vector<16x32xf32> to vector<16xf32>
    %270 = vector.shape_cast %269 : vector<16xf32> to vector<16x1xf32>
    %cst_176 = arith.constant 3.200000e+01 : f32
    %271 = vector.broadcast %cst_176 : f32 to vector<16x1xf32>
    %272 = arith.divf %270, %271 : vector<16x1xf32>
    %273 = vector.broadcast %265 : vector<16x1xf32> to vector<16x32xf32>
    %274 = arith.subf %257, %273 : vector<16x32xf32>
    %cst_177 = arith.constant 9.99999974E-6 : f32
    %275 = vector.broadcast %cst_177 : f32 to vector<16x1xf32>
    %276 = arith.addf %272, %275 : vector<16x1xf32>
    %277 = math.rsqrt %276 : vector<16x1xf32>
    %278 = vector.broadcast %277 : vector<16x1xf32> to vector<16x32xf32>
    %279 = arith.mulf %274, %278 : vector<16x32xf32>
    %280 = vector.shape_cast %259 : vector<32xf32> to vector<1x32xf32>
    %281 = vector.broadcast %280 : vector<1x32xf32> to vector<16x32xf32>
    %282 = arith.mulf %279, %281 : vector<16x32xf32>
    %283 = vector.shape_cast %261 : vector<32xf32> to vector<1x32xf32>
    %284 = vector.broadcast %283 : vector<1x32xf32> to vector<16x32xf32>
    %285 = arith.addf %282, %284 : vector<16x32xf32>
    %c0_178 = arith.constant 0 : index
    %c0_179 = arith.constant 0 : index
    %c0_180 = arith.constant 0 : index
    %286 = vector.load %arg13[%c0_178, %c0_179, %c0_180] : memref<2x32x64xf32, #tpu.memory_space<vmem>>, vector<1x32x64xf32>
    %287 = vector.shape_cast %286 : vector<1x32x64xf32> to vector<32x64xf32>
    %cst_181 = arith.constant dense<0.000000e+00> : vector<16x64xf32>
    %288 = tpu.matmul %285, %287, %cst_181 {dimension_numbers = #tpu.dot_dimension_numbers<[1], [0], [0], [1], [0, 0, 1, 1], [], []>} : vector<16x32xf32>, vector<32x64xf32>, vector<16x64xf32> -> vector<16x64xf32>
    %c0_182 = arith.constant 0 : index
    %c0_183 = arith.constant 0 : index
    %289 = vector.load %arg14[%c0_182, %c0_183] : memref<2x64xf32, #tpu.memory_space<vmem>>, vector<1x64xf32>
    %290 = vector.shape_cast %289 : vector<1x64xf32> to vector<64xf32>
    %291 = vector.shape_cast %290 : vector<64xf32> to vector<1x64xf32>
    %292 = vector.broadcast %291 : vector<1x64xf32> to vector<16x64xf32>
    %293 = arith.addf %288, %292 : vector<16x64xf32>
    %294 = arith.mulf %293, %293 : vector<16x64xf32>
    %295 = arith.mulf %293, %294 : vector<16x64xf32>
    %cst_184 = arith.constant 4.471500e-02 : f32
    %296 = vector.broadcast %cst_184 : f32 to vector<16x64xf32>
    %297 = arith.mulf %296, %295 : vector<16x64xf32>
    %298 = arith.addf %293, %297 : vector<16x64xf32>
    %cst_185 = arith.constant 0.797884583 : f32
    %299 = vector.broadcast %cst_185 : f32 to vector<16x64xf32>
    %300 = arith.mulf %299, %298 : vector<16x64xf32>
    %301 = math.tanh %300 : vector<16x64xf32>
    %cst_186 = arith.constant 1.000000e+00 : f32
    %302 = vector.broadcast %cst_186 : f32 to vector<16x64xf32>
    %303 = arith.addf %302, %301 : vector<16x64xf32>
    %cst_187 = arith.constant 5.000000e-01 : f32
    %304 = vector.broadcast %cst_187 : f32 to vector<16x64xf32>
    %305 = arith.mulf %304, %303 : vector<16x64xf32>
    %306 = arith.mulf %293, %305 : vector<16x64xf32>
    %c0_188 = arith.constant 0 : index
    %c0_189 = arith.constant 0 : index
    %c0_190 = arith.constant 0 : index
    %307 = vector.load %arg15[%c0_188, %c0_189, %c0_190] : memref<2x64x32xf32, #tpu.memory_space<vmem>>, vector<1x64x32xf32>
    %308 = vector.shape_cast %307 : vector<1x64x32xf32> to vector<64x32xf32>
    %cst_191 = arith.constant dense<0.000000e+00> : vector<16x32xf32>
    %309 = tpu.matmul %306, %308, %cst_191 {dimension_numbers = #tpu.dot_dimension_numbers<[1], [0], [0], [1], [0, 0, 1, 1], [], []>} : vector<16x64xf32>, vector<64x32xf32>, vector<16x32xf32> -> vector<16x32xf32>
    %c0_192 = arith.constant 0 : index
    %c0_193 = arith.constant 0 : index
    %310 = vector.load %arg16[%c0_192, %c0_193] : memref<2x32xf32, #tpu.memory_space<vmem>>, vector<1x32xf32>
    %311 = vector.shape_cast %310 : vector<1x32xf32> to vector<32xf32>
    %312 = vector.shape_cast %311 : vector<32xf32> to vector<1x32xf32>
    %313 = vector.broadcast %312 : vector<1x32xf32> to vector<16x32xf32>
    %314 = arith.addf %309, %313 : vector<16x32xf32>
    %315 = arith.addf %285, %314 : vector<16x32xf32>
    %c0_194 = arith.constant 0 : index
    %c0_195 = arith.constant 0 : index
    %316 = vector.load %arg11[%c0_194, %c0_195] : memref<2x32xf32, #tpu.memory_space<vmem>>, vector<1x32xf32>
    %317 = vector.shape_cast %316 : vector<1x32xf32> to vector<32xf32>
    %c0_196 = arith.constant 0 : index
    %c0_197 = arith.constant 0 : index
    %318 = vector.load %arg12[%c0_196, %c0_197] : memref<2x32xf32, #tpu.memory_space<vmem>>, vector<1x32xf32>
    %319 = vector.shape_cast %318 : vector<1x32xf32> to vector<32xf32>
    %cst_198 = arith.constant dense<0.000000e+00> : vector<16xf32>
    %320 = vector.multi_reduction <add>, %315, %cst_198 [1] : vector<16x32xf32> to vector<16xf32>
    %321 = vector.shape_cast %320 : vector<16xf32> to vector<16x1xf32>
    %cst_199 = arith.constant 3.200000e+01 : f32
    %322 = vector.broadcast %cst_199 : f32 to vector<16x1xf32>
    %323 = arith.divf %321, %322 : vector<16x1xf32>
    %324 = vector.broadcast %323 : vector<16x1xf32> to vector<16x32xf32>
    %325 = arith.subf %315, %324 : vector<16x32xf32>
    %326 = arith.mulf %325, %325 : vector<16x32xf32>
    %cst_200 = arith.constant dense<0.000000e+00> : vector<16xf32>
    %327 = vector.multi_reduction <add>, %326, %cst_200 [1] : vector<16x32xf32> to vector<16xf32>
    %328 = vector.shape_cast %327 : vector<16xf32> to vector<16x1xf32>
    %cst_201 = arith.constant 3.200000e+01 : f32
    %329 = vector.broadcast %cst_201 : f32 to vector<16x1xf32>
    %330 = arith.divf %328, %329 : vector<16x1xf32>
    %331 = vector.broadcast %323 : vector<16x1xf32> to vector<16x32xf32>
    %332 = arith.subf %315, %331 : vector<16x32xf32>
    %cst_202 = arith.constant 9.99999974E-6 : f32
    %333 = vector.broadcast %cst_202 : f32 to vector<16x1xf32>
    %334 = arith.addf %330, %333 : vector<16x1xf32>
    %335 = math.rsqrt %334 : vector<16x1xf32>
    %336 = vector.broadcast %335 : vector<16x1xf32> to vector<16x32xf32>
    %337 = arith.mulf %332, %336 : vector<16x32xf32>
    %338 = vector.shape_cast %317 : vector<32xf32> to vector<1x32xf32>
    %339 = vector.broadcast %338 : vector<1x32xf32> to vector<16x32xf32>
    %340 = arith.mulf %337, %339 : vector<16x32xf32>
    %341 = vector.shape_cast %319 : vector<32xf32> to vector<1x32xf32>
    %342 = vector.broadcast %341 : vector<1x32xf32> to vector<16x32xf32>
    %343 = arith.addf %340, %342 : vector<16x32xf32>
    %c1_203 = arith.constant 1 : index
    %c0_204 = arith.constant 0 : index
    %c0_205 = arith.constant 0 : index
    %c0_206 = arith.constant 0 : index
    %344 = vector.load %arg1[%c1_203, %c0_204, %c0_205, %c0_206] : memref<2x4x32x8xf32, #tpu.memory_space<vmem>>, vector<1x1x32x8xf32>
    %345 = vector.shape_cast %344 : vector<1x1x32x8xf32> to vector<32x8xf32>
    %cst_207 = arith.constant dense<0.000000e+00> : vector<16x8xf32>
    %346 = tpu.matmul %343, %345, %cst_207 {dimension_numbers = #tpu.dot_dimension_numbers<[1], [0], [0], [1], [0, 0, 1, 1], [], []>} : vector<16x32xf32>, vector<32x8xf32>, vector<16x8xf32> -> vector<16x8xf32>
    %c1_208 = arith.constant 1 : index
    %c0_209 = arith.constant 0 : index
    %c0_210 = arith.constant 0 : index
    %347 = vector.load %arg4[%c1_208, %c0_209, %c0_210] : memref<2x4x8xf32, #tpu.memory_space<vmem>>, vector<1x1x8xf32>
    %348 = vector.shape_cast %347 : vector<1x1x8xf32> to vector<8xf32>
    %349 = vector.shape_cast %348 : vector<8xf32> to vector<1x8xf32>
    %350 = vector.broadcast %349 : vector<1x8xf32> to vector<16x8xf32>
    %351 = arith.addf %346, %350 : vector<16x8xf32>
    %c1_211 = arith.constant 1 : index
    %c0_212 = arith.constant 0 : index
    %c0_213 = arith.constant 0 : index
    %c0_214 = arith.constant 0 : index
    %352 = vector.load %arg2[%c1_211, %c0_212, %c0_213, %c0_214] : memref<2x4x32x8xf32, #tpu.memory_space<vmem>>, vector<1x1x32x8xf32>
    %353 = vector.shape_cast %352 : vector<1x1x32x8xf32> to vector<32x8xf32>
    %cst_215 = arith.constant dense<0.000000e+00> : vector<16x8xf32>
    %354 = tpu.matmul %343, %353, %cst_215 {dimension_numbers = #tpu.dot_dimension_numbers<[1], [0], [0], [1], [0, 0, 1, 1], [], []>} : vector<16x32xf32>, vector<32x8xf32>, vector<16x8xf32> -> vector<16x8xf32>
    %c1_216 = arith.constant 1 : index
    %c0_217 = arith.constant 0 : index
    %c0_218 = arith.constant 0 : index
    %355 = vector.load %arg5[%c1_216, %c0_217, %c0_218] : memref<2x4x8xf32, #tpu.memory_space<vmem>>, vector<1x1x8xf32>
    %356 = vector.shape_cast %355 : vector<1x1x8xf32> to vector<8xf32>
    %357 = vector.shape_cast %356 : vector<8xf32> to vector<1x8xf32>
    %358 = vector.broadcast %357 : vector<1x8xf32> to vector<16x8xf32>
    %359 = arith.addf %354, %358 : vector<16x8xf32>
    %c1_219 = arith.constant 1 : index
    %c0_220 = arith.constant 0 : index
    %c0_221 = arith.constant 0 : index
    %c0_222 = arith.constant 0 : index
    %360 = vector.load %arg3[%c1_219, %c0_220, %c0_221, %c0_222] : memref<2x4x32x8xf32, #tpu.memory_space<vmem>>, vector<1x1x32x8xf32>
    %361 = vector.shape_cast %360 : vector<1x1x32x8xf32> to vector<32x8xf32>
    %cst_223 = arith.constant dense<0.000000e+00> : vector<16x8xf32>
    %362 = tpu.matmul %343, %361, %cst_223 {dimension_numbers = #tpu.dot_dimension_numbers<[1], [0], [0], [1], [0, 0, 1, 1], [], []>} : vector<16x32xf32>, vector<32x8xf32>, vector<16x8xf32> -> vector<16x8xf32>
    %c1_224 = arith.constant 1 : index
    %c0_225 = arith.constant 0 : index
    %c0_226 = arith.constant 0 : index
    %363 = vector.load %arg6[%c1_224, %c0_225, %c0_226] : memref<2x4x8xf32, #tpu.memory_space<vmem>>, vector<1x1x8xf32>
    %364 = vector.shape_cast %363 : vector<1x1x8xf32> to vector<8xf32>
    %365 = vector.shape_cast %364 : vector<8xf32> to vector<1x8xf32>
    %366 = vector.broadcast %365 : vector<1x8xf32> to vector<16x8xf32>
    %367 = arith.addf %362, %366 : vector<16x8xf32>
    %c1_227 = arith.constant 1 : index
    %c1_228 = arith.constant 1 : index
    %c0_229 = arith.constant 0 : index
    %c0_230 = arith.constant 0 : index
    %368 = vector.load %arg1[%c1_227, %c1_228, %c0_229, %c0_230] : memref<2x4x32x8xf32, #tpu.memory_space<vmem>>, vector<1x1x32x8xf32>
    %369 = vector.shape_cast %368 : vector<1x1x32x8xf32> to vector<32x8xf32>
    %cst_231 = arith.constant dense<0.000000e+00> : vector<16x8xf32>
    %370 = tpu.matmul %343, %369, %cst_231 {dimension_numbers = #tpu.dot_dimension_numbers<[1], [0], [0], [1], [0, 0, 1, 1], [], []>} : vector<16x32xf32>, vector<32x8xf32>, vector<16x8xf32> -> vector<16x8xf32>
    %c1_232 = arith.constant 1 : index
    %c1_233 = arith.constant 1 : index
    %c0_234 = arith.constant 0 : index
    %371 = vector.load %arg4[%c1_232, %c1_233, %c0_234] : memref<2x4x8xf32, #tpu.memory_space<vmem>>, vector<1x1x8xf32>
    %372 = vector.shape_cast %371 : vector<1x1x8xf32> to vector<8xf32>
    %373 = vector.shape_cast %372 : vector<8xf32> to vector<1x8xf32>
    %374 = vector.broadcast %373 : vector<1x8xf32> to vector<16x8xf32>
    %375 = arith.addf %370, %374 : vector<16x8xf32>
    %c1_235 = arith.constant 1 : index
    %c1_236 = arith.constant 1 : index
    %c0_237 = arith.constant 0 : index
    %c0_238 = arith.constant 0 : index
    %376 = vector.load %arg2[%c1_235, %c1_236, %c0_237, %c0_238] : memref<2x4x32x8xf32, #tpu.memory_space<vmem>>, vector<1x1x32x8xf32>
    %377 = vector.shape_cast %376 : vector<1x1x32x8xf32> to vector<32x8xf32>
    %cst_239 = arith.constant dense<0.000000e+00> : vector<16x8xf32>
    %378 = tpu.matmul %343, %377, %cst_239 {dimension_numbers = #tpu.dot_dimension_numbers<[1], [0], [0], [1], [0, 0, 1, 1], [], []>} : vector<16x32xf32>, vector<32x8xf32>, vector<16x8xf32> -> vector<16x8xf32>
    %c1_240 = arith.constant 1 : index
    %c1_241 = arith.constant 1 : index
    %c0_242 = arith.constant 0 : index
    %379 = vector.load %arg5[%c1_240, %c1_241, %c0_242] : memref<2x4x8xf32, #tpu.memory_space<vmem>>, vector<1x1x8xf32>
    %380 = vector.shape_cast %379 : vector<1x1x8xf32> to vector<8xf32>
    %381 = vector.shape_cast %380 : vector<8xf32> to vector<1x8xf32>
    %382 = vector.broadcast %381 : vector<1x8xf32> to vector<16x8xf32>
    %383 = arith.addf %378, %382 : vector<16x8xf32>
    %c1_243 = arith.constant 1 : index
    %c1_244 = arith.constant 1 : index
    %c0_245 = arith.constant 0 : index
    %c0_246 = arith.constant 0 : index
    %384 = vector.load %arg3[%c1_243, %c1_244, %c0_245, %c0_246] : memref<2x4x32x8xf32, #tpu.memory_space<vmem>>, vector<1x1x32x8xf32>
    %385 = vector.shape_cast %384 : vector<1x1x32x8xf32> to vector<32x8xf32>
    %cst_247 = arith.constant dense<0.000000e+00> : vector<16x8xf32>
    %386 = tpu.matmul %343, %385, %cst_247 {dimension_numbers = #tpu.dot_dimension_numbers<[1], [0], [0], [1], [0, 0, 1, 1], [], []>} : vector<16x32xf32>, vector<32x8xf32>, vector<16x8xf32> -> vector<16x8xf32>
    %c1_248 = arith.constant 1 : index
    %c1_249 = arith.constant 1 : index
    %c0_250 = arith.constant 0 : index
    %387 = vector.load %arg6[%c1_248, %c1_249, %c0_250] : memref<2x4x8xf32, #tpu.memory_space<vmem>>, vector<1x1x8xf32>
    %388 = vector.shape_cast %387 : vector<1x1x8xf32> to vector<8xf32>
    %389 = vector.shape_cast %388 : vector<8xf32> to vector<1x8xf32>
    %390 = vector.broadcast %389 : vector<1x8xf32> to vector<16x8xf32>
    %391 = arith.addf %386, %390 : vector<16x8xf32>
    %c1_251 = arith.constant 1 : index
    %c2_252 = arith.constant 2 : index
    %c0_253 = arith.constant 0 : index
    %c0_254 = arith.constant 0 : index
    %392 = vector.load %arg1[%c1_251, %c2_252, %c0_253, %c0_254] : memref<2x4x32x8xf32, #tpu.memory_space<vmem>>, vector<1x1x32x8xf32>
    %393 = vector.shape_cast %392 : vector<1x1x32x8xf32> to vector<32x8xf32>
    %cst_255 = arith.constant dense<0.000000e+00> : vector<16x8xf32>
    %394 = tpu.matmul %343, %393, %cst_255 {dimension_numbers = #tpu.dot_dimension_numbers<[1], [0], [0], [1], [0, 0, 1, 1], [], []>} : vector<16x32xf32>, vector<32x8xf32>, vector<16x8xf32> -> vector<16x8xf32>
    %c1_256 = arith.constant 1 : index
    %c2_257 = arith.constant 2 : index
    %c0_258 = arith.constant 0 : index
    %395 = vector.load %arg4[%c1_256, %c2_257, %c0_258] : memref<2x4x8xf32, #tpu.memory_space<vmem>>, vector<1x1x8xf32>
    %396 = vector.shape_cast %395 : vector<1x1x8xf32> to vector<8xf32>
    %397 = vector.shape_cast %396 : vector<8xf32> to vector<1x8xf32>
    %398 = vector.broadcast %397 : vector<1x8xf32> to vector<16x8xf32>
    %399 = arith.addf %394, %398 : vector<16x8xf32>
    %c1_259 = arith.constant 1 : index
    %c2_260 = arith.constant 2 : index
    %c0_261 = arith.constant 0 : index
    %c0_262 = arith.constant 0 : index
    %400 = vector.load %arg2[%c1_259, %c2_260, %c0_261, %c0_262] : memref<2x4x32x8xf32, #tpu.memory_space<vmem>>, vector<1x1x32x8xf32>
    %401 = vector.shape_cast %400 : vector<1x1x32x8xf32> to vector<32x8xf32>
    %cst_263 = arith.constant dense<0.000000e+00> : vector<16x8xf32>
    %402 = tpu.matmul %343, %401, %cst_263 {dimension_numbers = #tpu.dot_dimension_numbers<[1], [0], [0], [1], [0, 0, 1, 1], [], []>} : vector<16x32xf32>, vector<32x8xf32>, vector<16x8xf32> -> vector<16x8xf32>
    %c1_264 = arith.constant 1 : index
    %c2_265 = arith.constant 2 : index
    %c0_266 = arith.constant 0 : index
    %403 = vector.load %arg5[%c1_264, %c2_265, %c0_266] : memref<2x4x8xf32, #tpu.memory_space<vmem>>, vector<1x1x8xf32>
    %404 = vector.shape_cast %403 : vector<1x1x8xf32> to vector<8xf32>
    %405 = vector.shape_cast %404 : vector<8xf32> to vector<1x8xf32>
    %406 = vector.broadcast %405 : vector<1x8xf32> to vector<16x8xf32>
    %407 = arith.addf %402, %406 : vector<16x8xf32>
    %c1_267 = arith.constant 1 : index
    %c2_268 = arith.constant 2 : index
    %c0_269 = arith.constant 0 : index
    %c0_270 = arith.constant 0 : index
    %408 = vector.load %arg3[%c1_267, %c2_268, %c0_269, %c0_270] : memref<2x4x32x8xf32, #tpu.memory_space<vmem>>, vector<1x1x32x8xf32>
    %409 = vector.shape_cast %408 : vector<1x1x32x8xf32> to vector<32x8xf32>
    %cst_271 = arith.constant dense<0.000000e+00> : vector<16x8xf32>
    %410 = tpu.matmul %343, %409, %cst_271 {dimension_numbers = #tpu.dot_dimension_numbers<[1], [0], [0], [1], [0, 0, 1, 1], [], []>} : vector<16x32xf32>, vector<32x8xf32>, vector<16x8xf32> -> vector<16x8xf32>
    %c1_272 = arith.constant 1 : index
    %c2_273 = arith.constant 2 : index
    %c0_274 = arith.constant 0 : index
    %411 = vector.load %arg6[%c1_272, %c2_273, %c0_274] : memref<2x4x8xf32, #tpu.memory_space<vmem>>, vector<1x1x8xf32>
    %412 = vector.shape_cast %411 : vector<1x1x8xf32> to vector<8xf32>
    %413 = vector.shape_cast %412 : vector<8xf32> to vector<1x8xf32>
    %414 = vector.broadcast %413 : vector<1x8xf32> to vector<16x8xf32>
    %415 = arith.addf %410, %414 : vector<16x8xf32>
    %c1_275 = arith.constant 1 : index
    %c3_276 = arith.constant 3 : index
    %c0_277 = arith.constant 0 : index
    %c0_278 = arith.constant 0 : index
    %416 = vector.load %arg1[%c1_275, %c3_276, %c0_277, %c0_278] : memref<2x4x32x8xf32, #tpu.memory_space<vmem>>, vector<1x1x32x8xf32>
    %417 = vector.shape_cast %416 : vector<1x1x32x8xf32> to vector<32x8xf32>
    %cst_279 = arith.constant dense<0.000000e+00> : vector<16x8xf32>
    %418 = tpu.matmul %343, %417, %cst_279 {dimension_numbers = #tpu.dot_dimension_numbers<[1], [0], [0], [1], [0, 0, 1, 1], [], []>} : vector<16x32xf32>, vector<32x8xf32>, vector<16x8xf32> -> vector<16x8xf32>
    %c1_280 = arith.constant 1 : index
    %c3_281 = arith.constant 3 : index
    %c0_282 = arith.constant 0 : index
    %419 = vector.load %arg4[%c1_280, %c3_281, %c0_282] : memref<2x4x8xf32, #tpu.memory_space<vmem>>, vector<1x1x8xf32>
    %420 = vector.shape_cast %419 : vector<1x1x8xf32> to vector<8xf32>
    %421 = vector.shape_cast %420 : vector<8xf32> to vector<1x8xf32>
    %422 = vector.broadcast %421 : vector<1x8xf32> to vector<16x8xf32>
    %423 = arith.addf %418, %422 : vector<16x8xf32>
    %c1_283 = arith.constant 1 : index
    %c3_284 = arith.constant 3 : index
    %c0_285 = arith.constant 0 : index
    %c0_286 = arith.constant 0 : index
    %424 = vector.load %arg2[%c1_283, %c3_284, %c0_285, %c0_286] : memref<2x4x32x8xf32, #tpu.memory_space<vmem>>, vector<1x1x32x8xf32>
    %425 = vector.shape_cast %424 : vector<1x1x32x8xf32> to vector<32x8xf32>
    %cst_287 = arith.constant dense<0.000000e+00> : vector<16x8xf32>
    %426 = tpu.matmul %343, %425, %cst_287 {dimension_numbers = #tpu.dot_dimension_numbers<[1], [0], [0], [1], [0, 0, 1, 1], [], []>} : vector<16x32xf32>, vector<32x8xf32>, vector<16x8xf32> -> vector<16x8xf32>
    %c1_288 = arith.constant 1 : index
    %c3_289 = arith.constant 3 : index
    %c0_290 = arith.constant 0 : index
    %427 = vector.load %arg5[%c1_288, %c3_289, %c0_290] : memref<2x4x8xf32, #tpu.memory_space<vmem>>, vector<1x1x8xf32>
    %428 = vector.shape_cast %427 : vector<1x1x8xf32> to vector<8xf32>
    %429 = vector.shape_cast %428 : vector<8xf32> to vector<1x8xf32>
    %430 = vector.broadcast %429 : vector<1x8xf32> to vector<16x8xf32>
    %431 = arith.addf %426, %430 : vector<16x8xf32>
    %c1_291 = arith.constant 1 : index
    %c3_292 = arith.constant 3 : index
    %c0_293 = arith.constant 0 : index
    %c0_294 = arith.constant 0 : index
    %432 = vector.load %arg3[%c1_291, %c3_292, %c0_293, %c0_294] : memref<2x4x32x8xf32, #tpu.memory_space<vmem>>, vector<1x1x32x8xf32>
    %433 = vector.shape_cast %432 : vector<1x1x32x8xf32> to vector<32x8xf32>
    %cst_295 = arith.constant dense<0.000000e+00> : vector<16x8xf32>
    %434 = tpu.matmul %343, %433, %cst_295 {dimension_numbers = #tpu.dot_dimension_numbers<[1], [0], [0], [1], [0, 0, 1, 1], [], []>} : vector<16x32xf32>, vector<32x8xf32>, vector<16x8xf32> -> vector<16x8xf32>
    %c1_296 = arith.constant 1 : index
    %c3_297 = arith.constant 3 : index
    %c0_298 = arith.constant 0 : index
    %435 = vector.load %arg6[%c1_296, %c3_297, %c0_298] : memref<2x4x8xf32, #tpu.memory_space<vmem>>, vector<1x1x8xf32>
    %436 = vector.shape_cast %435 : vector<1x1x8xf32> to vector<8xf32>
    %437 = vector.shape_cast %436 : vector<8xf32> to vector<1x8xf32>
    %438 = vector.broadcast %437 : vector<1x8xf32> to vector<16x8xf32>
    %439 = arith.addf %434, %438 : vector<16x8xf32>
    %cst_299 = arith.constant 0.000000e+00 : f32
    %440 = vector.broadcast %cst_299 : f32 to vector<8x32xf32>
    %441 = vector.extract_strided_slice %351 {offsets = [0, 0], sizes = [8, 8], strides = [1, 1]} : vector<16x8xf32> to vector<8x8xf32>
    %442 = vector.extract_strided_slice %359 {offsets = [0, 0], sizes = [8, 8], strides = [1, 1]} : vector<16x8xf32> to vector<8x8xf32>
    %443 = vector.extract_strided_slice %367 {offsets = [0, 0], sizes = [8, 8], strides = [1, 1]} : vector<16x8xf32> to vector<8x8xf32>
    %cst_300 = arith.constant dense<0.000000e+00> : vector<8x8xf32>
    %444 = tpu.matmul %441, %442, %cst_300 {dimension_numbers = #tpu.dot_dimension_numbers<[1], [1], [0], [0], [0, 0, 1, 0], [], []>} : vector<8x8xf32>, vector<8x8xf32>, vector<8x8xf32> -> vector<8x8xf32>
    %cst_301 = arith.constant dense<0xFF800000> : vector<8xf32>
    %445 = vector.multi_reduction <maximumf>, %444, %cst_301 [1] : vector<8x8xf32> to vector<8xf32>
    %446 = vector.shape_cast %445 : vector<8xf32> to vector<8x1xf32>
    %447 = vector.broadcast %446 : vector<8x1xf32> to vector<8x8xf32>
    %448 = arith.subf %444, %447 : vector<8x8xf32>
    %449 = math.exp %448 : vector<8x8xf32>
    %cst_302 = arith.constant dense<0.000000e+00> : vector<8xf32>
    %450 = vector.multi_reduction <add>, %449, %cst_302 [1] : vector<8x8xf32> to vector<8xf32>
    %451 = vector.shape_cast %450 : vector<8xf32> to vector<8x1xf32>
    %452 = tpu.reciprocal %451 {approx = true} : vector<8x1xf32> -> vector<8x1xf32>
    %453 = vector.broadcast %452 : vector<8x1xf32> to vector<8x8xf32>
    %454 = arith.mulf %449, %453 : vector<8x8xf32>
    %cst_303 = arith.constant dense<0.000000e+00> : vector<8x8xf32>
    %455 = tpu.matmul %454, %443, %cst_303 {dimension_numbers = #tpu.dot_dimension_numbers<[1], [0], [0], [1], [0, 0, 1, 1], [], []>} : vector<8x8xf32>, vector<8x8xf32>, vector<8x8xf32> -> vector<8x8xf32>
    %c1_304 = arith.constant 1 : index
    %c0_305 = arith.constant 0 : index
    %c0_306 = arith.constant 0 : index
    %c0_307 = arith.constant 0 : index
    %456 = vector.load %arg7[%c1_304, %c0_305, %c0_306, %c0_307] : memref<2x4x8x32xf32, #tpu.memory_space<vmem>>, vector<1x1x8x32xf32>
    %457 = vector.shape_cast %456 : vector<1x1x8x32xf32> to vector<8x32xf32>
    %cst_308 = arith.constant dense<0.000000e+00> : vector<8x32xf32>
    %458 = tpu.matmul %455, %457, %cst_308 {dimension_numbers = #tpu.dot_dimension_numbers<[1], [0], [0], [1], [0, 0, 1, 1], [], []>} : vector<8x8xf32>, vector<8x32xf32>, vector<8x32xf32> -> vector<8x32xf32>
    %459 = arith.addf %440, %458 : vector<8x32xf32>
    %460 = vector.extract_strided_slice %375 {offsets = [0, 0], sizes = [8, 8], strides = [1, 1]} : vector<16x8xf32> to vector<8x8xf32>
    %461 = vector.extract_strided_slice %383 {offsets = [0, 0], sizes = [8, 8], strides = [1, 1]} : vector<16x8xf32> to vector<8x8xf32>
    %462 = vector.extract_strided_slice %391 {offsets = [0, 0], sizes = [8, 8], strides = [1, 1]} : vector<16x8xf32> to vector<8x8xf32>
    %cst_309 = arith.constant dense<0.000000e+00> : vector<8x8xf32>
    %463 = tpu.matmul %460, %461, %cst_309 {dimension_numbers = #tpu.dot_dimension_numbers<[1], [1], [0], [0], [0, 0, 1, 0], [], []>} : vector<8x8xf32>, vector<8x8xf32>, vector<8x8xf32> -> vector<8x8xf32>
    %cst_310 = arith.constant dense<0xFF800000> : vector<8xf32>
    %464 = vector.multi_reduction <maximumf>, %463, %cst_310 [1] : vector<8x8xf32> to vector<8xf32>
    %465 = vector.shape_cast %464 : vector<8xf32> to vector<8x1xf32>
    %466 = vector.broadcast %465 : vector<8x1xf32> to vector<8x8xf32>
    %467 = arith.subf %463, %466 : vector<8x8xf32>
    %468 = math.exp %467 : vector<8x8xf32>
    %cst_311 = arith.constant dense<0.000000e+00> : vector<8xf32>
    %469 = vector.multi_reduction <add>, %468, %cst_311 [1] : vector<8x8xf32> to vector<8xf32>
    %470 = vector.shape_cast %469 : vector<8xf32> to vector<8x1xf32>
    %471 = tpu.reciprocal %470 {approx = true} : vector<8x1xf32> -> vector<8x1xf32>
    %472 = vector.broadcast %471 : vector<8x1xf32> to vector<8x8xf32>
    %473 = arith.mulf %468, %472 : vector<8x8xf32>
    %cst_312 = arith.constant dense<0.000000e+00> : vector<8x8xf32>
    %474 = tpu.matmul %473, %462, %cst_312 {dimension_numbers = #tpu.dot_dimension_numbers<[1], [0], [0], [1], [0, 0, 1, 1], [], []>} : vector<8x8xf32>, vector<8x8xf32>, vector<8x8xf32> -> vector<8x8xf32>
    %c1_313 = arith.constant 1 : index
    %c1_314 = arith.constant 1 : index
    %c0_315 = arith.constant 0 : index
    %c0_316 = arith.constant 0 : index
    %475 = vector.load %arg7[%c1_313, %c1_314, %c0_315, %c0_316] : memref<2x4x8x32xf32, #tpu.memory_space<vmem>>, vector<1x1x8x32xf32>
    %476 = vector.shape_cast %475 : vector<1x1x8x32xf32> to vector<8x32xf32>
    %cst_317 = arith.constant dense<0.000000e+00> : vector<8x32xf32>
    %477 = tpu.matmul %474, %476, %cst_317 {dimension_numbers = #tpu.dot_dimension_numbers<[1], [0], [0], [1], [0, 0, 1, 1], [], []>} : vector<8x8xf32>, vector<8x32xf32>, vector<8x32xf32> -> vector<8x32xf32>
    %478 = arith.addf %459, %477 : vector<8x32xf32>
    %479 = vector.extract_strided_slice %399 {offsets = [0, 0], sizes = [8, 8], strides = [1, 1]} : vector<16x8xf32> to vector<8x8xf32>
    %480 = vector.extract_strided_slice %407 {offsets = [0, 0], sizes = [8, 8], strides = [1, 1]} : vector<16x8xf32> to vector<8x8xf32>
    %481 = vector.extract_strided_slice %415 {offsets = [0, 0], sizes = [8, 8], strides = [1, 1]} : vector<16x8xf32> to vector<8x8xf32>
    %cst_318 = arith.constant dense<0.000000e+00> : vector<8x8xf32>
    %482 = tpu.matmul %479, %480, %cst_318 {dimension_numbers = #tpu.dot_dimension_numbers<[1], [1], [0], [0], [0, 0, 1, 0], [], []>} : vector<8x8xf32>, vector<8x8xf32>, vector<8x8xf32> -> vector<8x8xf32>
    %cst_319 = arith.constant dense<0xFF800000> : vector<8xf32>
    %483 = vector.multi_reduction <maximumf>, %482, %cst_319 [1] : vector<8x8xf32> to vector<8xf32>
    %484 = vector.shape_cast %483 : vector<8xf32> to vector<8x1xf32>
    %485 = vector.broadcast %484 : vector<8x1xf32> to vector<8x8xf32>
    %486 = arith.subf %482, %485 : vector<8x8xf32>
    %487 = math.exp %486 : vector<8x8xf32>
    %cst_320 = arith.constant dense<0.000000e+00> : vector<8xf32>
    %488 = vector.multi_reduction <add>, %487, %cst_320 [1] : vector<8x8xf32> to vector<8xf32>
    %489 = vector.shape_cast %488 : vector<8xf32> to vector<8x1xf32>
    %490 = tpu.reciprocal %489 {approx = true} : vector<8x1xf32> -> vector<8x1xf32>
    %491 = vector.broadcast %490 : vector<8x1xf32> to vector<8x8xf32>
    %492 = arith.mulf %487, %491 : vector<8x8xf32>
    %cst_321 = arith.constant dense<0.000000e+00> : vector<8x8xf32>
    %493 = tpu.matmul %492, %481, %cst_321 {dimension_numbers = #tpu.dot_dimension_numbers<[1], [0], [0], [1], [0, 0, 1, 1], [], []>} : vector<8x8xf32>, vector<8x8xf32>, vector<8x8xf32> -> vector<8x8xf32>
    %c1_322 = arith.constant 1 : index
    %c2_323 = arith.constant 2 : index
    %c0_324 = arith.constant 0 : index
    %c0_325 = arith.constant 0 : index
    %494 = vector.load %arg7[%c1_322, %c2_323, %c0_324, %c0_325] : memref<2x4x8x32xf32, #tpu.memory_space<vmem>>, vector<1x1x8x32xf32>
    %495 = vector.shape_cast %494 : vector<1x1x8x32xf32> to vector<8x32xf32>
    %cst_326 = arith.constant dense<0.000000e+00> : vector<8x32xf32>
    %496 = tpu.matmul %493, %495, %cst_326 {dimension_numbers = #tpu.dot_dimension_numbers<[1], [0], [0], [1], [0, 0, 1, 1], [], []>} : vector<8x8xf32>, vector<8x32xf32>, vector<8x32xf32> -> vector<8x32xf32>
    %497 = arith.addf %478, %496 : vector<8x32xf32>
    %498 = vector.extract_strided_slice %423 {offsets = [0, 0], sizes = [8, 8], strides = [1, 1]} : vector<16x8xf32> to vector<8x8xf32>
    %499 = vector.extract_strided_slice %431 {offsets = [0, 0], sizes = [8, 8], strides = [1, 1]} : vector<16x8xf32> to vector<8x8xf32>
    %500 = vector.extract_strided_slice %439 {offsets = [0, 0], sizes = [8, 8], strides = [1, 1]} : vector<16x8xf32> to vector<8x8xf32>
    %cst_327 = arith.constant dense<0.000000e+00> : vector<8x8xf32>
    %501 = tpu.matmul %498, %499, %cst_327 {dimension_numbers = #tpu.dot_dimension_numbers<[1], [1], [0], [0], [0, 0, 1, 0], [], []>} : vector<8x8xf32>, vector<8x8xf32>, vector<8x8xf32> -> vector<8x8xf32>
    %cst_328 = arith.constant dense<0xFF800000> : vector<8xf32>
    %502 = vector.multi_reduction <maximumf>, %501, %cst_328 [1] : vector<8x8xf32> to vector<8xf32>
    %503 = vector.shape_cast %502 : vector<8xf32> to vector<8x1xf32>
    %504 = vector.broadcast %503 : vector<8x1xf32> to vector<8x8xf32>
    %505 = arith.subf %501, %504 : vector<8x8xf32>
    %506 = math.exp %505 : vector<8x8xf32>
    %cst_329 = arith.constant dense<0.000000e+00> : vector<8xf32>
    %507 = vector.multi_reduction <add>, %506, %cst_329 [1] : vector<8x8xf32> to vector<8xf32>
    %508 = vector.shape_cast %507 : vector<8xf32> to vector<8x1xf32>
    %509 = tpu.reciprocal %508 {approx = true} : vector<8x1xf32> -> vector<8x1xf32>
    %510 = vector.broadcast %509 : vector<8x1xf32> to vector<8x8xf32>
    %511 = arith.mulf %506, %510 : vector<8x8xf32>
    %cst_330 = arith.constant dense<0.000000e+00> : vector<8x8xf32>
    %512 = tpu.matmul %511, %500, %cst_330 {dimension_numbers = #tpu.dot_dimension_numbers<[1], [0], [0], [1], [0, 0, 1, 1], [], []>} : vector<8x8xf32>, vector<8x8xf32>, vector<8x8xf32> -> vector<8x8xf32>
    %c1_331 = arith.constant 1 : index
    %c3_332 = arith.constant 3 : index
    %c0_333 = arith.constant 0 : index
    %c0_334 = arith.constant 0 : index
    %513 = vector.load %arg7[%c1_331, %c3_332, %c0_333, %c0_334] : memref<2x4x8x32xf32, #tpu.memory_space<vmem>>, vector<1x1x8x32xf32>
    %514 = vector.shape_cast %513 : vector<1x1x8x32xf32> to vector<8x32xf32>
    %cst_335 = arith.constant dense<0.000000e+00> : vector<8x32xf32>
    %515 = tpu.matmul %512, %514, %cst_335 {dimension_numbers = #tpu.dot_dimension_numbers<[1], [0], [0], [1], [0, 0, 1, 1], [], []>} : vector<8x8xf32>, vector<8x32xf32>, vector<8x32xf32> -> vector<8x32xf32>
    %516 = arith.addf %497, %515 : vector<8x32xf32>
    %cst_336 = arith.constant 0.000000e+00 : f32
    %517 = vector.broadcast %cst_336 : f32 to vector<8x32xf32>
    %518 = vector.extract_strided_slice %351 {offsets = [8, 0], sizes = [8, 8], strides = [1, 1]} : vector<16x8xf32> to vector<8x8xf32>
    %519 = vector.extract_strided_slice %359 {offsets = [8, 0], sizes = [8, 8], strides = [1, 1]} : vector<16x8xf32> to vector<8x8xf32>
    %520 = vector.extract_strided_slice %367 {offsets = [8, 0], sizes = [8, 8], strides = [1, 1]} : vector<16x8xf32> to vector<8x8xf32>
    %cst_337 = arith.constant dense<0.000000e+00> : vector<8x8xf32>
    %521 = tpu.matmul %518, %519, %cst_337 {dimension_numbers = #tpu.dot_dimension_numbers<[1], [1], [0], [0], [0, 0, 1, 0], [], []>} : vector<8x8xf32>, vector<8x8xf32>, vector<8x8xf32> -> vector<8x8xf32>
    %cst_338 = arith.constant dense<0xFF800000> : vector<8xf32>
    %522 = vector.multi_reduction <maximumf>, %521, %cst_338 [1] : vector<8x8xf32> to vector<8xf32>
    %523 = vector.shape_cast %522 : vector<8xf32> to vector<8x1xf32>
    %524 = vector.broadcast %523 : vector<8x1xf32> to vector<8x8xf32>
    %525 = arith.subf %521, %524 : vector<8x8xf32>
    %526 = math.exp %525 : vector<8x8xf32>
    %cst_339 = arith.constant dense<0.000000e+00> : vector<8xf32>
    %527 = vector.multi_reduction <add>, %526, %cst_339 [1] : vector<8x8xf32> to vector<8xf32>
    %528 = vector.shape_cast %527 : vector<8xf32> to vector<8x1xf32>
    %529 = tpu.reciprocal %528 {approx = true} : vector<8x1xf32> -> vector<8x1xf32>
    %530 = vector.broadcast %529 : vector<8x1xf32> to vector<8x8xf32>
    %531 = arith.mulf %526, %530 : vector<8x8xf32>
    %cst_340 = arith.constant dense<0.000000e+00> : vector<8x8xf32>
    %532 = tpu.matmul %531, %520, %cst_340 {dimension_numbers = #tpu.dot_dimension_numbers<[1], [0], [0], [1], [0, 0, 1, 1], [], []>} : vector<8x8xf32>, vector<8x8xf32>, vector<8x8xf32> -> vector<8x8xf32>
    %c1_341 = arith.constant 1 : index
    %c0_342 = arith.constant 0 : index
    %c0_343 = arith.constant 0 : index
    %c0_344 = arith.constant 0 : index
    %533 = vector.load %arg7[%c1_341, %c0_342, %c0_343, %c0_344] : memref<2x4x8x32xf32, #tpu.memory_space<vmem>>, vector<1x1x8x32xf32>
    %534 = vector.shape_cast %533 : vector<1x1x8x32xf32> to vector<8x32xf32>
    %cst_345 = arith.constant dense<0.000000e+00> : vector<8x32xf32>
    %535 = tpu.matmul %532, %534, %cst_345 {dimension_numbers = #tpu.dot_dimension_numbers<[1], [0], [0], [1], [0, 0, 1, 1], [], []>} : vector<8x8xf32>, vector<8x32xf32>, vector<8x32xf32> -> vector<8x32xf32>
    %536 = arith.addf %517, %535 : vector<8x32xf32>
    %537 = vector.extract_strided_slice %375 {offsets = [8, 0], sizes = [8, 8], strides = [1, 1]} : vector<16x8xf32> to vector<8x8xf32>
    %538 = vector.extract_strided_slice %383 {offsets = [8, 0], sizes = [8, 8], strides = [1, 1]} : vector<16x8xf32> to vector<8x8xf32>
    %539 = vector.extract_strided_slice %391 {offsets = [8, 0], sizes = [8, 8], strides = [1, 1]} : vector<16x8xf32> to vector<8x8xf32>
    %cst_346 = arith.constant dense<0.000000e+00> : vector<8x8xf32>
    %540 = tpu.matmul %537, %538, %cst_346 {dimension_numbers = #tpu.dot_dimension_numbers<[1], [1], [0], [0], [0, 0, 1, 0], [], []>} : vector<8x8xf32>, vector<8x8xf32>, vector<8x8xf32> -> vector<8x8xf32>
    %cst_347 = arith.constant dense<0xFF800000> : vector<8xf32>
    %541 = vector.multi_reduction <maximumf>, %540, %cst_347 [1] : vector<8x8xf32> to vector<8xf32>
    %542 = vector.shape_cast %541 : vector<8xf32> to vector<8x1xf32>
    %543 = vector.broadcast %542 : vector<8x1xf32> to vector<8x8xf32>
    %544 = arith.subf %540, %543 : vector<8x8xf32>
    %545 = math.exp %544 : vector<8x8xf32>
    %cst_348 = arith.constant dense<0.000000e+00> : vector<8xf32>
    %546 = vector.multi_reduction <add>, %545, %cst_348 [1] : vector<8x8xf32> to vector<8xf32>
    %547 = vector.shape_cast %546 : vector<8xf32> to vector<8x1xf32>
    %548 = tpu.reciprocal %547 {approx = true} : vector<8x1xf32> -> vector<8x1xf32>
    %549 = vector.broadcast %548 : vector<8x1xf32> to vector<8x8xf32>
    %550 = arith.mulf %545, %549 : vector<8x8xf32>
    %cst_349 = arith.constant dense<0.000000e+00> : vector<8x8xf32>
    %551 = tpu.matmul %550, %539, %cst_349 {dimension_numbers = #tpu.dot_dimension_numbers<[1], [0], [0], [1], [0, 0, 1, 1], [], []>} : vector<8x8xf32>, vector<8x8xf32>, vector<8x8xf32> -> vector<8x8xf32>
    %c1_350 = arith.constant 1 : index
    %c1_351 = arith.constant 1 : index
    %c0_352 = arith.constant 0 : index
    %c0_353 = arith.constant 0 : index
    %552 = vector.load %arg7[%c1_350, %c1_351, %c0_352, %c0_353] : memref<2x4x8x32xf32, #tpu.memory_space<vmem>>, vector<1x1x8x32xf32>
    %553 = vector.shape_cast %552 : vector<1x1x8x32xf32> to vector<8x32xf32>
    %cst_354 = arith.constant dense<0.000000e+00> : vector<8x32xf32>
    %554 = tpu.matmul %551, %553, %cst_354 {dimension_numbers = #tpu.dot_dimension_numbers<[1], [0], [0], [1], [0, 0, 1, 1], [], []>} : vector<8x8xf32>, vector<8x32xf32>, vector<8x32xf32> -> vector<8x32xf32>
    %555 = arith.addf %536, %554 : vector<8x32xf32>
    %556 = vector.extract_strided_slice %399 {offsets = [8, 0], sizes = [8, 8], strides = [1, 1]} : vector<16x8xf32> to vector<8x8xf32>
    %557 = vector.extract_strided_slice %407 {offsets = [8, 0], sizes = [8, 8], strides = [1, 1]} : vector<16x8xf32> to vector<8x8xf32>
    %558 = vector.extract_strided_slice %415 {offsets = [8, 0], sizes = [8, 8], strides = [1, 1]} : vector<16x8xf32> to vector<8x8xf32>
    %cst_355 = arith.constant dense<0.000000e+00> : vector<8x8xf32>
    %559 = tpu.matmul %556, %557, %cst_355 {dimension_numbers = #tpu.dot_dimension_numbers<[1], [1], [0], [0], [0, 0, 1, 0], [], []>} : vector<8x8xf32>, vector<8x8xf32>, vector<8x8xf32> -> vector<8x8xf32>
    %cst_356 = arith.constant dense<0xFF800000> : vector<8xf32>
    %560 = vector.multi_reduction <maximumf>, %559, %cst_356 [1] : vector<8x8xf32> to vector<8xf32>
    %561 = vector.shape_cast %560 : vector<8xf32> to vector<8x1xf32>
    %562 = vector.broadcast %561 : vector<8x1xf32> to vector<8x8xf32>
    %563 = arith.subf %559, %562 : vector<8x8xf32>
    %564 = math.exp %563 : vector<8x8xf32>
    %cst_357 = arith.constant dense<0.000000e+00> : vector<8xf32>
    %565 = vector.multi_reduction <add>, %564, %cst_357 [1] : vector<8x8xf32> to vector<8xf32>
    %566 = vector.shape_cast %565 : vector<8xf32> to vector<8x1xf32>
    %567 = tpu.reciprocal %566 {approx = true} : vector<8x1xf32> -> vector<8x1xf32>
    %568 = vector.broadcast %567 : vector<8x1xf32> to vector<8x8xf32>
    %569 = arith.mulf %564, %568 : vector<8x8xf32>
    %cst_358 = arith.constant dense<0.000000e+00> : vector<8x8xf32>
    %570 = tpu.matmul %569, %558, %cst_358 {dimension_numbers = #tpu.dot_dimension_numbers<[1], [0], [0], [1], [0, 0, 1, 1], [], []>} : vector<8x8xf32>, vector<8x8xf32>, vector<8x8xf32> -> vector<8x8xf32>
    %c1_359 = arith.constant 1 : index
    %c2_360 = arith.constant 2 : index
    %c0_361 = arith.constant 0 : index
    %c0_362 = arith.constant 0 : index
    %571 = vector.load %arg7[%c1_359, %c2_360, %c0_361, %c0_362] : memref<2x4x8x32xf32, #tpu.memory_space<vmem>>, vector<1x1x8x32xf32>
    %572 = vector.shape_cast %571 : vector<1x1x8x32xf32> to vector<8x32xf32>
    %cst_363 = arith.constant dense<0.000000e+00> : vector<8x32xf32>
    %573 = tpu.matmul %570, %572, %cst_363 {dimension_numbers = #tpu.dot_dimension_numbers<[1], [0], [0], [1], [0, 0, 1, 1], [], []>} : vector<8x8xf32>, vector<8x32xf32>, vector<8x32xf32> -> vector<8x32xf32>
    %574 = arith.addf %555, %573 : vector<8x32xf32>
    %575 = vector.extract_strided_slice %423 {offsets = [8, 0], sizes = [8, 8], strides = [1, 1]} : vector<16x8xf32> to vector<8x8xf32>
    %576 = vector.extract_strided_slice %431 {offsets = [8, 0], sizes = [8, 8], strides = [1, 1]} : vector<16x8xf32> to vector<8x8xf32>
    %577 = vector.extract_strided_slice %439 {offsets = [8, 0], sizes = [8, 8], strides = [1, 1]} : vector<16x8xf32> to vector<8x8xf32>
    %cst_364 = arith.constant dense<0.000000e+00> : vector<8x8xf32>
    %578 = tpu.matmul %575, %576, %cst_364 {dimension_numbers = #tpu.dot_dimension_numbers<[1], [1], [0], [0], [0, 0, 1, 0], [], []>} : vector<8x8xf32>, vector<8x8xf32>, vector<8x8xf32> -> vector<8x8xf32>
    %cst_365 = arith.constant dense<0xFF800000> : vector<8xf32>
    %579 = vector.multi_reduction <maximumf>, %578, %cst_365 [1] : vector<8x8xf32> to vector<8xf32>
    %580 = vector.shape_cast %579 : vector<8xf32> to vector<8x1xf32>
    %581 = vector.broadcast %580 : vector<8x1xf32> to vector<8x8xf32>
    %582 = arith.subf %578, %581 : vector<8x8xf32>
    %583 = math.exp %582 : vector<8x8xf32>
    %cst_366 = arith.constant dense<0.000000e+00> : vector<8xf32>
    %584 = vector.multi_reduction <add>, %583, %cst_366 [1] : vector<8x8xf32> to vector<8xf32>
    %585 = vector.shape_cast %584 : vector<8xf32> to vector<8x1xf32>
    %586 = tpu.reciprocal %585 {approx = true} : vector<8x1xf32> -> vector<8x1xf32>
    %587 = vector.broadcast %586 : vector<8x1xf32> to vector<8x8xf32>
    %588 = arith.mulf %583, %587 : vector<8x8xf32>
    %cst_367 = arith.constant dense<0.000000e+00> : vector<8x8xf32>
    %589 = tpu.matmul %588, %577, %cst_367 {dimension_numbers = #tpu.dot_dimension_numbers<[1], [0], [0], [1], [0, 0, 1, 1], [], []>} : vector<8x8xf32>, vector<8x8xf32>, vector<8x8xf32> -> vector<8x8xf32>
    %c1_368 = arith.constant 1 : index
    %c3_369 = arith.constant 3 : index
    %c0_370 = arith.constant 0 : index
    %c0_371 = arith.constant 0 : index
    %590 = vector.load %arg7[%c1_368, %c3_369, %c0_370, %c0_371] : memref<2x4x8x32xf32, #tpu.memory_space<vmem>>, vector<1x1x8x32xf32>
    %591 = vector.shape_cast %590 : vector<1x1x8x32xf32> to vector<8x32xf32>
    %cst_372 = arith.constant dense<0.000000e+00> : vector<8x32xf32>
    %592 = tpu.matmul %589, %591, %cst_372 {dimension_numbers = #tpu.dot_dimension_numbers<[1], [0], [0], [1], [0, 0, 1, 1], [], []>} : vector<8x8xf32>, vector<8x32xf32>, vector<8x32xf32> -> vector<8x32xf32>
    %593 = arith.addf %574, %592 : vector<8x32xf32>
    %594 = tpu.concatenate %516, %593 in 0 : vector<8x32xf32>, vector<8x32xf32> -> vector<16x32xf32>
    %c1_373 = arith.constant 1 : index
    %c0_374 = arith.constant 0 : index
    %595 = vector.load %arg8[%c1_373, %c0_374] : memref<2x32xf32, #tpu.memory_space<vmem>>, vector<1x32xf32>
    %596 = vector.shape_cast %595 : vector<1x32xf32> to vector<32xf32>
    %597 = vector.shape_cast %596 : vector<32xf32> to vector<1x32xf32>
    %598 = vector.broadcast %597 : vector<1x32xf32> to vector<16x32xf32>
    %599 = arith.addf %594, %598 : vector<16x32xf32>
    %600 = arith.addf %343, %599 : vector<16x32xf32>
    %c1_375 = arith.constant 1 : index
    %c0_376 = arith.constant 0 : index
    %601 = vector.load %arg9[%c1_375, %c0_376] : memref<2x32xf32, #tpu.memory_space<vmem>>, vector<1x32xf32>
    %602 = vector.shape_cast %601 : vector<1x32xf32> to vector<32xf32>
    %c1_377 = arith.constant 1 : index
    %c0_378 = arith.constant 0 : index
    %603 = vector.load %arg10[%c1_377, %c0_378] : memref<2x32xf32, #tpu.memory_space<vmem>>, vector<1x32xf32>
    %604 = vector.shape_cast %603 : vector<1x32xf32> to vector<32xf32>
    %cst_379 = arith.constant dense<0.000000e+00> : vector<16xf32>
    %605 = vector.multi_reduction <add>, %600, %cst_379 [1] : vector<16x32xf32> to vector<16xf32>
    %606 = vector.shape_cast %605 : vector<16xf32> to vector<16x1xf32>
    %cst_380 = arith.constant 3.200000e+01 : f32
    %607 = vector.broadcast %cst_380 : f32 to vector<16x1xf32>
    %608 = arith.divf %606, %607 : vector<16x1xf32>
    %609 = vector.broadcast %608 : vector<16x1xf32> to vector<16x32xf32>
    %610 = arith.subf %600, %609 : vector<16x32xf32>
    %611 = arith.mulf %610, %610 : vector<16x32xf32>
    %cst_381 = arith.constant dense<0.000000e+00> : vector<16xf32>
    %612 = vector.multi_reduction <add>, %611, %cst_381 [1] : vector<16x32xf32> to vector<16xf32>
    %613 = vector.shape_cast %612 : vector<16xf32> to vector<16x1xf32>
    %cst_382 = arith.constant 3.200000e+01 : f32
    %614 = vector.broadcast %cst_382 : f32 to vector<16x1xf32>
    %615 = arith.divf %613, %614 : vector<16x1xf32>
    %616 = vector.broadcast %608 : vector<16x1xf32> to vector<16x32xf32>
    %617 = arith.subf %600, %616 : vector<16x32xf32>
    %cst_383 = arith.constant 9.99999974E-6 : f32
    %618 = vector.broadcast %cst_383 : f32 to vector<16x1xf32>
    %619 = arith.addf %615, %618 : vector<16x1xf32>
    %620 = math.rsqrt %619 : vector<16x1xf32>
    %621 = vector.broadcast %620 : vector<16x1xf32> to vector<16x32xf32>
    %622 = arith.mulf %617, %621 : vector<16x32xf32>
    %623 = vector.shape_cast %602 : vector<32xf32> to vector<1x32xf32>
    %624 = vector.broadcast %623 : vector<1x32xf32> to vector<16x32xf32>
    %625 = arith.mulf %622, %624 : vector<16x32xf32>
    %626 = vector.shape_cast %604 : vector<32xf32> to vector<1x32xf32>
    %627 = vector.broadcast %626 : vector<1x32xf32> to vector<16x32xf32>
    %628 = arith.addf %625, %627 : vector<16x32xf32>
    %c1_384 = arith.constant 1 : index
    %c0_385 = arith.constant 0 : index
    %c0_386 = arith.constant 0 : index
    %629 = vector.load %arg13[%c1_384, %c0_385, %c0_386] : memref<2x32x64xf32, #tpu.memory_space<vmem>>, vector<1x32x64xf32>
    %630 = vector.shape_cast %629 : vector<1x32x64xf32> to vector<32x64xf32>
    %cst_387 = arith.constant dense<0.000000e+00> : vector<16x64xf32>
    %631 = tpu.matmul %628, %630, %cst_387 {dimension_numbers = #tpu.dot_dimension_numbers<[1], [0], [0], [1], [0, 0, 1, 1], [], []>} : vector<16x32xf32>, vector<32x64xf32>, vector<16x64xf32> -> vector<16x64xf32>
    %c1_388 = arith.constant 1 : index
    %c0_389 = arith.constant 0 : index
    %632 = vector.load %arg14[%c1_388, %c0_389] : memref<2x64xf32, #tpu.memory_space<vmem>>, vector<1x64xf32>
    %633 = vector.shape_cast %632 : vector<1x64xf32> to vector<64xf32>
    %634 = vector.shape_cast %633 : vector<64xf32> to vector<1x64xf32>
    %635 = vector.broadcast %634 : vector<1x64xf32> to vector<16x64xf32>
    %636 = arith.addf %631, %635 : vector<16x64xf32>
    %637 = arith.mulf %636, %636 : vector<16x64xf32>
    %638 = arith.mulf %636, %637 : vector<16x64xf32>
    %cst_390 = arith.constant 4.471500e-02 : f32
    %639 = vector.broadcast %cst_390 : f32 to vector<16x64xf32>
    %640 = arith.mulf %639, %638 : vector<16x64xf32>
    %641 = arith.addf %636, %640 : vector<16x64xf32>
    %cst_391 = arith.constant 0.797884583 : f32
    %642 = vector.broadcast %cst_391 : f32 to vector<16x64xf32>
    %643 = arith.mulf %642, %641 : vector<16x64xf32>
    %644 = math.tanh %643 : vector<16x64xf32>
    %cst_392 = arith.constant 1.000000e+00 : f32
    %645 = vector.broadcast %cst_392 : f32 to vector<16x64xf32>
    %646 = arith.addf %645, %644 : vector<16x64xf32>
    %cst_393 = arith.constant 5.000000e-01 : f32
    %647 = vector.broadcast %cst_393 : f32 to vector<16x64xf32>
    %648 = arith.mulf %647, %646 : vector<16x64xf32>
    %649 = arith.mulf %636, %648 : vector<16x64xf32>
    %c1_394 = arith.constant 1 : index
    %c0_395 = arith.constant 0 : index
    %c0_396 = arith.constant 0 : index
    %650 = vector.load %arg15[%c1_394, %c0_395, %c0_396] : memref<2x64x32xf32, #tpu.memory_space<vmem>>, vector<1x64x32xf32>
    %651 = vector.shape_cast %650 : vector<1x64x32xf32> to vector<64x32xf32>
    %cst_397 = arith.constant dense<0.000000e+00> : vector<16x32xf32>
    %652 = tpu.matmul %649, %651, %cst_397 {dimension_numbers = #tpu.dot_dimension_numbers<[1], [0], [0], [1], [0, 0, 1, 1], [], []>} : vector<16x64xf32>, vector<64x32xf32>, vector<16x32xf32> -> vector<16x32xf32>
    %c1_398 = arith.constant 1 : index
    %c0_399 = arith.constant 0 : index
    %653 = vector.load %arg16[%c1_398, %c0_399] : memref<2x32xf32, #tpu.memory_space<vmem>>, vector<1x32xf32>
    %654 = vector.shape_cast %653 : vector<1x32xf32> to vector<32xf32>
    %655 = vector.shape_cast %654 : vector<32xf32> to vector<1x32xf32>
    %656 = vector.broadcast %655 : vector<1x32xf32> to vector<16x32xf32>
    %657 = arith.addf %652, %656 : vector<16x32xf32>
    %658 = arith.addf %628, %657 : vector<16x32xf32>
    %c1_400 = arith.constant 1 : index
    %c0_401 = arith.constant 0 : index
    %659 = vector.load %arg11[%c1_400, %c0_401] : memref<2x32xf32, #tpu.memory_space<vmem>>, vector<1x32xf32>
    %660 = vector.shape_cast %659 : vector<1x32xf32> to vector<32xf32>
    %c1_402 = arith.constant 1 : index
    %c0_403 = arith.constant 0 : index
    %661 = vector.load %arg12[%c1_402, %c0_403] : memref<2x32xf32, #tpu.memory_space<vmem>>, vector<1x32xf32>
    %662 = vector.shape_cast %661 : vector<1x32xf32> to vector<32xf32>
    %cst_404 = arith.constant dense<0.000000e+00> : vector<16xf32>
    %663 = vector.multi_reduction <add>, %658, %cst_404 [1] : vector<16x32xf32> to vector<16xf32>
    %664 = vector.shape_cast %663 : vector<16xf32> to vector<16x1xf32>
    %cst_405 = arith.constant 3.200000e+01 : f32
    %665 = vector.broadcast %cst_405 : f32 to vector<16x1xf32>
    %666 = arith.divf %664, %665 : vector<16x1xf32>
    %667 = vector.broadcast %666 : vector<16x1xf32> to vector<16x32xf32>
    %668 = arith.subf %658, %667 : vector<16x32xf32>
    %669 = arith.mulf %668, %668 : vector<16x32xf32>
    %cst_406 = arith.constant dense<0.000000e+00> : vector<16xf32>
    %670 = vector.multi_reduction <add>, %669, %cst_406 [1] : vector<16x32xf32> to vector<16xf32>
    %671 = vector.shape_cast %670 : vector<16xf32> to vector<16x1xf32>
    %cst_407 = arith.constant 3.200000e+01 : f32
    %672 = vector.broadcast %cst_407 : f32 to vector<16x1xf32>
    %673 = arith.divf %671, %672 : vector<16x1xf32>
    %674 = vector.broadcast %666 : vector<16x1xf32> to vector<16x32xf32>
    %675 = arith.subf %658, %674 : vector<16x32xf32>
    %cst_408 = arith.constant 9.99999974E-6 : f32
    %676 = vector.broadcast %cst_408 : f32 to vector<16x1xf32>
    %677 = arith.addf %673, %676 : vector<16x1xf32>
    %678 = math.rsqrt %677 : vector<16x1xf32>
    %679 = vector.broadcast %678 : vector<16x1xf32> to vector<16x32xf32>
    %680 = arith.mulf %675, %679 : vector<16x32xf32>
    %681 = vector.shape_cast %660 : vector<32xf32> to vector<1x32xf32>
    %682 = vector.broadcast %681 : vector<1x32xf32> to vector<16x32xf32>
    %683 = arith.mulf %680, %682 : vector<16x32xf32>
    %684 = vector.shape_cast %662 : vector<32xf32> to vector<1x32xf32>
    %685 = vector.broadcast %684 : vector<1x32xf32> to vector<16x32xf32>
    %686 = arith.addf %683, %685 : vector<16x32xf32>
    %c0_409 = arith.constant 0 : index
    %c0_410 = arith.constant 0 : index
    %687 = vector.load %arg17[%c0_409, %c0_410] : memref<32x64xf32, #tpu.memory_space<vmem>>, vector<32x64xf32>
    %cst_411 = arith.constant dense<0.000000e+00> : vector<16x64xf32>
    %688 = tpu.matmul %686, %687, %cst_411 {dimension_numbers = #tpu.dot_dimension_numbers<[1], [0], [0], [1], [0, 0, 1, 1], [], []>} : vector<16x32xf32>, vector<32x64xf32>, vector<16x64xf32> -> vector<16x64xf32>
    %c0_412 = arith.constant 0 : index
    %c0_413 = arith.constant 0 : index
    %689 = vector.load %arg18[%c0_412, %c0_413] : memref<1x64xf32, #tpu.memory_space<vmem>>, vector<1x64xf32>
    %690 = vector.shape_cast %689 : vector<1x64xf32> to vector<64xf32>
    %691 = vector.shape_cast %690 : vector<64xf32> to vector<1x64xf32>
    %692 = vector.broadcast %691 : vector<1x64xf32> to vector<16x64xf32>
    %693 = arith.addf %688, %692 : vector<16x64xf32>
    %c0_414 = arith.constant 0 : index
    %c0_415 = arith.constant 0 : index
    %694 = vector.load %arg19[%c0_414, %c0_415] : memref<1x64xf32, #tpu.memory_space<vmem>>, vector<1x64xf32>
    %695 = vector.shape_cast %694 : vector<1x64xf32> to vector<64xf32>
    %c0_416 = arith.constant 0 : index
    %c0_417 = arith.constant 0 : index
    %696 = vector.load %arg20[%c0_416, %c0_417] : memref<1x64xf32, #tpu.memory_space<vmem>>, vector<1x64xf32>
    %697 = vector.shape_cast %696 : vector<1x64xf32> to vector<64xf32>
    %cst_418 = arith.constant dense<0.000000e+00> : vector<16xf32>
    %698 = vector.multi_reduction <add>, %693, %cst_418 [1] : vector<16x64xf32> to vector<16xf32>
    %699 = vector.shape_cast %698 : vector<16xf32> to vector<16x1xf32>
    %cst_419 = arith.constant 6.400000e+01 : f32
    %700 = vector.broadcast %cst_419 : f32 to vector<16x1xf32>
    %701 = arith.divf %699, %700 : vector<16x1xf32>
    %702 = vector.broadcast %701 : vector<16x1xf32> to vector<16x64xf32>
    %703 = arith.subf %693, %702 : vector<16x64xf32>
    %704 = arith.mulf %703, %703 : vector<16x64xf32>
    %cst_420 = arith.constant dense<0.000000e+00> : vector<16xf32>
    %705 = vector.multi_reduction <add>, %704, %cst_420 [1] : vector<16x64xf32> to vector<16xf32>
    %706 = vector.shape_cast %705 : vector<16xf32> to vector<16x1xf32>
    %cst_421 = arith.constant 6.400000e+01 : f32
    %707 = vector.broadcast %cst_421 : f32 to vector<16x1xf32>
    %708 = arith.divf %706, %707 : vector<16x1xf32>
    %709 = vector.broadcast %701 : vector<16x1xf32> to vector<16x64xf32>
    %710 = arith.subf %693, %709 : vector<16x64xf32>
    %cst_422 = arith.constant 9.99999974E-6 : f32
    %711 = vector.broadcast %cst_422 : f32 to vector<16x1xf32>
    %712 = arith.addf %708, %711 : vector<16x1xf32>
    %713 = math.rsqrt %712 : vector<16x1xf32>
    %714 = vector.broadcast %713 : vector<16x1xf32> to vector<16x64xf32>
    %715 = arith.mulf %710, %714 : vector<16x64xf32>
    %716 = vector.shape_cast %695 : vector<64xf32> to vector<1x64xf32>
    %717 = vector.broadcast %716 : vector<1x64xf32> to vector<16x64xf32>
    %718 = arith.mulf %715, %717 : vector<16x64xf32>
    %719 = vector.shape_cast %697 : vector<64xf32> to vector<1x64xf32>
    %720 = vector.broadcast %719 : vector<1x64xf32> to vector<16x64xf32>
    %721 = arith.addf %718, %720 : vector<16x64xf32>
    %722 = arith.mulf %721, %721 : vector<16x64xf32>
    %723 = arith.mulf %721, %722 : vector<16x64xf32>
    %cst_423 = arith.constant 4.471500e-02 : f32
    %724 = vector.broadcast %cst_423 : f32 to vector<16x64xf32>
    %725 = arith.mulf %724, %723 : vector<16x64xf32>
    %726 = arith.addf %721, %725 : vector<16x64xf32>
    %cst_424 = arith.constant 0.797884583 : f32
    %727 = vector.broadcast %cst_424 : f32 to vector<16x64xf32>
    %728 = arith.mulf %727, %726 : vector<16x64xf32>
    %729 = math.tanh %728 : vector<16x64xf32>
    %cst_425 = arith.constant 1.000000e+00 : f32
    %730 = vector.broadcast %cst_425 : f32 to vector<16x64xf32>
    %731 = arith.addf %730, %729 : vector<16x64xf32>
    %cst_426 = arith.constant 5.000000e-01 : f32
    %732 = vector.broadcast %cst_426 : f32 to vector<16x64xf32>
    %733 = arith.mulf %732, %731 : vector<16x64xf32>
    %734 = arith.mulf %721, %733 : vector<16x64xf32>
    %c0_427 = arith.constant 0 : index
    %c0_428 = arith.constant 0 : index
    %735 = vector.load %arg21[%c0_427, %c0_428] : memref<64x32xf32, #tpu.memory_space<vmem>>, vector<64x32xf32>
    %cst_429 = arith.constant dense<0.000000e+00> : vector<16x32xf32>
    %736 = tpu.matmul %734, %735, %cst_429 {dimension_numbers = #tpu.dot_dimension_numbers<[1], [0], [0], [1], [0, 0, 1, 1], [], []>} : vector<16x64xf32>, vector<64x32xf32>, vector<16x32xf32> -> vector<16x32xf32>
    %c0_430 = arith.constant 0 : index
    %c0_431 = arith.constant 0 : index
    %737 = vector.load %arg22[%c0_430, %c0_431] : memref<1x32xf32, #tpu.memory_space<vmem>>, vector<1x32xf32>
    %738 = vector.shape_cast %737 : vector<1x32xf32> to vector<32xf32>
    %739 = vector.shape_cast %738 : vector<32xf32> to vector<1x32xf32>
    %740 = vector.broadcast %739 : vector<1x32xf32> to vector<16x32xf32>
    %741 = arith.addf %736, %740 : vector<16x32xf32>
    %c0_432 = arith.constant 0 : index
    %c0_433 = arith.constant 0 : index
    %742 = vector.load %arg23[%c0_432, %c0_433] : memref<16x32xf32, #tpu.memory_space<vmem>>, vector<16x32xf32>
    tpu.vector_store %arg23[%c0_432, %c0_433], %741 {strides = array<i32>} : memref<16x32xf32, #tpu.memory_space<vmem>>, vector<16x32xf32>,
    return
  }
}

</mosaic_0001>

<llo_original>
// kernel: tpu_custom_call.1
$region0: #{tpu_custom_call.1}
  #allocation0 [shape = 'u32[]', space=smem, size = 0x4, offset = 0x4, fixed_abs, tag = 'smem constant byte address 0x4 - core index']
  #allocation1 [shape = 'u32[144,128]{1,0:T(1,128)}', space=vmem, size = 0x12000, scoped, tag = 'internal scratch']
  %s0 = inlined_call_operand.vmem [shape: f32[16,32], index: 0, kind: input, shape index: {}]
  %s1 = inlined_call_operand.vmem [shape: f32[2,4,32,8], index: 1, kind: input, shape index: {}]
  %s2 = inlined_call_operand.vmem [shape: f32[2,4,32,8], index: 2, kind: input, shape index: {}]
  %s3 = inlined_call_operand.vmem [shape: f32[2,4,32,8], index: 3, kind: input, shape index: {}]
  %s4 = inlined_call_operand.vmem [shape: f32[2,4,8], index: 4, kind: input, shape index: {}]
  %s5 = inlined_call_operand.vmem [shape: f32[2,4,8], index: 5, kind: input, shape index: {}]
  %s6 = inlined_call_operand.vmem [shape: f32[2,4,8], index: 6, kind: input, shape index: {}]
  %s7 = inlined_call_operand.vmem [shape: f32[2,4,8,32], index: 7, kind: input, shape index: {}]
  %s8 = inlined_call_operand.vmem [shape: f32[2,32], index: 8, kind: input, shape index: {}]
  %s9 = inlined_call_operand.vmem [shape: f32[2,32], index: 9, kind: input, shape index: {}]
  %s10 = inlined_call_operand.vmem [shape: f32[2,32], index: 10, kind: input, shape index: {}]
  %s11 = inlined_call_operand.vmem [shape: f32[2,32], index: 11, kind: input, shape index: {}]
  %s12 = inlined_call_operand.vmem [shape: f32[2,32], index: 12, kind: input, shape index: {}]
  %s13 = inlined_call_operand.vmem [shape: f32[2,32,64], index: 13, kind: input, shape index: {}]
  %s14 = inlined_call_operand.vmem [shape: f32[2,64], index: 14, kind: input, shape index: {}]
  %s15 = inlined_call_operand.vmem [shape: f32[2,64,32], index: 15, kind: input, shape index: {}]
  %s16 = inlined_call_operand.vmem [shape: f32[2,32], index: 16, kind: input, shape index: {}]
  %s17 = inlined_call_operand.vmem [shape: f32[32,64], index: 17, kind: input, shape index: {}]
  %s18 = inlined_call_operand.vmem [shape: f32[1,64], index: 18, kind: input, shape index: {}]
  %s19 = inlined_call_operand.vmem [shape: f32[1,64], index: 19, kind: input, shape index: {}]
  %s20 = inlined_call_operand.vmem [shape: f32[1,64], index: 20, kind: input, shape index: {}]
  %s21 = inlined_call_operand.vmem [shape: f32[64,32], index: 21, kind: input, shape index: {}]
  %s22 = inlined_call_operand.vmem [shape: f32[1,32], index: 22, kind: input, shape index: {}]
  %s23 = inlined_call_operand.hbm [shape: f32[16,32], index: 23, kind: output, shape index: {}]
  %s24 = sld [smem:[#allocation0]]
  $region102: #{tpu_custom_call.1} parent=0
    _
  %s26 = ssub.s32 1, %s24
  %s27 = scalar_select 0, %s26, %s24
  $region1: #{tpu_custom_call.1} parent=0
    #allocation2 [shape = 'u8[8192]{0}', space=vmem, size = 0x2000, scoped, tag = 'output window, operand 0, single buffered']
    #allocation3 [shape = 's32[1]{0}', space=sflag, size = 0x4, scoped, tag = 'scoped memory for tpu_custom_call.1']
    %28 = vsyncpa [#allocation3], 0
    // Predicated region
    $region2: #{tpu_custom_call.1} parent=1 // pred_check
      _
    $region3: #{tpu_custom_call.1} parent=1 // pred_check_branch
      %30 = sbr.rel (0) target = $region5
    $region4: #{tpu_custom_call.1} parent=1 // pred_region
      _
    $region5: #{tpu_custom_call.1} parent=1 // pred_fallthru
      _
    // Predicated region
    $region6: #{tpu_custom_call.1} parent=1 // pred_check
      _
    $region7: #{tpu_custom_call.1} parent=1 // pred_check_branch
      %32 = sbr.rel (0) target = $region9
    $region8: #{tpu_custom_call.1} parent=1 // pred_region
      _
    $region9: #{tpu_custom_call.1} parent=1 // pred_fallthru
      _
    // Predicated region
    $region10: #{tpu_custom_call.1} parent=1 // pred_check
      _
    $region11: #{tpu_custom_call.1} parent=1 // pred_check_branch
      %34 = sbr.rel (0) target = $region13
    $region12: #{tpu_custom_call.1} parent=1 // pred_region
      _
    $region13: #{tpu_custom_call.1} parent=1 // pred_fallthru
      _
    // Predicated region
    $region14: #{tpu_custom_call.1} parent=1 // pred_check
      _
    $region15: #{tpu_custom_call.1} parent=1 // pred_check_branch
      %36 = sbr.rel (0) target = $region17
    $region16: #{tpu_custom_call.1} parent=1 // pred_region
      _
    $region17: #{tpu_custom_call.1} parent=1 // pred_fallthru
      _
    // Predicated region
    $region18: #{tpu_custom_call.1} parent=1 // pred_check
      _
    $region19: #{tpu_custom_call.1} parent=1 // pred_check_branch
      %38 = sbr.rel (0) target = $region21
    $region20: #{tpu_custom_call.1} parent=1 // pred_region
      _
    $region21: #{tpu_custom_call.1} parent=1 // pred_fallthru
      _
    // Predicated region
    $region22: #{tpu_custom_call.1} parent=1 // pred_check
      _
    $region23: #{tpu_custom_call.1} parent=1 // pred_check_branch
      %40 = sbr.rel (0) target = $region25
    $region24: #{tpu_custom_call.1} parent=1 // pred_region
      _
    $region25: #{tpu_custom_call.1} parent=1 // pred_fallthru
      _
    // Predicated region
    $region26: #{tpu_custom_call.1} parent=1 // pred_check
      _
    $region27: #{tpu_custom_call.1} parent=1 // pred_check_branch
      %42 = sbr.rel (0) target = $region29
    $region28: #{tpu_custom_call.1} parent=1 // pred_region
      _
    $region29: #{tpu_custom_call.1} parent=1 // pred_fallthru
      _
    // Predicated region
    $region30: #{tpu_custom_call.1} parent=1 // pred_check
      _
    $region31: #{tpu_custom_call.1} parent=1 // pred_check_branch
      %44 = sbr.rel (0) target = $region33
    $region32: #{tpu_custom_call.1} parent=1 // pred_region
      _
    $region33: #{tpu_custom_call.1} parent=1 // pred_fallthru
      _
    // Predicated region
    $region34: #{tpu_custom_call.1} parent=1 // pred_check
      _
    $region35: #{tpu_custom_call.1} parent=1 // pred_check_branch
      %46 = sbr.rel (0) target = $region37
    $region36: #{tpu_custom_call.1} parent=1 // pred_region
      _
    $region37: #{tpu_custom_call.1} parent=1 // pred_fallthru
      _
    // Predicated region
    $region38: #{tpu_custom_call.1} parent=1 // pred_check
      _
    $region39: #{tpu_custom_call.1} parent=1 // pred_check_branch
      %48 = sbr.rel (0) target = $region41
    $region40: #{tpu_custom_call.1} parent=1 // pred_region
      _
    $region41: #{tpu_custom_call.1} parent=1 // pred_fallthru
      _
    // Predicated region
    $region42: #{tpu_custom_call.1} parent=1 // pred_check
      _
    $region43: #{tpu_custom_call.1} parent=1 // pred_check_branch
      %50 = sbr.rel (0) target = $region45
    $region44: #{tpu_custom_call.1} parent=1 // pred_region
      _
    $region45: #{tpu_custom_call.1} parent=1 // pred_fallthru
      _
    // Predicated region
    $region46: #{tpu_custom_call.1} parent=1 // pred_check
      _
    $region47: #{tpu_custom_call.1} parent=1 // pred_check_branch
      %52 = sbr.rel (0) target = $region49
    $region48: #{tpu_custom_call.1} parent=1 // pred_region
      _
    $region49: #{tpu_custom_call.1} parent=1 // pred_fallthru
      _
    // Predicated region
    $region50: #{tpu_custom_call.1} parent=1 // pred_check
      _
    $region51: #{tpu_custom_call.1} parent=1 // pred_check_branch
      %54 = sbr.rel (0) target = $region53
    $region52: #{tpu_custom_call.1} parent=1 // pred_region
      _
    $region53: #{tpu_custom_call.1} parent=1 // pred_fallthru
      _
    // Predicated region
    $region54: #{tpu_custom_call.1} parent=1 // pred_check
      _
    $region55: #{tpu_custom_call.1} parent=1 // pred_check_branch
      %56 = sbr.rel (0) target = $region57
    $region56: #{tpu_custom_call.1} parent=1 // pred_region
      _
    $region57: #{tpu_custom_call.1} parent=1 // pred_fallthru
      _
    // Predicated region
    $region58: #{tpu_custom_call.1} parent=1 // pred_check
      _
    $region59: #{tpu_custom_call.1} parent=1 // pred_check_branch
      %58 = sbr.rel (0) target = $region61
    $region60: #{tpu_custom_call.1} parent=1 // pred_region
      _
    $region61: #{tpu_custom_call.1} parent=1 // pred_fallthru
      _
    // Predicated region
    $region62: #{tpu_custom_call.1} parent=1 // pred_check
      _
    $region63: #{tpu_custom_call.1} parent=1 // pred_check_branch
      %60 = sbr.rel (0) target = $region65
    $region64: #{tpu_custom_call.1} parent=1 // pred_region
      _
    $region65: #{tpu_custom_call.1} parent=1 // pred_fallthru
      _
    // Predicated region
    $region66: #{tpu_custom_call.1} parent=1 // pred_check
      _
    $region67: #{tpu_custom_call.1} parent=1 // pred_check_branch
      %62 = sbr.rel (0) target = $region69
    $region68: #{tpu_custom_call.1} parent=1 // pred_region
      _
    $region69: #{tpu_custom_call.1} parent=1 // pred_fallthru
      _
    // Predicated region
    $region70: #{tpu_custom_call.1} parent=1 // pred_check
      _
    $region71: #{tpu_custom_call.1} parent=1 // pred_check_branch
      %64 = sbr.rel (0) target = $region73
    $region72: #{tpu_custom_call.1} parent=1 // pred_region
      _
    $region73: #{tpu_custom_call.1} parent=1 // pred_fallthru
      _
    // Predicated region
    $region74: #{tpu_custom_call.1} parent=1 // pred_check
      _
    $region75: #{tpu_custom_call.1} parent=1 // pred_check_branch
      %66 = sbr.rel (0) target = $region77
    $region76: #{tpu_custom_call.1} parent=1 // pred_region
      _
    $region77: #{tpu_custom_call.1} parent=1 // pred_fallthru
      _
    // Predicated region
    $region78: #{tpu_custom_call.1} parent=1 // pred_check
      _
    $region79: #{tpu_custom_call.1} parent=1 // pred_check_branch
      %68 = sbr.rel (0) target = $region81
    $region80: #{tpu_custom_call.1} parent=1 // pred_region
      _
    $region81: #{tpu_custom_call.1} parent=1 // pred_fallthru
      _
    // Predicated region
    $region82: #{tpu_custom_call.1} parent=1 // pred_check
      _
    $region83: #{tpu_custom_call.1} parent=1 // pred_check_branch
      %70 = sbr.rel (0) target = $region85
    $region84: #{tpu_custom_call.1} parent=1 // pred_region
      _
    $region85: #{tpu_custom_call.1} parent=1 // pred_fallthru
      _
    // Predicated region
    $region86: #{tpu_custom_call.1} parent=1 // pred_check
      _
    $region87: #{tpu_custom_call.1} parent=1 // pred_check_branch
      %72 = sbr.rel (0) target = $region89
    $region88: #{tpu_custom_call.1} parent=1 // pred_region
      _
    $region89: #{tpu_custom_call.1} parent=1 // pred_fallthru
      _
    // Predicated region
    $region90: #{tpu_custom_call.1} parent=1 // pred_check
      _
    $region91: #{tpu_custom_call.1} parent=1 // pred_check_branch
      %74 = sbr.rel (0) target = $region93
    $region92: #{tpu_custom_call.1} parent=1 // pred_region
      _
    $region93: #{tpu_custom_call.1} parent=1 // pred_fallthru
      _
    %v75 = vld [vmem:[%s0] sm:$0xff]
    %v76 = vld [vmem:[%s0 + $0x8] sm:$0xff]
    %v77 = vld [vmem:[%s1] sm:$0xff]
    %v78 = vld [vmem:[%s1 + $0x8] sm:$0xff]
    %v79 = vld [vmem:[%s1 + $0x10] sm:$0xff]
    %v80 = vld [vmem:[%s1 + $0x18] sm:$0xff]
    %v81 = vld [vmem:[%s4] sm:$0x1]
    %v82 = vlaneseq
    %v83 = vshrl.u32 %v82, 7
    %v84 = vsub.s32 0, %v83
    %v85 = vrot.slane %v81, %v84
    %vm86 = vcmask 261120
    %v88 = vsel %vm86, %v75, 0
    %v91 = vsel %vm86, %v76, 0
    %93 = vmatprep.subr.mxu0 0.0
    %94 = vmatpush1.msra.mxu0 %v77
    %95 = vmatprep.subr.mxu0 0.0
    %96 = vmatpush1.msra.mxu0 %v78
    %97 = vmatprep.subr.mxu0 0.0
    %98 = vmatpush1.msra.mxu0 %v79
    %99 = vmatprep.subr.mxu0 0.0
    %100 = vmatpush1.msra.mxu0 %v80
    %101 = vmatprep.subr.mxu0 0.0
    %102 = vmatpush1.msra.mxu0 0.0
    %103 = vmatprep.subr.mxu0 0.0
    %104 = vmatpush1.msra.mxu0 0.0
    %105 = vmatprep.subr.mxu0 0.0
    %106 = vmatpush1.msra.mxu0 0.0
    %107 = vmatprep.subr.mxu0 0.0
    %108 = vmatpush1.msra.mxu0 0.0
    %109 = vmatprep.subr.mxu0 0.0
    %110 = vmatpush1.msra.mxu0 0.0
    %111 = vmatprep.subr.mxu0 0.0
    %112 = vmatpush1.msra.mxu0 0.0
    %113 = vmatprep.subr.mxu0 0.0
    %114 = vmatpush1.msra.mxu0 0.0
    %115 = vmatprep.subr.mxu0 0.0
    %116 = vmatpush1.msra.mxu0 0.0
    %117 = vmatprep.subr.mxu0 0.0
    %118 = vmatpush1.msra.mxu0 0.0
    %119 = vmatprep.subr.mxu0 0.0
    %120 = vmatpush1.msra.mxu0 0.0
    %121 = vmatprep.subr.mxu0 0.0
    %122 = vmatpush1.msra.mxu0 0.0
    %123 = vmatprep.subr.mxu0 0.0
    %124 = vmatpush1.msra.mxu0 0.0
    %125 = vmatprep.subr.mxu0 0.0
    %126 = vmatpush1.msra.mxu0 0.0
    %127 = vmatprep.subr.mxu0 0.0
    %128 = vmatpush1.msra.mxu0 0.0
    %129 = vmatprep.subr.mxu0 0.0
    %130 = vmatpush1.msra.mxu0 0.0
    %131 = vmatprep.subr.mxu0 0.0
    %132 = vmatpush1.msra.mxu0 0.0
    %133 = vmatprep.subr.mxu0 0.0
    %134 = vmatpush1.msra.mxu0 0.0
    %135 = vmatprep.subr.mxu0 0.0
    %136 = vmatpush1.msra.mxu0 0.0
    %137 = vmatprep.subr.mxu0 0.0
    %138 = vmatpush1.msra.mxu0 0.0
    %139 = vmatprep.subr.mxu0 0.0
    %140 = vmatpush1.msra.mxu0 0.0
    %141 = vmatprep.subr.mxu0 0.0
    %142 = vmatpush1.msra.mxu0 0.0
    %143 = vmatprep.subr.mxu0 0.0
    %144 = vmatpush1.msra.mxu0 0.0
    %145 = vmatprep.subr.mxu0 0.0
    %146 = vmatpush1.msra.mxu0 0.0
    %147 = vmatprep.subr.mxu0 0.0
    %148 = vmatpush1.msra.mxu0 0.0
    %149 = vmatprep.subr.mxu0 0.0
    %150 = vmatpush1.msra.mxu0 0.0
    %151 = vmatprep.subr.mxu0 0.0
    %152 = vmatpush1.msra.mxu0 0.0
    %153 = vmatprep.subr.mxu0 0.0
    %154 = vmatpush1.msra.mxu0 0.0
    %155 = vmatprep.subr.mxu0 0.0
    %156 = vmatpush1.msra.mxu0 0.0
    %157 = vmatprep.mubr.f32.mxu0 0.0
    %158 = vmatmul.mubr.f32.gmra.mrb[0].mxu0 %v88
    %v159 = vpop.f32.mrb[0].mxu0
    %v160 = vadd.f32 %v85, %v159
    %v161 = vpop.f32.mrb[0].mxu0
    %162 = vmatprep.mubr.f32.mxu0 0.0
    %163 = vmatmul.mubr.f32.gmra.mrb[0].mxu0 %v91
    %v164 = vpop.f32.mrb[0].mxu0
    %v165 = vadd.f32 %v85, %v164
    %v166 = vpop.f32.mrb[0].mxu0
    %167 = vdwg.mxu0
    %v168 = vld [vmem:[%s2] sm:$0xff]
    %v169 = vld [vmem:[%s2 + $0x8] sm:$0xff]
    %v170 = vld [vmem:[%s2 + $0x10] sm:$0xff]
    %v171 = vld [vmem:[%s2 + $0x18] sm:$0xff]
    %v172 = vld [vmem:[%s5] sm:$0x1]
    %v173 = vlaneseq
    %v174 = vshrl.u32 %v173, 7
    %v175 = vsub.s32 0, %v174
    %v176 = vrot.slane %v172, %v175
    %177 = vmatprep.subr.mxu0 0.0
    %178 = vmatpush1.msra.mxu0 %v168
    %179 = vmatprep.subr.mxu0 0.0
    %180 = vmatpush1.msra.mxu0 %v169
    %181 = vmatprep.subr.mxu0 0.0
    %182 = vmatpush1.msra.mxu0 %v170
    %183 = vmatprep.subr.mxu0 0.0
    %184 = vmatpush1.msra.mxu0 %v171
    %185 = vmatprep.subr.mxu0 0.0
    %186 = vmatpush1.msra.mxu0 0.0
    %187 = vmatprep.subr.mxu0 0.0
    %188 = vmatpush1.msra.mxu0 0.0
    %189 = vmatprep.subr.mxu0 0.0
    %190 = vmatpush1.msra.mxu0 0.0
    %191 = vmatprep.subr.mxu0 0.0
    %192 = vmatpush1.msra.mxu0 0.0
    %193 = vmatprep.subr.mxu0 0.0
    %194 = vmatpush1.msra.mxu0 0.0
    %195 = vmatprep.subr.mxu0 0.0
    %196 = vmatpush1.msra.mxu0 0.0
    %197 = vmatprep.subr.mxu0 0.0
    %198 = vmatpush1.msra.mxu0 0.0
    %199 = vmatprep.subr.mxu0 0.0
    %200 = vmatpush1.msra.mxu0 0.0
    %201 = vmatprep.subr.mxu0 0.0
    %202 = vmatpush1.msra.mxu0 0.0
    %203 = vmatprep.subr.mxu0 0.0
    %204 = vmatpush1.msra.mxu0 0.0
    %205 = vmatprep.subr.mxu0 0.0
    %206 = vmatpush1.msra.mxu0 0.0
    %207 = vmatprep.subr.mxu0 0.0
    %208 = vmatpush1.msra.mxu0 0.0
    %209 = vmatprep.subr.mxu0 0.0
    %210 = vmatpush1.msra.mxu0 0.0
    %211 = vmatprep.subr.mxu0 0.0
    %212 = vmatpush1.msra.mxu0 0.0
    %213 = vmatprep.subr.mxu0 0.0
    %214 = vmatpush1.msra.mxu0 0.0
    %215 = vmatprep.subr.mxu0 0.0
    %216 = vmatpush1.msra.mxu0 0.0
    %217 = vmatprep.subr.mxu0 0.0
    %218 = vmatpush1.msra.mxu0 0.0
    %219 = vmatprep.subr.mxu0 0.0
    %220 = vmatpush1.msra.mxu0 0.0
    %221 = vmatprep.subr.mxu0 0.0
    %222 = vmatpush1.msra.mxu0 0.0
    %223 = vmatprep.subr.mxu0 0.0
    %224 = vmatpush1.msra.mxu0 0.0
    %225 = vmatprep.subr.mxu0 0.0
    %226 = vmatpush1.msra.mxu0 0.0
    %227 = vmatprep.subr.mxu0 0.0
    %228 = vmatpush1.msra.mxu0 0.0
    %229 = vmatprep.subr.mxu0 0.0
    %230 = vmatpush1.msra.mxu0 0.0
    %231 = vmatprep.subr.mxu0 0.0
    %232 = vmatpush1.msra.mxu0 0.0
    %233 = vmatprep.subr.mxu0 0.0
    %234 = vmatpush1.msra.mxu0 0.0
    %235 = vmatprep.subr.mxu0 0.0
    %236 = vmatpush1.msra.mxu0 0.0
    %237 = vmatprep.subr.mxu0 0.0
    %238 = vmatpush1.msra.mxu0 0.0
    %239 = vmatprep.subr.mxu0 0.0
    %240 = vmatpush1.msra.mxu0 0.0
    %241 = vmatprep.mubr.f32.mxu0 0.0
    %242 = vmatmul.mubr.f32.gmra.mrb[0].mxu0 %v88
    %v243 = vpop.f32.mrb[0].mxu0
    %v244 = vadd.f32 %v176, %v243
    %v245 = vpop.f32.mrb[0].mxu0
    %246 = vmatprep.mubr.f32.mxu0 0.0
    %247 = vmatmul.mubr.f32.gmra.mrb[0].mxu0 %v91
    %v248 = vpop.f32.mrb[0].mxu0
    %v249 = vadd.f32 %v176, %v248
    %v250 = vpop.f32.mrb[0].mxu0
    %251 = vdwg.mxu0
    %v252 = vld [vmem:[%s3] sm:$0xff]
    %v253 = vld [vmem:[%s3 + $0x8] sm:$0xff]
    %v254 = vld [vmem:[%s3 + $0x10] sm:$0xff]
    %v255 = vld [vmem:[%s3 + $0x18] sm:$0xff]
    %v256 = vld [vmem:[%s6] sm:$0x1]
    %v257 = vlaneseq
    %v258 = vshrl.u32 %v257, 7
    %v259 = vsub.s32 0, %v258
    %v260 = vrot.slane %v256, %v259
    %261 = vmatprep.subr.mxu0 0.0
    %262 = vmatpush1.msra.mxu0 %v252
    %263 = vmatprep.subr.mxu0 0.0
    %264 = vmatpush1.msra.mxu0 %v253
    %265 = vmatprep.subr.mxu0 0.0
    %266 = vmatpush1.msra.mxu0 %v254
    %267 = vmatprep.subr.mxu0 0.0
    %268 = vmatpush1.msra.mxu0 %v255
    %269 = vmatprep.subr.mxu0 0.0
    %270 = vmatpush1.msra.mxu0 0.0
    %271 = vmatprep.subr.mxu0 0.0
    %272 = vmatpush1.msra.mxu0 0.0
    %273 = vmatprep.subr.mxu0 0.0
    %274 = vmatpush1.msra.mxu0 0.0
    %275 = vmatprep.subr.mxu0 0.0
    %276 = vmatpush1.msra.mxu0 0.0
    %277 = vmatprep.subr.mxu0 0.0
    %278 = vmatpush1.msra.mxu0 0.0
    %279 = vmatprep.subr.mxu0 0.0
    %280 = vmatpush1.msra.mxu0 0.0
    %281 = vmatprep.subr.mxu0 0.0
    %282 = vmatpush1.msra.mxu0 0.0
    %283 = vmatprep.subr.mxu0 0.0
    %284 = vmatpush1.msra.mxu0 0.0
    %285 = vmatprep.subr.mxu0 0.0
    %286 = vmatpush1.msra.mxu0 0.0
    %287 = vmatprep.subr.mxu0 0.0
    %288 = vmatpush1.msra.mxu0 0.0
    %289 = vmatprep.subr.mxu0 0.0
    %290 = vmatpush1.msra.mxu0 0.0
    %291 = vmatprep.subr.mxu0 0.0
    %292 = vmatpush1.msra.mxu0 0.0
    %293 = vmatprep.subr.mxu0 0.0
    %294 = vmatpush1.msra.mxu0 0.0
    %295 = vmatprep.subr.mxu0 0.0
    %296 = vmatpush1.msra.mxu0 0.0
    %297 = vmatprep.subr.mxu0 0.0
    %298 = vmatpush1.msra.mxu0 0.0
    %299 = vmatprep.subr.mxu0 0.0
    %300 = vmatpush1.msra.mxu0 0.0
    %301 = vmatprep.subr.mxu0 0.0
    %302 = vmatpush1.msra.mxu0 0.0
    %303 = vmatprep.subr.mxu0 0.0
    %304 = vmatpush1.msra.mxu0 0.0
    %305 = vmatprep.subr.mxu0 0.0
    %306 = vmatpush1.msra.mxu0 0.0
    %307 = vmatprep.subr.mxu0 0.0
    %308 = vmatpush1.msra.mxu0 0.0
    %309 = vmatprep.subr.mxu0 0.0
    %310 = vmatpush1.msra.mxu0 0.0
    %311 = vmatprep.subr.mxu0 0.0
    %312 = vmatpush1.msra.mxu0 0.0
    %313 = vmatprep.subr.mxu0 0.0
    %314 = vmatpush1.msra.mxu0 0.0
    %315 = vmatprep.subr.mxu0 0.0
    %316 = vmatpush1.msra.mxu0 0.0
    %317 = vmatprep.subr.mxu0 0.0
    %318 = vmatpush1.msra.mxu0 0.0
    %319 = vmatprep.subr.mxu0 0.0
    %320 = vmatpush1.msra.mxu0 0.0
    %321 = vmatprep.subr.mxu0 0.0
    %322 = vmatpush1.msra.mxu0 0.0
    %323 = vmatprep.subr.mxu0 0.0
    %324 = vmatpush1.msra.mxu0 0.0
    %325 = vmatprep.mubr.f32.mxu0 0.0
    %326 = vmatmul.mubr.f32.gmra.mrb[0].mxu0 %v88
    %v327 = vpop.f32.mrb[0].mxu0
    %v328 = vadd.f32 %v260, %v327
    %v329 = vpop.f32.mrb[0].mxu0
    %330 = vmatprep.mubr.f32.mxu0 0.0
    %331 = vmatmul.mubr.f32.gmra.mrb[0].mxu0 %v91
    %v332 = vpop.f32.mrb[0].mxu0
    %v333 = vadd.f32 %v260, %v332
    %v334 = vpop.f32.mrb[0].mxu0
    %335 = vdwg.mxu0
    %s336 = scalar_lea.vmem %s1, 32
    %v337 = vld [vmem:[%s336] sm:$0xff]
    %v338 = vld [vmem:[%s336 + $0x8] sm:$0xff]
    %v339 = vld [vmem:[%s336 + $0x10] sm:$0xff]
    %v340 = vld [vmem:[%s336 + $0x18] sm:$0xff]
    %v341 = vld [vmem:[%s4 + $0x1] sm:$0x1]
    %v342 = vlaneseq
    %v343 = vshrl.u32 %v342, 7
    %v344 = vsub.s32 0, %v343
    %v345 = vrot.slane %v341, %v344
    %346 = vmatprep.subr.mxu0 0.0
    %347 = vmatpush1.msra.mxu0 %v337
    %348 = vmatprep.subr.mxu0 0.0
    %349 = vmatpush1.msra.mxu0 %v338
    %350 = vmatprep.subr.mxu0 0.0
    %351 = vmatpush1.msra.mxu0 %v339
    %352 = vmatprep.subr.mxu0 0.0
    %353 = vmatpush1.msra.mxu0 %v340
    %354 = vmatprep.subr.mxu0 0.0
    %355 = vmatpush1.msra.mxu0 0.0
    %356 = vmatprep.subr.mxu0 0.0
    %357 = vmatpush1.msra.mxu0 0.0
    %358 = vmatprep.subr.mxu0 0.0
    %359 = vmatpush1.msra.mxu0 0.0
    %360 = vmatprep.subr.mxu0 0.0
    %361 = vmatpush1.msra.mxu0 0.0
    %362 = vmatprep.subr.mxu0 0.0
    %363 = vmatpush1.msra.mxu0 0.0
    %364 = vmatprep.subr.mxu0 0.0
    %365 = vmatpush1.msra.mxu0 0.0
    %366 = vmatprep.subr.mxu0 0.0
    %367 = vmatpush1.msra.mxu0 0.0
    %368 = vmatprep.subr.mxu0 0.0
    %369 = vmatpush1.msra.mxu0 0.0
    %370 = vmatprep.subr.mxu0 0.0
    %371 = vmatpush1.msra.mxu0 0.0
    %372 = vmatprep.subr.mxu0 0.0
    %373 = vmatpush1.msra.mxu0 0.0
    %374 = vmatprep.subr.mxu0 0.0
    %375 = vmatpush1.msra.mxu0 0.0
    %376 = vmatprep.subr.mxu0 0.0
    %377 = vmatpush1.msra.mxu0 0.0
    %378 = vmatprep.subr.mxu0 0.0
    %379 = vmatpush1.msra.mxu0 0.0
    %380 = vmatprep.subr.mxu0 0.0
    %381 = vmatpush1.msra.mxu0 0.0
    %382 = vmatprep.subr.mxu0 0.0
    %383 = vmatpush1.msra.mxu0 0.0
    %384 = vmatprep.subr.mxu0 0.0
    %385 = vmatpush1.msra.mxu0 0.0
    %386 = vmatprep.subr.mxu0 0.0
    %387 = vmatpush1.msra.mxu0 0.0
    %388 = vmatprep.subr.mxu0 0.0
    %389 = vmatpush1.msra.mxu0 0.0
    %390 = vmatprep.subr.mxu0 0.0
    %391 = vmatpush1.msra.mxu0 0.0
    %392 = vmatprep.subr.mxu0 0.0
    %393 = vmatpush1.msra.mxu0 0.0
    %394 = vmatprep.subr.mxu0 0.0
    %395 = vmatpush1.msra.mxu0 0.0
    %396 = vmatprep.subr.mxu0 0.0
    %397 = vmatpush1.msra.mxu0 0.0
    %398 = vmatprep.subr.mxu0 0.0
    %399 = vmatpush1.msra.mxu0 0.0
    %400 = vmatprep.subr.mxu0 0.0
    %401 = vmatpush1.msra.mxu0 0.0
    %402 = vmatprep.subr.mxu0 0.0
    %403 = vmatpush1.msra.mxu0 0.0
    %404 = vmatprep.subr.mxu0 0.0
    %405 = vmatpush1.msra.mxu0 0.0
    %406 = vmatprep.subr.mxu0 0.0
    %407 = vmatpush1.msra.mxu0 0.0
    %408 = vmatprep.subr.mxu0 0.0
    %409 = vmatpush1.msra.mxu0 0.0
    %410 = vmatprep.mubr.f32.mxu0 0.0
    %411 = vmatmul.mubr.f32.gmra.mrb[0].mxu0 %v88
    %v412 = vpop.f32.mrb[0].mxu0
    %v413 = vadd.f32 %v345, %v412
    %v414 = vpop.f32.mrb[0].mxu0
    %415 = vmatprep.mubr.f32.mxu0 0.0
    %416 = vmatmul.mubr.f32.gmra.mrb[0].mxu0 %v91
    %v417 = vpop.f32.mrb[0].mxu0
    %v418 = vadd.f32 %v345, %v417
    %v419 = vpop.f32.mrb[0].mxu0
    %420 = vdwg.mxu0
    %s421 = scalar_lea.vmem %s2, 32
    %v422 = vld [vmem:[%s421] sm:$0xff]
    %v423 = vld [vmem:[%s421 + $0x8] sm:$0xff]
    %v424 = vld [vmem:[%s421 + $0x10] sm:$0xff]
    %v425 = vld [vmem:[%s421 + $0x18] sm:$0xff]
    %v426 = vld [vmem:[%s5 + $0x1] sm:$0x1]
    %v427 = vlaneseq
    %v428 = vshrl.u32 %v427, 7
    %v429 = vsub.s32 0, %v428
    %v430 = vrot.slane %v426, %v429
    %431 = vmatprep.subr.mxu0 0.0
    %432 = vmatpush1.msra.mxu0 %v422
    %433 = vmatprep.subr.mxu0 0.0
    %434 = vmatpush1.msra.mxu0 %v423
    %435 = vmatprep.subr.mxu0 0.0
    %436 = vmatpush1.msra.mxu0 %v424
    %437 = vmatprep.subr.mxu0 0.0
    %438 = vmatpush1.msra.mxu0 %v425
    %439 = vmatprep.subr.mxu0 0.0
    %440 = vmatpush1.msra.mxu0 0.0
    %441 = vmatprep.subr.mxu0 0.0
    %442 = vmatpush1.msra.mxu0 0.0
    %443 = vmatprep.subr.mxu0 0.0
    %444 = vmatpush1.msra.mxu0 0.0
    %445 = vmatprep.subr.mxu0 0.0
    %446 = vmatpush1.msra.mxu0 0.0
    %447 = vmatprep.subr.mxu0 0.0
    %448 = vmatpush1.msra.mxu0 0.0
    %449 = vmatprep.subr.mxu0 0.0
    %450 = vmatpush1.msra.mxu0 0.0
    %451 = vmatprep.subr.mxu0 0.0
    %452 = vmatpush1.msra.mxu0 0.0
    %453 = vmatprep.subr.mxu0 0.0
    %454 = vmatpush1.msra.mxu0 0.0
    %455 = vmatprep.subr.mxu0 0.0
    %456 = vmatpush1.msra.mxu0 0.0
    %457 = vmatprep.subr.mxu0 0.0
    %458 = vmatpush1.msra.mxu0 0.0
    %459 = vmatprep.subr.mxu0 0.0
    %460 = vmatpush1.msra.mxu0 0.0
    %461 = vmatprep.subr.mxu0 0.0
    %462 = vmatpush1.msra.mxu0 0.0
    %463 = vmatprep.subr.mxu0 0.0
    %464 = vmatpush1.msra.mxu0 0.0
    %465 = vmatprep.subr.mxu0 0.0
    %466 = vmatpush1.msra.mxu0 0.0
    %467 = vmatprep.subr.mxu0 0.0
    %468 = vmatpush1.msra.mxu0 0.0
    %469 = vmatprep.subr.mxu0 0.0
    %470 = vmatpush1.msra.mxu0 0.0
    %471 = vmatprep.subr.mxu0 0.0
    %472 = vmatpush1.msra.mxu0 0.0
    %473 = vmatprep.subr.mxu0 0.0
    %474 = vmatpush1.msra.mxu0 0.0
    %475 = vmatprep.subr.mxu0 0.0
    %476 = vmatpush1.msra.mxu0 0.0
    %477 = vmatprep.subr.mxu0 0.0
    %478 = vmatpush1.msra.mxu0 0.0
    %479 = vmatprep.subr.mxu0 0.0
    %480 = vmatpush1.msra.mxu0 0.0
    %481 = vmatprep.subr.mxu0 0.0
    %482 = vmatpush1.msra.mxu0 0.0
    %483 = vmatprep.subr.mxu0 0.0
    %484 = vmatpush1.msra.mxu0 0.0
    %485 = vmatprep.subr.mxu0 0.0
    %486 = vmatpush1.msra.mxu0 0.0
    %487 = vmatprep.subr.mxu0 0.0
    %488 = vmatpush1.msra.mxu0 0.0
    %489 = vmatprep.subr.mxu0 0.0
    %490 = vmatpush1.msra.mxu0 0.0
    %491 = vmatprep.subr.mxu0 0.0
    %492 = vmatpush1.msra.mxu0 0.0
    %493 = vmatprep.subr.mxu0 0.0
    %494 = vmatpush1.msra.mxu0 0.0
    %495 = vmatprep.mubr.f32.mxu0 0.0
    %496 = vmatmul.mubr.f32.gmra.mrb[0].mxu0 %v88
    %v497 = vpop.f32.mrb[0].mxu0
    %v498 = vadd.f32 %v430, %v497
    %v499 = vpop.f32.mrb[0].mxu0
    %500 = vmatprep.mubr.f32.mxu0 0.0
    %501 = vmatmul.mubr.f32.gmra.mrb[0].mxu0 %v91
    %v502 = vpop.f32.mrb[0].mxu0
    %v503 = vadd.f32 %v430, %v502
    %v504 = vpop.f32.mrb[0].mxu0
    %505 = vdwg.mxu0
    %s506 = scalar_lea.vmem %s3, 32
    %v507 = vld [vmem:[%s506] sm:$0xff]
    %v508 = vld [vmem:[%s506 + $0x8] sm:$0xff]
    %v509 = vld [vmem:[%s506 + $0x10] sm:$0xff]
    %v510 = vld [vmem:[%s506 + $0x18] sm:$0xff]
    %v511 = vld [vmem:[%s6 + $0x1] sm:$0x1]
    %v512 = vlaneseq
    %v513 = vshrl.u32 %v512, 7
    %v514 = vsub.s32 0, %v513
    %v515 = vrot.slane %v511, %v514
    %516 = vmatprep.subr.mxu0 0.0
    %517 = vmatpush1.msra.mxu0 %v507
    %518 = vmatprep.subr.mxu0 0.0
    %519 = vmatpush1.msra.mxu0 %v508
    %520 = vmatprep.subr.mxu0 0.0
    %521 = vmatpush1.msra.mxu0 %v509
    %522 = vmatprep.subr.mxu0 0.0
    %523 = vmatpush1.msra.mxu0 %v510
    %524 = vmatprep.subr.mxu0 0.0
    %525 = vmatpush1.msra.mxu0 0.0
    %526 = vmatprep.subr.mxu0 0.0
    %527 = vmatpush1.msra.mxu0 0.0
    %528 = vmatprep.subr.mxu0 0.0
    %529 = vmatpush1.msra.mxu0 0.0
    %530 = vmatprep.subr.mxu0 0.0
    %531 = vmatpush1.msra.mxu0 0.0
    %532 = vmatprep.subr.mxu0 0.0
    %533 = vmatpush1.msra.mxu0 0.0
    %534 = vmatprep.subr.mxu0 0.0
    %535 = vmatpush1.msra.mxu0 0.0
    %536 = vmatprep.subr.mxu0 0.0
    %537 = vmatpush1.msra.mxu0 0.0
    %538 = vmatprep.subr.mxu0 0.0
    %539 = vmatpush1.msra.mxu0 0.0
    %540 = vmatprep.subr.mxu0 0.0
    %541 = vmatpush1.msra.mxu0 0.0
    %542 = vmatprep.subr.mxu0 0.0
    %543 = vmatpush1.msra.mxu0 0.0
    %544 = vmatprep.subr.mxu0 0.0
    %545 = vmatpush1.msra.mxu0 0.0
    %546 = vmatprep.subr.mxu0 0.0
    %547 = vmatpush1.msra.mxu0 0.0
    %548 = vmatprep.subr.mxu0 0.0
    %549 = vmatpush1.msra.mxu0 0.0
    %550 = vmatprep.subr.mxu0 0.0
    %551 = vmatpush1.msra.mxu0 0.0
    %552 = vmatprep.subr.mxu0 0.0
    %553 = vmatpush1.msra.mxu0 0.0
    %554 = vmatprep.subr.mxu0 0.0
    %555 = vmatpush1.msra.mxu0 0.0
    %556 = vmatprep.subr.mxu0 0.0
    %557 = vmatpush1.msra.mxu0 0.0
    %558 = vmatprep.subr.mxu0 0.0
    %559 = vmatpush1.msra.mxu0 0.0
    %560 = vmatprep.subr.mxu0 0.0
    %561 = vmatpush1.msra.mxu0 0.0
    %562 = vmatprep.subr.mxu0 0.0
    %563 = vmatpush1.msra.mxu0 0.0
    %564 = vmatprep.subr.mxu0 0.0
    %565 = vmatpush1.msra.mxu0 0.0
    %566 = vmatprep.subr.mxu0 0.0
    %567 = vmatpush1.msra.mxu0 0.0
    %568 = vmatprep.subr.mxu0 0.0
    %569 = vmatpush1.msra.mxu0 0.0
    %570 = vmatprep.subr.mxu0 0.0
    %571 = vmatpush1.msra.mxu0 0.0
    %572 = vmatprep.subr.mxu0 0.0
    %573 = vmatpush1.msra.mxu0 0.0
    %574 = vmatprep.subr.mxu0 0.0
    %575 = vmatpush1.msra.mxu0 0.0
    %576 = vmatprep.subr.mxu0 0.0
    %577 = vmatpush1.msra.mxu0 0.0
    %578 = vmatprep.subr.mxu0 0.0
    %579 = vmatpush1.msra.mxu0 0.0
    %580 = vmatprep.mubr.f32.mxu0 0.0
    %581 = vmatmul.mubr.f32.gmra.mrb[0].mxu0 %v88
    %v582 = vpop.f32.mrb[0].mxu0
    %v583 = vadd.f32 %v515, %v582
    %v584 = vpop.f32.mrb[0].mxu0
    %585 = vmatprep.mubr.f32.mxu0 0.0
    %586 = vmatmul.mubr.f32.gmra.mrb[0].mxu0 %v91
    %v587 = vpop.f32.mrb[0].mxu0
    %v588 = vadd.f32 %v515, %v587
    %v589 = vpop.f32.mrb[0].mxu0
    %590 = vdwg.mxu0
    %s591 = scalar_lea.vmem %s1, 64
    %v592 = vld [vmem:[%s591] sm:$0xff]
    %v593 = vld [vmem:[%s591 + $0x8] sm:$0xff]
    %v594 = vld [vmem:[%s591 + $0x10] sm:$0xff]
    %v595 = vld [vmem:[%s591 + $0x18] sm:$0xff]
    %v596 = vld [vmem:[%s4 + $0x2] sm:$0x1]
    %v597 = vlaneseq
    %v598 = vshrl.u32 %v597, 7
    %v599 = vsub.s32 0, %v598
    %v600 = vrot.slane %v596, %v599
    %601 = vmatprep.subr.mxu0 0.0
    %602 = vmatpush1.msra.mxu0 %v592
    %603 = vmatprep.subr.mxu0 0.0
    %604 = vmatpush1.msra.mxu0 %v593
    %605 = vmatprep.subr.mxu0 0.0
    %606 = vmatpush1.msra.mxu0 %v594
    %607 = vmatprep.subr.mxu0 0.0
    %608 = vmatpush1.msra.mxu0 %v595
    %609 = vmatprep.subr.mxu0 0.0
    %610 = vmatpush1.msra.mxu0 0.0
    %611 = vmatprep.subr.mxu0 0.0
    %612 = vmatpush1.msra.mxu0 0.0
    %613 = vmatprep.subr.mxu0 0.0
    %614 = vmatpush1.msra.mxu0 0.0
    %615 = vmatprep.subr.mxu0 0.0
    %616 = vmatpush1.msra.mxu0 0.0
    %617 = vmatprep.subr.mxu0 0.0
    %618 = vmatpush1.msra.mxu0 0.0
    %619 = vmatprep.subr.mxu0 0.0
    %620 = vmatpush1.msra.mxu0 0.0
    %621 = vmatprep.subr.mxu0 0.0
    %622 = vmatpush1.msra.mxu0 0.0
    %623 = vmatprep.subr.mxu0 0.0
    %624 = vmatpush1.msra.mxu0 0.0
    %625 = vmatprep.subr.mxu0 0.0
    %626 = vmatpush1.msra.mxu0 0.0
    %627 = vmatprep.subr.mxu0 0.0
    %628 = vmatpush1.msra.mxu0 0.0
    %629 = vmatprep.subr.mxu0 0.0
    %630 = vmatpush1.msra.mxu0 0.0
    %631 = vmatprep.subr.mxu0 0.0
    %632 = vmatpush1.msra.mxu0 0.0
    %633 = vmatprep.subr.mxu0 0.0
    %634 = vmatpush1.msra.mxu0 0.0
    %635 = vmatprep.subr.mxu0 0.0
    %636 = vmatpush1.msra.mxu0 0.0
    %637 = vmatprep.subr.mxu0 0.0
    %638 = vmatpush1.msra.mxu0 0.0
    %639 = vmatprep.subr.mxu0 0.0
    %640 = vmatpush1.msra.mxu0 0.0
    %641 = vmatprep.subr.mxu0 0.0
    %642 = vmatpush1.msra.mxu0 0.0
    %643 = vmatprep.subr.mxu0 0.0
    %644 = vmatpush1.msra.mxu0 0.0
    %645 = vmatprep.subr.mxu0 0.0
    %646 = vmatpush1.msra.mxu0 0.0
    %647 = vmatprep.subr.mxu0 0.0
    %648 = vmatpush1.msra.mxu0 0.0
    %649 = vmatprep.subr.mxu0 0.0
    %650 = vmatpush1.msra.mxu0 0.0
    %651 = vmatprep.subr.mxu0 0.0
    %652 = vmatpush1.msra.mxu0 0.0
    %653 = vmatprep.subr.mxu0 0.0
    %654 = vmatpush1.msra.mxu0 0.0
    %655 = vmatprep.subr.mxu0 0.0
    %656 = vmatpush1.msra.mxu0 0.0
    %657 = vmatprep.subr.mxu0 0.0
    %658 = vmatpush1.msra.mxu0 0.0
    %659 = vmatprep.subr.mxu0 0.0
    %660 = vmatpush1.msra.mxu0 0.0
    %661 = vmatprep.subr.mxu0 0.0
    %662 = vmatpush1.msra.mxu0 0.0
    %663 = vmatprep.subr.mxu0 0.0
    %664 = vmatpush1.msra.mxu0 0.0
    %665 = vmatprep.mubr.f32.mxu0 0.0
    %666 = vmatmul.mubr.f32.gmra.mrb[0].mxu0 %v88
    %v667 = vpop.f32.mrb[0].mxu0
    %v668 = vadd.f32 %v600, %v667
    %v669 = vpop.f32.mrb[0].mxu0
    %670 = vmatprep.mubr.f32.mxu0 0.0
    %671 = vmatmul.mubr.f32.gmra.mrb[0].mxu0 %v91
    %v672 = vpop.f32.mrb[0].mxu0
    %v673 = vadd.f32 %v600, %v672
    %v674 = vpop.f32.mrb[0].mxu0
    %675 = vdwg.mxu0
    %s676 = scalar_lea.vmem %s2, 64
    %v677 = vld [vmem:[%s676] sm:$0xff]
    %v678 = vld [vmem:[%s676 + $0x8] sm:$0xff]
    %v679 = vld [vmem:[%s676 + $0x10] sm:$0xff]
    %v680 = vld [vmem:[%s676 + $0x18] sm:$0xff]
    %v681 = vld [vmem:[%s5 + $0x2] sm:$0x1]
    %v682 = vlaneseq
    %v683 = vshrl.u32 %v682, 7
    %v684 = vsub.s32 0, %v683
    %v685 = vrot.slane %v681, %v684
    %686 = vmatprep.subr.mxu0 0.0
    %687 = vmatpush1.msra.mxu0 %v677
    %688 = vmatprep.subr.mxu0 0.0
    %689 = vmatpush1.msra.mxu0 %v678
    %690 = vmatprep.subr.mxu0 0.0
    %691 = vmatpush1.msra.mxu0 %v679
    %692 = vmatprep.subr.mxu0 0.0
    %693 = vmatpush1.msra.mxu0 %v680
    %694 = vmatprep.subr.mxu0 0.0
    %695 = vmatpush1.msra.mxu0 0.0
    %696 = vmatprep.subr.mxu0 0.0
    %697 = vmatpush1.msra.mxu0 0.0
    %698 = vmatprep.subr.mxu0 0.0
    %699 = vmatpush1.msra.mxu0 0.0
    %700 = vmatprep.subr.mxu0 0.0
    %701 = vmatpush1.msra.mxu0 0.0
    %702 = vmatprep.subr.mxu0 0.0
    %703 = vmatpush1.msra.mxu0 0.0
    %704 = vmatprep.subr.mxu0 0.0
    %705 = vmatpush1.msra.mxu0 0.0
    %706 = vmatprep.subr.mxu0 0.0
    %707 = vmatpush1.msra.mxu0 0.0
    %708 = vmatprep.subr.mxu0 0.0
    %709 = vmatpush1.msra.mxu0 0.0
    %710 = vmatprep.subr.mxu0 0.0
    %711 = vmatpush1.msra.mxu0 0.0
    %712 = vmatprep.subr.mxu0 0.0
    %713 = vmatpush1.msra.mxu0 0.0
    %714 = vmatprep.subr.mxu0 0.0
    %715 = vmatpush1.msra.mxu0 0.0
    %716 = vmatprep.subr.mxu0 0.0
    %717 = vmatpush1.msra.mxu0 0.0
    %718 = vmatprep.subr.mxu0 0.0
    %719 = vmatpush1.msra.mxu0 0.0
    %720 = vmatprep.subr.mxu0 0.0
    %721 = vmatpush1.msra.mxu0 0.0
    %722 = vmatprep.subr.mxu0 0.0
    %723 = vmatpush1.msra.mxu0 0.0
    %724 = vmatprep.subr.mxu0 0.0
    %725 = vmatpush1.msra.mxu0 0.0
    %726 = vmatprep.subr.mxu0 0.0
    %727 = vmatpush1.msra.mxu0 0.0
    %728 = vmatprep.subr.mxu0 0.0
    %729 = vmatpush1.msra.mxu0 0.0
    %730 = vmatprep.subr.mxu0 0.0
    %731 = vmatpush1.msra.mxu0 0.0
    %732 = vmatprep.subr.mxu0 0.0
    %733 = vmatpush1.msra.mxu0 0.0
    %734 = vmatprep.subr.mxu0 0.0
    %735 = vmatpush1.msra.mxu0 0.0
    %736 = vmatprep.subr.mxu0 0.0
    %737 = vmatpush1.msra.mxu0 0.0
    %738 = vmatprep.subr.mxu0 0.0
    %739 = vmatpush1.msra.mxu0 0.0
    %740 = vmatprep.subr.mxu0 0.0
    %741 = vmatpush1.msra.mxu0 0.0
    %742 = vmatprep.subr.mxu0 0.0
    %743 = vmatpush1.msra.mxu0 0.0
    %744 = vmatprep.subr.mxu0 0.0
    %745 = vmatpush1.msra.mxu0 0.0
    %746 = vmatprep.subr.mxu0 0.0
    %747 = vmatpush1.msra.mxu0 0.0
    %748 = vmatprep.subr.mxu0 0.0
    %749 = vmatpush1.msra.mxu0 0.0
    %750 = vmatprep.mubr.f32.mxu0 0.0
    %751 = vmatmul.mubr.f32.gmra.mrb[0].mxu0 %v88
    %v752 = vpop.f32.mrb[0].mxu0
    %v753 = vadd.f32 %v685, %v752
    %v754 = vpop.f32.mrb[0].mxu0
    %755 = vmatprep.mubr.f32.mxu0 0.0
    %756 = vmatmul.mubr.f32.gmra.mrb[0].mxu0 %v91
    %v757 = vpop.f32.mrb[0].mxu0
    %v758 = vadd.f32 %v685, %v757
    %v759 = vpop.f32.mrb[0].mxu0
    %760 = vdwg.mxu0
    %s761 = scalar_lea.vmem %s3, 64
    %v762 = vld [vmem:[%s761] sm:$0xff]
    %v763 = vld [vmem:[%s761 + $0x8] sm:$0xff]
    %v764 = vld [vmem:[%s761 + $0x10] sm:$0xff]
    %v765 = vld [vmem:[%s761 + $0x18] sm:$0xff]
    %v766 = vld [vmem:[%s6 + $0x2] sm:$0x1]
    %v767 = vlaneseq
    %v768 = vshrl.u32 %v767, 7
    %v769 = vsub.s32 0, %v768
    %v770 = vrot.slane %v766, %v769
    %771 = vmatprep.subr.mxu0 0.0
    %772 = vmatpush1.msra.mxu0 %v762
    %773 = vmatprep.subr.mxu0 0.0
    %774 = vmatpush1.msra.mxu0 %v763
    %775 = vmatprep.subr.mxu0 0.0
    %776 = vmatpush1.msra.mxu0 %v764
    %777 = vmatprep.subr.mxu0 0.0
    %778 = vmatpush1.msra.mxu0 %v765
    %779 = vmatprep.subr.mxu0 0.0
    %780 = vmatpush1.msra.mxu0 0.0
    %781 = vmatprep.subr.mxu0 0.0
    %782 = vmatpush1.msra.mxu0 0.0
    %783 = vmatprep.subr.mxu0 0.0
    %784 = vmatpush1.msra.mxu0 0.0
    %785 = vmatprep.subr.mxu0 0.0
    %786 = vmatpush1.msra.mxu0 0.0
    %787 = vmatprep.subr.mxu0 0.0
    %788 = vmatpush1.msra.mxu0 0.0
    %789 = vmatprep.subr.mxu0 0.0
    %790 = vmatpush1.msra.mxu0 0.0
    %791 = vmatprep.subr.mxu0 0.0
    %792 = vmatpush1.msra.mxu0 0.0
    %793 = vmatprep.subr.mxu0 0.0
    %794 = vmatpush1.msra.mxu0 0.0
    %795 = vmatprep.subr.mxu0 0.0
    %796 = vmatpush1.msra.mxu0 0.0
    %797 = vmatprep.subr.mxu0 0.0
    %798 = vmatpush1.msra.mxu0 0.0
    %799 = vmatprep.subr.mxu0 0.0
    %800 = vmatpush1.msra.mxu0 0.0
    %801 = vmatprep.subr.mxu0 0.0
    %802 = vmatpush1.msra.mxu0 0.0
    %803 = vmatprep.subr.mxu0 0.0
    %804 = vmatpush1.msra.mxu0 0.0
    %805 = vmatprep.subr.mxu0 0.0
    %806 = vmatpush1.msra.mxu0 0.0
    %807 = vmatprep.subr.mxu0 0.0
    %808 = vmatpush1.msra.mxu0 0.0
    %809 = vmatprep.subr.mxu0 0.0
    %810 = vmatpush1.msra.mxu0 0.0
    %811 = vmatprep.subr.mxu0 0.0
    %812 = vmatpush1.msra.mxu0 0.0
    %813 = vmatprep.subr.mxu0 0.0
    %814 = vmatpush1.msra.mxu0 0.0
    %815 = vmatprep.subr.mxu0 0.0
    %816 = vmatpush1.msra.mxu0 0.0
    %817 = vmatprep.subr.mxu0 0.0
    %818 = vmatpush1.msra.mxu0 0.0
    %819 = vmatprep.subr.mxu0 0.0
    %820 = vmatpush1.msra.mxu0 0.0
    %821 = vmatprep.subr.mxu0 0.0
    %822 = vmatpush1.msra.mxu0 0.0
    %823 = vmatprep.subr.mxu0 0.0
    %824 = vmatpush1.msra.mxu0 0.0
    %825 = vmatprep.subr.mxu0 0.0
    %826 = vmatpush1.msra.mxu0 0.0
    %827 = vmatprep.subr.mxu0 0.0
    %828 = vmatpush1.msra.mxu0 0.0
    %829 = vmatprep.subr.mxu0 0.0
    %830 = vmatpush1.msra.mxu0 0.0
    %831 = vmatprep.subr.mxu0 0.0
    %832 = vmatpush1.msra.mxu0 0.0
    %833 = vmatprep.subr.mxu0 0.0
    %834 = vmatpush1.msra.mxu0 0.0
    %835 = vmatprep.mubr.f32.mxu0 0.0
    %836 = vmatmul.mubr.f32.gmra.mrb[0].mxu0 %v88
    %v837 = vpop.f32.mrb[0].mxu0
    %v838 = vadd.f32 %v770, %v837
    %v839 = vpop.f32.mrb[0].mxu0
    %840 = vmatprep.mubr.f32.mxu0 0.0
    %841 = vmatmul.mubr.f32.gmra.mrb[0].mxu0 %v91
    %v842 = vpop.f32.mrb[0].mxu0
    %v843 = vadd.f32 %v770, %v842
    %v844 = vpop.f32.mrb[0].mxu0
    %845 = vdwg.mxu0
    %s846 = scalar_lea.vmem %s1, 96
    %v847 = vld [vmem:[%s846] sm:$0xff]
    %v848 = vld [vmem:[%s846 + $0x8] sm:$0xff]
    %v849 = vld [vmem:[%s846 + $0x10] sm:$0xff]
    %v850 = vld [vmem:[%s846 + $0x18] sm:$0xff]
    %v851 = vld [vmem:[%s4 + $0x3] sm:$0x1]
    %v852 = vlaneseq
    %v853 = vshrl.u32 %v852, 7
    %v854 = vsub.s32 0, %v853
    %v855 = vrot.slane %v851, %v854
    %856 = vmatprep.subr.mxu0 0.0
    %857 = vmatpush1.msra.mxu0 %v847
    %858 = vmatprep.subr.mxu0 0.0
    %859 = vmatpush1.msra.mxu0 %v848
    %860 = vmatprep.subr.mxu0 0.0
    %861 = vmatpush1.msra.mxu0 %v849
    %862 = vmatprep.subr.mxu0 0.0
    %863 = vmatpush1.msra.mxu0 %v850
    %864 = vmatprep.subr.mxu0 0.0
    %865 = vmatpush1.msra.mxu0 0.0
    %866 = vmatprep.subr.mxu0 0.0
    %867 = vmatpush1.msra.mxu0 0.0
    %868 = vmatprep.subr.mxu0 0.0
    %869 = vmatpush1.msra.mxu0 0.0
    %870 = vmatprep.subr.mxu0 0.0
    %871 = vmatpush1.msra.mxu0 0.0
    %872 = vmatprep.subr.mxu0 0.0
    %873 = vmatpush1.msra.mxu0 0.0
    %874 = vmatprep.subr.mxu0 0.0
    %875 = vmatpush1.msra.mxu0 0.0
    %876 = vmatprep.subr.mxu0 0.0
    %877 = vmatpush1.msra.mxu0 0.0
    %878 = vmatprep.subr.mxu0 0.0
    %879 = vmatpush1.msra.mxu0 0.0
    %880 = vmatprep.subr.mxu0 0.0
    %881 = vmatpush1.msra.mxu0 0.0
    %882 = vmatprep.subr.mxu0 0.0
    %883 = vmatpush1.msra.mxu0 0.0
    %884 = vmatprep.subr.mxu0 0.0
    %885 = vmatpush1.msra.mxu0 0.0
    %886 = vmatprep.subr.mxu0 0.0
    %887 = vmatpush1.msra.mxu0 0.0
    %888 = vmatprep.subr.mxu0 0.0
    %889 = vmatpush1.msra.mxu0 0.0
    %890 = vmatprep.subr.mxu0 0.0
    %891 = vmatpush1.msra.mxu0 0.0
    %892 = vmatprep.subr.mxu0 0.0
    %893 = vmatpush1.msra.mxu0 0.0
    %894 = vmatprep.subr.mxu0 0.0
    %895 = vmatpush1.msra.mxu0 0.0
    %896 = vmatprep.subr.mxu0 0.0
    %897 = vmatpush1.msra.mxu0 0.0
    %898 = vmatprep.subr.mxu0 0.0
    %899 = vmatpush1.msra.mxu0 0.0
    %900 = vmatprep.subr.mxu0 0.0
    %901 = vmatpush1.msra.mxu0 0.0
    %902 = vmatprep.subr.mxu0 0.0
    %903 = vmatpush1.msra.mxu0 0.0
    %904 = vmatprep.subr.mxu0 0.0
    %905 = vmatpush1.msra.mxu0 0.0
    %906 = vmatprep.subr.mxu0 0.0
    %907 = vmatpush1.msra.mxu0 0.0
    %908 = vmatprep.subr.mxu0 0.0
    %909 = vmatpush1.msra.mxu0 0.0
    %910 = vmatprep.subr.mxu0 0.0
    %911 = vmatpush1.msra.mxu0 0.0
    %912 = vmatprep.subr.mxu0 0.0
    %913 = vmatpush1.msra.mxu0 0.0
    %914 = vmatprep.subr.mxu0 0.0
    %915 = vmatpush1.msra.mxu0 0.0
    %916 = vmatprep.subr.mxu0 0.0
    %917 = vmatpush1.msra.mxu0 0.0
    %918 = vmatprep.subr.mxu0 0.0
    %919 = vmatpush1.msra.mxu0 0.0
    %920 = vmatprep.mubr.f32.mxu0 0.0
    %921 = vmatmul.mubr.f32.gmra.mrb[0].mxu0 %v88
    %v922 = vpop.f32.mrb[0].mxu0
    %v923 = vadd.f32 %v855, %v922
    %v924 = vpop.f32.mrb[0].mxu0
    %925 = vmatprep.mubr.f32.mxu0 0.0
    %926 = vmatmul.mubr.f32.gmra.mrb[0].mxu0 %v91
    %v927 = vpop.f32.mrb[0].mxu0
    %v928 = vadd.f32 %v855, %v927
    %v929 = vpop.f32.mrb[0].mxu0
    %930 = vdwg.mxu0
    %s931 = scalar_lea.vmem %s2, 96
    %v932 = vld [vmem:[%s931] sm:$0xff]
    %v933 = vld [vmem:[%s931 + $0x8] sm:$0xff]
    %v934 = vld [vmem:[%s931 + $0x10] sm:$0xff]
    %v935 = vld [vmem:[%s931 + $0x18] sm:$0xff]
    %v936 = vld [vmem:[%s5 + $0x3] sm:$0x1]
    %v937 = vlaneseq
    %v938 = vshrl.u32 %v937, 7
    %v939 = vsub.s32 0, %v938
    %v940 = vrot.slane %v936, %v939
    %941 = vmatprep.subr.mxu0 0.0
    %942 = vmatpush1.msra.mxu0 %v932
    %943 = vmatprep.subr.mxu0 0.0
    %944 = vmatpush1.msra.mxu0 %v933
    %945 = vmatprep.subr.mxu0 0.0
    %946 = vmatpush1.msra.mxu0 %v934
    %947 = vmatprep.subr.mxu0 0.0
    %948 = vmatpush1.msra.mxu0 %v935
    %949 = vmatprep.subr.mxu0 0.0
    %950 = vmatpush1.msra.mxu0 0.0
    %951 = vmatprep.subr.mxu0 0.0
    %952 = vmatpush1.msra.mxu0 0.0
    %953 = vmatprep.subr.mxu0 0.0
    %954 = vmatpush1.msra.mxu0 0.0
    %955 = vmatprep.subr.mxu0 0.0
    %956 = vmatpush1.msra.mxu0 0.0
    %957 = vmatprep.subr.mxu0 0.0
    %958 = vmatpush1.msra.mxu0 0.0
    %959 = vmatprep.subr.mxu0 0.0
    %960 = vmatpush1.msra.mxu0 0.0
    %961 = vmatprep.subr.mxu0 0.0
    %962 = vmatpush1.msra.mxu0 0.0
    %963 = vmatprep.subr.mxu0 0.0
    %964 = vmatpush1.msra.mxu0 0.0
    %965 = vmatprep.subr.mxu0 0.0
    %966 = vmatpush1.msra.mxu0 0.0
    %967 = vmatprep.subr.mxu0 0.0
    %968 = vmatpush1.msra.mxu0 0.0
    %969 = vmatprep.subr.mxu0 0.0
    %970 = vmatpush1.msra.mxu0 0.0
    %971 = vmatprep.subr.mxu0 0.0
    %972 = vmatpush1.msra.mxu0 0.0
    %973 = vmatprep.subr.mxu0 0.0
    %974 = vmatpush1.msra.mxu0 0.0
    %975 = vmatprep.subr.mxu0 0.0
    %976 = vmatpush1.msra.mxu0 0.0
    %977 = vmatprep.subr.mxu0 0.0
    %978 = vmatpush1.msra.mxu0 0.0
    %979 = vmatprep.subr.mxu0 0.0
    %980 = vmatpush1.msra.mxu0 0.0
    %981 = vmatprep.subr.mxu0 0.0
    %982 = vmatpush1.msra.mxu0 0.0
    %983 = vmatprep.subr.mxu0 0.0
    %984 = vmatpush1.msra.mxu0 0.0
    %985 = vmatprep.subr.mxu0 0.0
    %986 = vmatpush1.msra.mxu0 0.0
    %987 = vmatprep.subr.mxu0 0.0
    %988 = vmatpush1.msra.mxu0 0.0
    %989 = vmatprep.subr.mxu0 0.0
    %990 = vmatpush1.msra.mxu0 0.0
    %991 = vmatprep.subr.mxu0 0.0
    %992 = vmatpush1.msra.mxu0 0.0
    %993 = vmatprep.subr.mxu0 0.0
    %994 = vmatpush1.msra.mxu0 0.0
    %995 = vmatprep.subr.mxu0 0.0
    %996 = vmatpush1.msra.mxu0 0.0
    %997 = vmatprep.subr.mxu0 0.0
    %998 = vmatpush1.msra.mxu0 0.0
    %999 = vmatprep.subr.mxu0 0.0
    %1000 = vmatpush1.msra.mxu0 0.0
    %1001 = vmatprep.subr.mxu0 0.0
    %1002 = vmatpush1.msra.mxu0 0.0
    %1003 = vmatprep.subr.mxu0 0.0
    %1004 = vmatpush1.msra.mxu0 0.0
    %1005 = vmatprep.mubr.f32.mxu0 0.0
    %1006 = vmatmul.mubr.f32.gmra.mrb[0].mxu0 %v88
    %v1007 = vpop.f32.mrb[0].mxu0
    %v1008 = vadd.f32 %v940, %v1007
    %v1009 = vpop.f32.mrb[0].mxu0
    %1010 = vmatprep.mubr.f32.mxu0 0.0
    %1011 = vmatmul.mubr.f32.gmra.mrb[0].mxu0 %v91
    %v1012 = vpop.f32.mrb[0].mxu0
    %v1013 = vadd.f32 %v940, %v1012
    %v1014 = vpop.f32.mrb[0].mxu0
    %1015 = vdwg.mxu0
    %s1016 = scalar_lea.vmem %s3, 96
    %v1017 = vld [vmem:[%s1016] sm:$0xff]
    %v1018 = vld [vmem:[%s1016 + $0x8] sm:$0xff]
    %v1019 = vld [vmem:[%s1016 + $0x10] sm:$0xff]
    %v1020 = vld [vmem:[%s1016 + $0x18] sm:$0xff]
    %v1021 = vld [vmem:[%s6 + $0x3] sm:$0x1]
    %v1022 = vlaneseq
    %v1023 = vshrl.u32 %v1022, 7
    %v1024 = vsub.s32 0, %v1023
    %v1025 = vrot.slane %v1021, %v1024
    %1026 = vmatprep.subr.mxu0 0.0
    %1027 = vmatpush1.msra.mxu0 %v1017
    %1028 = vmatprep.subr.mxu0 0.0
    %1029 = vmatpush1.msra.mxu0 %v1018
    %1030 = vmatprep.subr.mxu0 0.0
    %1031 = vmatpush1.msra.mxu0 %v1019
    %1032 = vmatprep.subr.mxu0 0.0
    %1033 = vmatpush1.msra.mxu0 %v1020
    %1034 = vmatprep.subr.mxu0 0.0
    %1035 = vmatpush1.msra.mxu0 0.0
    %1036 = vmatprep.subr.mxu0 0.0
    %1037 = vmatpush1.msra.mxu0 0.0
    %1038 = vmatprep.subr.mxu0 0.0
    %1039 = vmatpush1.msra.mxu0 0.0
    %1040 = vmatprep.subr.mxu0 0.0
    %1041 = vmatpush1.msra.mxu0 0.0
    %1042 = vmatprep.subr.mxu0 0.0
    %1043 = vmatpush1.msra.mxu0 0.0
    %1044 = vmatprep.subr.mxu0 0.0
    %1045 = vmatpush1.msra.mxu0 0.0
    %1046 = vmatprep.subr.mxu0 0.0
    %1047 = vmatpush1.msra.mxu0 0.0
    %1048 = vmatprep.subr.mxu0 0.0
    %1049 = vmatpush1.msra.mxu0 0.0
    %1050 = vmatprep.subr.mxu0 0.0
    %1051 = vmatpush1.msra.mxu0 0.0
    %1052 = vmatprep.subr.mxu0 0.0
    %1053 = vmatpush1.msra.mxu0 0.0
    %1054 = vmatprep.subr.mxu0 0.0
    %1055 = vmatpush1.msra.mxu0 0.0
    %1056 = vmatprep.subr.mxu0 0.0
    %1057 = vmatpush1.msra.mxu0 0.0
    %1058 = vmatprep.subr.mxu0 0.0
    %1059 = vmatpush1.msra.mxu0 0.0
    %1060 = vmatprep.subr.mxu0 0.0
    %1061 = vmatpush1.msra.mxu0 0.0
    %1062 = vmatprep.subr.mxu0 0.0
    %1063 = vmatpush1.msra.mxu0 0.0
    %1064 = vmatprep.subr.mxu0 0.0
    %1065 = vmatpush1.msra.mxu0 0.0
    %1066 = vmatprep.subr.mxu0 0.0
    %1067 = vmatpush1.msra.mxu0 0.0
    %1068 = vmatprep.subr.mxu0 0.0
    %1069 = vmatpush1.msra.mxu0 0.0
    %1070 = vmatprep.subr.mxu0 0.0
    %1071 = vmatpush1.msra.mxu0 0.0
    %1072 = vmatprep.subr.mxu0 0.0
    %1073 = vmatpush1.msra.mxu0 0.0
    %1074 = vmatprep.subr.mxu0 0.0
    %1075 = vmatpush1.msra.mxu0 0.0
    %1076 = vmatprep.subr.mxu0 0.0
    %1077 = vmatpush1.msra.mxu0 0.0
    %1078 = vmatprep.subr.mxu0 0.0
    %1079 = vmatpush1.msra.mxu0 0.0
    %1080 = vmatprep.subr.mxu0 0.0
    %1081 = vmatpush1.msra.mxu0 0.0
    %1082 = vmatprep.subr.mxu0 0.0
    %1083 = vmatpush1.msra.mxu0 0.0
    %1084 = vmatprep.subr.mxu0 0.0
    %1085 = vmatpush1.msra.mxu0 0.0
    %1086 = vmatprep.subr.mxu0 0.0
    %1087 = vmatpush1.msra.mxu0 0.0
    %1088 = vmatprep.subr.mxu0 0.0
    %1089 = vmatpush1.msra.mxu0 0.0
    %1090 = vmatprep.mubr.f32.mxu0 0.0
    %1091 = vmatmul.mubr.f32.gmra.mrb[0].mxu0 %v88
    %v1092 = vpop.f32.mrb[0].mxu0
    %v1093 = vadd.f32 %v1025, %v1092
    %v1094 = vpop.f32.mrb[0].mxu0
    %1095 = vmatprep.mubr.f32.mxu0 0.0
    %1096 = vmatmul.mubr.f32.gmra.mrb[0].mxu0 %v91
    %v1097 = vpop.f32.mrb[0].mxu0
    %v1098 = vadd.f32 %v1025, %v1097
    %v1099 = vpop.f32.mrb[0].mxu0
    %1100 = vdwg.mxu0
    %vm1101 = vcmask 64512
    %v1103 = vsel %vm1101, %v160, 0
    %v1106 = vsel %vm1101, %v244, 0
    %1108 = vmatprep.subr.mxu0 0.0
    %1109 = vmatpush1.xpose.msra.mxu0 %v1106
    %1110 = vmatprep.subr.mxu0 0.0
    %1111 = vmatpush1.xpose.msra.mxu0 0.0
    %1112 = vmatprep.subr.mxu0 0.0
    %1113 = vmatpush1.xpose.msra.mxu0 0.0
    %1114 = vmatprep.subr.mxu0 0.0
    %1115 = vmatpush1.xpose.msra.mxu0 0.0
    %1116 = vmatprep.subr.mxu0 0.0
    %1117 = vmatpush1.xpose.msra.mxu0 0.0
    %1118 = vmatprep.subr.mxu0 0.0
    %1119 = vmatpush1.xpose.msra.mxu0 0.0
    %1120 = vmatprep.subr.mxu0 0.0
    %1121 = vmatpush1.xpose.msra.mxu0 0.0
    %1122 = vmatprep.subr.mxu0 0.0
    %1123 = vmatpush1.xpose.msra.mxu0 0.0
    %1124 = vmatprep.subr.mxu0 0.0
    %1125 = vmatpush1.xpose.msra.mxu0 0.0
    %1126 = vmatprep.subr.mxu0 0.0
    %1127 = vmatpush1.xpose.msra.mxu0 0.0
    %1128 = vmatprep.subr.mxu0 0.0
    %1129 = vmatpush1.xpose.msra.mxu0 0.0
    %1130 = vmatprep.subr.mxu0 0.0
    %1131 = vmatpush1.xpose.msra.mxu0 0.0
    %1132 = vmatprep.subr.mxu0 0.0
    %1133 = vmatpush1.xpose.msra.mxu0 0.0
    %1134 = vmatprep.subr.mxu0 0.0
    %1135 = vmatpush1.xpose.msra.mxu0 0.0
    %1136 = vmatprep.subr.mxu0 0.0
    %1137 = vmatpush1.xpose.msra.mxu0 0.0
    %1138 = vmatprep.subr.mxu0 0.0
    %1139 = vmatpush1.xpose.msra.mxu0 0.0
    %1140 = vmatprep.subr.mxu0 0.0
    %1141 = vmatpush1.xpose.msra.mxu0 0.0
    %1142 = vmatprep.subr.mxu0 0.0
    %1143 = vmatpush1.xpose.msra.mxu0 0.0
    %1144 = vmatprep.subr.mxu0 0.0
    %1145 = vmatpush1.xpose.msra.mxu0 0.0
    %1146 = vmatprep.subr.mxu0 0.0
    %1147 = vmatpush1.xpose.msra.mxu0 0.0
    %1148 = vmatprep.subr.mxu0 0.0
    %1149 = vmatpush1.xpose.msra.mxu0 0.0
    %1150 = vmatprep.subr.mxu0 0.0
    %1151 = vmatpush1.xpose.msra.mxu0 0.0
    %1152 = vmatprep.subr.mxu0 0.0
    %1153 = vmatpush1.xpose.msra.mxu0 0.0
    %1154 = vmatprep.subr.mxu0 0.0
    %1155 = vmatpush1.xpose.msra.mxu0 0.0
    %1156 = vmatprep.subr.mxu0 0.0
    %1157 = vmatpush1.xpose.msra.mxu0 0.0
    %1158 = vmatprep.subr.mxu0 0.0
    %1159 = vmatpush1.xpose.msra.mxu0 0.0
    %1160 = vmatprep.subr.mxu0 0.0
    %1161 = vmatpush1.xpose.msra.mxu0 0.0
    %1162 = vmatprep.subr.mxu0 0.0
    %1163 = vmatpush1.xpose.msra.mxu0 0.0
    %1164 = vmatprep.subr.mxu0 0.0
    %1165 = vmatpush1.xpose.msra.mxu0 0.0
    %1166 = vmatprep.subr.mxu0 0.0
    %1167 = vmatpush1.xpose.msra.mxu0 0.0
    %1168 = vmatprep.subr.mxu0 0.0
    %1169 = vmatpush1.xpose.msra.mxu0 0.0
    %1170 = vmatprep.subr.mxu0 0.0
    %1171 = vmatpush1.xpose.msra.mxu0 0.0
    %1172 = vmatprep.mubr.f32.mxu0 0.0
    %1173 = vmatmul.mubr.f32.gmra.mrb[0].mxu0 %v1103
    %v1174 = vpop.f32.mrb[0].mxu0
    %v1175 = vadd.f32 0.0, %v1174
    %v1176 = vpop.f32.mrb[0].mxu0
    %1177 = vdwg.mxu0
    %v1178 = vsel %vm1101, %v1175, -inf
    %1179 = vmax.xlane.f32.xlu0 %v1178
    %v1180 = vpop.xlane.xlu0 %1179
    %v1181 = vsub.f32 %v1175, %v1180
    %v1182 = vmul.f32 %v1181, 1.442695
    %v1183 = vpow.pop %v1182
    %v1184 = vsel %vm1101, %v1183, 0.0
    %1185 = vadd.xlane.f32.xlu0 %v1184
    %v1186 = vpop.xlane.xlu0 %1185
    %v1187 = vrcp.pop %v1186
    %v1188 = vmul.f32 %v1183, %v1187
    %v1190 = vsel %vm1101, %v1188, 0
    %1192 = vmatprep.subr.mxu0 0.0
    %1193 = vmatpush1.msra.mxu0 %v328
    %1194 = vmatprep.subr.mxu0 0.0
    %1195 = vmatpush1.msra.mxu0 0.0
    %1196 = vmatprep.subr.mxu0 0.0
    %1197 = vmatpush1.msra.mxu0 0.0
    %1198 = vmatprep.subr.mxu0 0.0
    %1199 = vmatpush1.msra.mxu0 0.0
    %1200 = vmatprep.subr.mxu0 0.0
    %1201 = vmatpush1.msra.mxu0 0.0
    %1202 = vmatprep.subr.mxu0 0.0
    %1203 = vmatpush1.msra.mxu0 0.0
    %1204 = vmatprep.subr.mxu0 0.0
    %1205 = vmatpush1.msra.mxu0 0.0
    %1206 = vmatprep.subr.mxu0 0.0
    %1207 = vmatpush1.msra.mxu0 0.0
    %1208 = vmatprep.subr.mxu0 0.0
    %1209 = vmatpush1.msra.mxu0 0.0
    %1210 = vmatprep.subr.mxu0 0.0
    %1211 = vmatpush1.msra.mxu0 0.0
    %1212 = vmatprep.subr.mxu0 0.0
    %1213 = vmatpush1.msra.mxu0 0.0
    %1214 = vmatprep.subr.mxu0 0.0
    %1215 = vmatpush1.msra.mxu0 0.0
    %1216 = vmatprep.subr.mxu0 0.0
    %1217 = vmatpush1.msra.mxu0 0.0
    %1218 = vmatprep.subr.mxu0 0.0
    %1219 = vmatpush1.msra.mxu0 0.0
    %1220 = vmatprep.subr.mxu0 0.0
    %1221 = vmatpush1.msra.mxu0 0.0
    %1222 = vmatprep.subr.mxu0 0.0
    %1223 = vmatpush1.msra.mxu0 0.0
    %1224 = vmatprep.subr.mxu0 0.0
    %1225 = vmatpush1.msra.mxu0 0.0
    %1226 = vmatprep.subr.mxu0 0.0
    %1227 = vmatpush1.msra.mxu0 0.0
    %1228 = vmatprep.subr.mxu0 0.0
    %1229 = vmatpush1.msra.mxu0 0.0
    %1230 = vmatprep.subr.mxu0 0.0
    %1231 = vmatpush1.msra.mxu0 0.0
    %1232 = vmatprep.subr.mxu0 0.0
    %1233 = vmatpush1.msra.mxu0 0.0
    %1234 = vmatprep.subr.mxu0 0.0
    %1235 = vmatpush1.msra.mxu0 0.0
    %1236 = vmatprep.subr.mxu0 0.0
    %1237 = vmatpush1.msra.mxu0 0.0
    %1238 = vmatprep.subr.mxu0 0.0
    %1239 = vmatpush1.msra.mxu0 0.0
    %1240 = vmatprep.subr.mxu0 0.0
    %1241 = vmatpush1.msra.mxu0 0.0
    %1242 = vmatprep.subr.mxu0 0.0
    %1243 = vmatpush1.msra.mxu0 0.0
    %1244 = vmatprep.subr.mxu0 0.0
    %1245 = vmatpush1.msra.mxu0 0.0
    %1246 = vmatprep.subr.mxu0 0.0
    %1247 = vmatpush1.msra.mxu0 0.0
    %1248 = vmatprep.subr.mxu0 0.0
    %1249 = vmatpush1.msra.mxu0 0.0
    %1250 = vmatprep.subr.mxu0 0.0
    %1251 = vmatpush1.msra.mxu0 0.0
    %1252 = vmatprep.subr.mxu0 0.0
    %1253 = vmatpush1.msra.mxu0 0.0
    %1254 = vmatprep.subr.mxu0 0.0
    %1255 = vmatpush1.msra.mxu0 0.0
    %1256 = vmatprep.mubr.f32.mxu0 0.0
    %1257 = vmatmul.mubr.f32.gmra.mrb[0].mxu0 %v1190
    %v1258 = vpop.f32.mrb[0].mxu0
    %v1259 = vadd.f32 0.0, %v1258
    %v1260 = vpop.f32.mrb[0].mxu0
    %1261 = vdwg.mxu0
    %v1262 = vld [vmem:[%s7] sm:$0xff]
    %v1264 = vsel %vm1101, %v413, 0
    %v1267 = vsel %vm1101, %v498, 0
    %1269 = vmatprep.subr.mxu0 0.0
    %1270 = vmatpush1.xpose.msra.mxu0 %v1267
    %1271 = vmatprep.subr.mxu0 0.0
    %1272 = vmatpush1.xpose.msra.mxu0 0.0
    %1273 = vmatprep.subr.mxu0 0.0
    %1274 = vmatpush1.xpose.msra.mxu0 0.0
    %1275 = vmatprep.subr.mxu0 0.0
    %1276 = vmatpush1.xpose.msra.mxu0 0.0
    %1277 = vmatprep.subr.mxu0 0.0
    %1278 = vmatpush1.xpose.msra.mxu0 0.0
    %1279 = vmatprep.subr.mxu0 0.0
    %1280 = vmatpush1.xpose.msra.mxu0 0.0
    %1281 = vmatprep.subr.mxu0 0.0
    %1282 = vmatpush1.xpose.msra.mxu0 0.0
    %1283 = vmatprep.subr.mxu0 0.0
    %1284 = vmatpush1.xpose.msra.mxu0 0.0
    %1285 = vmatprep.subr.mxu0 0.0
    %1286 = vmatpush1.xpose.msra.mxu0 0.0
    %1287 = vmatprep.subr.mxu0 0.0
    %1288 = vmatpush1.xpose.msra.mxu0 0.0
    %1289 = vmatprep.subr.mxu0 0.0
    %1290 = vmatpush1.xpose.msra.mxu0 0.0
    %1291 = vmatprep.subr.mxu0 0.0
    %1292 = vmatpush1.xpose.msra.mxu0 0.0
    %1293 = vmatprep.subr.mxu0 0.0
    %1294 = vmatpush1.xpose.msra.mxu0 0.0
    %1295 = vmatprep.subr.mxu0 0.0
    %1296 = vmatpush1.xpose.msra.mxu0 0.0
    %1297 = vmatprep.subr.mxu0 0.0
    %1298 = vmatpush1.xpose.msra.mxu0 0.0
    %1299 = vmatprep.subr.mxu0 0.0
    %1300 = vmatpush1.xpose.msra.mxu0 0.0
    %1301 = vmatprep.subr.mxu0 0.0
    %1302 = vmatpush1.xpose.msra.mxu0 0.0
    %1303 = vmatprep.subr.mxu0 0.0
    %1304 = vmatpush1.xpose.msra.mxu0 0.0
    %1305 = vmatprep.subr.mxu0 0.0
    %1306 = vmatpush1.xpose.msra.mxu0 0.0
    %1307 = vmatprep.subr.mxu0 0.0
    %1308 = vmatpush1.xpose.msra.mxu0 0.0
    %1309 = vmatprep.subr.mxu0 0.0
    %1310 = vmatpush1.xpose.msra.mxu0 0.0
    %1311 = vmatprep.subr.mxu0 0.0
    %1312 = vmatpush1.xpose.msra.mxu0 0.0
    %1313 = vmatprep.subr.mxu0 0.0
    %1314 = vmatpush1.xpose.msra.mxu0 0.0
    %1315 = vmatprep.subr.mxu0 0.0
    %1316 = vmatpush1.xpose.msra.mxu0 0.0
    %1317 = vmatprep.subr.mxu0 0.0
    %1318 = vmatpush1.xpose.msra.mxu0 0.0
    %1319 = vmatprep.subr.mxu0 0.0
    %1320 = vmatpush1.xpose.msra.mxu0 0.0
    %1321 = vmatprep.subr.mxu0 0.0
    %1322 = vmatpush1.xpose.msra.mxu0 0.0
    %1323 = vmatprep.subr.mxu0 0.0
    %1324 = vmatpush1.xpose.msra.mxu0 0.0
    %1325 = vmatprep.subr.mxu0 0.0
    %1326 = vmatpush1.xpose.msra.mxu0 0.0
    %1327 = vmatprep.subr.mxu0 0.0
    %1328 = vmatpush1.xpose.msra.mxu0 0.0
    %1329 = vmatprep.subr.mxu0 0.0
    %1330 = vmatpush1.xpose.msra.mxu0 0.0
    %1331 = vmatprep.subr.mxu0 0.0
    %1332 = vmatpush1.xpose.msra.mxu0 0.0
    %1333 = vmatprep.mubr.f32.mxu0 0.0
    %1334 = vmatmul.mubr.f32.gmra.mrb[0].mxu0 %v1264
    %v1335 = vpop.f32.mrb[0].mxu0
    %v1336 = vadd.f32 0.0, %v1335
    %v1337 = vpop.f32.mrb[0].mxu0
    %1338 = vdwg.mxu0
    %v1339 = vsel %vm1101, %v1336, -inf
    %1340 = vmax.xlane.f32.xlu0 %v1339
    %v1341 = vpop.xlane.xlu0 %1340
    %v1342 = vsub.f32 %v1336, %v1341
    %v1343 = vmul.f32 %v1342, 1.442695
    %v1344 = vpow.pop %v1343
    %v1345 = vsel %vm1101, %v1344, 0.0
    %1346 = vadd.xlane.f32.xlu0 %v1345
    %v1347 = vpop.xlane.xlu0 %1346
    %v1348 = vrcp.pop %v1347
    %v1349 = vmul.f32 %v1344, %v1348
    %v1351 = vsel %vm1101, %v1349, 0
    %1353 = vmatprep.subr.mxu0 0.0
    %1354 = vmatpush1.msra.mxu0 %v583
    %1355 = vmatprep.subr.mxu0 0.0
    %1356 = vmatpush1.msra.mxu0 0.0
    %1357 = vmatprep.subr.mxu0 0.0
    %1358 = vmatpush1.msra.mxu0 0.0
    %1359 = vmatprep.subr.mxu0 0.0
    %1360 = vmatpush1.msra.mxu0 0.0
    %1361 = vmatprep.subr.mxu0 0.0
    %1362 = vmatpush1.msra.mxu0 0.0
    %1363 = vmatprep.subr.mxu0 0.0
    %1364 = vmatpush1.msra.mxu0 0.0
    %1365 = vmatprep.subr.mxu0 0.0
    %1366 = vmatpush1.msra.mxu0 0.0
    %1367 = vmatprep.subr.mxu0 0.0
    %1368 = vmatpush1.msra.mxu0 0.0
    %1369 = vmatprep.subr.mxu0 0.0
    %1370 = vmatpush1.msra.mxu0 0.0
    %1371 = vmatprep.subr.mxu0 0.0
    %1372 = vmatpush1.msra.mxu0 0.0
    %1373 = vmatprep.subr.mxu0 0.0
    %1374 = vmatpush1.msra.mxu0 0.0
    %1375 = vmatprep.subr.mxu0 0.0
    %1376 = vmatpush1.msra.mxu0 0.0
    %1377 = vmatprep.subr.mxu0 0.0
    %1378 = vmatpush1.msra.mxu0 0.0
    %1379 = vmatprep.subr.mxu0 0.0
    %1380 = vmatpush1.msra.mxu0 0.0
    %1381 = vmatprep.subr.mxu0 0.0
    %1382 = vmatpush1.msra.mxu0 0.0
    %1383 = vmatprep.subr.mxu0 0.0
    %1384 = vmatpush1.msra.mxu0 0.0
    %1385 = vmatprep.subr.mxu0 0.0
    %1386 = vmatpush1.msra.mxu0 0.0
    %1387 = vmatprep.subr.mxu0 0.0
    %1388 = vmatpush1.msra.mxu0 0.0
    %1389 = vmatprep.subr.mxu0 0.0
    %1390 = vmatpush1.msra.mxu0 0.0
    %1391 = vmatprep.subr.mxu0 0.0
    %1392 = vmatpush1.msra.mxu0 0.0
    %1393 = vmatprep.subr.mxu0 0.0
    %1394 = vmatpush1.msra.mxu0 0.0
    %1395 = vmatprep.subr.mxu0 0.0
    %1396 = vmatpush1.msra.mxu0 0.0
    %1397 = vmatprep.subr.mxu0 0.0
    %1398 = vmatpush1.msra.mxu0 0.0
    %1399 = vmatprep.subr.mxu0 0.0
    %1400 = vmatpush1.msra.mxu0 0.0
    %1401 = vmatprep.subr.mxu0 0.0
    %1402 = vmatpush1.msra.mxu0 0.0
    %1403 = vmatprep.subr.mxu0 0.0
    %1404 = vmatpush1.msra.mxu0 0.0
    %1405 = vmatprep.subr.mxu0 0.0
    %1406 = vmatpush1.msra.mxu0 0.0
    %1407 = vmatprep.subr.mxu0 0.0
    %1408 = vmatpush1.msra.mxu0 0.0
    %1409 = vmatprep.subr.mxu0 0.0
    %1410 = vmatpush1.msra.mxu0 0.0
    %1411 = vmatprep.subr.mxu0 0.0
    %1412 = vmatpush1.msra.mxu0 0.0
    %1413 = vmatprep.subr.mxu0 0.0
    %1414 = vmatpush1.msra.mxu0 0.0
    %1415 = vmatprep.subr.mxu0 0.0
    %1416 = vmatpush1.msra.mxu0 0.0
    %1417 = vmatprep.mubr.f32.mxu0 0.0
    %1418 = vmatmul.mubr.f32.gmra.mrb[0].mxu0 %v1351
    %v1419 = vpop.f32.mrb[0].mxu0
    %v1420 = vadd.f32 0.0, %v1419
    %v1421 = vpop.f32.mrb[0].mxu0
    %1422 = vdwg.mxu0
    %s1423 = scalar_lea.vmem %s7, 8
    %v1424 = vld [vmem:[%s1423] sm:$0xff]
    %v1426 = vsel %vm1101, %v1420, 0
    %1428 = vmatprep.subr.mxu0 0.0
    %1429 = vmatpush1.msra.mxu0 %v1424
    %1430 = vmatprep.subr.mxu0 0.0
    %1431 = vmatpush1.msra.mxu0 0.0
    %1432 = vmatprep.subr.mxu0 0.0
    %1433 = vmatpush1.msra.mxu0 0.0
    %1434 = vmatprep.subr.mxu0 0.0
    %1435 = vmatpush1.msra.mxu0 0.0
    %1436 = vmatprep.subr.mxu0 0.0
    %1437 = vmatpush1.msra.mxu0 0.0
    %1438 = vmatprep.subr.mxu0 0.0
    %1439 = vmatpush1.msra.mxu0 0.0
    %1440 = vmatprep.subr.mxu0 0.0
    %1441 = vmatpush1.msra.mxu0 0.0
    %1442 = vmatprep.subr.mxu0 0.0
    %1443 = vmatpush1.msra.mxu0 0.0
    %1444 = vmatprep.subr.mxu0 0.0
    %1445 = vmatpush1.msra.mxu0 0.0
    %1446 = vmatprep.subr.mxu0 0.0
    %1447 = vmatpush1.msra.mxu0 0.0
    %1448 = vmatprep.subr.mxu0 0.0
    %1449 = vmatpush1.msra.mxu0 0.0
    %1450 = vmatprep.subr.mxu0 0.0
    %1451 = vmatpush1.msra.mxu0 0.0
    %1452 = vmatprep.subr.mxu0 0.0
    %1453 = vmatpush1.msra.mxu0 0.0
    %1454 = vmatprep.subr.mxu0 0.0
    %1455 = vmatpush1.msra.mxu0 0.0
    %1456 = vmatprep.subr.mxu0 0.0
    %1457 = vmatpush1.msra.mxu0 0.0
    %1458 = vmatprep.subr.mxu0 0.0
    %1459 = vmatpush1.msra.mxu0 0.0
    %1460 = vmatprep.subr.mxu0 0.0
    %1461 = vmatpush1.msra.mxu0 0.0
    %1462 = vmatprep.subr.mxu0 0.0
    %1463 = vmatpush1.msra.mxu0 0.0
    %1464 = vmatprep.subr.mxu0 0.0
    %1465 = vmatpush1.msra.mxu0 0.0
    %1466 = vmatprep.subr.mxu0 0.0
    %1467 = vmatpush1.msra.mxu0 0.0
    %1468 = vmatprep.subr.mxu0 0.0
    %1469 = vmatpush1.msra.mxu0 0.0
    %1470 = vmatprep.subr.mxu0 0.0
    %1471 = vmatpush1.msra.mxu0 0.0
    %1472 = vmatprep.subr.mxu0 0.0
    %1473 = vmatpush1.msra.mxu0 0.0
    %1474 = vmatprep.subr.mxu0 0.0
    %1475 = vmatpush1.msra.mxu0 0.0
    %1476 = vmatprep.subr.mxu0 0.0
    %1477 = vmatpush1.msra.mxu0 0.0
    %1478 = vmatprep.subr.mxu0 0.0
    %1479 = vmatpush1.msra.mxu0 0.0
    %1480 = vmatprep.subr.mxu0 0.0
    %1481 = vmatpush1.msra.mxu0 0.0
    %1482 = vmatprep.subr.mxu0 0.0
    %1483 = vmatpush1.msra.mxu0 0.0
    %1484 = vmatprep.subr.mxu0 0.0
    %1485 = vmatpush1.msra.mxu0 0.0
    %1486 = vmatprep.subr.mxu0 0.0
    %1487 = vmatpush1.msra.mxu0 0.0
    %1488 = vmatprep.subr.mxu0 0.0
    %1489 = vmatpush1.msra.mxu0 0.0
    %1490 = vmatprep.subr.mxu0 0.0
    %1491 = vmatpush1.msra.mxu0 0.0
    %1492 = vmatprep.mubr.f32.mxu0 0.0
    %1493 = vmatmul.mubr.f32.gmra.mrb[0].mxu0 %v1426
    %v1494 = vpop.f32.mrb[0].mxu0
    %v1495 = vadd.f32 0.0, %v1494
    %v1496 = vpop.f32.mrb[0].mxu0
    %1497 = vdwg.mxu0
    %v1499 = vsel %vm1101, %v1259, 0
    %1501 = vmatprep.subr.mxu0 0.0
    %1502 = vmatpush1.msra.mxu0 %v1262
    %1503 = vmatprep.subr.mxu0 0.0
    %1504 = vmatpush1.msra.mxu0 0.0
    %1505 = vmatprep.subr.mxu0 0.0
    %1506 = vmatpush1.msra.mxu0 0.0
    %1507 = vmatprep.subr.mxu0 0.0
    %1508 = vmatpush1.msra.mxu0 0.0
    %1509 = vmatprep.subr.mxu0 0.0
    %1510 = vmatpush1.msra.mxu0 0.0
    %1511 = vmatprep.subr.mxu0 0.0
    %1512 = vmatpush1.msra.mxu0 0.0
    %1513 = vmatprep.subr.mxu0 0.0
    %1514 = vmatpush1.msra.mxu0 0.0
    %1515 = vmatprep.subr.mxu0 0.0
    %1516 = vmatpush1.msra.mxu0 0.0
    %1517 = vmatprep.subr.mxu0 0.0
    %1518 = vmatpush1.msra.mxu0 0.0
    %1519 = vmatprep.subr.mxu0 0.0
    %1520 = vmatpush1.msra.mxu0 0.0
    %1521 = vmatprep.subr.mxu0 0.0
    %1522 = vmatpush1.msra.mxu0 0.0
    %1523 = vmatprep.subr.mxu0 0.0
    %1524 = vmatpush1.msra.mxu0 0.0
    %1525 = vmatprep.subr.mxu0 0.0
    %1526 = vmatpush1.msra.mxu0 0.0
    %1527 = vmatprep.subr.mxu0 0.0
    %1528 = vmatpush1.msra.mxu0 0.0
    %1529 = vmatprep.subr.mxu0 0.0
    %1530 = vmatpush1.msra.mxu0 0.0
    %1531 = vmatprep.subr.mxu0 0.0
    %1532 = vmatpush1.msra.mxu0 0.0
    %1533 = vmatprep.subr.mxu0 0.0
    %1534 = vmatpush1.msra.mxu0 0.0
    %1535 = vmatprep.subr.mxu0 0.0
    %1536 = vmatpush1.msra.mxu0 0.0
    %1537 = vmatprep.subr.mxu0 0.0
    %1538 = vmatpush1.msra.mxu0 0.0
    %1539 = vmatprep.subr.mxu0 0.0
    %1540 = vmatpush1.msra.mxu0 0.0
    %1541 = vmatprep.subr.mxu0 0.0
    %1542 = vmatpush1.msra.mxu0 0.0
    %1543 = vmatprep.subr.mxu0 0.0
    %1544 = vmatpush1.msra.mxu0 0.0
    %1545 = vmatprep.subr.mxu0 0.0
    %1546 = vmatpush1.msra.mxu0 0.0
    %1547 = vmatprep.subr.mxu0 0.0
    %1548 = vmatpush1.msra.mxu0 0.0
    %1549 = vmatprep.subr.mxu0 0.0
    %1550 = vmatpush1.msra.mxu0 0.0
    %1551 = vmatprep.subr.mxu0 0.0
    %1552 = vmatpush1.msra.mxu0 0.0
    %1553 = vmatprep.subr.mxu0 0.0
    %1554 = vmatpush1.msra.mxu0 0.0
    %1555 = vmatprep.subr.mxu0 0.0
    %1556 = vmatpush1.msra.mxu0 0.0
    %1557 = vmatprep.subr.mxu0 0.0
    %1558 = vmatpush1.msra.mxu0 0.0
    %1559 = vmatprep.subr.mxu0 0.0
    %1560 = vmatpush1.msra.mxu0 0.0
    %1561 = vmatprep.subr.mxu0 0.0
    %1562 = vmatpush1.msra.mxu0 0.0
    %1563 = vmatprep.subr.mxu0 0.0
    %1564 = vmatpush1.msra.mxu0 0.0
    %1565 = vmatprep.mubr.f32.mxu0 0.0
    %1566 = vmatmul.mubr.f32.gmra.mrb[0].mxu0 %v1499
    %v1567 = vpop.f32.mrb[0].mxu0
    %v1568 = vadd.f32 %v1495, %v1567
    %v1569 = vpop.f32.mrb[0].mxu0
    %1570 = vdwg.mxu0
    %v1572 = vsel %vm1101, %v668, 0
    %v1575 = vsel %vm1101, %v753, 0
    %1577 = vmatprep.subr.mxu0 0.0
    %1578 = vmatpush1.xpose.msra.mxu0 %v1575
    %1579 = vmatprep.subr.mxu0 0.0
    %1580 = vmatpush1.xpose.msra.mxu0 0.0
    %1581 = vmatprep.subr.mxu0 0.0
    %1582 = vmatpush1.xpose.msra.mxu0 0.0
    %1583 = vmatprep.subr.mxu0 0.0
    %1584 = vmatpush1.xpose.msra.mxu0 0.0
    %1585 = vmatprep.subr.mxu0 0.0
    %1586 = vmatpush1.xpose.msra.mxu0 0.0
    %1587 = vmatprep.subr.mxu0 0.0
    %1588 = vmatpush1.xpose.msra.mxu0 0.0
    %1589 = vmatprep.subr.mxu0 0.0
    %1590 = vmatpush1.xpose.msra.mxu0 0.0
    %1591 = vmatprep.subr.mxu0 0.0
    %1592 = vmatpush1.xpose.msra.mxu0 0.0
    %1593 = vmatprep.subr.mxu0 0.0
    %1594 = vmatpush1.xpose.msra.mxu0 0.0
    %1595 = vmatprep.subr.mxu0 0.0
    %1596 = vmatpush1.xpose.msra.mxu0 0.0
    %1597 = vmatprep.subr.mxu0 0.0
    %1598 = vmatpush1.xpose.msra.mxu0 0.0
    %1599 = vmatprep.subr.mxu0 0.0
    %1600 = vmatpush1.xpose.msra.mxu0 0.0
    %1601 = vmatprep.subr.mxu0 0.0
    %1602 = vmatpush1.xpose.msra.mxu0 0.0
    %1603 = vmatprep.subr.mxu0 0.0
    %1604 = vmatpush1.xpose.msra.mxu0 0.0
    %1605 = vmatprep.subr.mxu0 0.0
    %1606 = vmatpush1.xpose.msra.mxu0 0.0
    %1607 = vmatprep.subr.mxu0 0.0
    %1608 = vmatpush1.xpose.msra.mxu0 0.0
    %1609 = vmatprep.subr.mxu0 0.0
    %1610 = vmatpush1.xpose.msra.mxu0 0.0
    %1611 = vmatprep.subr.mxu0 0.0
    %1612 = vmatpush1.xpose.msra.mxu0 0.0
    %1613 = vmatprep.subr.mxu0 0.0
    %1614 = vmatpush1.xpose.msra.mxu0 0.0
    %1615 = vmatprep.subr.mxu0 0.0
    %1616 = vmatpush1.xpose.msra.mxu0 0.0
    %1617 = vmatprep.subr.mxu0 0.0
    %1618 = vmatpush1.xpose.msra.mxu0 0.0
    %1619 = vmatprep.subr.mxu0 0.0
    %1620 = vmatpush1.xpose.msra.mxu0 0.0
    %1621 = vmatprep.subr.mxu0 0.0
    %1622 = vmatpush1.xpose.msra.mxu0 0.0
    %1623 = vmatprep.subr.mxu0 0.0
    %1624 = vmatpush1.xpose.msra.mxu0 0.0
    %1625 = vmatprep.subr.mxu0 0.0
    %1626 = vmatpush1.xpose.msra.mxu0 0.0
    %1627 = vmatprep.subr.mxu0 0.0
    %1628 = vmatpush1.xpose.msra.mxu0 0.0
    %1629 = vmatprep.subr.mxu0 0.0
    %1630 = vmatpush1.xpose.msra.mxu0 0.0
    %1631 = vmatprep.subr.mxu0 0.0
    %1632 = vmatpush1.xpose.msra.mxu0 0.0
    %1633 = vmatprep.subr.mxu0 0.0
    %1634 = vmatpush1.xpose.msra.mxu0 0.0
    %1635 = vmatprep.subr.mxu0 0.0
    %1636 = vmatpush1.xpose.msra.mxu0 0.0
    %1637 = vmatprep.subr.mxu0 0.0
    %1638 = vmatpush1.xpose.msra.mxu0 0.0
    %1639 = vmatprep.subr.mxu0 0.0
    %1640 = vmatpush1.xpose.msra.mxu0 0.0
    %1641 = vmatprep.mubr.f32.mxu0 0.0
    %1642 = vmatmul.mubr.f32.gmra.mrb[0].mxu0 %v1572
    %v1643 = vpop.f32.mrb[0].mxu0
    %v1644 = vadd.f32 0.0, %v1643
    %v1645 = vpop.f32.mrb[0].mxu0
    %1646 = vdwg.mxu0
    %v1647 = vsel %vm1101, %v1644, -inf
    %1648 = vmax.xlane.f32.xlu0 %v1647
    %v1649 = vpop.xlane.xlu0 %1648
    %v1650 = vsub.f32 %v1644, %v1649
    %v1651 = vmul.f32 %v1650, 1.442695
    %v1652 = vpow.pop %v1651
    %v1653 = vsel %vm1101, %v1652, 0.0
    %1654 = vadd.xlane.f32.xlu0 %v1653
    %v1655 = vpop.xlane.xlu0 %1654
    %v1656 = vrcp.pop %v1655
    %v1657 = vmul.f32 %v1652, %v1656
    %v1659 = vsel %vm1101, %v1657, 0
    %1661 = vmatprep.subr.mxu0 0.0
    %1662 = vmatpush1.msra.mxu0 %v838
    %1663 = vmatprep.subr.mxu0 0.0
    %1664 = vmatpush1.msra.mxu0 0.0
    %1665 = vmatprep.subr.mxu0 0.0
    %1666 = vmatpush1.msra.mxu0 0.0
    %1667 = vmatprep.subr.mxu0 0.0
    %1668 = vmatpush1.msra.mxu0 0.0
    %1669 = vmatprep.subr.mxu0 0.0
    %1670 = vmatpush1.msra.mxu0 0.0
    %1671 = vmatprep.subr.mxu0 0.0
    %1672 = vmatpush1.msra.mxu0 0.0
    %1673 = vmatprep.subr.mxu0 0.0
    %1674 = vmatpush1.msra.mxu0 0.0
    %1675 = vmatprep.subr.mxu0 0.0
    %1676 = vmatpush1.msra.mxu0 0.0
    %1677 = vmatprep.subr.mxu0 0.0
    %1678 = vmatpush1.msra.mxu0 0.0
    %1679 = vmatprep.subr.mxu0 0.0
    %1680 = vmatpush1.msra.mxu0 0.0
    %1681 = vmatprep.subr.mxu0 0.0
    %1682 = vmatpush1.msra.mxu0 0.0
    %1683 = vmatprep.subr.mxu0 0.0
    %1684 = vmatpush1.msra.mxu0 0.0
    %1685 = vmatprep.subr.mxu0 0.0
    %1686 = vmatpush1.msra.mxu0 0.0
    %1687 = vmatprep.subr.mxu0 0.0
    %1688 = vmatpush1.msra.mxu0 0.0
    %1689 = vmatprep.subr.mxu0 0.0
    %1690 = vmatpush1.msra.mxu0 0.0
    %1691 = vmatprep.subr.mxu0 0.0
    %1692 = vmatpush1.msra.mxu0 0.0
    %1693 = vmatprep.subr.mxu0 0.0
    %1694 = vmatpush1.msra.mxu0 0.0
    %1695 = vmatprep.subr.mxu0 0.0
    %1696 = vmatpush1.msra.mxu0 0.0
    %1697 = vmatprep.subr.mxu0 0.0
    %1698 = vmatpush1.msra.mxu0 0.0
    %1699 = vmatprep.subr.mxu0 0.0
    %1700 = vmatpush1.msra.mxu0 0.0
    %1701 = vmatprep.subr.mxu0 0.0
    %1702 = vmatpush1.msra.mxu0 0.0
    %1703 = vmatprep.subr.mxu0 0.0
    %1704 = vmatpush1.msra.mxu0 0.0
    %1705 = vmatprep.subr.mxu0 0.0
    %1706 = vmatpush1.msra.mxu0 0.0
    %1707 = vmatprep.subr.mxu0 0.0
    %1708 = vmatpush1.msra.mxu0 0.0
    %1709 = vmatprep.subr.mxu0 0.0
    %1710 = vmatpush1.msra.mxu0 0.0
    %1711 = vmatprep.subr.mxu0 0.0
    %1712 = vmatpush1.msra.mxu0 0.0
    %1713 = vmatprep.subr.mxu0 0.0
    %1714 = vmatpush1.msra.mxu0 0.0
    %1715 = vmatprep.subr.mxu0 0.0
    %1716 = vmatpush1.msra.mxu0 0.0
    %1717 = vmatprep.subr.mxu0 0.0
    %1718 = vmatpush1.msra.mxu0 0.0
    %1719 = vmatprep.subr.mxu0 0.0
    %1720 = vmatpush1.msra.mxu0 0.0
    %1721 = vmatprep.subr.mxu0 0.0
    %1722 = vmatpush1.msra.mxu0 0.0
    %1723 = vmatprep.subr.mxu0 0.0
    %1724 = vmatpush1.msra.mxu0 0.0
    %1725 = vmatprep.mubr.f32.mxu0 0.0
    %1726 = vmatmul.mubr.f32.gmra.mrb[0].mxu0 %v1659
    %v1727 = vpop.f32.mrb[0].mxu0
    %v1728 = vadd.f32 0.0, %v1727
    %v1729 = vpop.f32.mrb[0].mxu0
    %1730 = vdwg.mxu0
    %s1731 = scalar_lea.vmem %s7, 16
    %v1732 = vld [vmem:[%s1731] sm:$0xff]
    %v1734 = vsel %vm1101, %v1728, 0
    %1736 = vmatprep.subr.mxu0 0.0
    %1737 = vmatpush1.msra.mxu0 %v1732
    %1738 = vmatprep.subr.mxu0 0.0
    %1739 = vmatpush1.msra.mxu0 0.0
    %1740 = vmatprep.subr.mxu0 0.0
    %1741 = vmatpush1.msra.mxu0 0.0
    %1742 = vmatprep.subr.mxu0 0.0
    %1743 = vmatpush1.msra.mxu0 0.0
    %1744 = vmatprep.subr.mxu0 0.0
    %1745 = vmatpush1.msra.mxu0 0.0
    %1746 = vmatprep.subr.mxu0 0.0
    %1747 = vmatpush1.msra.mxu0 0.0
    %1748 = vmatprep.subr.mxu0 0.0
    %1749 = vmatpush1.msra.mxu0 0.0
    %1750 = vmatprep.subr.mxu0 0.0
    %1751 = vmatpush1.msra.mxu0 0.0
    %1752 = vmatprep.subr.mxu0 0.0
    %1753 = vmatpush1.msra.mxu0 0.0
    %1754 = vmatprep.subr.mxu0 0.0
    %1755 = vmatpush1.msra.mxu0 0.0
    %1756 = vmatprep.subr.mxu0 0.0
    %1757 = vmatpush1.msra.mxu0 0.0
    %1758 = vmatprep.subr.mxu0 0.0
    %1759 = vmatpush1.msra.mxu0 0.0
    %1760 = vmatprep.subr.mxu0 0.0
    %1761 = vmatpush1.msra.mxu0 0.0
    %1762 = vmatprep.subr.mxu0 0.0
    %1763 = vmatpush1.msra.mxu0 0.0
    %1764 = vmatprep.subr.mxu0 0.0
    %1765 = vmatpush1.msra.mxu0 0.0
    %1766 = vmatprep.subr.mxu0 0.0
    %1767 = vmatpush1.msra.mxu0 0.0
    %1768 = vmatprep.subr.mxu0 0.0
    %1769 = vmatpush1.msra.mxu0 0.0
    %1770 = vmatprep.subr.mxu0 0.0
    %1771 = vmatpush1.msra.mxu0 0.0
    %1772 = vmatprep.subr.mxu0 0.0
    %1773 = vmatpush1.msra.mxu0 0.0
    %1774 = vmatprep.subr.mxu0 0.0
    %1775 = vmatpush1.msra.mxu0 0.0
    %1776 = vmatprep.subr.mxu0 0.0
    %1777 = vmatpush1.msra.mxu0 0.0
    %1778 = vmatprep.subr.mxu0 0.0
    %1779 = vmatpush1.msra.mxu0 0.0
    %1780 = vmatprep.subr.mxu0 0.0
    %1781 = vmatpush1.msra.mxu0 0.0
    %1782 = vmatprep.subr.mxu0 0.0
    %1783 = vmatpush1.msra.mxu0 0.0
    %1784 = vmatprep.subr.mxu0 0.0
    %1785 = vmatpush1.msra.mxu0 0.0
    %1786 = vmatprep.subr.mxu0 0.0
    %1787 = vmatpush1.msra.mxu0 0.0
    %1788 = vmatprep.subr.mxu0 0.0
    %1789 = vmatpush1.msra.mxu0 0.0
    %1790 = vmatprep.subr.mxu0 0.0
    %1791 = vmatpush1.msra.mxu0 0.0
    %1792 = vmatprep.subr.mxu0 0.0
    %1793 = vmatpush1.msra.mxu0 0.0
    %1794 = vmatprep.subr.mxu0 0.0
    %1795 = vmatpush1.msra.mxu0 0.0
    %1796 = vmatprep.subr.mxu0 0.0
    %1797 = vmatpush1.msra.mxu0 0.0
    %1798 = vmatprep.subr.mxu0 0.0
    %1799 = vmatpush1.msra.mxu0 0.0
    %1800 = vmatprep.mubr.f32.mxu0 0.0
    %1801 = vmatmul.mubr.f32.gmra.mrb[0].mxu0 %v1734
    %v1802 = vpop.f32.mrb[0].mxu0
    %v1803 = vadd.f32 0.0, %v1802
    %v1804 = vpop.f32.mrb[0].mxu0
    %1805 = vdwg.mxu0
    %v1806 = vadd.f32 %v1568, %v1803
    %v1808 = vsel %vm1101, %v923, 0
    %v1811 = vsel %vm1101, %v1008, 0
    %1813 = vmatprep.subr.mxu0 0.0
    %1814 = vmatpush1.xpose.msra.mxu0 %v1811
    %1815 = vmatprep.subr.mxu0 0.0
    %1816 = vmatpush1.xpose.msra.mxu0 0.0
    %1817 = vmatprep.subr.mxu0 0.0
    %1818 = vmatpush1.xpose.msra.mxu0 0.0
    %1819 = vmatprep.subr.mxu0 0.0
    %1820 = vmatpush1.xpose.msra.mxu0 0.0
    %1821 = vmatprep.subr.mxu0 0.0
    %1822 = vmatpush1.xpose.msra.mxu0 0.0
    %1823 = vmatprep.subr.mxu0 0.0
    %1824 = vmatpush1.xpose.msra.mxu0 0.0
    %1825 = vmatprep.subr.mxu0 0.0
    %1826 = vmatpush1.xpose.msra.mxu0 0.0
    %1827 = vmatprep.subr.mxu0 0.0
    %1828 = vmatpush1.xpose.msra.mxu0 0.0
    %1829 = vmatprep.subr.mxu0 0.0
    %1830 = vmatpush1.xpose.msra.mxu0 0.0
    %1831 = vmatprep.subr.mxu0 0.0
    %1832 = vmatpush1.xpose.msra.mxu0 0.0
    %1833 = vmatprep.subr.mxu0 0.0
    %1834 = vmatpush1.xpose.msra.mxu0 0.0
    %1835 = vmatprep.subr.mxu0 0.0
    %1836 = vmatpush1.xpose.msra.mxu0 0.0
    %1837 = vmatprep.subr.mxu0 0.0
    %1838 = vmatpush1.xpose.msra.mxu0 0.0
    %1839 = vmatprep.subr.mxu0 0.0
    %1840 = vmatpush1.xpose.msra.mxu0 0.0
    %1841 = vmatprep.subr.mxu0 0.0
    %1842 = vmatpush1.xpose.msra.mxu0 0.0
    %1843 = vmatprep.subr.mxu0 0.0
    %1844 = vmatpush1.xpose.msra.mxu0 0.0
    %1845 = vmatprep.subr.mxu0 0.0
    %1846 = vmatpush1.xpose.msra.mxu0 0.0
    %1847 = vmatprep.subr.mxu0 0.0
    %1848 = vmatpush1.xpose.msra.mxu0 0.0
    %1849 = vmatprep.subr.mxu0 0.0
    %1850 = vmatpush1.xpose.msra.mxu0 0.0
    %1851 = vmatprep.subr.mxu0 0.0
    %1852 = vmatpush1.xpose.msra.mxu0 0.0
    %1853 = vmatprep.subr.mxu0 0.0
    %1854 = vmatpush1.xpose.msra.mxu0 0.0
    %1855 = vmatprep.subr.mxu0 0.0
    %1856 = vmatpush1.xpose.msra.mxu0 0.0
    %1857 = vmatprep.subr.mxu0 0.0
    %1858 = vmatpush1.xpose.msra.mxu0 0.0
    %1859 = vmatprep.subr.mxu0 0.0
    %1860 = vmatpush1.xpose.msra.mxu0 0.0
    %1861 = vmatprep.subr.mxu0 0.0
    %1862 = vmatpush1.xpose.msra.mxu0 0.0
    %1863 = vmatprep.subr.mxu0 0.0
    %1864 = vmatpush1.xpose.msra.mxu0 0.0
    %1865 = vmatprep.subr.mxu0 0.0
    %1866 = vmatpush1.xpose.msra.mxu0 0.0
    %1867 = vmatprep.subr.mxu0 0.0
    %1868 = vmatpush1.xpose.msra.mxu0 0.0
    %1869 = vmatprep.subr.mxu0 0.0
    %1870 = vmatpush1.xpose.msra.mxu0 0.0
    %1871 = vmatprep.subr.mxu0 0.0
    %1872 = vmatpush1.xpose.msra.mxu0 0.0
    %1873 = vmatprep.subr.mxu0 0.0
    %1874 = vmatpush1.xpose.msra.mxu0 0.0
    %1875 = vmatprep.subr.mxu0 0.0
    %1876 = vmatpush1.xpose.msra.mxu0 0.0
    %1877 = vmatprep.mubr.f32.mxu0 0.0
    %1878 = vmatmul.mubr.f32.gmra.mrb[0].mxu0 %v1808
    %v1879 = vpop.f32.mrb[0].mxu0
    %v1880 = vadd.f32 0.0, %v1879
    %v1881 = vpop.f32.mrb[0].mxu0
    %1882 = vdwg.mxu0
    %v1883 = vsel %vm1101, %v1880, -inf
    %1884 = vmax.xlane.f32.xlu0 %v1883
    %v1885 = vpop.xlane.xlu0 %1884
    %v1886 = vsub.f32 %v1880, %v1885
    %v1887 = vmul.f32 %v1886, 1.442695
    %v1888 = vpow.pop %v1887
    %v1889 = vsel %vm1101, %v1888, 0.0
    %1890 = vadd.xlane.f32.xlu0 %v1889
    %v1891 = vpop.xlane.xlu0 %1890
    %v1892 = vrcp.pop %v1891
    %v1893 = vmul.f32 %v1888, %v1892
    %v1895 = vsel %vm1101, %v1893, 0
    %1897 = vmatprep.subr.mxu0 0.0
    %1898 = vmatpush1.msra.mxu0 %v1093
    %1899 = vmatprep.subr.mxu0 0.0
    %1900 = vmatpush1.msra.mxu0 0.0
    %1901 = vmatprep.subr.mxu0 0.0
    %1902 = vmatpush1.msra.mxu0 0.0
    %1903 = vmatprep.subr.mxu0 0.0
    %1904 = vmatpush1.msra.mxu0 0.0
    %1905 = vmatprep.subr.mxu0 0.0
    %1906 = vmatpush1.msra.mxu0 0.0
    %1907 = vmatprep.subr.mxu0 0.0
    %1908 = vmatpush1.msra.mxu0 0.0
    %1909 = vmatprep.subr.mxu0 0.0
    %1910 = vmatpush1.msra.mxu0 0.0
    %1911 = vmatprep.subr.mxu0 0.0
    %1912 = vmatpush1.msra.mxu0 0.0
    %1913 = vmatprep.subr.mxu0 0.0
    %1914 = vmatpush1.msra.mxu0 0.0
    %1915 = vmatprep.subr.mxu0 0.0
    %1916 = vmatpush1.msra.mxu0 0.0
    %1917 = vmatprep.subr.mxu0 0.0
    %1918 = vmatpush1.msra.mxu0 0.0
    %1919 = vmatprep.subr.mxu0 0.0
    %1920 = vmatpush1.msra.mxu0 0.0
    %1921 = vmatprep.subr.mxu0 0.0
    %1922 = vmatpush1.msra.mxu0 0.0
    %1923 = vmatprep.subr.mxu0 0.0
    %1924 = vmatpush1.msra.mxu0 0.0
    %1925 = vmatprep.subr.mxu0 0.0
    %1926 = vmatpush1.msra.mxu0 0.0
    %1927 = vmatprep.subr.mxu0 0.0
    %1928 = vmatpush1.msra.mxu0 0.0
    %1929 = vmatprep.subr.mxu0 0.0
    %1930 = vmatpush1.msra.mxu0 0.0
    %1931 = vmatprep.subr.mxu0 0.0
    %1932 = vmatpush1.msra.mxu0 0.0
    %1933 = vmatprep.subr.mxu0 0.0
    %1934 = vmatpush1.msra.mxu0 0.0
    %1935 = vmatprep.subr.mxu0 0.0
    %1936 = vmatpush1.msra.mxu0 0.0
    %1937 = vmatprep.subr.mxu0 0.0
    %1938 = vmatpush1.msra.mxu0 0.0
    %1939 = vmatprep.subr.mxu0 0.0
    %1940 = vmatpush1.msra.mxu0 0.0
    %1941 = vmatprep.subr.mxu0 0.0
    %1942 = vmatpush1.msra.mxu0 0.0
    %1943 = vmatprep.subr.mxu0 0.0
    %1944 = vmatpush1.msra.mxu0 0.0
    %1945 = vmatprep.subr.mxu0 0.0
    %1946 = vmatpush1.msra.mxu0 0.0
    %1947 = vmatprep.subr.mxu0 0.0
    %1948 = vmatpush1.msra.mxu0 0.0
    %1949 = vmatprep.subr.mxu0 0.0
    %1950 = vmatpush1.msra.mxu0 0.0
    %1951 = vmatprep.subr.mxu0 0.0
    %1952 = vmatpush1.msra.mxu0 0.0
    %1953 = vmatprep.subr.mxu0 0.0
    %1954 = vmatpush1.msra.mxu0 0.0
    %1955 = vmatprep.subr.mxu0 0.0
    %1956 = vmatpush1.msra.mxu0 0.0
    %1957 = vmatprep.subr.mxu0 0.0
    %1958 = vmatpush1.msra.mxu0 0.0
    %1959 = vmatprep.subr.mxu0 0.0
    %1960 = vmatpush1.msra.mxu0 0.0
    %1961 = vmatprep.mubr.f32.mxu0 0.0
    %1962 = vmatmul.mubr.f32.gmra.mrb[0].mxu0 %v1895
    %v1963 = vpop.f32.mrb[0].mxu0
    %v1964 = vadd.f32 0.0, %v1963
    %v1965 = vpop.f32.mrb[0].mxu0
    %1966 = vdwg.mxu0
    %s1967 = scalar_lea.vmem %s7, 24
    %v1968 = vld [vmem:[%s1967] sm:$0xff]
    %v1970 = vsel %vm1101, %v1964, 0
    %1972 = vmatprep.subr.mxu0 0.0
    %1973 = vmatpush1.msra.mxu0 %v1968
    %1974 = vmatprep.subr.mxu0 0.0
    %1975 = vmatpush1.msra.mxu0 0.0
    %1976 = vmatprep.subr.mxu0 0.0
    %1977 = vmatpush1.msra.mxu0 0.0
    %1978 = vmatprep.subr.mxu0 0.0
    %1979 = vmatpush1.msra.mxu0 0.0
    %1980 = vmatprep.subr.mxu0 0.0
    %1981 = vmatpush1.msra.mxu0 0.0
    %1982 = vmatprep.subr.mxu0 0.0
    %1983 = vmatpush1.msra.mxu0 0.0
    %1984 = vmatprep.subr.mxu0 0.0
    %1985 = vmatpush1.msra.mxu0 0.0
    %1986 = vmatprep.subr.mxu0 0.0
    %1987 = vmatpush1.msra.mxu0 0.0
    %1988 = vmatprep.subr.mxu0 0.0
    %1989 = vmatpush1.msra.mxu0 0.0
    %1990 = vmatprep.subr.mxu0 0.0
    %1991 = vmatpush1.msra.mxu0 0.0
    %1992 = vmatprep.subr.mxu0 0.0
    %1993 = vmatpush1.msra.mxu0 0.0
    %1994 = vmatprep.subr.mxu0 0.0
    %1995 = vmatpush1.msra.mxu0 0.0
    %1996 = vmatprep.subr.mxu0 0.0
    %1997 = vmatpush1.msra.mxu0 0.0
    %1998 = vmatprep.subr.mxu0 0.0
    %1999 = vmatpush1.msra.mxu0 0.0
    %2000 = vmatprep.subr.mxu0 0.0
    %2001 = vmatpush1.msra.mxu0 0.0
    %2002 = vmatprep.subr.mxu0 0.0
    %2003 = vmatpush1.msra.mxu0 0.0
    %2004 = vmatprep.subr.mxu0 0.0
    %2005 = vmatpush1.msra.mxu0 0.0
    %2006 = vmatprep.subr.mxu0 0.0
    %2007 = vmatpush1.msra.mxu0 0.0
    %2008 = vmatprep.subr.mxu0 0.0
    %2009 = vmatpush1.msra.mxu0 0.0
    %2010 = vmatprep.subr.mxu0 0.0
    %2011 = vmatpush1.msra.mxu0 0.0
    %2012 = vmatprep.subr.mxu0 0.0
    %2013 = vmatpush1.msra.mxu0 0.0
    %2014 = vmatprep.subr.mxu0 0.0
    %2015 = vmatpush1.msra.mxu0 0.0
    %2016 = vmatprep.subr.mxu0 0.0
    %2017 = vmatpush1.msra.mxu0 0.0
    %2018 = vmatprep.subr.mxu0 0.0
    %2019 = vmatpush1.msra.mxu0 0.0
    %2020 = vmatprep.subr.mxu0 0.0
    %2021 = vmatpush1.msra.mxu0 0.0
    %2022 = vmatprep.subr.mxu0 0.0
    %2023 = vmatpush1.msra.mxu0 0.0
    %2024 = vmatprep.subr.mxu0 0.0
    %2025 = vmatpush1.msra.mxu0 0.0
    %2026 = vmatprep.subr.mxu0 0.0
    %2027 = vmatpush1.msra.mxu0 0.0
    %2028 = vmatprep.subr.mxu0 0.0
    %2029 = vmatpush1.msra.mxu0 0.0
    %2030 = vmatprep.subr.mxu0 0.0
    %2031 = vmatpush1.msra.mxu0 0.0
    %2032 = vmatprep.subr.mxu0 0.0
    %2033 = vmatpush1.msra.mxu0 0.0
    %2034 = vmatprep.subr.mxu0 0.0
    %2035 = vmatpush1.msra.mxu0 0.0
    %2036 = vmatprep.mubr.f32.mxu0 0.0
    %2037 = vmatmul.mubr.f32.gmra.mrb[0].mxu0 %v1970
    %v2038 = vpop.f32.mrb[0].mxu0
    %v2039 = vadd.f32 0.0, %v2038
    %v2040 = vpop.f32.mrb[0].mxu0
    %2041 = vdwg.mxu0
    %v2042 = vadd.f32 %v1806, %v2039
    %v2044 = vsel %vm1101, %v165, 0
    %v2047 = vsel %vm1101, %v249, 0
    %2049 = vmatprep.subr.mxu0 0.0
    %2050 = vmatpush1.xpose.msra.mxu0 %v2047
    %2051 = vmatprep.subr.mxu0 0.0
    %2052 = vmatpush1.xpose.msra.mxu0 0.0
    %2053 = vmatprep.subr.mxu0 0.0
    %2054 = vmatpush1.xpose.msra.mxu0 0.0
    %2055 = vmatprep.subr.mxu0 0.0
    %2056 = vmatpush1.xpose.msra.mxu0 0.0
    %2057 = vmatprep.subr.mxu0 0.0
    %2058 = vmatpush1.xpose.msra.mxu0 0.0
    %2059 = vmatprep.subr.mxu0 0.0
    %2060 = vmatpush1.xpose.msra.mxu0 0.0
    %2061 = vmatprep.subr.mxu0 0.0
    %2062 = vmatpush1.xpose.msra.mxu0 0.0
    %2063 = vmatprep.subr.mxu0 0.0
    %2064 = vmatpush1.xpose.msra.mxu0 0.0
    %2065 = vmatprep.subr.mxu0 0.0
    %2066 = vmatpush1.xpose.msra.mxu0 0.0
    %2067 = vmatprep.subr.mxu0 0.0
    %2068 = vmatpush1.xpose.msra.mxu0 0.0
    %2069 = vmatprep.subr.mxu0 0.0
    %2070 = vmatpush1.xpose.msra.mxu0 0.0
    %2071 = vmatprep.subr.mxu0 0.0
    %2072 = vmatpush1.xpose.msra.mxu0 0.0
    %2073 = vmatprep.subr.mxu0 0.0
    %2074 = vmatpush1.xpose.msra.mxu0 0.0
    %2075 = vmatprep.subr.mxu0 0.0
    %2076 = vmatpush1.xpose.msra.mxu0 0.0
    %2077 = vmatprep.subr.mxu0 0.0
    %2078 = vmatpush1.xpose.msra.mxu0 0.0
    %2079 = vmatprep.subr.mxu0 0.0
    %2080 = vmatpush1.xpose.msra.mxu0 0.0
    %2081 = vmatprep.subr.mxu0 0.0
    %2082 = vmatpush1.xpose.msra.mxu0 0.0
    %2083 = vmatprep.subr.mxu0 0.0
    %2084 = vmatpush1.xpose.msra.mxu0 0.0
    %2085 = vmatprep.subr.mxu0 0.0
    %2086 = vmatpush1.xpose.msra.mxu0 0.0
    %2087 = vmatprep.subr.mxu0 0.0
    %2088 = vmatpush1.xpose.msra.mxu0 0.0
    %2089 = vmatprep.subr.mxu0 0.0
    %2090 = vmatpush1.xpose.msra.mxu0 0.0
    %2091 = vmatprep.subr.mxu0 0.0
    %2092 = vmatpush1.xpose.msra.mxu0 0.0
    %2093 = vmatprep.subr.mxu0 0.0
    %2094 = vmatpush1.xpose.msra.mxu0 0.0
    %2095 = vmatprep.subr.mxu0 0.0
    %2096 = vmatpush1.xpose.msra.mxu0 0.0
    %2097 = vmatprep.subr.mxu0 0.0
    %2098 = vmatpush1.xpose.msra.mxu0 0.0
    %2099 = vmatprep.subr.mxu0 0.0
    %2100 = vmatpush1.xpose.msra.mxu0 0.0
    %2101 = vmatprep.subr.mxu0 0.0
    %2102 = vmatpush1.xpose.msra.mxu0 0.0
    %2103 = vmatprep.subr.mxu0 0.0
    %2104 = vmatpush1.xpose.msra.mxu0 0.0
    %2105 = vmatprep.subr.mxu0 0.0
    %2106 = vmatpush1.xpose.msra.mxu0 0.0
    %2107 = vmatprep.subr.mxu0 0.0
    %2108 = vmatpush1.xpose.msra.mxu0 0.0
    %2109 = vmatprep.subr.mxu0 0.0
    %2110 = vmatpush1.xpose.msra.mxu0 0.0
    %2111 = vmatprep.subr.mxu0 0.0
    %2112 = vmatpush1.xpose.msra.mxu0 0.0
    %2113 = vmatprep.mubr.f32.mxu0 0.0
    %2114 = vmatmul.mubr.f32.gmra.mrb[0].mxu0 %v2044
    %v2115 = vpop.f32.mrb[0].mxu0
    %v2116 = vadd.f32 0.0, %v2115
    %v2117 = vpop.f32.mrb[0].mxu0
    %2118 = vdwg.mxu0
    %v2119 = vsel %vm1101, %v2116, -inf
    %2120 = vmax.xlane.f32.xlu0 %v2119
    %v2121 = vpop.xlane.xlu0 %2120
    %v2122 = vsub.f32 %v2116, %v2121
    %v2123 = vmul.f32 %v2122, 1.442695
    %v2124 = vpow.pop %v2123
    %v2125 = vsel %vm1101, %v2124, 0.0
    %2126 = vadd.xlane.f32.xlu0 %v2125
    %v2127 = vpop.xlane.xlu0 %2126
    %v2128 = vrcp.pop %v2127
    %v2129 = vmul.f32 %v2124, %v2128
    %v2131 = vsel %vm1101, %v2129, 0
    %2133 = vmatprep.subr.mxu0 0.0
    %2134 = vmatpush1.msra.mxu0 %v333
    %2135 = vmatprep.subr.mxu0 0.0
    %2136 = vmatpush1.msra.mxu0 0.0
    %2137 = vmatprep.subr.mxu0 0.0
    %2138 = vmatpush1.msra.mxu0 0.0
    %2139 = vmatprep.subr.mxu0 0.0
    %2140 = vmatpush1.msra.mxu0 0.0
    %2141 = vmatprep.subr.mxu0 0.0
    %2142 = vmatpush1.msra.mxu0 0.0
    %2143 = vmatprep.subr.mxu0 0.0
    %2144 = vmatpush1.msra.mxu0 0.0
    %2145 = vmatprep.subr.mxu0 0.0
    %2146 = vmatpush1.msra.mxu0 0.0
    %2147 = vmatprep.subr.mxu0 0.0
    %2148 = vmatpush1.msra.mxu0 0.0
    %2149 = vmatprep.subr.mxu0 0.0
    %2150 = vmatpush1.msra.mxu0 0.0
    %2151 = vmatprep.subr.mxu0 0.0
    %2152 = vmatpush1.msra.mxu0 0.0
    %2153 = vmatprep.subr.mxu0 0.0
    %2154 = vmatpush1.msra.mxu0 0.0
    %2155 = vmatprep.subr.mxu0 0.0
    %2156 = vmatpush1.msra.mxu0 0.0
    %2157 = vmatprep.subr.mxu0 0.0
    %2158 = vmatpush1.msra.mxu0 0.0
    %2159 = vmatprep.subr.mxu0 0.0
    %2160 = vmatpush1.msra.mxu0 0.0
    %2161 = vmatprep.subr.mxu0 0.0
    %2162 = vmatpush1.msra.mxu0 0.0
    %2163 = vmatprep.subr.mxu0 0.0
    %2164 = vmatpush1.msra.mxu0 0.0
    %2165 = vmatprep.subr.mxu0 0.0
    %2166 = vmatpush1.msra.mxu0 0.0
    %2167 = vmatprep.subr.mxu0 0.0
    %2168 = vmatpush1.msra.mxu0 0.0
    %2169 = vmatprep.subr.mxu0 0.0
    %2170 = vmatpush1.msra.mxu0 0.0
    %2171 = vmatprep.subr.mxu0 0.0
    %2172 = vmatpush1.msra.mxu0 0.0
    %2173 = vmatprep.subr.mxu0 0.0
    %2174 = vmatpush1.msra.mxu0 0.0
    %2175 = vmatprep.subr.mxu0 0.0
    %2176 = vmatpush1.msra.mxu0 0.0
    %2177 = vmatprep.subr.mxu0 0.0
    %2178 = vmatpush1.msra.mxu0 0.0
    %2179 = vmatprep.subr.mxu0 0.0
    %2180 = vmatpush1.msra.mxu0 0.0
    %2181 = vmatprep.subr.mxu0 0.0
    %2182 = vmatpush1.msra.mxu0 0.0
    %2183 = vmatprep.subr.mxu0 0.0
    %2184 = vmatpush1.msra.mxu0 0.0
    %2185 = vmatprep.subr.mxu0 0.0
    %2186 = vmatpush1.msra.mxu0 0.0
    %2187 = vmatprep.subr.mxu0 0.0
    %2188 = vmatpush1.msra.mxu0 0.0
    %2189 = vmatprep.subr.mxu0 0.0
    %2190 = vmatpush1.msra.mxu0 0.0
    %2191 = vmatprep.subr.mxu0 0.0
    %2192 = vmatpush1.msra.mxu0 0.0
    %2193 = vmatprep.subr.mxu0 0.0
    %2194 = vmatpush1.msra.mxu0 0.0
    %2195 = vmatprep.subr.mxu0 0.0
    %2196 = vmatpush1.msra.mxu0 0.0
    %2197 = vmatprep.mubr.f32.mxu0 0.0
    %2198 = vmatmul.mubr.f32.gmra.mrb[0].mxu0 %v2131
    %v2199 = vpop.f32.mrb[0].mxu0
    %v2200 = vadd.f32 0.0, %v2199
    %v2201 = vpop.f32.mrb[0].mxu0
    %2202 = vdwg.mxu0
    %v2204 = vsel %vm1101, %v418, 0
    %v2207 = vsel %vm1101, %v503, 0
    %2209 = vmatprep.subr.mxu0 0.0
    %2210 = vmatpush1.xpose.msra.mxu0 %v2207
    %2211 = vmatprep.subr.mxu0 0.0
    %2212 = vmatpush1.xpose.msra.mxu0 0.0
    %2213 = vmatprep.subr.mxu0 0.0
    %2214 = vmatpush1.xpose.msra.mxu0 0.0
    %2215 = vmatprep.subr.mxu0 0.0
    %2216 = vmatpush1.xpose.msra.mxu0 0.0
    %2217 = vmatprep.subr.mxu0 0.0
    %2218 = vmatpush1.xpose.msra.mxu0 0.0
    %2219 = vmatprep.subr.mxu0 0.0
    %2220 = vmatpush1.xpose.msra.mxu0 0.0
    %2221 = vmatprep.subr.mxu0 0.0
    %2222 = vmatpush1.xpose.msra.mxu0 0.0
    %2223 = vmatprep.subr.mxu0 0.0
    %2224 = vmatpush1.xpose.msra.mxu0 0.0
    %2225 = vmatprep.subr.mxu0 0.0
    %2226 = vmatpush1.xpose.msra.mxu0 0.0
    %2227 = vmatprep.subr.mxu0 0.0
    %2228 = vmatpush1.xpose.msra.mxu0 0.0
    %2229 = vmatprep.subr.mxu0 0.0
    %2230 = vmatpush1.xpose.msra.mxu0 0.0
    %2231 = vmatprep.subr.mxu0 0.0
    %2232 = vmatpush1.xpose.msra.mxu0 0.0
    %2233 = vmatprep.subr.mxu0 0.0
    %2234 = vmatpush1.xpose.msra.mxu0 0.0
    %2235 = vmatprep.subr.mxu0 0.0
    %2236 = vmatpush1.xpose.msra.mxu0 0.0
    %2237 = vmatprep.subr.mxu0 0.0
    %2238 = vmatpush1.xpose.msra.mxu0 0.0
    %2239 = vmatprep.subr.mxu0 0.0
    %2240 = vmatpush1.xpose.msra.mxu0 0.0
    %2241 = vmatprep.subr.mxu0 0.0
    %2242 = vmatpush1.xpose.msra.mxu0 0.0
    %2243 = vmatprep.subr.mxu0 0.0
    %2244 = vmatpush1.xpose.msra.mxu0 0.0
    %2245 = vmatprep.subr.mxu0 0.0
    %2246 = vmatpush1.xpose.msra.mxu0 0.0
    %2247 = vmatprep.subr.mxu0 0.0
    %2248 = vmatpush1.xpose.msra.mxu0 0.0
    %2249 = vmatprep.subr.mxu0 0.0
    %2250 = vmatpush1.xpose.msra.mxu0 0.0
    %2251 = vmatprep.subr.mxu0 0.0
    %2252 = vmatpush1.xpose.msra.mxu0 0.0
    %2253 = vmatprep.subr.mxu0 0.0
    %2254 = vmatpush1.xpose.msra.mxu0 0.0
    %2255 = vmatprep.subr.mxu0 0.0
    %2256 = vmatpush1.xpose.msra.mxu0 0.0
    %2257 = vmatprep.subr.mxu0 0.0
    %2258 = vmatpush1.xpose.msra.mxu0 0.0
    %2259 = vmatprep.subr.mxu0 0.0
    %2260 = vmatpush1.xpose.msra.mxu0 0.0
    %2261 = vmatprep.subr.mxu0 0.0
    %2262 = vmatpush1.xpose.msra.mxu0 0.0
    %2263 = vmatprep.subr.mxu0 0.0
    %2264 = vmatpush1.xpose.msra.mxu0 0.0
    %2265 = vmatprep.subr.mxu0 0.0
    %2266 = vmatpush1.xpose.msra.mxu0 0.0
    %2267 = vmatprep.subr.mxu0 0.0
    %2268 = vmatpush1.xpose.msra.mxu0 0.0
    %2269 = vmatprep.subr.mxu0 0.0
    %2270 = vmatpush1.xpose.msra.mxu0 0.0
    %2271 = vmatprep.subr.mxu0 0.0
    %2272 = vmatpush1.xpose.msra.mxu0 0.0
    %2273 = vmatprep.mubr.f32.mxu0 0.0
    %2274 = vmatmul.mubr.f32.gmra.mrb[0].mxu0 %v2204
    %v2275 = vpop.f32.mrb[0].mxu0
    %v2276 = vadd.f32 0.0, %v2275
    %v2277 = vpop.f32.mrb[0].mxu0
    %2278 = vdwg.mxu0
    %v2279 = vsel %vm1101, %v2276, -inf
    %2280 = vmax.xlane.f32.xlu0 %v2279
    %v2281 = vpop.xlane.xlu0 %2280
    %v2282 = vsub.f32 %v2276, %v2281
    %v2283 = vmul.f32 %v2282, 1.442695
    %v2284 = vpow.pop %v2283
    %v2285 = vsel %vm1101, %v2284, 0.0
    %2286 = vadd.xlane.f32.xlu0 %v2285
    %v2287 = vpop.xlane.xlu0 %2286
    %v2288 = vrcp.pop %v2287
    %v2289 = vmul.f32 %v2284, %v2288
    %v2291 = vsel %vm1101, %v2289, 0
    %2293 = vmatprep.subr.mxu0 0.0
    %2294 = vmatpush1.msra.mxu0 %v588
    %2295 = vmatprep.subr.mxu0 0.0
    %2296 = vmatpush1.msra.mxu0 0.0
    %2297 = vmatprep.subr.mxu0 0.0
    %2298 = vmatpush1.msra.mxu0 0.0
    %2299 = vmatprep.subr.mxu0 0.0
    %2300 = vmatpush1.msra.mxu0 0.0
    %2301 = vmatprep.subr.mxu0 0.0
    %2302 = vmatpush1.msra.mxu0 0.0
    %2303 = vmatprep.subr.mxu0 0.0
    %2304 = vmatpush1.msra.mxu0 0.0
    %2305 = vmatprep.subr.mxu0 0.0
    %2306 = vmatpush1.msra.mxu0 0.0
    %2307 = vmatprep.subr.mxu0 0.0
    %2308 = vmatpush1.msra.mxu0 0.0
    %2309 = vmatprep.subr.mxu0 0.0
    %2310 = vmatpush1.msra.mxu0 0.0
    %2311 = vmatprep.subr.mxu0 0.0
    %2312 = vmatpush1.msra.mxu0 0.0
    %2313 = vmatprep.subr.mxu0 0.0
    %2314 = vmatpush1.msra.mxu0 0.0
    %2315 = vmatprep.subr.mxu0 0.0
    %2316 = vmatpush1.msra.mxu0 0.0
    %2317 = vmatprep.subr.mxu0 0.0
    %2318 = vmatpush1.msra.mxu0 0.0
    %2319 = vmatprep.subr.mxu0 0.0
    %2320 = vmatpush1.msra.mxu0 0.0
    %2321 = vmatprep.subr.mxu0 0.0
    %2322 = vmatpush1.msra.mxu0 0.0
    %2323 = vmatprep.subr.mxu0 0.0
    %2324 = vmatpush1.msra.mxu0 0.0
    %2325 = vmatprep.subr.mxu0 0.0
    %2326 = vmatpush1.msra.mxu0 0.0
    %2327 = vmatprep.subr.mxu0 0.0
    %2328 = vmatpush1.msra.mxu0 0.0
    %2329 = vmatprep.subr.mxu0 0.0
    %2330 = vmatpush1.msra.mxu0 0.0
    %2331 = vmatprep.subr.mxu0 0.0
    %2332 = vmatpush1.msra.mxu0 0.0
    %2333 = vmatprep.subr.mxu0 0.0
    %2334 = vmatpush1.msra.mxu0 0.0
    %2335 = vmatprep.subr.mxu0 0.0
    %2336 = vmatpush1.msra.mxu0 0.0
    %2337 = vmatprep.subr.mxu0 0.0
    %2338 = vmatpush1.msra.mxu0 0.0
    %2339 = vmatprep.subr.mxu0 0.0
    %2340 = vmatpush1.msra.mxu0 0.0
    %2341 = vmatprep.subr.mxu0 0.0
    %2342 = vmatpush1.msra.mxu0 0.0
    %2343 = vmatprep.subr.mxu0 0.0
    %2344 = vmatpush1.msra.mxu0 0.0
    %2345 = vmatprep.subr.mxu0 0.0
    %2346 = vmatpush1.msra.mxu0 0.0
    %2347 = vmatprep.subr.mxu0 0.0
    %2348 = vmatpush1.msra.mxu0 0.0
    %2349 = vmatprep.subr.mxu0 0.0
    %2350 = vmatpush1.msra.mxu0 0.0
    %2351 = vmatprep.subr.mxu0 0.0
    %2352 = vmatpush1.msra.mxu0 0.0
    %2353 = vmatprep.subr.mxu0 0.0
    %2354 = vmatpush1.msra.mxu0 0.0
    %2355 = vmatprep.subr.mxu0 0.0
    %2356 = vmatpush1.msra.mxu0 0.0
    %2357 = vmatprep.mubr.f32.mxu0 0.0
    %2358 = vmatmul.mubr.f32.gmra.mrb[0].mxu0 %v2291
    %v2359 = vpop.f32.mrb[0].mxu0
    %v2360 = vadd.f32 0.0, %v2359
    %v2361 = vpop.f32.mrb[0].mxu0
    %2362 = vdwg.mxu0
    %v2364 = vsel %vm1101, %v2360, 0
    %2366 = vmatprep.subr.mxu0 0.0
    %2367 = vmatpush1.msra.mxu0 %v1424
    %2368 = vmatprep.subr.mxu0 0.0
    %2369 = vmatpush1.msra.mxu0 0.0
    %2370 = vmatprep.subr.mxu0 0.0
    %2371 = vmatpush1.msra.mxu0 0.0
    %2372 = vmatprep.subr.mxu0 0.0
    %2373 = vmatpush1.msra.mxu0 0.0
    %2374 = vmatprep.subr.mxu0 0.0
    %2375 = vmatpush1.msra.mxu0 0.0
    %2376 = vmatprep.subr.mxu0 0.0
    %2377 = vmatpush1.msra.mxu0 0.0
    %2378 = vmatprep.subr.mxu0 0.0
    %2379 = vmatpush1.msra.mxu0 0.0
    %2380 = vmatprep.subr.mxu0 0.0
    %2381 = vmatpush1.msra.mxu0 0.0
    %2382 = vmatprep.subr.mxu0 0.0
    %2383 = vmatpush1.msra.mxu0 0.0
    %2384 = vmatprep.subr.mxu0 0.0
    %2385 = vmatpush1.msra.mxu0 0.0
    %2386 = vmatprep.subr.mxu0 0.0
    %2387 = vmatpush1.msra.mxu0 0.0
    %2388 = vmatprep.subr.mxu0 0.0
    %2389 = vmatpush1.msra.mxu0 0.0
    %2390 = vmatprep.subr.mxu0 0.0
    %2391 = vmatpush1.msra.mxu0 0.0
    %2392 = vmatprep.subr.mxu0 0.0
    %2393 = vmatpush1.msra.mxu0 0.0
    %2394 = vmatprep.subr.mxu0 0.0
    %2395 = vmatpush1.msra.mxu0 0.0
    %2396 = vmatprep.subr.mxu0 0.0
    %2397 = vmatpush1.msra.mxu0 0.0
    %2398 = vmatprep.subr.mxu0 0.0
    %2399 = vmatpush1.msra.mxu0 0.0
    %2400 = vmatprep.subr.mxu0 0.0
    %2401 = vmatpush1.msra.mxu0 0.0
    %2402 = vmatprep.subr.mxu0 0.0
    %2403 = vmatpush1.msra.mxu0 0.0
    %2404 = vmatprep.subr.mxu0 0.0
    %2405 = vmatpush1.msra.mxu0 0.0
    %2406 = vmatprep.subr.mxu0 0.0
    %2407 = vmatpush1.msra.mxu0 0.0
    %2408 = vmatprep.subr.mxu0 0.0
    %2409 = vmatpush1.msra.mxu0 0.0
    %2410 = vmatprep.subr.mxu0 0.0
    %2411 = vmatpush1.msra.mxu0 0.0
    %2412 = vmatprep.subr.mxu0 0.0
    %2413 = vmatpush1.msra.mxu0 0.0
    %2414 = vmatprep.subr.mxu0 0.0
    %2415 = vmatpush1.msra.mxu0 0.0
    %2416 = vmatprep.subr.mxu0 0.0
    %2417 = vmatpush1.msra.mxu0 0.0
    %2418 = vmatprep.subr.mxu0 0.0
    %2419 = vmatpush1.msra.mxu0 0.0
    %2420 = vmatprep.subr.mxu0 0.0
    %2421 = vmatpush1.msra.mxu0 0.0
    %2422 = vmatprep.subr.mxu0 0.0
    %2423 = vmatpush1.msra.mxu0 0.0
    %2424 = vmatprep.subr.mxu0 0.0
    %2425 = vmatpush1.msra.mxu0 0.0
    %2426 = vmatprep.subr.mxu0 0.0
    %2427 = vmatpush1.msra.mxu0 0.0
    %2428 = vmatprep.subr.mxu0 0.0
    %2429 = vmatpush1.msra.mxu0 0.0
    %2430 = vmatprep.mubr.f32.mxu0 0.0
    %2431 = vmatmul.mubr.f32.gmra.mrb[0].mxu0 %v2364
    %v2432 = vpop.f32.mrb[0].mxu0
    %v2433 = vadd.f32 0.0, %v2432
    %v2434 = vpop.f32.mrb[0].mxu0
    %2435 = vdwg.mxu0
    %v2437 = vsel %vm1101, %v2200, 0
    %2439 = vmatprep.subr.mxu0 0.0
    %2440 = vmatpush1.msra.mxu0 %v1262
    %2441 = vmatprep.subr.mxu0 0.0
    %2442 = vmatpush1.msra.mxu0 0.0
    %2443 = vmatprep.subr.mxu0 0.0
    %2444 = vmatpush1.msra.mxu0 0.0
    %2445 = vmatprep.subr.mxu0 0.0
    %2446 = vmatpush1.msra.mxu0 0.0
    %2447 = vmatprep.subr.mxu0 0.0
    %2448 = vmatpush1.msra.mxu0 0.0
    %2449 = vmatprep.subr.mxu0 0.0
    %2450 = vmatpush1.msra.mxu0 0.0
    %2451 = vmatprep.subr.mxu0 0.0
    %2452 = vmatpush1.msra.mxu0 0.0
    %2453 = vmatprep.subr.mxu0 0.0
    %2454 = vmatpush1.msra.mxu0 0.0
    %2455 = vmatprep.subr.mxu0 0.0
    %2456 = vmatpush1.msra.mxu0 0.0
    %2457 = vmatprep.subr.mxu0 0.0
    %2458 = vmatpush1.msra.mxu0 0.0
    %2459 = vmatprep.subr.mxu0 0.0
    %2460 = vmatpush1.msra.mxu0 0.0
    %2461 = vmatprep.subr.mxu0 0.0
    %2462 = vmatpush1.msra.mxu0 0.0
    %2463 = vmatprep.subr.mxu0 0.0
    %2464 = vmatpush1.msra.mxu0 0.0
    %2465 = vmatprep.subr.mxu0 0.0
    %2466 = vmatpush1.msra.mxu0 0.0
    %2467 = vmatprep.subr.mxu0 0.0
    %2468 = vmatpush1.msra.mxu0 0.0
    %2469 = vmatprep.subr.mxu0 0.0
    %2470 = vmatpush1.msra.mxu0 0.0
    %2471 = vmatprep.subr.mxu0 0.0
    %2472 = vmatpush1.msra.mxu0 0.0
    %2473 = vmatprep.subr.mxu0 0.0
    %2474 = vmatpush1.msra.mxu0 0.0
    %2475 = vmatprep.subr.mxu0 0.0
    %2476 = vmatpush1.msra.mxu0 0.0
    %2477 = vmatprep.subr.mxu0 0.0
    %2478 = vmatpush1.msra.mxu0 0.0
    %2479 = vmatprep.subr.mxu0 0.0
    %2480 = vmatpush1.msra.mxu0 0.0
    %2481 = vmatprep.subr.mxu0 0.0
    %2482 = vmatpush1.msra.mxu0 0.0
    %2483 = vmatprep.subr.mxu0 0.0
    %2484 = vmatpush1.msra.mxu0 0.0
    %2485 = vmatprep.subr.mxu0 0.0
    %2486 = vmatpush1.msra.mxu0 0.0
    %2487 = vmatprep.subr.mxu0 0.0
    %2488 = vmatpush1.msra.mxu0 0.0
    %2489 = vmatprep.subr.mxu0 0.0
    %2490 = vmatpush1.msra.mxu0 0.0
    %2491 = vmatprep.subr.mxu0 0.0
    %2492 = vmatpush1.msra.mxu0 0.0
    %2493 = vmatprep.subr.mxu0 0.0
    %2494 = vmatpush1.msra.mxu0 0.0
    %2495 = vmatprep.subr.mxu0 0.0
    %2496 = vmatpush1.msra.mxu0 0.0
    %2497 = vmatprep.subr.mxu0 0.0
    %2498 = vmatpush1.msra.mxu0 0.0
    %2499 = vmatprep.subr.mxu0 0.0
    %2500 = vmatpush1.msra.mxu0 0.0
    %2501 = vmatprep.subr.mxu0 0.0
    %2502 = vmatpush1.msra.mxu0 0.0
    %2503 = vmatprep.mubr.f32.mxu0 0.0
    %2504 = vmatmul.mubr.f32.gmra.mrb[0].mxu0 %v2437
    %v2505 = vpop.f32.mrb[0].mxu0
    %v2506 = vadd.f32 %v2433, %v2505
    %v2507 = vpop.f32.mrb[0].mxu0
    %2508 = vdwg.mxu0
    %v2510 = vsel %vm1101, %v673, 0
    %v2513 = vsel %vm1101, %v758, 0
    %2515 = vmatprep.subr.mxu0 0.0
    %2516 = vmatpush1.xpose.msra.mxu0 %v2513
    %2517 = vmatprep.subr.mxu0 0.0
    %2518 = vmatpush1.xpose.msra.mxu0 0.0
    %2519 = vmatprep.subr.mxu0 0.0
    %2520 = vmatpush1.xpose.msra.mxu0 0.0
    %2521 = vmatprep.subr.mxu0 0.0
    %2522 = vmatpush1.xpose.msra.mxu0 0.0
    %2523 = vmatprep.subr.mxu0 0.0
    %2524 = vmatpush1.xpose.msra.mxu0 0.0
    %2525 = vmatprep.subr.mxu0 0.0
    %2526 = vmatpush1.xpose.msra.mxu0 0.0
    %2527 = vmatprep.subr.mxu0 0.0
    %2528 = vmatpush1.xpose.msra.mxu0 0.0
    %2529 = vmatprep.subr.mxu0 0.0
    %2530 = vmatpush1.xpose.msra.mxu0 0.0
    %2531 = vmatprep.subr.mxu0 0.0
    %2532 = vmatpush1.xpose.msra.mxu0 0.0
    %2533 = vmatprep.subr.mxu0 0.0
    %2534 = vmatpush1.xpose.msra.mxu0 0.0
    %2535 = vmatprep.subr.mxu0 0.0
    %2536 = vmatpush1.xpose.msra.mxu0 0.0
    %2537 = vmatprep.subr.mxu0 0.0
    %2538 = vmatpush1.xpose.msra.mxu0 0.0
    %2539 = vmatprep.subr.mxu0 0.0
    %2540 = vmatpush1.xpose.msra.mxu0 0.0
    %2541 = vmatprep.subr.mxu0 0.0
    %2542 = vmatpush1.xpose.msra.mxu0 0.0
    %2543 = vmatprep.subr.mxu0 0.0
    %2544 = vmatpush1.xpose.msra.mxu0 0.0
    %2545 = vmatprep.subr.mxu0 0.0
    %2546 = vmatpush1.xpose.msra.mxu0 0.0
    %2547 = vmatprep.subr.mxu0 0.0
    %2548 = vmatpush1.xpose.msra.mxu0 0.0
    %2549 = vmatprep.subr.mxu0 0.0
    %2550 = vmatpush1.xpose.msra.mxu0 0.0
    %2551 = vmatprep.subr.mxu0 0.0
    %2552 = vmatpush1.xpose.msra.mxu0 0.0
    %2553 = vmatprep.subr.mxu0 0.0
    %2554 = vmatpush1.xpose.msra.mxu0 0.0
    %2555 = vmatprep.subr.mxu0 0.0
    %2556 = vmatpush1.xpose.msra.mxu0 0.0
    %2557 = vmatprep.subr.mxu0 0.0
    %2558 = vmatpush1.xpose.msra.mxu0 0.0
    %2559 = vmatprep.subr.mxu0 0.0
    %2560 = vmatpush1.xpose.msra.mxu0 0.0
    %2561 = vmatprep.subr.mxu0 0.0
    %2562 = vmatpush1.xpose.msra.mxu0 0.0
    %2563 = vmatprep.subr.mxu0 0.0
    %2564 = vmatpush1.xpose.msra.mxu0 0.0
    %2565 = vmatprep.subr.mxu0 0.0
    %2566 = vmatpush1.xpose.msra.mxu0 0.0
    %2567 = vmatprep.subr.mxu0 0.0
    %2568 = vmatpush1.xpose.msra.mxu0 0.0
    %2569 = vmatprep.subr.mxu0 0.0
    %2570 = vmatpush1.xpose.msra.mxu0 0.0
    %2571 = vmatprep.subr.mxu0 0.0
    %2572 = vmatpush1.xpose.msra.mxu0 0.0
    %2573 = vmatprep.subr.mxu0 0.0
    %2574 = vmatpush1.xpose.msra.mxu0 0.0
    %2575 = vmatprep.subr.mxu0 0.0
    %2576 = vmatpush1.xpose.msra.mxu0 0.0
    %2577 = vmatprep.subr.mxu0 0.0
    %2578 = vmatpush1.xpose.msra.mxu0 0.0
    %2579 = vmatprep.mubr.f32.mxu0 0.0
    %2580 = vmatmul.mubr.f32.gmra.mrb[0].mxu0 %v2510
    %v2581 = vpop.f32.mrb[0].mxu0
    %v2582 = vadd.f32 0.0, %v2581
    %v2583 = vpop.f32.mrb[0].mxu0
    %2584 = vdwg.mxu0
    %v2585 = vsel %vm1101, %v2582, -inf
    %2586 = vmax.xlane.f32.xlu0 %v2585
    %v2587 = vpop.xlane.xlu0 %2586
    %v2588 = vsub.f32 %v2582, %v2587
    %v2589 = vmul.f32 %v2588, 1.442695
    %v2590 = vpow.pop %v2589
    %v2591 = vsel %vm1101, %v2590, 0.0
    %2592 = vadd.xlane.f32.xlu0 %v2591
    %v2593 = vpop.xlane.xlu0 %2592
    %v2594 = vrcp.pop %v2593
    %v2595 = vmul.f32 %v2590, %v2594
    %v2597 = vsel %vm1101, %v2595, 0
    %2599 = vmatprep.subr.mxu0 0.0
    %2600 = vmatpush1.msra.mxu0 %v843
    %2601 = vmatprep.subr.mxu0 0.0
    %2602 = vmatpush1.msra.mxu0 0.0
    %2603 = vmatprep.subr.mxu0 0.0
    %2604 = vmatpush1.msra.mxu0 0.0
    %2605 = vmatprep.subr.mxu0 0.0
    %2606 = vmatpush1.msra.mxu0 0.0
    %2607 = vmatprep.subr.mxu0 0.0
    %2608 = vmatpush1.msra.mxu0 0.0
    %2609 = vmatprep.subr.mxu0 0.0
    %2610 = vmatpush1.msra.mxu0 0.0
    %2611 = vmatprep.subr.mxu0 0.0
    %2612 = vmatpush1.msra.mxu0 0.0
    %2613 = vmatprep.subr.mxu0 0.0
    %2614 = vmatpush1.msra.mxu0 0.0
    %2615 = vmatprep.subr.mxu0 0.0
    %2616 = vmatpush1.msra.mxu0 0.0
    %2617 = vmatprep.subr.mxu0 0.0
    %2618 = vmatpush1.msra.mxu0 0.0
    %2619 = vmatprep.subr.mxu0 0.0
    %2620 = vmatpush1.msra.mxu0 0.0
    %2621 = vmatprep.subr.mxu0 0.0
    %2622 = vmatpush1.msra.mxu0 0.0
    %2623 = vmatprep.subr.mxu0 0.0
    %2624 = vmatpush1.msra.mxu0 0.0
    %2625 = vmatprep.subr.mxu0 0.0
    %2626 = vmatpush1.msra.mxu0 0.0
    %2627 = vmatprep.subr.mxu0 0.0
    %2628 = vmatpush1.msra.mxu0 0.0
    %2629 = vmatprep.subr.mxu0 0.0
    %2630 = vmatpush1.msra.mxu0 0.0
    %2631 = vmatprep.subr.mxu0 0.0
    %2632 = vmatpush1.msra.mxu0 0.0
    %2633 = vmatprep.subr.mxu0 0.0
    %2634 = vmatpush1.msra.mxu0 0.0
    %2635 = vmatprep.subr.mxu0 0.0
    %2636 = vmatpush1.msra.mxu0 0.0
    %2637 = vmatprep.subr.mxu0 0.0
    %2638 = vmatpush1.msra.mxu0 0.0
    %2639 = vmatprep.subr.mxu0 0.0
    %2640 = vmatpush1.msra.mxu0 0.0
    %2641 = vmatprep.subr.mxu0 0.0
    %2642 = vmatpush1.msra.mxu0 0.0
    %2643 = vmatprep.subr.mxu0 0.0
    %2644 = vmatpush1.msra.mxu0 0.0
    %2645 = vmatprep.subr.mxu0 0.0
    %2646 = vmatpush1.msra.mxu0 0.0
    %2647 = vmatprep.subr.mxu0 0.0
    %2648 = vmatpush1.msra.mxu0 0.0
    %2649 = vmatprep.subr.mxu0 0.0
    %2650 = vmatpush1.msra.mxu0 0.0
    %2651 = vmatprep.subr.mxu0 0.0
    %2652 = vmatpush1.msra.mxu0 0.0
    %2653 = vmatprep.subr.mxu0 0.0
    %2654 = vmatpush1.msra.mxu0 0.0
    %2655 = vmatprep.subr.mxu0 0.0
    %2656 = vmatpush1.msra.mxu0 0.0
    %2657 = vmatprep.subr.mxu0 0.0
    %2658 = vmatpush1.msra.mxu0 0.0
    %2659 = vmatprep.subr.mxu0 0.0
    %2660 = vmatpush1.msra.mxu0 0.0
    %2661 = vmatprep.subr.mxu0 0.0
    %2662 = vmatpush1.msra.mxu0 0.0
    %2663 = vmatprep.mubr.f32.mxu0 0.0
    %2664 = vmatmul.mubr.f32.gmra.mrb[0].mxu0 %v2597
    %v2665 = vpop.f32.mrb[0].mxu0
    %v2666 = vadd.f32 0.0, %v2665
    %v2667 = vpop.f32.mrb[0].mxu0
    %2668 = vdwg.mxu0
    %v2670 = vsel %vm1101, %v2666, 0
    %2672 = vmatprep.subr.mxu0 0.0
    %2673 = vmatpush1.msra.mxu0 %v1732
    %2674 = vmatprep.subr.mxu0 0.0
    %2675 = vmatpush1.msra.mxu0 0.0
    %2676 = vmatprep.subr.mxu0 0.0
    %2677 = vmatpush1.msra.mxu0 0.0
    %2678 = vmatprep.subr.mxu0 0.0
    %2679 = vmatpush1.msra.mxu0 0.0
    %2680 = vmatprep.subr.mxu0 0.0
    %2681 = vmatpush1.msra.mxu0 0.0
    %2682 = vmatprep.subr.mxu0 0.0
    %2683 = vmatpush1.msra.mxu0 0.0
    %2684 = vmatprep.subr.mxu0 0.0
    %2685 = vmatpush1.msra.mxu0 0.0
    %2686 = vmatprep.subr.mxu0 0.0
    %2687 = vmatpush1.msra.mxu0 0.0
    %2688 = vmatprep.subr.mxu0 0.0
    %2689 = vmatpush1.msra.mxu0 0.0
    %2690 = vmatprep.subr.mxu0 0.0
    %2691 = vmatpush1.msra.mxu0 0.0
    %2692 = vmatprep.subr.mxu0 0.0
    %2693 = vmatpush1.msra.mxu0 0.0
    %2694 = vmatprep.subr.mxu0 0.0
    %2695 = vmatpush1.msra.mxu0 0.0
    %2696 = vmatprep.subr.mxu0 0.0
    %2697 = vmatpush1.msra.mxu0 0.0
    %2698 = vmatprep.subr.mxu0 0.0
    %2699 = vmatpush1.msra.mxu0 0.0
    %2700 = vmatprep.subr.mxu0 0.0
    %2701 = vmatpush1.msra.mxu0 0.0
    %2702 = vmatprep.subr.mxu0 0.0
    %2703 = vmatpush1.msra.mxu0 0.0
    %2704 = vmatprep.subr.mxu0 0.0
    %2705 = vmatpush1.msra.mxu0 0.0
    %2706 = vmatprep.subr.mxu0 0.0
    %2707 = vmatpush1.msra.mxu0 0.0
    %2708 = vmatprep.subr.mxu0 0.0
    %2709 = vmatpush1.msra.mxu0 0.0
    %2710 = vmatprep.subr.mxu0 0.0
    %2711 = vmatpush1.msra.mxu0 0.0
    %2712 = vmatprep.subr.mxu0 0.0
    %2713 = vmatpush1.msra.mxu0 0.0
    %2714 = vmatprep.subr.mxu0 0.0
    %2715 = vmatpush1.msra.mxu0 0.0
    %2716 = vmatprep.subr.mxu0 0.0
    %2717 = vmatpush1.msra.mxu0 0.0
    %2718 = vmatprep.subr.mxu0 0.0
    %2719 = vmatpush1.msra.mxu0 0.0
    %2720 = vmatprep.subr.mxu0 0.0
    %2721 = vmatpush1.msra.mxu0 0.0
    %2722 = vmatprep.subr.mxu0 0.0
    %2723 = vmatpush1.msra.mxu0 0.0
    %2724 = vmatprep.subr.mxu0 0.0
    %2725 = vmatpush1.msra.mxu0 0.0
    %2726 = vmatprep.subr.mxu0 0.0
    %2727 = vmatpush1.msra.mxu0 0.0
    %2728 = vmatprep.subr.mxu0 0.0
    %2729 = vmatpush1.msra.mxu0 0.0
    %2730 = vmatprep.subr.mxu0 0.0
    %2731 = vmatpush1.msra.mxu0 0.0
    %2732 = vmatprep.subr.mxu0 0.0
    %2733 = vmatpush1.msra.mxu0 0.0
    %2734 = vmatprep.subr.mxu0 0.0
    %2735 = vmatpush1.msra.mxu0 0.0
    %2736 = vmatprep.mubr.f32.mxu0 0.0
    %2737 = vmatmul.mubr.f32.gmra.mrb[0].mxu0 %v2670
    %v2738 = vpop.f32.mrb[0].mxu0
    %v2739 = vadd.f32 0.0, %v2738
    %v2740 = vpop.f32.mrb[0].mxu0
    %2741 = vdwg.mxu0
    %v2742 = vadd.f32 %v2506, %v2739
    %v2744 = vsel %vm1101, %v928, 0
    %v2747 = vsel %vm1101, %v1013, 0
    %2749 = vmatprep.subr.mxu0 0.0
    %2750 = vmatpush1.xpose.msra.mxu0 %v2747
    %2751 = vmatprep.subr.mxu0 0.0
    %2752 = vmatpush1.xpose.msra.mxu0 0.0
    %2753 = vmatprep.subr.mxu0 0.0
    %2754 = vmatpush1.xpose.msra.mxu0 0.0
    %2755 = vmatprep.subr.mxu0 0.0
    %2756 = vmatpush1.xpose.msra.mxu0 0.0
    %2757 = vmatprep.subr.mxu0 0.0
    %2758 = vmatpush1.xpose.msra.mxu0 0.0
    %2759 = vmatprep.subr.mxu0 0.0
    %2760 = vmatpush1.xpose.msra.mxu0 0.0
    %2761 = vmatprep.subr.mxu0 0.0
    %2762 = vmatpush1.xpose.msra.mxu0 0.0
    %2763 = vmatprep.subr.mxu0 0.0
    %2764 = vmatpush1.xpose.msra.mxu0 0.0
    %2765 = vmatprep.subr.mxu0 0.0
    %2766 = vmatpush1.xpose.msra.mxu0 0.0
    %2767 = vmatprep.subr.mxu0 0.0
    %2768 = vmatpush1.xpose.msra.mxu0 0.0
    %2769 = vmatprep.subr.mxu0 0.0
    %2770 = vmatpush1.xpose.msra.mxu0 0.0
    %2771 = vmatprep.subr.mxu0 0.0
    %2772 = vmatpush1.xpose.msra.mxu0 0.0
    %2773 = vmatprep.subr.mxu0 0.0
    %2774 = vmatpush1.xpose.msra.mxu0 0.0
    %2775 = vmatprep.subr.mxu0 0.0
    %2776 = vmatpush1.xpose.msra.mxu0 0.0
    %2777 = vmatprep.subr.mxu0 0.0
    %2778 = vmatpush1.xpose.msra.mxu0 0.0
    %2779 = vmatprep.subr.mxu0 0.0
    %2780 = vmatpush1.xpose.msra.mxu0 0.0
    %2781 = vmatprep.subr.mxu0 0.0
    %2782 = vmatpush1.xpose.msra.mxu0 0.0
    %2783 = vmatprep.subr.mxu0 0.0
    %2784 = vmatpush1.xpose.msra.mxu0 0.0
    %2785 = vmatprep.subr.mxu0 0.0
    %2786 = vmatpush1.xpose.msra.mxu0 0.0
    %2787 = vmatprep.subr.mxu0 0.0
    %2788 = vmatpush1.xpose.msra.mxu0 0.0
    %2789 = vmatprep.subr.mxu0 0.0
    %2790 = vmatpush1.xpose.msra.mxu0 0.0
    %2791 = vmatprep.subr.mxu0 0.0
    %2792 = vmatpush1.xpose.msra.mxu0 0.0
    %2793 = vmatprep.subr.mxu0 0.0
    %2794 = vmatpush1.xpose.msra.mxu0 0.0
    %2795 = vmatprep.subr.mxu0 0.0
    %2796 = vmatpush1.xpose.msra.mxu0 0.0
    %2797 = vmatprep.subr.mxu0 0.0
    %2798 = vmatpush1.xpose.msra.mxu0 0.0
    %2799 = vmatprep.subr.mxu0 0.0
    %2800 = vmatpush1.xpose.msra.mxu0 0.0
    %2801 = vmatprep.subr.mxu0 0.0
    %2802 = vmatpush1.xpose.msra.mxu0 0.0
    %2803 = vmatprep.subr.mxu0 0.0
    %2804 = vmatpush1.xpose.msra.mxu0 0.0
    %2805 = vmatprep.subr.mxu0 0.0
    %2806 = vmatpush1.xpose.msra.mxu0 0.0
    %2807 = vmatprep.subr.mxu0 0.0
    %2808 = vmatpush1.xpose.msra.mxu0 0.0
    %2809 = vmatprep.subr.mxu0 0.0
    %2810 = vmatpush1.xpose.msra.mxu0 0.0
    %2811 = vmatprep.subr.mxu0 0.0
    %2812 = vmatpush1.xpose.msra.mxu0 0.0
    %2813 = vmatprep.mubr.f32.mxu0 0.0
    %2814 = vmatmul.mubr.f32.gmra.mrb[0].mxu0 %v2744
    %v2815 = vpop.f32.mrb[0].mxu0
    %v2816 = vadd.f32 0.0, %v2815
    %v2817 = vpop.f32.mrb[0].mxu0
    %2818 = vdwg.mxu0
    %v2819 = vsel %vm1101, %v2816, -inf
    %2820 = vmax.xlane.f32.xlu0 %v2819
    %v2821 = vpop.xlane.xlu0 %2820
    %v2822 = vsub.f32 %v2816, %v2821
    %v2823 = vmul.f32 %v2822, 1.442695
    %v2824 = vpow.pop %v2823
    %v2825 = vsel %vm1101, %v2824, 0.0
    %2826 = vadd.xlane.f32.xlu0 %v2825
    %v2827 = vpop.xlane.xlu0 %2826
    %v2828 = vrcp.pop %v2827
    %v2829 = vmul.f32 %v2824, %v2828
    %v2831 = vsel %vm1101, %v2829, 0
    %2833 = vmatprep.subr.mxu0 0.0
    %2834 = vmatpush1.msra.mxu0 %v1098
    %2835 = vmatprep.subr.mxu0 0.0
    %2836 = vmatpush1.msra.mxu0 0.0
    %2837 = vmatprep.subr.mxu0 0.0
    %2838 = vmatpush1.msra.mxu0 0.0
    %2839 = vmatprep.subr.mxu0 0.0
    %2840 = vmatpush1.msra.mxu0 0.0
    %2841 = vmatprep.subr.mxu0 0.0
    %2842 = vmatpush1.msra.mxu0 0.0
    %2843 = vmatprep.subr.mxu0 0.0
    %2844 = vmatpush1.msra.mxu0 0.0
    %2845 = vmatprep.subr.mxu0 0.0
    %2846 = vmatpush1.msra.mxu0 0.0
    %2847 = vmatprep.subr.mxu0 0.0
    %2848 = vmatpush1.msra.mxu0 0.0
    %2849 = vmatprep.subr.mxu0 0.0
    %2850 = vmatpush1.msra.mxu0 0.0
    %2851 = vmatprep.subr.mxu0 0.0
    %2852 = vmatpush1.msra.mxu0 0.0
    %2853 = vmatprep.subr.mxu0 0.0
    %2854 = vmatpush1.msra.mxu0 0.0
    %2855 = vmatprep.subr.mxu0 0.0
    %2856 = vmatpush1.msra.mxu0 0.0
    %2857 = vmatprep.subr.mxu0 0.0
    %2858 = vmatpush1.msra.mxu0 0.0
    %2859 = vmatprep.subr.mxu0 0.0
    %2860 = vmatpush1.msra.mxu0 0.0
    %2861 = vmatprep.subr.mxu0 0.0
    %2862 = vmatpush1.msra.mxu0 0.0
    %2863 = vmatprep.subr.mxu0 0.0
    %2864 = vmatpush1.msra.mxu0 0.0
    %2865 = vmatprep.subr.mxu0 0.0
    %2866 = vmatpush1.msra.mxu0 0.0
    %2867 = vmatprep.subr.mxu0 0.0
    %2868 = vmatpush1.msra.mxu0 0.0
    %2869 = vmatprep.subr.mxu0 0.0
    %2870 = vmatpush1.msra.mxu0 0.0
    %2871 = vmatprep.subr.mxu0 0.0
    %2872 = vmatpush1.msra.mxu0 0.0
    %2873 = vmatprep.subr.mxu0 0.0
    %2874 = vmatpush1.msra.mxu0 0.0
    %2875 = vmatprep.subr.mxu0 0.0
    %2876 = vmatpush1.msra.mxu0 0.0
    %2877 = vmatprep.subr.mxu0 0.0
    %2878 = vmatpush1.msra.mxu0 0.0
    %2879 = vmatprep.subr.mxu0 0.0
    %2880 = vmatpush1.msra.mxu0 0.0
    %2881 = vmatprep.subr.mxu0 0.0
    %2882 = vmatpush1.msra.mxu0 0.0
    %2883 = vmatprep.subr.mxu0 0.0
    %2884 = vmatpush1.msra.mxu0 0.0
    %2885 = vmatprep.subr.mxu0 0.0
    %2886 = vmatpush1.msra.mxu0 0.0
    %2887 = vmatprep.subr.mxu0 0.0
    %2888 = vmatpush1.msra.mxu0 0.0
    %2889 = vmatprep.subr.mxu0 0.0
    %2890 = vmatpush1.msra.mxu0 0.0
    %2891 = vmatprep.subr.mxu0 0.0
    %2892 = vmatpush1.msra.mxu0 0.0
    %2893 = vmatprep.subr.mxu0 0.0
    %2894 = vmatpush1.msra.mxu0 0.0
    %2895 = vmatprep.subr.mxu0 0.0
    %2896 = vmatpush1.msra.mxu0 0.0
    %2897 = vmatprep.mubr.f32.mxu0 0.0
    %2898 = vmatmul.mubr.f32.gmra.mrb[0].mxu0 %v2831
    %v2899 = vpop.f32.mrb[0].mxu0
    %v2900 = vadd.f32 0.0, %v2899
    %v2901 = vpop.f32.mrb[0].mxu0
    %2902 = vdwg.mxu0
    %v2904 = vsel %vm1101, %v2900, 0
    %2906 = vmatprep.subr.mxu0 0.0
    %2907 = vmatpush1.msra.mxu0 %v1968
    %2908 = vmatprep.subr.mxu0 0.0
    %2909 = vmatpush1.msra.mxu0 0.0
    %2910 = vmatprep.subr.mxu0 0.0
    %2911 = vmatpush1.msra.mxu0 0.0
    %2912 = vmatprep.subr.mxu0 0.0
    %2913 = vmatpush1.msra.mxu0 0.0
    %2914 = vmatprep.subr.mxu0 0.0
    %2915 = vmatpush1.msra.mxu0 0.0
    %2916 = vmatprep.subr.mxu0 0.0
    %2917 = vmatpush1.msra.mxu0 0.0
    %2918 = vmatprep.subr.mxu0 0.0
    %2919 = vmatpush1.msra.mxu0 0.0
    %2920 = vmatprep.subr.mxu0 0.0
    %2921 = vmatpush1.msra.mxu0 0.0
    %2922 = vmatprep.subr.mxu0 0.0
    %2923 = vmatpush1.msra.mxu0 0.0
    %2924 = vmatprep.subr.mxu0 0.0
    %2925 = vmatpush1.msra.mxu0 0.0
    %2926 = vmatprep.subr.mxu0 0.0
    %2927 = vmatpush1.msra.mxu0 0.0
    %2928 = vmatprep.subr.mxu0 0.0
    %2929 = vmatpush1.msra.mxu0 0.0
    %2930 = vmatprep.subr.mxu0 0.0
    %2931 = vmatpush1.msra.mxu0 0.0
    %2932 = vmatprep.subr.mxu0 0.0
    %2933 = vmatpush1.msra.mxu0 0.0
    %2934 = vmatprep.subr.mxu0 0.0
    %2935 = vmatpush1.msra.mxu0 0.0
    %2936 = vmatprep.subr.mxu0 0.0
    %2937 = vmatpush1.msra.mxu0 0.0
    %2938 = vmatprep.subr.mxu0 0.0
    %2939 = vmatpush1.msra.mxu0 0.0
    %2940 = vmatprep.subr.mxu0 0.0
    %2941 = vmatpush1.msra.mxu0 0.0
    %2942 = vmatprep.subr.mxu0 0.0
    %2943 = vmatpush1.msra.mxu0 0.0
    %2944 = vmatprep.subr.mxu0 0.0
    %2945 = vmatpush1.msra.mxu0 0.0
    %2946 = vmatprep.subr.mxu0 0.0
    %2947 = vmatpush1.msra.mxu0 0.0
    %2948 = vmatprep.subr.mxu0 0.0
    %2949 = vmatpush1.msra.mxu0 0.0
    %2950 = vmatprep.subr.mxu0 0.0
    %2951 = vmatpush1.msra.mxu0 0.0
    %2952 = vmatprep.subr.mxu0 0.0
    %2953 = vmatpush1.msra.mxu0 0.0
    %2954 = vmatprep.subr.mxu0 0.0
    %2955 = vmatpush1.msra.mxu0 0.0
    %2956 = vmatprep.subr.mxu0 0.0
    %2957 = vmatpush1.msra.mxu0 0.0
    %2958 = vmatprep.subr.mxu0 0.0
    %2959 = vmatpush1.msra.mxu0 0.0
    %2960 = vmatprep.subr.mxu0 0.0
    %2961 = vmatpush1.msra.mxu0 0.0
    %2962 = vmatprep.subr.mxu0 0.0
    %2963 = vmatpush1.msra.mxu0 0.0
    %2964 = vmatprep.subr.mxu0 0.0
    %2965 = vmatpush1.msra.mxu0 0.0
    %2966 = vmatprep.subr.mxu0 0.0
    %2967 = vmatpush1.msra.mxu0 0.0
    %2968 = vmatprep.subr.mxu0 0.0
    %2969 = vmatpush1.msra.mxu0 0.0
    %2970 = vmatprep.mubr.f32.mxu0 0.0
    %2971 = vmatmul.mubr.f32.gmra.mrb[0].mxu0 %v2904
    %v2972 = vpop.f32.mrb[0].mxu0
    %v2973 = vadd.f32 0.0, %v2972
    %v2974 = vpop.f32.mrb[0].mxu0
    %2975 = vdwg.mxu0
    %v2976 = vadd.f32 %v2742, %v2973
    %v2977 = vld [vmem:[%s8] sm:$0x1]
    %v2978 = vlaneseq
    %v2979 = vshrl.u32 %v2978, 7
    %v2980 = vsub.s32 0, %v2979
    %v2981 = vrot.slane %v2977, %v2980
    %v2982 = vadd.f32 %v2042, %v2981
    %v2983 = vadd.f32 %v2976, %v2981
    %v2984 = vadd.f32 %v75, %v2982
    %v2985 = vadd.f32 %v76, %v2983
    %v2986 = vld [vmem:[%s9] sm:$0x1]
    %v2987 = vld [vmem:[%s10] sm:$0x1]
    %v2988 = vsel %vm86, %v2984, 0.0
    %2989 = vadd.xlane.f32.xlu0 %v2988
    %v2990 = vpop.xlane.xlu0 %2989
    %v2991 = vsel %vm86, %v2985, 0.0
    %2992 = vadd.xlane.f32.xlu0 %v2991
    %v2993 = vpop.xlane.xlu0 %2992
    %v2994 = vrcp.pop 32.0
    %v2995 = vmul.f32 %v2990, %v2994
    %v2996 = vmul.f32 %v2993, %v2994
    %v2997 = vsub.f32 %v2984, %v2995
    %v2998 = vsub.f32 %v2985, %v2996
    %v2999 = vmul.f32 %v2997, %v2997
    %v3000 = vmul.f32 %v2998, %v2998
    %v3001 = vsel %vm86, %v2999, 0.0
    %3002 = vadd.xlane.f32.xlu0 %v3001
    %v3003 = vpop.xlane.xlu0 %3002
    %v3004 = vsel %vm86, %v3000, 0.0
    %3005 = vadd.xlane.f32.xlu0 %v3004
    %v3006 = vpop.xlane.xlu0 %3005
    %v3007 = vmul.f32 %v3003, %v2994
    %v3008 = vmul.f32 %v3006, %v2994
    %v3009 = vadd.f32 %v3007, 1e-05
    %v3010 = vadd.f32 %v3008, 1e-05
    %v3011 = vrsqrt.pop %v3009
    %v3012 = vrsqrt.pop %v3010
    %v3013 = vmul.f32 %v2997, %v3011
    %v3014 = vmul.f32 %v2998, %v3012
    %v3015 = vlaneseq
    %v3016 = vshrl.u32 %v3015, 7
    %v3017 = vsub.s32 0, %v3016
    %v3018 = vrot.slane %v2986, %v3017
    %v3019 = vmul.f32 %v3013, %v3018
    %v3020 = vmul.f32 %v3014, %v3018
    %v3021 = vlaneseq
    %v3022 = vshrl.u32 %v3021, 7
    %v3023 = vsub.s32 0, %v3022
    %v3024 = vrot.slane %v2987, %v3023
    %v3025 = vadd.f32 %v3019, %v3024
    %v3026 = vadd.f32 %v3020, %v3024
    %v3027 = vld [vmem:[%s13] sm:$0xff]
    %v3028 = vld [vmem:[%s13 + $0x8] sm:$0xff]
    %v3029 = vld [vmem:[%s13 + $0x10] sm:$0xff]
    %v3030 = vld [vmem:[%s13 + $0x18] sm:$0xff]
    %v3031 = vld [vmem:[%s14] sm:$0x1]
    %v3032 = vlaneseq
    %v3033 = vshrl.u32 %v3032, 7
    %v3034 = vsub.s32 0, %v3033
    %v3035 = vrot.slane %v3031, %v3034
    %v3037 = vsel %vm86, %v3025, 0
    %v3040 = vsel %vm86, %v3026, 0
    %3042 = vmatprep.subr.mxu0 0.0
    %3043 = vmatpush1.msra.mxu0 %v3027
    %3044 = vmatprep.subr.mxu0 0.0
    %3045 = vmatpush1.msra.mxu0 %v3028
    %3046 = vmatprep.subr.mxu0 0.0
    %3047 = vmatpush1.msra.mxu0 %v3029
    %3048 = vmatprep.subr.mxu0 0.0
    %3049 = vmatpush1.msra.mxu0 %v3030
    %3050 = vmatprep.subr.mxu0 0.0
    %3051 = vmatpush1.msra.mxu0 0.0
    %3052 = vmatprep.subr.mxu0 0.0
    %3053 = vmatpush1.msra.mxu0 0.0
    %3054 = vmatprep.subr.mxu0 0.0
    %3055 = vmatpush1.msra.mxu0 0.0
    %3056 = vmatprep.subr.mxu0 0.0
    %3057 = vmatpush1.msra.mxu0 0.0
    %3058 = vmatprep.subr.mxu0 0.0
    %3059 = vmatpush1.msra.mxu0 0.0
    %3060 = vmatprep.subr.mxu0 0.0
    %3061 = vmatpush1.msra.mxu0 0.0
    %3062 = vmatprep.subr.mxu0 0.0
    %3063 = vmatpush1.msra.mxu0 0.0
    %3064 = vmatprep.subr.mxu0 0.0
    %3065 = vmatpush1.msra.mxu0 0.0
    %3066 = vmatprep.subr.mxu0 0.0
    %3067 = vmatpush1.msra.mxu0 0.0
    %3068 = vmatprep.subr.mxu0 0.0
    %3069 = vmatpush1.msra.mxu0 0.0
    %3070 = vmatprep.subr.mxu0 0.0
    %3071 = vmatpush1.msra.mxu0 0.0
    %3072 = vmatprep.subr.mxu0 0.0
    %3073 = vmatpush1.msra.mxu0 0.0
    %3074 = vmatprep.subr.mxu0 0.0
    %3075 = vmatpush1.msra.mxu0 0.0
    %3076 = vmatprep.subr.mxu0 0.0
    %3077 = vmatpush1.msra.mxu0 0.0
    %3078 = vmatprep.subr.mxu0 0.0
    %3079 = vmatpush1.msra.mxu0 0.0
    %3080 = vmatprep.subr.mxu0 0.0
    %3081 = vmatpush1.msra.mxu0 0.0
    %3082 = vmatprep.subr.mxu0 0.0
    %3083 = vmatpush1.msra.mxu0 0.0
    %3084 = vmatprep.subr.mxu0 0.0
    %3085 = vmatpush1.msra.mxu0 0.0
    %3086 = vmatprep.subr.mxu0 0.0
    %3087 = vmatpush1.msra.mxu0 0.0
    %3088 = vmatprep.subr.mxu0 0.0
    %3089 = vmatpush1.msra.mxu0 0.0
    %3090 = vmatprep.subr.mxu0 0.0
    %3091 = vmatpush1.msra.mxu0 0.0
    %3092 = vmatprep.subr.mxu0 0.0
    %3093 = vmatpush1.msra.mxu0 0.0
    %3094 = vmatprep.subr.mxu0 0.0
    %3095 = vmatpush1.msra.mxu0 0.0
    %3096 = vmatprep.subr.mxu0 0.0
    %3097 = vmatpush1.msra.mxu0 0.0
    %3098 = vmatprep.subr.mxu0 0.0
    %3099 = vmatpush1.msra.mxu0 0.0
    %3100 = vmatprep.subr.mxu0 0.0
    %3101 = vmatpush1.msra.mxu0 0.0
    %3102 = vmatprep.subr.mxu0 0.0
    %3103 = vmatpush1.msra.mxu0 0.0
    %3104 = vmatprep.subr.mxu0 0.0
    %3105 = vmatpush1.msra.mxu0 0.0
    %3106 = vmatprep.mubr.f32.mxu0 0.0
    %3107 = vmatmul.mubr.f32.gmra.mrb[0].mxu0 %v3037
    %v3108 = vpop.f32.mrb[0].mxu0
    %v3109 = vadd.f32 %v3035, %v3108
    %v3110 = vpop.f32.mrb[0].mxu0
    %3111 = vmatprep.mubr.f32.mxu0 0.0
    %3112 = vmatmul.mubr.f32.gmra.mrb[0].mxu0 %v3040
    %v3113 = vpop.f32.mrb[0].mxu0
    %v3114 = vadd.f32 %v3035, %v3113
    %v3115 = vpop.f32.mrb[0].mxu0
    %3116 = vdwg.mxu0
    %v3117 = vmul.f32 %v3109, %v3109
    %v3118 = vmul.f32 %v3114, %v3114
    %v3119 = vmul.f32 %v3109, %v3117
    %v3120 = vmul.f32 %v3114, %v3118
    %v3121 = vmul.f32 %v3119, 0.044715
    %v3122 = vmul.f32 %v3120, 0.044715
    %v3123 = vadd.f32 %v3109, %v3121
    %v3124 = vadd.f32 %v3114, %v3122
    %v3125 = vmul.f32 %v3123, 0.7978846
    %v3126 = vmul.f32 %v3124, 0.7978846
    %v3127 = vtanh.pop %v3125
    %v3128 = vtanh.pop %v3126
    %v3129 = vadd.f32 %v3127, 1.0
    %v3130 = vadd.f32 %v3128, 1.0
    %v3131 = vmul.f32 %v3129, 0.5
    %v3132 = vmul.f32 %v3130, 0.5
    %v3133 = vmul.f32 %v3109, %v3131
    %v3134 = vmul.f32 %v3114, %v3132
    %v3135 = vld [vmem:[%s15] sm:$0xff]
    %v3136 = vld [vmem:[%s15 + $0x8] sm:$0xff]
    %v3137 = vld [vmem:[%s15 + $0x10] sm:$0xff]
    %v3138 = vld [vmem:[%s15 + $0x18] sm:$0xff]
    %v3139 = vld [vmem:[%s15 + $0x20] sm:$0xff]
    %v3140 = vld [vmem:[%s15 + $0x28] sm:$0xff]
    %v3141 = vld [vmem:[%s15 + $0x30] sm:$0xff]
    %v3142 = vld [vmem:[%s15 + $0x38] sm:$0xff]
    %v3143 = vld [vmem:[%s16] sm:$0x1]
    %v3144 = vlaneseq
    %v3145 = vshrl.u32 %v3144, 7
    %v3146 = vsub.s32 0, %v3145
    %v3147 = vrot.slane %v3143, %v3146
    %vm3148 = vcmask 523264
    %v3150 = vsel %vm3148, %v3133, 0
    %v3153 = vsel %vm3148, %v3134, 0
    %3155 = vmatprep.subr.mxu0 0.0
    %3156 = vmatpush1.msra.mxu0 %v3135
    %3157 = vmatprep.subr.mxu0 0.0
    %3158 = vmatpush1.msra.mxu0 %v3136
    %3159 = vmatprep.subr.mxu0 0.0
    %3160 = vmatpush1.msra.mxu0 %v3137
    %3161 = vmatprep.subr.mxu0 0.0
    %3162 = vmatpush1.msra.mxu0 %v3138
    %3163 = vmatprep.subr.mxu0 0.0
    %3164 = vmatpush1.msra.mxu0 %v3139
    %3165 = vmatprep.subr.mxu0 0.0
    %3166 = vmatpush1.msra.mxu0 %v3140
    %3167 = vmatprep.subr.mxu0 0.0
    %3168 = vmatpush1.msra.mxu0 %v3141
    %3169 = vmatprep.subr.mxu0 0.0
    %3170 = vmatpush1.msra.mxu0 %v3142
    %3171 = vmatprep.subr.mxu0 0.0
    %3172 = vmatpush1.msra.mxu0 0.0
    %3173 = vmatprep.subr.mxu0 0.0
    %3174 = vmatpush1.msra.mxu0 0.0
    %3175 = vmatprep.subr.mxu0 0.0
    %3176 = vmatpush1.msra.mxu0 0.0
    %3177 = vmatprep.subr.mxu0 0.0
    %3178 = vmatpush1.msra.mxu0 0.0
    %3179 = vmatprep.subr.mxu0 0.0
    %3180 = vmatpush1.msra.mxu0 0.0
    %3181 = vmatprep.subr.mxu0 0.0
    %3182 = vmatpush1.msra.mxu0 0.0
    %3183 = vmatprep.subr.mxu0 0.0
    %3184 = vmatpush1.msra.mxu0 0.0
    %3185 = vmatprep.subr.mxu0 0.0
    %3186 = vmatpush1.msra.mxu0 0.0
    %3187 = vmatprep.subr.mxu0 0.0
    %3188 = vmatpush1.msra.mxu0 0.0
    %3189 = vmatprep.subr.mxu0 0.0
    %3190 = vmatpush1.msra.mxu0 0.0
    %3191 = vmatprep.subr.mxu0 0.0
    %3192 = vmatpush1.msra.mxu0 0.0
    %3193 = vmatprep.subr.mxu0 0.0
    %3194 = vmatpush1.msra.mxu0 0.0
    %3195 = vmatprep.subr.mxu0 0.0
    %3196 = vmatpush1.msra.mxu0 0.0
    %3197 = vmatprep.subr.mxu0 0.0
    %3198 = vmatpush1.msra.mxu0 0.0
    %3199 = vmatprep.subr.mxu0 0.0
    %3200 = vmatpush1.msra.mxu0 0.0
    %3201 = vmatprep.subr.mxu0 0.0
    %3202 = vmatpush1.msra.mxu0 0.0
    %3203 = vmatprep.subr.mxu0 0.0
    %3204 = vmatpush1.msra.mxu0 0.0
    %3205 = vmatprep.subr.mxu0 0.0
    %3206 = vmatpush1.msra.mxu0 0.0
    %3207 = vmatprep.subr.mxu0 0.0
    %3208 = vmatpush1.msra.mxu0 0.0
    %3209 = vmatprep.subr.mxu0 0.0
    %3210 = vmatpush1.msra.mxu0 0.0
    %3211 = vmatprep.subr.mxu0 0.0
    %3212 = vmatpush1.msra.mxu0 0.0
    %3213 = vmatprep.subr.mxu0 0.0
    %3214 = vmatpush1.msra.mxu0 0.0
    %3215 = vmatprep.subr.mxu0 0.0
    %3216 = vmatpush1.msra.mxu0 0.0
    %3217 = vmatprep.subr.mxu0 0.0
    %3218 = vmatpush1.msra.mxu0 0.0
    %3219 = vmatprep.mubr.f32.mxu0 0.0
    %3220 = vmatmul.mubr.f32.gmra.mrb[0].mxu0 %v3150
    %v3221 = vpop.f32.mrb[0].mxu0
    %v3222 = vadd.f32 %v3147, %v3221
    %v3223 = vpop.f32.mrb[0].mxu0
    %3224 = vmatprep.mubr.f32.mxu0 0.0
    %3225 = vmatmul.mubr.f32.gmra.mrb[0].mxu0 %v3153
    %v3226 = vpop.f32.mrb[0].mxu0
    %v3227 = vadd.f32 %v3147, %v3226
    %v3228 = vpop.f32.mrb[0].mxu0
    %3229 = vdwg.mxu0
    %v3230 = vadd.f32 %v3025, %v3222
    %v3231 = vadd.f32 %v3026, %v3227
    %v3232 = vld [vmem:[%s11] sm:$0x1]
    %v3233 = vld [vmem:[%s12] sm:$0x1]
    %v3234 = vsel %vm86, %v3230, 0.0
    %3235 = vadd.xlane.f32.xlu0 %v3234
    %v3236 = vpop.xlane.xlu0 %3235
    %v3237 = vsel %vm86, %v3231, 0.0
    %3238 = vadd.xlane.f32.xlu0 %v3237
    %v3239 = vpop.xlane.xlu0 %3238
    %v3240 = vmul.f32 %v3236, %v2994
    %v3241 = vmul.f32 %v3239, %v2994
    %v3242 = vsub.f32 %v3230, %v3240
    %v3243 = vsub.f32 %v3231, %v3241
    %v3244 = vmul.f32 %v3242, %v3242
    %v3245 = vmul.f32 %v3243, %v3243
    %v3246 = vsel %vm86, %v3244, 0.0
    %3247 = vadd.xlane.f32.xlu0 %v3246
    %v3248 = vpop.xlane.xlu0 %3247
    %v3249 = vsel %vm86, %v3245, 0.0
    %3250 = vadd.xlane.f32.xlu0 %v3249
    %v3251 = vpop.xlane.xlu0 %3250
    %v3252 = vmul.f32 %v3248, %v2994
    %v3253 = vmul.f32 %v3251, %v2994
    %v3254 = vadd.f32 %v3252, 1e-05
    %v3255 = vadd.f32 %v3253, 1e-05
    %v3256 = vrsqrt.pop %v3254
    %v3257 = vrsqrt.pop %v3255
    %v3258 = vmul.f32 %v3242, %v3256
    %v3259 = vmul.f32 %v3243, %v3257
    %v3260 = vlaneseq
    %v3261 = vshrl.u32 %v3260, 7
    %v3262 = vsub.s32 0, %v3261
    %v3263 = vrot.slane %v3232, %v3262
    %v3264 = vmul.f32 %v3258, %v3263
    %v3265 = vmul.f32 %v3259, %v3263
    %v3266 = vlaneseq
    %v3267 = vshrl.u32 %v3266, 7
    %v3268 = vsub.s32 0, %v3267
    %v3269 = vrot.slane %v3233, %v3268
    %v3270 = vadd.f32 %v3264, %v3269
    %v3271 = vadd.f32 %v3265, %v3269
    %s3272 = scalar_lea.vmem %s1, 128
    %v3273 = vld [vmem:[%s3272] sm:$0xff]
    %v3274 = vld [vmem:[%s3272 + $0x8] sm:$0xff]
    %v3275 = vld [vmem:[%s3272 + $0x10] sm:$0xff]
    %v3276 = vld [vmem:[%s3272 + $0x18] sm:$0xff]
    %s3277 = scalar_lea.vmem %s4, 4
    %v3278 = vld [vmem:[%s3277] sm:$0x1]
    %v3279 = vlaneseq
    %v3280 = vshrl.u32 %v3279, 7
    %v3281 = vsub.s32 0, %v3280
    %v3282 = vrot.slane %v3278, %v3281
    %v3284 = vsel %vm86, %v3270, 0
    %v3287 = vsel %vm86, %v3271, 0
    %3289 = vmatprep.subr.mxu0 0.0
    %3290 = vmatpush1.msra.mxu0 %v3273
    %3291 = vmatprep.subr.mxu0 0.0
    %3292 = vmatpush1.msra.mxu0 %v3274
    %3293 = vmatprep.subr.mxu0 0.0
    %3294 = vmatpush1.msra.mxu0 %v3275
    %3295 = vmatprep.subr.mxu0 0.0
    %3296 = vmatpush1.msra.mxu0 %v3276
    %3297 = vmatprep.subr.mxu0 0.0
    %3298 = vmatpush1.msra.mxu0 0.0
    %3299 = vmatprep.subr.mxu0 0.0
    %3300 = vmatpush1.msra.mxu0 0.0
    %3301 = vmatprep.subr.mxu0 0.0
    %3302 = vmatpush1.msra.mxu0 0.0
    %3303 = vmatprep.subr.mxu0 0.0
    %3304 = vmatpush1.msra.mxu0 0.0
    %3305 = vmatprep.subr.mxu0 0.0
    %3306 = vmatpush1.msra.mxu0 0.0
    %3307 = vmatprep.subr.mxu0 0.0
    %3308 = vmatpush1.msra.mxu0 0.0
    %3309 = vmatprep.subr.mxu0 0.0
    %3310 = vmatpush1.msra.mxu0 0.0
    %3311 = vmatprep.subr.mxu0 0.0
    %3312 = vmatpush1.msra.mxu0 0.0
    %3313 = vmatprep.subr.mxu0 0.0
    %3314 = vmatpush1.msra.mxu0 0.0
    %3315 = vmatprep.subr.mxu0 0.0
    %3316 = vmatpush1.msra.mxu0 0.0
    %3317 = vmatprep.subr.mxu0 0.0
    %3318 = vmatpush1.msra.mxu0 0.0
    %3319 = vmatprep.subr.mxu0 0.0
    %3320 = vmatpush1.msra.mxu0 0.0
    %3321 = vmatprep.subr.mxu0 0.0
    %3322 = vmatpush1.msra.mxu0 0.0
    %3323 = vmatprep.subr.mxu0 0.0
    %3324 = vmatpush1.msra.mxu0 0.0
    %3325 = vmatprep.subr.mxu0 0.0
    %3326 = vmatpush1.msra.mxu0 0.0
    %3327 = vmatprep.subr.mxu0 0.0
    %3328 = vmatpush1.msra.mxu0 0.0
    %3329 = vmatprep.subr.mxu0 0.0
    %3330 = vmatpush1.msra.mxu0 0.0
    %3331 = vmatprep.subr.mxu0 0.0
    %3332 = vmatpush1.msra.mxu0 0.0
    %3333 = vmatprep.subr.mxu0 0.0
    %3334 = vmatpush1.msra.mxu0 0.0
    %3335 = vmatprep.subr.mxu0 0.0
    %3336 = vmatpush1.msra.mxu0 0.0
    %3337 = vmatprep.subr.mxu0 0.0
    %3338 = vmatpush1.msra.mxu0 0.0
    %3339 = vmatprep.subr.mxu0 0.0
    %3340 = vmatpush1.msra.mxu0 0.0
    %3341 = vmatprep.subr.mxu0 0.0
    %3342 = vmatpush1.msra.mxu0 0.0
    %3343 = vmatprep.subr.mxu0 0.0
    %3344 = vmatpush1.msra.mxu0 0.0
    %3345 = vmatprep.subr.mxu0 0.0
    %3346 = vmatpush1.msra.mxu0 0.0
    %3347 = vmatprep.subr.mxu0 0.0
    %3348 = vmatpush1.msra.mxu0 0.0
    %3349 = vmatprep.subr.mxu0 0.0
    %3350 = vmatpush1.msra.mxu0 0.0
    %3351 = vmatprep.subr.mxu0 0.0
    %3352 = vmatpush1.msra.mxu0 0.0
    %3353 = vmatprep.mubr.f32.mxu0 0.0
    %3354 = vmatmul.mubr.f32.gmra.mrb[0].mxu0 %v3284
    %v3355 = vpop.f32.mrb[0].mxu0
    %v3356 = vadd.f32 %v3282, %v3355
    %v3357 = vpop.f32.mrb[0].mxu0
    %3358 = vmatprep.mubr.f32.mxu0 0.0
    %3359 = vmatmul.mubr.f32.gmra.mrb[0].mxu0 %v3287
    %v3360 = vpop.f32.mrb[0].mxu0
    %v3361 = vadd.f32 %v3282, %v3360
    %v3362 = vpop.f32.mrb[0].mxu0
    %3363 = vdwg.mxu0
    %s3364 = scalar_lea.vmem %s2, 128
    %v3365 = vld [vmem:[%s3364] sm:$0xff]
    %v3366 = vld [vmem:[%s3364 + $0x8] sm:$0xff]
    %v3367 = vld [vmem:[%s3364 + $0x10] sm:$0xff]
    %v3368 = vld [vmem:[%s3364 + $0x18] sm:$0xff]
    %s3369 = scalar_lea.vmem %s5, 4
    %v3370 = vld [vmem:[%s3369] sm:$0x1]
    %v3371 = vlaneseq
    %v3372 = vshrl.u32 %v3371, 7
    %v3373 = vsub.s32 0, %v3372
    %v3374 = vrot.slane %v3370, %v3373
    %3375 = vmatprep.subr.mxu0 0.0
    %3376 = vmatpush1.msra.mxu0 %v3365
    %3377 = vmatprep.subr.mxu0 0.0
    %3378 = vmatpush1.msra.mxu0 %v3366
    %3379 = vmatprep.subr.mxu0 0.0
    %3380 = vmatpush1.msra.mxu0 %v3367
    %3381 = vmatprep.subr.mxu0 0.0
    %3382 = vmatpush1.msra.mxu0 %v3368
    %3383 = vmatprep.subr.mxu0 0.0
    %3384 = vmatpush1.msra.mxu0 0.0
    %3385 = vmatprep.subr.mxu0 0.0
    %3386 = vmatpush1.msra.mxu0 0.0
    %3387 = vmatprep.subr.mxu0 0.0
    %3388 = vmatpush1.msra.mxu0 0.0
    %3389 = vmatprep.subr.mxu0 0.0
    %3390 = vmatpush1.msra.mxu0 0.0
    %3391 = vmatprep.subr.mxu0 0.0
    %3392 = vmatpush1.msra.mxu0 0.0
    %3393 = vmatprep.subr.mxu0 0.0
    %3394 = vmatpush1.msra.mxu0 0.0
    %3395 = vmatprep.subr.mxu0 0.0
    %3396 = vmatpush1.msra.mxu0 0.0
    %3397 = vmatprep.subr.mxu0 0.0
    %3398 = vmatpush1.msra.mxu0 0.0
    %3399 = vmatprep.subr.mxu0 0.0
    %3400 = vmatpush1.msra.mxu0 0.0
    %3401 = vmatprep.subr.mxu0 0.0
    %3402 = vmatpush1.msra.mxu0 0.0
    %3403 = vmatprep.subr.mxu0 0.0
    %3404 = vmatpush1.msra.mxu0 0.0
    %3405 = vmatprep.subr.mxu0 0.0
    %3406 = vmatpush1.msra.mxu0 0.0
    %3407 = vmatprep.subr.mxu0 0.0
    %3408 = vmatpush1.msra.mxu0 0.0
    %3409 = vmatprep.subr.mxu0 0.0
    %3410 = vmatpush1.msra.mxu0 0.0
    %3411 = vmatprep.subr.mxu0 0.0
    %3412 = vmatpush1.msra.mxu0 0.0
    %3413 = vmatprep.subr.mxu0 0.0
    %3414 = vmatpush1.msra.mxu0 0.0
    %3415 = vmatprep.subr.mxu0 0.0
    %3416 = vmatpush1.msra.mxu0 0.0
    %3417 = vmatprep.subr.mxu0 0.0
    %3418 = vmatpush1.msra.mxu0 0.0
    %3419 = vmatprep.subr.mxu0 0.0
    %3420 = vmatpush1.msra.mxu0 0.0
    %3421 = vmatprep.subr.mxu0 0.0
    %3422 = vmatpush1.msra.mxu0 0.0
    %3423 = vmatprep.subr.mxu0 0.0
    %3424 = vmatpush1.msra.mxu0 0.0
    %3425 = vmatprep.subr.mxu0 0.0
    %3426 = vmatpush1.msra.mxu0 0.0
    %3427 = vmatprep.subr.mxu0 0.0
    %3428 = vmatpush1.msra.mxu0 0.0
    %3429 = vmatprep.subr.mxu0 0.0
    %3430 = vmatpush1.msra.mxu0 0.0
    %3431 = vmatprep.subr.mxu0 0.0
    %3432 = vmatpush1.msra.mxu0 0.0
    %3433 = vmatprep.subr.mxu0 0.0
    %3434 = vmatpush1.msra.mxu0 0.0
    %3435 = vmatprep.subr.mxu0 0.0
    %3436 = vmatpush1.msra.mxu0 0.0
    %3437 = vmatprep.subr.mxu0 0.0
    %3438 = vmatpush1.msra.mxu0 0.0
    %3439 = vmatprep.mubr.f32.mxu0 0.0
    %3440 = vmatmul.mubr.f32.gmra.mrb[0].mxu0 %v3284
    %v3441 = vpop.f32.mrb[0].mxu0
    %v3442 = vadd.f32 %v3374, %v3441
    %v3443 = vpop.f32.mrb[0].mxu0
    %3444 = vmatprep.mubr.f32.mxu0 0.0
    %3445 = vmatmul.mubr.f32.gmra.mrb[0].mxu0 %v3287
    %v3446 = vpop.f32.mrb[0].mxu0
    %v3447 = vadd.f32 %v3374, %v3446
    %v3448 = vpop.f32.mrb[0].mxu0
    %3449 = vdwg.mxu0
    %s3450 = scalar_lea.vmem %s3, 128
    %v3451 = vld [vmem:[%s3450] sm:$0xff]
    %v3452 = vld [vmem:[%s3450 + $0x8] sm:$0xff]
    %v3453 = vld [vmem:[%s3450 + $0x10] sm:$0xff]
    %v3454 = vld [vmem:[%s3450 + $0x18] sm:$0xff]
    %s3455 = scalar_lea.vmem %s6, 4
    %v3456 = vld [vmem:[%s3455] sm:$0x1]
    %v3457 = vlaneseq
    %v3458 = vshrl.u32 %v3457, 7
    %v3459 = vsub.s32 0, %v3458
    %v3460 = vrot.slane %v3456, %v3459
    %3461 = vmatprep.subr.mxu0 0.0
    %3462 = vmatpush1.msra.mxu0 %v3451
    %3463 = vmatprep.subr.mxu0 0.0
    %3464 = vmatpush1.msra.mxu0 %v3452
    %3465 = vmatprep.subr.mxu0 0.0
    %3466 = vmatpush1.msra.mxu0 %v3453
    %3467 = vmatprep.subr.mxu0 0.0
    %3468 = vmatpush1.msra.mxu0 %v3454
    %3469 = vmatprep.subr.mxu0 0.0
    %3470 = vmatpush1.msra.mxu0 0.0
    %3471 = vmatprep.subr.mxu0 0.0
    %3472 = vmatpush1.msra.mxu0 0.0
    %3473 = vmatprep.subr.mxu0 0.0
    %3474 = vmatpush1.msra.mxu0 0.0
    %3475 = vmatprep.subr.mxu0 0.0
    %3476 = vmatpush1.msra.mxu0 0.0
    %3477 = vmatprep.subr.mxu0 0.0
    %3478 = vmatpush1.msra.mxu0 0.0
    %3479 = vmatprep.subr.mxu0 0.0
    %3480 = vmatpush1.msra.mxu0 0.0
    %3481 = vmatprep.subr.mxu0 0.0
    %3482 = vmatpush1.msra.mxu0 0.0
    %3483 = vmatprep.subr.mxu0 0.0
    %3484 = vmatpush1.msra.mxu0 0.0
    %3485 = vmatprep.subr.mxu0 0.0
    %3486 = vmatpush1.msra.mxu0 0.0
    %3487 = vmatprep.subr.mxu0 0.0
    %3488 = vmatpush1.msra.mxu0 0.0
    %3489 = vmatprep.subr.mxu0 0.0
    %3490 = vmatpush1.msra.mxu0 0.0
    %3491 = vmatprep.subr.mxu0 0.0
    %3492 = vmatpush1.msra.mxu0 0.0
    %3493 = vmatprep.subr.mxu0 0.0
    %3494 = vmatpush1.msra.mxu0 0.0
    %3495 = vmatprep.subr.mxu0 0.0
    %3496 = vmatpush1.msra.mxu0 0.0
    %3497 = vmatprep.subr.mxu0 0.0
    %3498 = vmatpush1.msra.mxu0 0.0
    %3499 = vmatprep.subr.mxu0 0.0
    %3500 = vmatpush1.msra.mxu0 0.0
    %3501 = vmatprep.subr.mxu0 0.0
    %3502 = vmatpush1.msra.mxu0 0.0
    %3503 = vmatprep.subr.mxu0 0.0
    %3504 = vmatpush1.msra.mxu0 0.0
    %3505 = vmatprep.subr.mxu0 0.0
    %3506 = vmatpush1.msra.mxu0 0.0
    %3507 = vmatprep.subr.mxu0 0.0
    %3508 = vmatpush1.msra.mxu0 0.0
    %3509 = vmatprep.subr.mxu0 0.0
    %3510 = vmatpush1.msra.mxu0 0.0
    %3511 = vmatprep.subr.mxu0 0.0
    %3512 = vmatpush1.msra.mxu0 0.0
    %3513 = vmatprep.subr.mxu0 0.0
    %3514 = vmatpush1.msra.mxu0 0.0
    %3515 = vmatprep.subr.mxu0 0.0
    %3516 = vmatpush1.msra.mxu0 0.0
    %3517 = vmatprep.subr.mxu0 0.0
    %3518 = vmatpush1.msra.mxu0 0.0
    %3519 = vmatprep.subr.mxu0 0.0
    %3520 = vmatpush1.msra.mxu0 0.0
    %3521 = vmatprep.subr.mxu0 0.0
    %3522 = vmatpush1.msra.mxu0 0.0
    %3523 = vmatprep.subr.mxu0 0.0
    %3524 = vmatpush1.msra.mxu0 0.0
    %3525 = vmatprep.mubr.f32.mxu0 0.0
    %3526 = vmatmul.mubr.f32.gmra.mrb[0].mxu0 %v3284
    %v3527 = vpop.f32.mrb[0].mxu0
    %v3528 = vadd.f32 %v3460, %v3527
    %v3529 = vpop.f32.mrb[0].mxu0
    %3530 = vmatprep.mubr.f32.mxu0 0.0
    %3531 = vmatmul.mubr.f32.gmra.mrb[0].mxu0 %v3287
    %v3532 = vpop.f32.mrb[0].mxu0
    %v3533 = vadd.f32 %v3460, %v3532
    %v3534 = vpop.f32.mrb[0].mxu0
    %3535 = vdwg.mxu0
    %s3536 = scalar_lea.vmem %s1, 160
    %v3537 = vld [vmem:[%s3536] sm:$0xff]
    %v3538 = vld [vmem:[%s3536 + $0x8] sm:$0xff]
    %v3539 = vld [vmem:[%s3536 + $0x10] sm:$0xff]
    %v3540 = vld [vmem:[%s3536 + $0x18] sm:$0xff]
    %v3541 = vld [vmem:[%s3277 + $0x1] sm:$0x1]
    %v3542 = vlaneseq
    %v3543 = vshrl.u32 %v3542, 7
    %v3544 = vsub.s32 0, %v3543
    %v3545 = vrot.slane %v3541, %v3544
    %3546 = vmatprep.subr.mxu0 0.0
    %3547 = vmatpush1.msra.mxu0 %v3537
    %3548 = vmatprep.subr.mxu0 0.0
    %3549 = vmatpush1.msra.mxu0 %v3538
    %3550 = vmatprep.subr.mxu0 0.0
    %3551 = vmatpush1.msra.mxu0 %v3539
    %3552 = vmatprep.subr.mxu0 0.0
    %3553 = vmatpush1.msra.mxu0 %v3540
    %3554 = vmatprep.subr.mxu0 0.0
    %3555 = vmatpush1.msra.mxu0 0.0
    %3556 = vmatprep.subr.mxu0 0.0
    %3557 = vmatpush1.msra.mxu0 0.0
    %3558 = vmatprep.subr.mxu0 0.0
    %3559 = vmatpush1.msra.mxu0 0.0
    %3560 = vmatprep.subr.mxu0 0.0
    %3561 = vmatpush1.msra.mxu0 0.0
    %3562 = vmatprep.subr.mxu0 0.0
    %3563 = vmatpush1.msra.mxu0 0.0
    %3564 = vmatprep.subr.mxu0 0.0
    %3565 = vmatpush1.msra.mxu0 0.0
    %3566 = vmatprep.subr.mxu0 0.0
    %3567 = vmatpush1.msra.mxu0 0.0
    %3568 = vmatprep.subr.mxu0 0.0
    %3569 = vmatpush1.msra.mxu0 0.0
    %3570 = vmatprep.subr.mxu0 0.0
    %3571 = vmatpush1.msra.mxu0 0.0
    %3572 = vmatprep.subr.mxu0 0.0
    %3573 = vmatpush1.msra.mxu0 0.0
    %3574 = vmatprep.subr.mxu0 0.0
    %3575 = vmatpush1.msra.mxu0 0.0
    %3576 = vmatprep.subr.mxu0 0.0
    %3577 = vmatpush1.msra.mxu0 0.0
    %3578 = vmatprep.subr.mxu0 0.0
    %3579 = vmatpush1.msra.mxu0 0.0
    %3580 = vmatprep.subr.mxu0 0.0
    %3581 = vmatpush1.msra.mxu0 0.0
    %3582 = vmatprep.subr.mxu0 0.0
    %3583 = vmatpush1.msra.mxu0 0.0
    %3584 = vmatprep.subr.mxu0 0.0
    %3585 = vmatpush1.msra.mxu0 0.0
    %3586 = vmatprep.subr.mxu0 0.0
    %3587 = vmatpush1.msra.mxu0 0.0
    %3588 = vmatprep.subr.mxu0 0.0
    %3589 = vmatpush1.msra.mxu0 0.0
    %3590 = vmatprep.subr.mxu0 0.0
    %3591 = vmatpush1.msra.mxu0 0.0
    %3592 = vmatprep.subr.mxu0 0.0
    %3593 = vmatpush1.msra.mxu0 0.0
    %3594 = vmatprep.subr.mxu0 0.0
    %3595 = vmatpush1.msra.mxu0 0.0
    %3596 = vmatprep.subr.mxu0 0.0
    %3597 = vmatpush1.msra.mxu0 0.0
    %3598 = vmatprep.subr.mxu0 0.0
    %3599 = vmatpush1.msra.mxu0 0.0
    %3600 = vmatprep.subr.mxu0 0.0
    %3601 = vmatpush1.msra.mxu0 0.0
    %3602 = vmatprep.subr.mxu0 0.0
    %3603 = vmatpush1.msra.mxu0 0.0
    %3604 = vmatprep.subr.mxu0 0.0
    %3605 = vmatpush1.msra.mxu0 0.0
    %3606 = vmatprep.subr.mxu0 0.0
    %3607 = vmatpush1.msra.mxu0 0.0
    %3608 = vmatprep.subr.mxu0 0.0
    %3609 = vmatpush1.msra.mxu0 0.0
    %3610 = vmatprep.mubr.f32.mxu0 0.0
    %3611 = vmatmul.mubr.f32.gmra.mrb[0].mxu0 %v3284
    %v3612 = vpop.f32.mrb[0].mxu0
    %v3613 = vadd.f32 %v3545, %v3612
    %v3614 = vpop.f32.mrb[0].mxu0
    %3615 = vmatprep.mubr.f32.mxu0 0.0
    %3616 = vmatmul.mubr.f32.gmra.mrb[0].mxu0 %v3287
    %v3617 = vpop.f32.mrb[0].mxu0
    %v3618 = vadd.f32 %v3545, %v3617
    %v3619 = vpop.f32.mrb[0].mxu0
    %3620 = vdwg.mxu0
    %s3621 = scalar_lea.vmem %s2, 160
    %v3622 = vld [vmem:[%s3621] sm:$0xff]
    %v3623 = vld [vmem:[%s3621 + $0x8] sm:$0xff]
    %v3624 = vld [vmem:[%s3621 + $0x10] sm:$0xff]
    %v3625 = vld [vmem:[%s3621 + $0x18] sm:$0xff]
    %v3626 = vld [vmem:[%s3369 + $0x1] sm:$0x1]
    %v3627 = vlaneseq
    %v3628 = vshrl.u32 %v3627, 7
    %v3629 = vsub.s32 0, %v3628
    %v3630 = vrot.slane %v3626, %v3629
    %3631 = vmatprep.subr.mxu0 0.0
    %3632 = vmatpush1.msra.mxu0 %v3622
    %3633 = vmatprep.subr.mxu0 0.0
    %3634 = vmatpush1.msra.mxu0 %v3623
    %3635 = vmatprep.subr.mxu0 0.0
    %3636 = vmatpush1.msra.mxu0 %v3624
    %3637 = vmatprep.subr.mxu0 0.0
    %3638 = vmatpush1.msra.mxu0 %v3625
    %3639 = vmatprep.subr.mxu0 0.0
    %3640 = vmatpush1.msra.mxu0 0.0
    %3641 = vmatprep.subr.mxu0 0.0
    %3642 = vmatpush1.msra.mxu0 0.0
    %3643 = vmatprep.subr.mxu0 0.0
    %3644 = vmatpush1.msra.mxu0 0.0
    %3645 = vmatprep.subr.mxu0 0.0
    %3646 = vmatpush1.msra.mxu0 0.0
    %3647 = vmatprep.subr.mxu0 0.0
    %3648 = vmatpush1.msra.mxu0 0.0
    %3649 = vmatprep.subr.mxu0 0.0
    %3650 = vmatpush1.msra.mxu0 0.0
    %3651 = vmatprep.subr.mxu0 0.0
    %3652 = vmatpush1.msra.mxu0 0.0
    %3653 = vmatprep.subr.mxu0 0.0
    %3654 = vmatpush1.msra.mxu0 0.0
    %3655 = vmatprep.subr.mxu0 0.0
    %3656 = vmatpush1.msra.mxu0 0.0
    %3657 = vmatprep.subr.mxu0 0.0
    %3658 = vmatpush1.msra.mxu0 0.0
    %3659 = vmatprep.subr.mxu0 0.0
    %3660 = vmatpush1.msra.mxu0 0.0
    %3661 = vmatprep.subr.mxu0 0.0
    %3662 = vmatpush1.msra.mxu0 0.0
    %3663 = vmatprep.subr.mxu0 0.0
    %3664 = vmatpush1.msra.mxu0 0.0
    %3665 = vmatprep.subr.mxu0 0.0
    %3666 = vmatpush1.msra.mxu0 0.0
    %3667 = vmatprep.subr.mxu0 0.0
    %3668 = vmatpush1.msra.mxu0 0.0
    %3669 = vmatprep.subr.mxu0 0.0
    %3670 = vmatpush1.msra.mxu0 0.0
    %3671 = vmatprep.subr.mxu0 0.0
    %3672 = vmatpush1.msra.mxu0 0.0
    %3673 = vmatprep.subr.mxu0 0.0
    %3674 = vmatpush1.msra.mxu0 0.0
    %3675 = vmatprep.subr.mxu0 0.0
    %3676 = vmatpush1.msra.mxu0 0.0
    %3677 = vmatprep.subr.mxu0 0.0
    %3678 = vmatpush1.msra.mxu0 0.0
    %3679 = vmatprep.subr.mxu0 0.0
    %3680 = vmatpush1.msra.mxu0 0.0
    %3681 = vmatprep.subr.mxu0 0.0
    %3682 = vmatpush1.msra.mxu0 0.0
    %3683 = vmatprep.subr.mxu0 0.0
    %3684 = vmatpush1.msra.mxu0 0.0
    %3685 = vmatprep.subr.mxu0 0.0
    %3686 = vmatpush1.msra.mxu0 0.0
    %3687 = vmatprep.subr.mxu0 0.0
    %3688 = vmatpush1.msra.mxu0 0.0
    %3689 = vmatprep.subr.mxu0 0.0
    %3690 = vmatpush1.msra.mxu0 0.0
    %3691 = vmatprep.subr.mxu0 0.0
    %3692 = vmatpush1.msra.mxu0 0.0
    %3693 = vmatprep.subr.mxu0 0.0
    %3694 = vmatpush1.msra.mxu0 0.0
    %3695 = vmatprep.mubr.f32.mxu0 0.0
    %3696 = vmatmul.mubr.f32.gmra.mrb[0].mxu0 %v3284
    %v3697 = vpop.f32.mrb[0].mxu0
    %v3698 = vadd.f32 %v3630, %v3697
    %v3699 = vpop.f32.mrb[0].mxu0
    %3700 = vmatprep.mubr.f32.mxu0 0.0
    %3701 = vmatmul.mubr.f32.gmra.mrb[0].mxu0 %v3287
    %v3702 = vpop.f32.mrb[0].mxu0
    %v3703 = vadd.f32 %v3630, %v3702
    %v3704 = vpop.f32.mrb[0].mxu0
    %3705 = vdwg.mxu0
    %s3706 = scalar_lea.vmem %s3, 160
    %v3707 = vld [vmem:[%s3706] sm:$0xff]
    %v3708 = vld [vmem:[%s3706 + $0x8] sm:$0xff]
    %v3709 = vld [vmem:[%s3706 + $0x10] sm:$0xff]
    %v3710 = vld [vmem:[%s3706 + $0x18] sm:$0xff]
    %v3711 = vld [vmem:[%s3455 + $0x1] sm:$0x1]
    %v3712 = vlaneseq
    %v3713 = vshrl.u32 %v3712, 7
    %v3714 = vsub.s32 0, %v3713
    %v3715 = vrot.slane %v3711, %v3714
    %3716 = vmatprep.subr.mxu0 0.0
    %3717 = vmatpush1.msra.mxu0 %v3707
    %3718 = vmatprep.subr.mxu0 0.0
    %3719 = vmatpush1.msra.mxu0 %v3708
    %3720 = vmatprep.subr.mxu0 0.0
    %3721 = vmatpush1.msra.mxu0 %v3709
    %3722 = vmatprep.subr.mxu0 0.0
    %3723 = vmatpush1.msra.mxu0 %v3710
    %3724 = vmatprep.subr.mxu0 0.0
    %3725 = vmatpush1.msra.mxu0 0.0
    %3726 = vmatprep.subr.mxu0 0.0
    %3727 = vmatpush1.msra.mxu0 0.0
    %3728 = vmatprep.subr.mxu0 0.0
    %3729 = vmatpush1.msra.mxu0 0.0
    %3730 = vmatprep.subr.mxu0 0.0
    %3731 = vmatpush1.msra.mxu0 0.0
    %3732 = vmatprep.subr.mxu0 0.0
    %3733 = vmatpush1.msra.mxu0 0.0
    %3734 = vmatprep.subr.mxu0 0.0
    %3735 = vmatpush1.msra.mxu0 0.0
    %3736 = vmatprep.subr.mxu0 0.0
    %3737 = vmatpush1.msra.mxu0 0.0
    %3738 = vmatprep.subr.mxu0 0.0
    %3739 = vmatpush1.msra.mxu0 0.0
    %3740 = vmatprep.subr.mxu0 0.0
    %3741 = vmatpush1.msra.mxu0 0.0
    %3742 = vmatprep.subr.mxu0 0.0
    %3743 = vmatpush1.msra.mxu0 0.0
    %3744 = vmatprep.subr.mxu0 0.0
    %3745 = vmatpush1.msra.mxu0 0.0
    %3746 = vmatprep.subr.mxu0 0.0
    %3747 = vmatpush1.msra.mxu0 0.0
    %3748 = vmatprep.subr.mxu0 0.0
    %3749 = vmatpush1.msra.mxu0 0.0
    %3750 = vmatprep.subr.mxu0 0.0
    %3751 = vmatpush1.msra.mxu0 0.0
    %3752 = vmatprep.subr.mxu0 0.0
    %3753 = vmatpush1.msra.mxu0 0.0
    %3754 = vmatprep.subr.mxu0 0.0
    %3755 = vmatpush1.msra.mxu0 0.0
    %3756 = vmatprep.subr.mxu0 0.0
    %3757 = vmatpush1.msra.mxu0 0.0
    %3758 = vmatprep.subr.mxu0 0.0
    %3759 = vmatpush1.msra.mxu0 0.0
    %3760 = vmatprep.subr.mxu0 0.0
    %3761 = vmatpush1.msra.mxu0 0.0
    %3762 = vmatprep.subr.mxu0 0.0
    %3763 = vmatpush1.msra.mxu0 0.0
    %3764 = vmatprep.subr.mxu0 0.0
    %3765 = vmatpush1.msra.mxu0 0.0
    %3766 = vmatprep.subr.mxu0 0.0
    %3767 = vmatpush1.msra.mxu0 0.0
    %3768 = vmatprep.subr.mxu0 0.0
    %3769 = vmatpush1.msra.mxu0 0.0
    %3770 = vmatprep.subr.mxu0 0.0
    %3771 = vmatpush1.msra.mxu0 0.0
    %3772 = vmatprep.subr.mxu0 0.0
    %3773 = vmatpush1.msra.mxu0 0.0
    %3774 = vmatprep.subr.mxu0 0.0
    %3775 = vmatpush1.msra.mxu0 0.0
    %3776 = vmatprep.subr.mxu0 0.0
    %3777 = vmatpush1.msra.mxu0 0.0
    %3778 = vmatprep.subr.mxu0 0.0
    %3779 = vmatpush1.msra.mxu0 0.0
    %3780 = vmatprep.mubr.f32.mxu0 0.0
    %3781 = vmatmul.mubr.f32.gmra.mrb[0].mxu0 %v3284
    %v3782 = vpop.f32.mrb[0].mxu0
    %v3783 = vadd.f32 %v3715, %v3782
    %v3784 = vpop.f32.mrb[0].mxu0
    %3785 = vmatprep.mubr.f32.mxu0 0.0
    %3786 = vmatmul.mubr.f32.gmra.mrb[0].mxu0 %v3287
    %v3787 = vpop.f32.mrb[0].mxu0
    %v3788 = vadd.f32 %v3715, %v3787
    %v3789 = vpop.f32.mrb[0].mxu0
    %3790 = vdwg.mxu0
    %s3791 = scalar_lea.vmem %s1, 192
    %v3792 = vld [vmem:[%s3791] sm:$0xff]
    %v3793 = vld [vmem:[%s3791 + $0x8] sm:$0xff]
    %v3794 = vld [vmem:[%s3791 + $0x10] sm:$0xff]
    %v3795 = vld [vmem:[%s3791 + $0x18] sm:$0xff]
    %v3796 = vld [vmem:[%s3277 + $0x2] sm:$0x1]
    %v3797 = vlaneseq
    %v3798 = vshrl.u32 %v3797, 7
    %v3799 = vsub.s32 0, %v3798
    %v3800 = vrot.slane %v3796, %v3799
    %3801 = vmatprep.subr.mxu0 0.0
    %3802 = vmatpush1.msra.mxu0 %v3792
    %3803 = vmatprep.subr.mxu0 0.0
    %3804 = vmatpush1.msra.mxu0 %v3793
    %3805 = vmatprep.subr.mxu0 0.0
    %3806 = vmatpush1.msra.mxu0 %v3794
    %3807 = vmatprep.subr.mxu0 0.0
    %3808 = vmatpush1.msra.mxu0 %v3795
    %3809 = vmatprep.subr.mxu0 0.0
    %3810 = vmatpush1.msra.mxu0 0.0
    %3811 = vmatprep.subr.mxu0 0.0
    %3812 = vmatpush1.msra.mxu0 0.0
    %3813 = vmatprep.subr.mxu0 0.0
    %3814 = vmatpush1.msra.mxu0 0.0
    %3815 = vmatprep.subr.mxu0 0.0
    %3816 = vmatpush1.msra.mxu0 0.0
    %3817 = vmatprep.subr.mxu0 0.0
    %3818 = vmatpush1.msra.mxu0 0.0
    %3819 = vmatprep.subr.mxu0 0.0
    %3820 = vmatpush1.msra.mxu0 0.0
    %3821 = vmatprep.subr.mxu0 0.0
    %3822 = vmatpush1.msra.mxu0 0.0
    %3823 = vmatprep.subr.mxu0 0.0
    %3824 = vmatpush1.msra.mxu0 0.0
    %3825 = vmatprep.subr.mxu0 0.0
    %3826 = vmatpush1.msra.mxu0 0.0
    %3827 = vmatprep.subr.mxu0 0.0
    %3828 = vmatpush1.msra.mxu0 0.0
    %3829 = vmatprep.subr.mxu0 0.0
    %3830 = vmatpush1.msra.mxu0 0.0
    %3831 = vmatprep.subr.mxu0 0.0
    %3832 = vmatpush1.msra.mxu0 0.0
    %3833 = vmatprep.subr.mxu0 0.0
    %3834 = vmatpush1.msra.mxu0 0.0
    %3835 = vmatprep.subr.mxu0 0.0
    %3836 = vmatpush1.msra.mxu0 0.0
    %3837 = vmatprep.subr.mxu0 0.0
    %3838 = vmatpush1.msra.mxu0 0.0
    %3839 = vmatprep.subr.mxu0 0.0
    %3840 = vmatpush1.msra.mxu0 0.0
    %3841 = vmatprep.subr.mxu0 0.0
    %3842 = vmatpush1.msra.mxu0 0.0
    %3843 = vmatprep.subr.mxu0 0.0
    %3844 = vmatpush1.msra.mxu0 0.0
    %3845 = vmatprep.subr.mxu0 0.0
    %3846 = vmatpush1.msra.mxu0 0.0
    %3847 = vmatprep.subr.mxu0 0.0
    %3848 = vmatpush1.msra.mxu0 0.0
    %3849 = vmatprep.subr.mxu0 0.0
    %3850 = vmatpush1.msra.mxu0 0.0
    %3851 = vmatprep.subr.mxu0 0.0
    %3852 = vmatpush1.msra.mxu0 0.0
    %3853 = vmatprep.subr.mxu0 0.0
    %3854 = vmatpush1.msra.mxu0 0.0
    %3855 = vmatprep.subr.mxu0 0.0
    %3856 = vmatpush1.msra.mxu0 0.0
    %3857 = vmatprep.subr.mxu0 0.0
    %3858 = vmatpush1.msra.mxu0 0.0
    %3859 = vmatprep.subr.mxu0 0.0
    %3860 = vmatpush1.msra.mxu0 0.0
    %3861 = vmatprep.subr.mxu0 0.0
    %3862 = vmatpush1.msra.mxu0 0.0
    %3863 = vmatprep.subr.mxu0 0.0
    %3864 = vmatpush1.msra.mxu0 0.0
    %3865 = vmatprep.mubr.f32.mxu0 0.0
    %3866 = vmatmul.mubr.f32.gmra.mrb[0].mxu0 %v3284
    %v3867 = vpop.f32.mrb[0].mxu0
    %v3868 = vadd.f32 %v3800, %v3867
    %v3869 = vpop.f32.mrb[0].mxu0
    %3870 = vmatprep.mubr.f32.mxu0 0.0
    %3871 = vmatmul.mubr.f32.gmra.mrb[0].mxu0 %v3287
    %v3872 = vpop.f32.mrb[0].mxu0
    %v3873 = vadd.f32 %v3800, %v3872
    %v3874 = vpop.f32.mrb[0].mxu0
    %3875 = vdwg.mxu0
    %s3876 = scalar_lea.vmem %s2, 192
    %v3877 = vld [vmem:[%s3876] sm:$0xff]
    %v3878 = vld [vmem:[%s3876 + $0x8] sm:$0xff]
    %v3879 = vld [vmem:[%s3876 + $0x10] sm:$0xff]
    %v3880 = vld [vmem:[%s3876 + $0x18] sm:$0xff]
    %v3881 = vld [vmem:[%s3369 + $0x2] sm:$0x1]
    %v3882 = vlaneseq
    %v3883 = vshrl.u32 %v3882, 7
    %v3884 = vsub.s32 0, %v3883
    %v3885 = vrot.slane %v3881, %v3884
    %3886 = vmatprep.subr.mxu0 0.0
    %3887 = vmatpush1.msra.mxu0 %v3877
    %3888 = vmatprep.subr.mxu0 0.0
    %3889 = vmatpush1.msra.mxu0 %v3878
    %3890 = vmatprep.subr.mxu0 0.0
    %3891 = vmatpush1.msra.mxu0 %v3879
    %3892 = vmatprep.subr.mxu0 0.0
    %3893 = vmatpush1.msra.mxu0 %v3880
    %3894 = vmatprep.subr.mxu0 0.0
    %3895 = vmatpush1.msra.mxu0 0.0
    %3896 = vmatprep.subr.mxu0 0.0
    %3897 = vmatpush1.msra.mxu0 0.0
    %3898 = vmatprep.subr.mxu0 0.0
    %3899 = vmatpush1.msra.mxu0 0.0
    %3900 = vmatprep.subr.mxu0 0.0
    %3901 = vmatpush1.msra.mxu0 0.0
    %3902 = vmatprep.subr.mxu0 0.0
    %3903 = vmatpush1.msra.mxu0 0.0
    %3904 = vmatprep.subr.mxu0 0.0
    %3905 = vmatpush1.msra.mxu0 0.0
    %3906 = vmatprep.subr.mxu0 0.0
    %3907 = vmatpush1.msra.mxu0 0.0
    %3908 = vmatprep.subr.mxu0 0.0
    %3909 = vmatpush1.msra.mxu0 0.0
    %3910 = vmatprep.subr.mxu0 0.0
    %3911 = vmatpush1.msra.mxu0 0.0
    %3912 = vmatprep.subr.mxu0 0.0
    %3913 = vmatpush1.msra.mxu0 0.0
    %3914 = vmatprep.subr.mxu0 0.0
    %3915 = vmatpush1.msra.mxu0 0.0
    %3916 = vmatprep.subr.mxu0 0.0
    %3917 = vmatpush1.msra.mxu0 0.0
    %3918 = vmatprep.subr.mxu0 0.0
    %3919 = vmatpush1.msra.mxu0 0.0
    %3920 = vmatprep.subr.mxu0 0.0
    %3921 = vmatpush1.msra.mxu0 0.0
    %3922 = vmatprep.subr.mxu0 0.0
    %3923 = vmatpush1.msra.mxu0 0.0
    %3924 = vmatprep.subr.mxu0 0.0
    %3925 = vmatpush1.msra.mxu0 0.0
    %3926 = vmatprep.subr.mxu0 0.0
    %3927 = vmatpush1.msra.mxu0 0.0
    %3928 = vmatprep.subr.mxu0 0.0
    %3929 = vmatpush1.msra.mxu0 0.0
    %3930 = vmatprep.subr.mxu0 0.0
    %3931 = vmatpush1.msra.mxu0 0.0
    %3932 = vmatprep.subr.mxu0 0.0
    %3933 = vmatpush1.msra.mxu0 0.0
    %3934 = vmatprep.subr.mxu0 0.0
    %3935 = vmatpush1.msra.mxu0 0.0
    %3936 = vmatprep.subr.mxu0 0.0
    %3937 = vmatpush1.msra.mxu0 0.0
    %3938 = vmatprep.subr.mxu0 0.0
    %3939 = vmatpush1.msra.mxu0 0.0
    %3940 = vmatprep.subr.mxu0 0.0
    %3941 = vmatpush1.msra.mxu0 0.0
    %3942 = vmatprep.subr.mxu0 0.0
    %3943 = vmatpush1.msra.mxu0 0.0
    %3944 = vmatprep.subr.mxu0 0.0
    %3945 = vmatpush1.msra.mxu0 0.0
    %3946 = vmatprep.subr.mxu0 0.0
    %3947 = vmatpush1.msra.mxu0 0.0
    %3948 = vmatprep.subr.mxu0 0.0
    %3949 = vmatpush1.msra.mxu0 0.0
    %3950 = vmatprep.mubr.f32.mxu0 0.0
    %3951 = vmatmul.mubr.f32.gmra.mrb[0].mxu0 %v3284
    %v3952 = vpop.f32.mrb[0].mxu0
    %v3953 = vadd.f32 %v3885, %v3952
    %v3954 = vpop.f32.mrb[0].mxu0
    %3955 = vmatprep.mubr.f32.mxu0 0.0
    %3956 = vmatmul.mubr.f32.gmra.mrb[0].mxu0 %v3287
    %v3957 = vpop.f32.mrb[0].mxu0
    %v3958 = vadd.f32 %v3885, %v3957
    %v3959 = vpop.f32.mrb[0].mxu0
    %3960 = vdwg.mxu0
    %s3961 = scalar_lea.vmem %s3, 192
    %v3962 = vld [vmem:[%s3961] sm:$0xff]
    %v3963 = vld [vmem:[%s3961 + $0x8] sm:$0xff]
    %v3964 = vld [vmem:[%s3961 + $0x10] sm:$0xff]
    %v3965 = vld [vmem:[%s3961 + $0x18] sm:$0xff]
    %v3966 = vld [vmem:[%s3455 + $0x2] sm:$0x1]
    %v3967 = vlaneseq
    %v3968 = vshrl.u32 %v3967, 7
    %v3969 = vsub.s32 0, %v3968
    %v3970 = vrot.slane %v3966, %v3969
    %3971 = vmatprep.subr.mxu0 0.0
    %3972 = vmatpush1.msra.mxu0 %v3962
    %3973 = vmatprep.subr.mxu0 0.0
    %3974 = vmatpush1.msra.mxu0 %v3963
    %3975 = vmatprep.subr.mxu0 0.0
    %3976 = vmatpush1.msra.mxu0 %v3964
    %3977 = vmatprep.subr.mxu0 0.0
    %3978 = vmatpush1.msra.mxu0 %v3965
    %3979 = vmatprep.subr.mxu0 0.0
    %3980 = vmatpush1.msra.mxu0 0.0
    %3981 = vmatprep.subr.mxu0 0.0
    %3982 = vmatpush1.msra.mxu0 0.0
    %3983 = vmatprep.subr.mxu0 0.0
    %3984 = vmatpush1.msra.mxu0 0.0
    %3985 = vmatprep.subr.mxu0 0.0
    %3986 = vmatpush1.msra.mxu0 0.0
    %3987 = vmatprep.subr.mxu0 0.0
    %3988 = vmatpush1.msra.mxu0 0.0
    %3989 = vmatprep.subr.mxu0 0.0
    %3990 = vmatpush1.msra.mxu0 0.0
    %3991 = vmatprep.subr.mxu0 0.0
    %3992 = vmatpush1.msra.mxu0 0.0
    %3993 = vmatprep.subr.mxu0 0.0
    %3994 = vmatpush1.msra.mxu0 0.0
    %3995 = vmatprep.subr.mxu0 0.0
    %3996 = vmatpush1.msra.mxu0 0.0
    %3997 = vmatprep.subr.mxu0 0.0
    %3998 = vmatpush1.msra.mxu0 0.0
    %3999 = vmatprep.subr.mxu0 0.0
    %4000 = vmatpush1.msra.mxu0 0.0
    %4001 = vmatprep.subr.mxu0 0.0
    %4002 = vmatpush1.msra.mxu0 0.0
    %4003 = vmatprep.subr.mxu0 0.0
    %4004 = vmatpush1.msra.mxu0 0.0
    %4005 = vmatprep.subr.mxu0 0.0
    %4006 = vmatpush1.msra.mxu0 0.0
    %4007 = vmatprep.subr.mxu0 0.0
    %4008 = vmatpush1.msra.mxu0 0.0
    %4009 = vmatprep.subr.mxu0 0.0
    %4010 = vmatpush1.msra.mxu0 0.0
    %4011 = vmatprep.subr.mxu0 0.0
    %4012 = vmatpush1.msra.mxu0 0.0
    %4013 = vmatprep.subr.mxu0 0.0
    %4014 = vmatpush1.msra.mxu0 0.0
    %4015 = vmatprep.subr.mxu0 0.0
    %4016 = vmatpush1.msra.mxu0 0.0
    %4017 = vmatprep.subr.mxu0 0.0
    %4018 = vmatpush1.msra.mxu0 0.0
    %4019 = vmatprep.subr.mxu0 0.0
    %4020 = vmatpush1.msra.mxu0 0.0
    %4021 = vmatprep.subr.mxu0 0.0
    %4022 = vmatpush1.msra.mxu0 0.0
    %4023 = vmatprep.subr.mxu0 0.0
    %4024 = vmatpush1.msra.mxu0 0.0
    %4025 = vmatprep.subr.mxu0 0.0
    %4026 = vmatpush1.msra.mxu0 0.0
    %4027 = vmatprep.subr.mxu0 0.0
    %4028 = vmatpush1.msra.mxu0 0.0
    %4029 = vmatprep.subr.mxu0 0.0
    %4030 = vmatpush1.msra.mxu0 0.0
    %4031 = vmatprep.subr.mxu0 0.0
    %4032 = vmatpush1.msra.mxu0 0.0
    %4033 = vmatprep.subr.mxu0 0.0
    %4034 = vmatpush1.msra.mxu0 0.0
    %4035 = vmatprep.mubr.f32.mxu0 0.0
    %4036 = vmatmul.mubr.f32.gmra.mrb[0].mxu0 %v3284
    %v4037 = vpop.f32.mrb[0].mxu0
    %v4038 = vadd.f32 %v3970, %v4037
    %v4039 = vpop.f32.mrb[0].mxu0
    %4040 = vmatprep.mubr.f32.mxu0 0.0
    %4041 = vmatmul.mubr.f32.gmra.mrb[0].mxu0 %v3287
    %v4042 = vpop.f32.mrb[0].mxu0
    %v4043 = vadd.f32 %v3970, %v4042
    %v4044 = vpop.f32.mrb[0].mxu0
    %4045 = vdwg.mxu0
    %s4046 = scalar_lea.vmem %s1, 224
    %v4047 = vld [vmem:[%s4046] sm:$0xff]
    %v4048 = vld [vmem:[%s4046 + $0x8] sm:$0xff]
    %v4049 = vld [vmem:[%s4046 + $0x10] sm:$0xff]
    %v4050 = vld [vmem:[%s4046 + $0x18] sm:$0xff]
    %v4051 = vld [vmem:[%s3277 + $0x3] sm:$0x1]
    %v4052 = vlaneseq
    %v4053 = vshrl.u32 %v4052, 7
    %v4054 = vsub.s32 0, %v4053
    %v4055 = vrot.slane %v4051, %v4054
    %4056 = vmatprep.subr.mxu0 0.0
    %4057 = vmatpush1.msra.mxu0 %v4047
    %4058 = vmatprep.subr.mxu0 0.0
    %4059 = vmatpush1.msra.mxu0 %v4048
    %4060 = vmatprep.subr.mxu0 0.0
    %4061 = vmatpush1.msra.mxu0 %v4049
    %4062 = vmatprep.subr.mxu0 0.0
    %4063 = vmatpush1.msra.mxu0 %v4050
    %4064 = vmatprep.subr.mxu0 0.0
    %4065 = vmatpush1.msra.mxu0 0.0
    %4066 = vmatprep.subr.mxu0 0.0
    %4067 = vmatpush1.msra.mxu0 0.0
    %4068 = vmatprep.subr.mxu0 0.0
    %4069 = vmatpush1.msra.mxu0 0.0
    %4070 = vmatprep.subr.mxu0 0.0
    %4071 = vmatpush1.msra.mxu0 0.0
    %4072 = vmatprep.subr.mxu0 0.0
    %4073 = vmatpush1.msra.mxu0 0.0
    %4074 = vmatprep.subr.mxu0 0.0
    %4075 = vmatpush1.msra.mxu0 0.0
    %4076 = vmatprep.subr.mxu0 0.0
    %4077 = vmatpush1.msra.mxu0 0.0
    %4078 = vmatprep.subr.mxu0 0.0
    %4079 = vmatpush1.msra.mxu0 0.0
    %4080 = vmatprep.subr.mxu0 0.0
    %4081 = vmatpush1.msra.mxu0 0.0
    %4082 = vmatprep.subr.mxu0 0.0
    %4083 = vmatpush1.msra.mxu0 0.0
    %4084 = vmatprep.subr.mxu0 0.0
    %4085 = vmatpush1.msra.mxu0 0.0
    %4086 = vmatprep.subr.mxu0 0.0
    %4087 = vmatpush1.msra.mxu0 0.0
    %4088 = vmatprep.subr.mxu0 0.0
    %4089 = vmatpush1.msra.mxu0 0.0
    %4090 = vmatprep.subr.mxu0 0.0
    %4091 = vmatpush1.msra.mxu0 0.0
    %4092 = vmatprep.subr.mxu0 0.0
    %4093 = vmatpush1.msra.mxu0 0.0
    %4094 = vmatprep.subr.mxu0 0.0
    %4095 = vmatpush1.msra.mxu0 0.0
    %4096 = vmatprep.subr.mxu0 0.0
    %4097 = vmatpush1.msra.mxu0 0.0
    %4098 = vmatprep.subr.mxu0 0.0
    %4099 = vmatpush1.msra.mxu0 0.0
    %4100 = vmatprep.subr.mxu0 0.0
    %4101 = vmatpush1.msra.mxu0 0.0
    %4102 = vmatprep.subr.mxu0 0.0
    %4103 = vmatpush1.msra.mxu0 0.0
    %4104 = vmatprep.subr.mxu0 0.0
    %4105 = vmatpush1.msra.mxu0 0.0
    %4106 = vmatprep.subr.mxu0 0.0
    %4107 = vmatpush1.msra.mxu0 0.0
    %4108 = vmatprep.subr.mxu0 0.0
    %4109 = vmatpush1.msra.mxu0 0.0
    %4110 = vmatprep.subr.mxu0 0.0
    %4111 = vmatpush1.msra.mxu0 0.0
    %4112 = vmatprep.subr.mxu0 0.0
    %4113 = vmatpush1.msra.mxu0 0.0
    %4114 = vmatprep.subr.mxu0 0.0
    %4115 = vmatpush1.msra.mxu0 0.0
    %4116 = vmatprep.subr.mxu0 0.0
    %4117 = vmatpush1.msra.mxu0 0.0
    %4118 = vmatprep.subr.mxu0 0.0
    %4119 = vmatpush1.msra.mxu0 0.0
    %4120 = vmatprep.mubr.f32.mxu0 0.0
    %4121 = vmatmul.mubr.f32.gmra.mrb[0].mxu0 %v3284
    %v4122 = vpop.f32.mrb[0].mxu0
    %v4123 = vadd.f32 %v4055, %v4122
    %v4124 = vpop.f32.mrb[0].mxu0
    %4125 = vmatprep.mubr.f32.mxu0 0.0
    %4126 = vmatmul.mubr.f32.gmra.mrb[0].mxu0 %v3287
    %v4127 = vpop.f32.mrb[0].mxu0
    %v4128 = vadd.f32 %v4055, %v4127
    %v4129 = vpop.f32.mrb[0].mxu0
    %4130 = vdwg.mxu0
    %s4131 = scalar_lea.vmem %s2, 224
    %v4132 = vld [vmem:[%s4131] sm:$0xff]
    %v4133 = vld [vmem:[%s4131 + $0x8] sm:$0xff]
    %v4134 = vld [vmem:[%s4131 + $0x10] sm:$0xff]
    %v4135 = vld [vmem:[%s4131 + $0x18] sm:$0xff]
    %v4136 = vld [vmem:[%s3369 + $0x3] sm:$0x1]
    %v4137 = vlaneseq
    %v4138 = vshrl.u32 %v4137, 7
    %v4139 = vsub.s32 0, %v4138
    %v4140 = vrot.slane %v4136, %v4139
    %4141 = vmatprep.subr.mxu0 0.0
    %4142 = vmatpush1.msra.mxu0 %v4132
    %4143 = vmatprep.subr.mxu0 0.0
    %4144 = vmatpush1.msra.mxu0 %v4133
    %4145 = vmatprep.subr.mxu0 0.0
    %4146 = vmatpush1.msra.mxu0 %v4134
    %4147 = vmatprep.subr.mxu0 0.0
    %4148 = vmatpush1.msra.mxu0 %v4135
    %4149 = vmatprep.subr.mxu0 0.0
    %4150 = vmatpush1.msra.mxu0 0.0
    %4151 = vmatprep.subr.mxu0 0.0
    %4152 = vmatpush1.msra.mxu0 0.0
    %4153 = vmatprep.subr.mxu0 0.0
    %4154 = vmatpush1.msra.mxu0 0.0
    %4155 = vmatprep.subr.mxu0 0.0
    %4156 = vmatpush1.msra.mxu0 0.0
    %4157 = vmatprep.subr.mxu0 0.0
    %4158 = vmatpush1.msra.mxu0 0.0
    %4159 = vmatprep.subr.mxu0 0.0
    %4160 = vmatpush1.msra.mxu0 0.0
    %4161 = vmatprep.subr.mxu0 0.0
    %4162 = vmatpush1.msra.mxu0 0.0
    %4163 = vmatprep.subr.mxu0 0.0
    %4164 = vmatpush1.msra.mxu0 0.0
    %4165 = vmatprep.subr.mxu0 0.0
    %4166 = vmatpush1.msra.mxu0 0.0
    %4167 = vmatprep.subr.mxu0 0.0
    %4168 = vmatpush1.msra.mxu0 0.0
    %4169 = vmatprep.subr.mxu0 0.0
    %4170 = vmatpush1.msra.mxu0 0.0
    %4171 = vmatprep.subr.mxu0 0.0
    %4172 = vmatpush1.msra.mxu0 0.0
    %4173 = vmatprep.subr.mxu0 0.0
    %4174 = vmatpush1.msra.mxu0 0.0
    %4175 = vmatprep.subr.mxu0 0.0
    %4176 = vmatpush1.msra.mxu0 0.0
    %4177 = vmatprep.subr.mxu0 0.0
    %4178 = vmatpush1.msra.mxu0 0.0
    %4179 = vmatprep.subr.mxu0 0.0
    %4180 = vmatpush1.msra.mxu0 0.0
    %4181 = vmatprep.subr.mxu0 0.0
    %4182 = vmatpush1.msra.mxu0 0.0
    %4183 = vmatprep.subr.mxu0 0.0
    %4184 = vmatpush1.msra.mxu0 0.0
    %4185 = vmatprep.subr.mxu0 0.0
    %4186 = vmatpush1.msra.mxu0 0.0
    %4187 = vmatprep.subr.mxu0 0.0
    %4188 = vmatpush1.msra.mxu0 0.0
    %4189 = vmatprep.subr.mxu0 0.0
    %4190 = vmatpush1.msra.mxu0 0.0
    %4191 = vmatprep.subr.mxu0 0.0
    %4192 = vmatpush1.msra.mxu0 0.0
    %4193 = vmatprep.subr.mxu0 0.0
    %4194 = vmatpush1.msra.mxu0 0.0
    %4195 = vmatprep.subr.mxu0 0.0
    %4196 = vmatpush1.msra.mxu0 0.0
    %4197 = vmatprep.subr.mxu0 0.0
    %4198 = vmatpush1.msra.mxu0 0.0
    %4199 = vmatprep.subr.mxu0 0.0
    %4200 = vmatpush1.msra.mxu0 0.0
    %4201 = vmatprep.subr.mxu0 0.0
    %4202 = vmatpush1.msra.mxu0 0.0
    %4203 = vmatprep.subr.mxu0 0.0
    %4204 = vmatpush1.msra.mxu0 0.0
    %4205 = vmatprep.mubr.f32.mxu0 0.0
    %4206 = vmatmul.mubr.f32.gmra.mrb[0].mxu0 %v3284
    %v4207 = vpop.f32.mrb[0].mxu0
    %v4208 = vadd.f32 %v4140, %v4207
    %v4209 = vpop.f32.mrb[0].mxu0
    %4210 = vmatprep.mubr.f32.mxu0 0.0
    %4211 = vmatmul.mubr.f32.gmra.mrb[0].mxu0 %v3287
    %v4212 = vpop.f32.mrb[0].mxu0
    %v4213 = vadd.f32 %v4140, %v4212
    %v4214 = vpop.f32.mrb[0].mxu0
    %4215 = vdwg.mxu0
    %s4216 = scalar_lea.vmem %s3, 224
    %v4217 = vld [vmem:[%s4216] sm:$0xff]
    %v4218 = vld [vmem:[%s4216 + $0x8] sm:$0xff]
    %v4219 = vld [vmem:[%s4216 + $0x10] sm:$0xff]
    %v4220 = vld [vmem:[%s4216 + $0x18] sm:$0xff]
    %v4221 = vld [vmem:[%s3455 + $0x3] sm:$0x1]
    %v4222 = vlaneseq
    %v4223 = vshrl.u32 %v4222, 7
    %v4224 = vsub.s32 0, %v4223
    %v4225 = vrot.slane %v4221, %v4224
    %4226 = vmatprep.subr.mxu0 0.0
    %4227 = vmatpush1.msra.mxu0 %v4217
    %4228 = vmatprep.subr.mxu0 0.0
    %4229 = vmatpush1.msra.mxu0 %v4218
    %4230 = vmatprep.subr.mxu0 0.0
    %4231 = vmatpush1.msra.mxu0 %v4219
    %4232 = vmatprep.subr.mxu0 0.0
    %4233 = vmatpush1.msra.mxu0 %v4220
    %4234 = vmatprep.subr.mxu0 0.0
    %4235 = vmatpush1.msra.mxu0 0.0
    %4236 = vmatprep.subr.mxu0 0.0
    %4237 = vmatpush1.msra.mxu0 0.0
    %4238 = vmatprep.subr.mxu0 0.0
    %4239 = vmatpush1.msra.mxu0 0.0
    %4240 = vmatprep.subr.mxu0 0.0
    %4241 = vmatpush1.msra.mxu0 0.0
    %4242 = vmatprep.subr.mxu0 0.0
    %4243 = vmatpush1.msra.mxu0 0.0
    %4244 = vmatprep.subr.mxu0 0.0
    %4245 = vmatpush1.msra.mxu0 0.0
    %4246 = vmatprep.subr.mxu0 0.0
    %4247 = vmatpush1.msra.mxu0 0.0
    %4248 = vmatprep.subr.mxu0 0.0
    %4249 = vmatpush1.msra.mxu0 0.0
    %4250 = vmatprep.subr.mxu0 0.0
    %4251 = vmatpush1.msra.mxu0 0.0
    %4252 = vmatprep.subr.mxu0 0.0
    %4253 = vmatpush1.msra.mxu0 0.0
    %4254 = vmatprep.subr.mxu0 0.0
    %4255 = vmatpush1.msra.mxu0 0.0
    %4256 = vmatprep.subr.mxu0 0.0
    %4257 = vmatpush1.msra.mxu0 0.0
    %4258 = vmatprep.subr.mxu0 0.0
    %4259 = vmatpush1.msra.mxu0 0.0
    %4260 = vmatprep.subr.mxu0 0.0
    %4261 = vmatpush1.msra.mxu0 0.0
    %4262 = vmatprep.subr.mxu0 0.0
    %4263 = vmatpush1.msra.mxu0 0.0
    %4264 = vmatprep.subr.mxu0 0.0
    %4265 = vmatpush1.msra.mxu0 0.0
    %4266 = vmatprep.subr.mxu0 0.0
    %4267 = vmatpush1.msra.mxu0 0.0
    %4268 = vmatprep.subr.mxu0 0.0
    %4269 = vmatpush1.msra.mxu0 0.0
    %4270 = vmatprep.subr.mxu0 0.0
    %4271 = vmatpush1.msra.mxu0 0.0
    %4272 = vmatprep.subr.mxu0 0.0
    %4273 = vmatpush1.msra.mxu0 0.0
    %4274 = vmatprep.subr.mxu0 0.0
    %4275 = vmatpush1.msra.mxu0 0.0
    %4276 = vmatprep.subr.mxu0 0.0
    %4277 = vmatpush1.msra.mxu0 0.0
    %4278 = vmatprep.subr.mxu0 0.0
    %4279 = vmatpush1.msra.mxu0 0.0
    %4280 = vmatprep.subr.mxu0 0.0
    %4281 = vmatpush1.msra.mxu0 0.0
    %4282 = vmatprep.subr.mxu0 0.0
    %4283 = vmatpush1.msra.mxu0 0.0
    %4284 = vmatprep.subr.mxu0 0.0
    %4285 = vmatpush1.msra.mxu0 0.0
    %4286 = vmatprep.subr.mxu0 0.0
    %4287 = vmatpush1.msra.mxu0 0.0
    %4288 = vmatprep.subr.mxu0 0.0
    %4289 = vmatpush1.msra.mxu0 0.0
    %4290 = vmatprep.mubr.f32.mxu0 0.0
    %4291 = vmatmul.mubr.f32.gmra.mrb[0].mxu0 %v3284
    %v4292 = vpop.f32.mrb[0].mxu0
    %v4293 = vadd.f32 %v4225, %v4292
    %v4294 = vpop.f32.mrb[0].mxu0
    %4295 = vmatprep.mubr.f32.mxu0 0.0
    %4296 = vmatmul.mubr.f32.gmra.mrb[0].mxu0 %v3287
    %v4297 = vpop.f32.mrb[0].mxu0
    %v4298 = vadd.f32 %v4225, %v4297
    %v4299 = vpop.f32.mrb[0].mxu0
    %4300 = vdwg.mxu0
    %v4302 = vsel %vm1101, %v3356, 0
    %v4305 = vsel %vm1101, %v3442, 0
    %4307 = vmatprep.subr.mxu0 0.0
    %4308 = vmatpush1.xpose.msra.mxu0 %v4305
    %4309 = vmatprep.subr.mxu0 0.0
    %4310 = vmatpush1.xpose.msra.mxu0 0.0
    %4311 = vmatprep.subr.mxu0 0.0
    %4312 = vmatpush1.xpose.msra.mxu0 0.0
    %4313 = vmatprep.subr.mxu0 0.0
    %4314 = vmatpush1.xpose.msra.mxu0 0.0
    %4315 = vmatprep.subr.mxu0 0.0
    %4316 = vmatpush1.xpose.msra.mxu0 0.0
    %4317 = vmatprep.subr.mxu0 0.0
    %4318 = vmatpush1.xpose.msra.mxu0 0.0
    %4319 = vmatprep.subr.mxu0 0.0
    %4320 = vmatpush1.xpose.msra.mxu0 0.0
    %4321 = vmatprep.subr.mxu0 0.0
    %4322 = vmatpush1.xpose.msra.mxu0 0.0
    %4323 = vmatprep.subr.mxu0 0.0
    %4324 = vmatpush1.xpose.msra.mxu0 0.0
    %4325 = vmatprep.subr.mxu0 0.0
    %4326 = vmatpush1.xpose.msra.mxu0 0.0
    %4327 = vmatprep.subr.mxu0 0.0
    %4328 = vmatpush1.xpose.msra.mxu0 0.0
    %4329 = vmatprep.subr.mxu0 0.0
    %4330 = vmatpush1.xpose.msra.mxu0 0.0
    %4331 = vmatprep.subr.mxu0 0.0
    %4332 = vmatpush1.xpose.msra.mxu0 0.0
    %4333 = vmatprep.subr.mxu0 0.0
    %4334 = vmatpush1.xpose.msra.mxu0 0.0
    %4335 = vmatprep.subr.mxu0 0.0
    %4336 = vmatpush1.xpose.msra.mxu0 0.0
    %4337 = vmatprep.subr.mxu0 0.0
    %4338 = vmatpush1.xpose.msra.mxu0 0.0
    %4339 = vmatprep.subr.mxu0 0.0
    %4340 = vmatpush1.xpose.msra.mxu0 0.0
    %4341 = vmatprep.subr.mxu0 0.0
    %4342 = vmatpush1.xpose.msra.mxu0 0.0
    %4343 = vmatprep.subr.mxu0 0.0
    %4344 = vmatpush1.xpose.msra.mxu0 0.0
    %4345 = vmatprep.subr.mxu0 0.0
    %4346 = vmatpush1.xpose.msra.mxu0 0.0
    %4347 = vmatprep.subr.mxu0 0.0
    %4348 = vmatpush1.xpose.msra.mxu0 0.0
    %4349 = vmatprep.subr.mxu0 0.0
    %4350 = vmatpush1.xpose.msra.mxu0 0.0
    %4351 = vmatprep.subr.mxu0 0.0
    %4352 = vmatpush1.xpose.msra.mxu0 0.0
    %4353 = vmatprep.subr.mxu0 0.0
    %4354 = vmatpush1.xpose.msra.mxu0 0.0
    %4355 = vmatprep.subr.mxu0 0.0
    %4356 = vmatpush1.xpose.msra.mxu0 0.0
    %4357 = vmatprep.subr.mxu0 0.0
    %4358 = vmatpush1.xpose.msra.mxu0 0.0
    %4359 = vmatprep.subr.mxu0 0.0
    %4360 = vmatpush1.xpose.msra.mxu0 0.0
    %4361 = vmatprep.subr.mxu0 0.0
    %4362 = vmatpush1.xpose.msra.mxu0 0.0
    %4363 = vmatprep.subr.mxu0 0.0
    %4364 = vmatpush1.xpose.msra.mxu0 0.0
    %4365 = vmatprep.subr.mxu0 0.0
    %4366 = vmatpush1.xpose.msra.mxu0 0.0
    %4367 = vmatprep.subr.mxu0 0.0
    %4368 = vmatpush1.xpose.msra.mxu0 0.0
    %4369 = vmatprep.subr.mxu0 0.0
    %4370 = vmatpush1.xpose.msra.mxu0 0.0
    %4371 = vmatprep.mubr.f32.mxu0 0.0
    %4372 = vmatmul.mubr.f32.gmra.mrb[0].mxu0 %v4302
    %v4373 = vpop.f32.mrb[0].mxu0
    %v4374 = vadd.f32 0.0, %v4373
    %v4375 = vpop.f32.mrb[0].mxu0
    %4376 = vdwg.mxu0
    %v4377 = vsel %vm1101, %v4374, -inf
    %4378 = vmax.xlane.f32.xlu0 %v4377
    %v4379 = vpop.xlane.xlu0 %4378
    %v4380 = vsub.f32 %v4374, %v4379
    %v4381 = vmul.f32 %v4380, 1.442695
    %v4382 = vpow.pop %v4381
    %v4383 = vsel %vm1101, %v4382, 0.0
    %4384 = vadd.xlane.f32.xlu0 %v4383
    %v4385 = vpop.xlane.xlu0 %4384
    %v4386 = vrcp.pop %v4385
    %v4387 = vmul.f32 %v4382, %v4386
    %v4389 = vsel %vm1101, %v4387, 0
    %4391 = vmatprep.subr.mxu0 0.0
    %4392 = vmatpush1.msra.mxu0 %v3528
    %4393 = vmatprep.subr.mxu0 0.0
    %4394 = vmatpush1.msra.mxu0 0.0
    %4395 = vmatprep.subr.mxu0 0.0
    %4396 = vmatpush1.msra.mxu0 0.0
    %4397 = vmatprep.subr.mxu0 0.0
    %4398 = vmatpush1.msra.mxu0 0.0
    %4399 = vmatprep.subr.mxu0 0.0
    %4400 = vmatpush1.msra.mxu0 0.0
    %4401 = vmatprep.subr.mxu0 0.0
    %4402 = vmatpush1.msra.mxu0 0.0
    %4403 = vmatprep.subr.mxu0 0.0
    %4404 = vmatpush1.msra.mxu0 0.0
    %4405 = vmatprep.subr.mxu0 0.0
    %4406 = vmatpush1.msra.mxu0 0.0
    %4407 = vmatprep.subr.mxu0 0.0
    %4408 = vmatpush1.msra.mxu0 0.0
    %4409 = vmatprep.subr.mxu0 0.0
    %4410 = vmatpush1.msra.mxu0 0.0
    %4411 = vmatprep.subr.mxu0 0.0
    %4412 = vmatpush1.msra.mxu0 0.0
    %4413 = vmatprep.subr.mxu0 0.0
    %4414 = vmatpush1.msra.mxu0 0.0
    %4415 = vmatprep.subr.mxu0 0.0
    %4416 = vmatpush1.msra.mxu0 0.0
    %4417 = vmatprep.subr.mxu0 0.0
    %4418 = vmatpush1.msra.mxu0 0.0
    %4419 = vmatprep.subr.mxu0 0.0
    %4420 = vmatpush1.msra.mxu0 0.0
    %4421 = vmatprep.subr.mxu0 0.0
    %4422 = vmatpush1.msra.mxu0 0.0
    %4423 = vmatprep.subr.mxu0 0.0
    %4424 = vmatpush1.msra.mxu0 0.0
    %4425 = vmatprep.subr.mxu0 0.0
    %4426 = vmatpush1.msra.mxu0 0.0
    %4427 = vmatprep.subr.mxu0 0.0
    %4428 = vmatpush1.msra.mxu0 0.0
    %4429 = vmatprep.subr.mxu0 0.0
    %4430 = vmatpush1.msra.mxu0 0.0
    %4431 = vmatprep.subr.mxu0 0.0
    %4432 = vmatpush1.msra.mxu0 0.0
    %4433 = vmatprep.subr.mxu0 0.0
    %4434 = vmatpush1.msra.mxu0 0.0
    %4435 = vmatprep.subr.mxu0 0.0
    %4436 = vmatpush1.msra.mxu0 0.0
    %4437 = vmatprep.subr.mxu0 0.0
    %4438 = vmatpush1.msra.mxu0 0.0
    %4439 = vmatprep.subr.mxu0 0.0
    %4440 = vmatpush1.msra.mxu0 0.0
    %4441 = vmatprep.subr.mxu0 0.0
    %4442 = vmatpush1.msra.mxu0 0.0
    %4443 = vmatprep.subr.mxu0 0.0
    %4444 = vmatpush1.msra.mxu0 0.0
    %4445 = vmatprep.subr.mxu0 0.0
    %4446 = vmatpush1.msra.mxu0 0.0
    %4447 = vmatprep.subr.mxu0 0.0
    %4448 = vmatpush1.msra.mxu0 0.0
    %4449 = vmatprep.subr.mxu0 0.0
    %4450 = vmatpush1.msra.mxu0 0.0
    %4451 = vmatprep.subr.mxu0 0.0
    %4452 = vmatpush1.msra.mxu0 0.0
    %4453 = vmatprep.subr.mxu0 0.0
    %4454 = vmatpush1.msra.mxu0 0.0
    %4455 = vmatprep.mubr.f32.mxu0 0.0
    %4456 = vmatmul.mubr.f32.gmra.mrb[0].mxu0 %v4389
    %v4457 = vpop.f32.mrb[0].mxu0
    %v4458 = vadd.f32 0.0, %v4457
    %v4459 = vpop.f32.mrb[0].mxu0
    %4460 = vdwg.mxu0
    %s4461 = scalar_lea.vmem %s7, 32
    %v4462 = vld [vmem:[%s4461] sm:$0xff]
    %v4464 = vsel %vm1101, %v3613, 0
    %v4467 = vsel %vm1101, %v3698, 0
    %4469 = vmatprep.subr.mxu0 0.0
    %4470 = vmatpush1.xpose.msra.mxu0 %v4467
    %4471 = vmatprep.subr.mxu0 0.0
    %4472 = vmatpush1.xpose.msra.mxu0 0.0
    %4473 = vmatprep.subr.mxu0 0.0
    %4474 = vmatpush1.xpose.msra.mxu0 0.0
    %4475 = vmatprep.subr.mxu0 0.0
    %4476 = vmatpush1.xpose.msra.mxu0 0.0
    %4477 = vmatprep.subr.mxu0 0.0
    %4478 = vmatpush1.xpose.msra.mxu0 0.0
    %4479 = vmatprep.subr.mxu0 0.0
    %4480 = vmatpush1.xpose.msra.mxu0 0.0
    %4481 = vmatprep.subr.mxu0 0.0
    %4482 = vmatpush1.xpose.msra.mxu0 0.0
    %4483 = vmatprep.subr.mxu0 0.0
    %4484 = vmatpush1.xpose.msra.mxu0 0.0
    %4485 = vmatprep.subr.mxu0 0.0
    %4486 = vmatpush1.xpose.msra.mxu0 0.0
    %4487 = vmatprep.subr.mxu0 0.0
    %4488 = vmatpush1.xpose.msra.mxu0 0.0
    %4489 = vmatprep.subr.mxu0 0.0
    %4490 = vmatpush1.xpose.msra.mxu0 0.0
    %4491 = vmatprep.subr.mxu0 0.0
    %4492 = vmatpush1.xpose.msra.mxu0 0.0
    %4493 = vmatprep.subr.mxu0 0.0
    %4494 = vmatpush1.xpose.msra.mxu0 0.0
    %4495 = vmatprep.subr.mxu0 0.0
    %4496 = vmatpush1.xpose.msra.mxu0 0.0
    %4497 = vmatprep.subr.mxu0 0.0
    %4498 = vmatpush1.xpose.msra.mxu0 0.0
    %4499 = vmatprep.subr.mxu0 0.0
    %4500 = vmatpush1.xpose.msra.mxu0 0.0
    %4501 = vmatprep.subr.mxu0 0.0
    %4502 = vmatpush1.xpose.msra.mxu0 0.0
    %4503 = vmatprep.subr.mxu0 0.0
    %4504 = vmatpush1.xpose.msra.mxu0 0.0
    %4505 = vmatprep.subr.mxu0 0.0
    %4506 = vmatpush1.xpose.msra.mxu0 0.0
    %4507 = vmatprep.subr.mxu0 0.0
    %4508 = vmatpush1.xpose.msra.mxu0 0.0
    %4509 = vmatprep.subr.mxu0 0.0
    %4510 = vmatpush1.xpose.msra.mxu0 0.0
    %4511 = vmatprep.subr.mxu0 0.0
    %4512 = vmatpush1.xpose.msra.mxu0 0.0
    %4513 = vmatprep.subr.mxu0 0.0
    %4514 = vmatpush1.xpose.msra.mxu0 0.0
    %4515 = vmatprep.subr.mxu0 0.0
    %4516 = vmatpush1.xpose.msra.mxu0 0.0
    %4517 = vmatprep.subr.mxu0 0.0
    %4518 = vmatpush1.xpose.msra.mxu0 0.0
    %4519 = vmatprep.subr.mxu0 0.0
    %4520 = vmatpush1.xpose.msra.mxu0 0.0
    %4521 = vmatprep.subr.mxu0 0.0
    %4522 = vmatpush1.xpose.msra.mxu0 0.0
    %4523 = vmatprep.subr.mxu0 0.0
    %4524 = vmatpush1.xpose.msra.mxu0 0.0
    %4525 = vmatprep.subr.mxu0 0.0
    %4526 = vmatpush1.xpose.msra.mxu0 0.0
    %4527 = vmatprep.subr.mxu0 0.0
    %4528 = vmatpush1.xpose.msra.mxu0 0.0
    %4529 = vmatprep.subr.mxu0 0.0
    %4530 = vmatpush1.xpose.msra.mxu0 0.0
    %4531 = vmatprep.subr.mxu0 0.0
    %4532 = vmatpush1.xpose.msra.mxu0 0.0
    %4533 = vmatprep.mubr.f32.mxu0 0.0
    %4534 = vmatmul.mubr.f32.gmra.mrb[0].mxu0 %v4464
    %v4535 = vpop.f32.mrb[0].mxu0
    %v4536 = vadd.f32 0.0, %v4535
    %v4537 = vpop.f32.mrb[0].mxu0
    %4538 = vdwg.mxu0
    %v4539 = vsel %vm1101, %v4536, -inf
    %4540 = vmax.xlane.f32.xlu0 %v4539
    %v4541 = vpop.xlane.xlu0 %4540
    %v4542 = vsub.f32 %v4536, %v4541
    %v4543 = vmul.f32 %v4542, 1.442695
    %v4544 = vpow.pop %v4543
    %v4545 = vsel %vm1101, %v4544, 0.0
    %4546 = vadd.xlane.f32.xlu0 %v4545
    %v4547 = vpop.xlane.xlu0 %4546
    %v4548 = vrcp.pop %v4547
    %v4549 = vmul.f32 %v4544, %v4548
    %v4551 = vsel %vm1101, %v4549, 0
    %4553 = vmatprep.subr.mxu0 0.0
    %4554 = vmatpush1.msra.mxu0 %v3783
    %4555 = vmatprep.subr.mxu0 0.0
    %4556 = vmatpush1.msra.mxu0 0.0
    %4557 = vmatprep.subr.mxu0 0.0
    %4558 = vmatpush1.msra.mxu0 0.0
    %4559 = vmatprep.subr.mxu0 0.0
    %4560 = vmatpush1.msra.mxu0 0.0
    %4561 = vmatprep.subr.mxu0 0.0
    %4562 = vmatpush1.msra.mxu0 0.0
    %4563 = vmatprep.subr.mxu0 0.0
    %4564 = vmatpush1.msra.mxu0 0.0
    %4565 = vmatprep.subr.mxu0 0.0
    %4566 = vmatpush1.msra.mxu0 0.0
    %4567 = vmatprep.subr.mxu0 0.0
    %4568 = vmatpush1.msra.mxu0 0.0
    %4569 = vmatprep.subr.mxu0 0.0
    %4570 = vmatpush1.msra.mxu0 0.0
    %4571 = vmatprep.subr.mxu0 0.0
    %4572 = vmatpush1.msra.mxu0 0.0
    %4573 = vmatprep.subr.mxu0 0.0
    %4574 = vmatpush1.msra.mxu0 0.0
    %4575 = vmatprep.subr.mxu0 0.0
    %4576 = vmatpush1.msra.mxu0 0.0
    %4577 = vmatprep.subr.mxu0 0.0
    %4578 = vmatpush1.msra.mxu0 0.0
    %4579 = vmatprep.subr.mxu0 0.0
    %4580 = vmatpush1.msra.mxu0 0.0
    %4581 = vmatprep.subr.mxu0 0.0
    %4582 = vmatpush1.msra.mxu0 0.0
    %4583 = vmatprep.subr.mxu0 0.0
    %4584 = vmatpush1.msra.mxu0 0.0
    %4585 = vmatprep.subr.mxu0 0.0
    %4586 = vmatpush1.msra.mxu0 0.0
    %4587 = vmatprep.subr.mxu0 0.0
    %4588 = vmatpush1.msra.mxu0 0.0
    %4589 = vmatprep.subr.mxu0 0.0
    %4590 = vmatpush1.msra.mxu0 0.0
    %4591 = vmatprep.subr.mxu0 0.0
    %4592 = vmatpush1.msra.mxu0 0.0
    %4593 = vmatprep.subr.mxu0 0.0
    %4594 = vmatpush1.msra.mxu0 0.0
    %4595 = vmatprep.subr.mxu0 0.0
    %4596 = vmatpush1.msra.mxu0 0.0
    %4597 = vmatprep.subr.mxu0 0.0
    %4598 = vmatpush1.msra.mxu0 0.0
    %4599 = vmatprep.subr.mxu0 0.0
    %4600 = vmatpush1.msra.mxu0 0.0
    %4601 = vmatprep.subr.mxu0 0.0
    %4602 = vmatpush1.msra.mxu0 0.0
    %4603 = vmatprep.subr.mxu0 0.0
    %4604 = vmatpush1.msra.mxu0 0.0
    %4605 = vmatprep.subr.mxu0 0.0
    %4606 = vmatpush1.msra.mxu0 0.0
    %4607 = vmatprep.subr.mxu0 0.0
    %4608 = vmatpush1.msra.mxu0 0.0
    %4609 = vmatprep.subr.mxu0 0.0
    %4610 = vmatpush1.msra.mxu0 0.0
    %4611 = vmatprep.subr.mxu0 0.0
    %4612 = vmatpush1.msra.mxu0 0.0
    %4613 = vmatprep.subr.mxu0 0.0
    %4614 = vmatpush1.msra.mxu0 0.0
    %4615 = vmatprep.subr.mxu0 0.0
    %4616 = vmatpush1.msra.mxu0 0.0
    %4617 = vmatprep.mubr.f32.mxu0 0.0
    %4618 = vmatmul.mubr.f32.gmra.mrb[0].mxu0 %v4551
    %v4619 = vpop.f32.mrb[0].mxu0
    %v4620 = vadd.f32 0.0, %v4619
    %v4621 = vpop.f32.mrb[0].mxu0
    %4622 = vdwg.mxu0
    %s4623 = scalar_lea.vmem %s7, 40
    %v4624 = vld [vmem:[%s4623] sm:$0xff]
    %v4626 = vsel %vm1101, %v4620, 0
    %4628 = vmatprep.subr.mxu0 0.0
    %4629 = vmatpush1.msra.mxu0 %v4624
    %4630 = vmatprep.subr.mxu0 0.0
    %4631 = vmatpush1.msra.mxu0 0.0
    %4632 = vmatprep.subr.mxu0 0.0
    %4633 = vmatpush1.msra.mxu0 0.0
    %4634 = vmatprep.subr.mxu0 0.0
    %4635 = vmatpush1.msra.mxu0 0.0
    %4636 = vmatprep.subr.mxu0 0.0
    %4637 = vmatpush1.msra.mxu0 0.0
    %4638 = vmatprep.subr.mxu0 0.0
    %4639 = vmatpush1.msra.mxu0 0.0
    %4640 = vmatprep.subr.mxu0 0.0
    %4641 = vmatpush1.msra.mxu0 0.0
    %4642 = vmatprep.subr.mxu0 0.0
    %4643 = vmatpush1.msra.mxu0 0.0
    %4644 = vmatprep.subr.mxu0 0.0
    %4645 = vmatpush1.msra.mxu0 0.0
    %4646 = vmatprep.subr.mxu0 0.0
    %4647 = vmatpush1.msra.mxu0 0.0
    %4648 = vmatprep.subr.mxu0 0.0
    %4649 = vmatpush1.msra.mxu0 0.0
    %4650 = vmatprep.subr.mxu0 0.0
    %4651 = vmatpush1.msra.mxu0 0.0
    %4652 = vmatprep.subr.mxu0 0.0
    %4653 = vmatpush1.msra.mxu0 0.0
    %4654 = vmatprep.subr.mxu0 0.0
    %4655 = vmatpush1.msra.mxu0 0.0
    %4656 = vmatprep.subr.mxu0 0.0
    %4657 = vmatpush1.msra.mxu0 0.0
    %4658 = vmatprep.subr.mxu0 0.0
    %4659 = vmatpush1.msra.mxu0 0.0
    %4660 = vmatprep.subr.mxu0 0.0
    %4661 = vmatpush1.msra.mxu0 0.0
    %4662 = vmatprep.subr.mxu0 0.0
    %4663 = vmatpush1.msra.mxu0 0.0
    %4664 = vmatprep.subr.mxu0 0.0
    %4665 = vmatpush1.msra.mxu0 0.0
    %4666 = vmatprep.subr.mxu0 0.0
    %4667 = vmatpush1.msra.mxu0 0.0
    %4668 = vmatprep.subr.mxu0 0.0
    %4669 = vmatpush1.msra.mxu0 0.0
    %4670 = vmatprep.subr.mxu0 0.0
    %4671 = vmatpush1.msra.mxu0 0.0
    %4672 = vmatprep.subr.mxu0 0.0
    %4673 = vmatpush1.msra.mxu0 0.0
    %4674 = vmatprep.subr.mxu0 0.0
    %4675 = vmatpush1.msra.mxu0 0.0
    %4676 = vmatprep.subr.mxu0 0.0
    %4677 = vmatpush1.msra.mxu0 0.0
    %4678 = vmatprep.subr.mxu0 0.0
    %4679 = vmatpush1.msra.mxu0 0.0
    %4680 = vmatprep.subr.mxu0 0.0
    %4681 = vmatpush1.msra.mxu0 0.0
    %4682 = vmatprep.subr.mxu0 0.0
    %4683 = vmatpush1.msra.mxu0 0.0
    %4684 = vmatprep.subr.mxu0 0.0
    %4685 = vmatpush1.msra.mxu0 0.0
    %4686 = vmatprep.subr.mxu0 0.0
    %4687 = vmatpush1.msra.mxu0 0.0
    %4688 = vmatprep.subr.mxu0 0.0
    %4689 = vmatpush1.msra.mxu0 0.0
    %4690 = vmatprep.subr.mxu0 0.0
    %4691 = vmatpush1.msra.mxu0 0.0
    %4692 = vmatprep.mubr.f32.mxu0 0.0
    %4693 = vmatmul.mubr.f32.gmra.mrb[0].mxu0 %v4626
    %v4694 = vpop.f32.mrb[0].mxu0
    %v4695 = vadd.f32 0.0, %v4694
    %v4696 = vpop.f32.mrb[0].mxu0
    %4697 = vdwg.mxu0
    %v4699 = vsel %vm1101, %v4458, 0
    %4701 = vmatprep.subr.mxu0 0.0
    %4702 = vmatpush1.msra.mxu0 %v4462
    %4703 = vmatprep.subr.mxu0 0.0
    %4704 = vmatpush1.msra.mxu0 0.0
    %4705 = vmatprep.subr.mxu0 0.0
    %4706 = vmatpush1.msra.mxu0 0.0
    %4707 = vmatprep.subr.mxu0 0.0
    %4708 = vmatpush1.msra.mxu0 0.0
    %4709 = vmatprep.subr.mxu0 0.0
    %4710 = vmatpush1.msra.mxu0 0.0
    %4711 = vmatprep.subr.mxu0 0.0
    %4712 = vmatpush1.msra.mxu0 0.0
    %4713 = vmatprep.subr.mxu0 0.0
    %4714 = vmatpush1.msra.mxu0 0.0
    %4715 = vmatprep.subr.mxu0 0.0
    %4716 = vmatpush1.msra.mxu0 0.0
    %4717 = vmatprep.subr.mxu0 0.0
    %4718 = vmatpush1.msra.mxu0 0.0
    %4719 = vmatprep.subr.mxu0 0.0
    %4720 = vmatpush1.msra.mxu0 0.0
    %4721 = vmatprep.subr.mxu0 0.0
    %4722 = vmatpush1.msra.mxu0 0.0
    %4723 = vmatprep.subr.mxu0 0.0
    %4724 = vmatpush1.msra.mxu0 0.0
    %4725 = vmatprep.subr.mxu0 0.0
    %4726 = vmatpush1.msra.mxu0 0.0
    %4727 = vmatprep.subr.mxu0 0.0
    %4728 = vmatpush1.msra.mxu0 0.0
    %4729 = vmatprep.subr.mxu0 0.0
    %4730 = vmatpush1.msra.mxu0 0.0
    %4731 = vmatprep.subr.mxu0 0.0
    %4732 = vmatpush1.msra.mxu0 0.0
    %4733 = vmatprep.subr.mxu0 0.0
    %4734 = vmatpush1.msra.mxu0 0.0
    %4735 = vmatprep.subr.mxu0 0.0
    %4736 = vmatpush1.msra.mxu0 0.0
    %4737 = vmatprep.subr.mxu0 0.0
    %4738 = vmatpush1.msra.mxu0 0.0
    %4739 = vmatprep.subr.mxu0 0.0
    %4740 = vmatpush1.msra.mxu0 0.0
    %4741 = vmatprep.subr.mxu0 0.0
    %4742 = vmatpush1.msra.mxu0 0.0
    %4743 = vmatprep.subr.mxu0 0.0
    %4744 = vmatpush1.msra.mxu0 0.0
    %4745 = vmatprep.subr.mxu0 0.0
    %4746 = vmatpush1.msra.mxu0 0.0
    %4747 = vmatprep.subr.mxu0 0.0
    %4748 = vmatpush1.msra.mxu0 0.0
    %4749 = vmatprep.subr.mxu0 0.0
    %4750 = vmatpush1.msra.mxu0 0.0
    %4751 = vmatprep.subr.mxu0 0.0
    %4752 = vmatpush1.msra.mxu0 0.0
    %4753 = vmatprep.subr.mxu0 0.0
    %4754 = vmatpush1.msra.mxu0 0.0
    %4755 = vmatprep.subr.mxu0 0.0
    %4756 = vmatpush1.msra.mxu0 0.0
    %4757 = vmatprep.subr.mxu0 0.0
    %4758 = vmatpush1.msra.mxu0 0.0
    %4759 = vmatprep.subr.mxu0 0.0
    %4760 = vmatpush1.msra.mxu0 0.0
    %4761 = vmatprep.subr.mxu0 0.0
    %4762 = vmatpush1.msra.mxu0 0.0
    %4763 = vmatprep.subr.mxu0 0.0
    %4764 = vmatpush1.msra.mxu0 0.0
    %4765 = vmatprep.mubr.f32.mxu0 0.0
    %4766 = vmatmul.mubr.f32.gmra.mrb[0].mxu0 %v4699
    %v4767 = vpop.f32.mrb[0].mxu0
    %v4768 = vadd.f32 %v4695, %v4767
    %v4769 = vpop.f32.mrb[0].mxu0
    %4770 = vdwg.mxu0
    %v4772 = vsel %vm1101, %v3868, 0
    %v4775 = vsel %vm1101, %v3953, 0
    %4777 = vmatprep.subr.mxu0 0.0
    %4778 = vmatpush1.xpose.msra.mxu0 %v4775
    %4779 = vmatprep.subr.mxu0 0.0
    %4780 = vmatpush1.xpose.msra.mxu0 0.0
    %4781 = vmatprep.subr.mxu0 0.0
    %4782 = vmatpush1.xpose.msra.mxu0 0.0
    %4783 = vmatprep.subr.mxu0 0.0
    %4784 = vmatpush1.xpose.msra.mxu0 0.0
    %4785 = vmatprep.subr.mxu0 0.0
    %4786 = vmatpush1.xpose.msra.mxu0 0.0
    %4787 = vmatprep.subr.mxu0 0.0
    %4788 = vmatpush1.xpose.msra.mxu0 0.0
    %4789 = vmatprep.subr.mxu0 0.0
    %4790 = vmatpush1.xpose.msra.mxu0 0.0
    %4791 = vmatprep.subr.mxu0 0.0
    %4792 = vmatpush1.xpose.msra.mxu0 0.0
    %4793 = vmatprep.subr.mxu0 0.0
    %4794 = vmatpush1.xpose.msra.mxu0 0.0
    %4795 = vmatprep.subr.mxu0 0.0
    %4796 = vmatpush1.xpose.msra.mxu0 0.0
    %4797 = vmatprep.subr.mxu0 0.0
    %4798 = vmatpush1.xpose.msra.mxu0 0.0
    %4799 = vmatprep.subr.mxu0 0.0
    %4800 = vmatpush1.xpose.msra.mxu0 0.0
    %4801 = vmatprep.subr.mxu0 0.0
    %4802 = vmatpush1.xpose.msra.mxu0 0.0
    %4803 = vmatprep.subr.mxu0 0.0
    %4804 = vmatpush1.xpose.msra.mxu0 0.0
    %4805 = vmatprep.subr.mxu0 0.0
    %4806 = vmatpush1.xpose.msra.mxu0 0.0
    %4807 = vmatprep.subr.mxu0 0.0
    %4808 = vmatpush1.xpose.msra.mxu0 0.0
    %4809 = vmatprep.subr.mxu0 0.0
    %4810 = vmatpush1.xpose.msra.mxu0 0.0
    %4811 = vmatprep.subr.mxu0 0.0
    %4812 = vmatpush1.xpose.msra.mxu0 0.0
    %4813 = vmatprep.subr.mxu0 0.0
    %4814 = vmatpush1.xpose.msra.mxu0 0.0
    %4815 = vmatprep.subr.mxu0 0.0
    %4816 = vmatpush1.xpose.msra.mxu0 0.0
    %4817 = vmatprep.subr.mxu0 0.0
    %4818 = vmatpush1.xpose.msra.mxu0 0.0
    %4819 = vmatprep.subr.mxu0 0.0
    %4820 = vmatpush1.xpose.msra.mxu0 0.0
    %4821 = vmatprep.subr.mxu0 0.0
    %4822 = vmatpush1.xpose.msra.mxu0 0.0
    %4823 = vmatprep.subr.mxu0 0.0
    %4824 = vmatpush1.xpose.msra.mxu0 0.0
    %4825 = vmatprep.subr.mxu0 0.0
    %4826 = vmatpush1.xpose.msra.mxu0 0.0
    %4827 = vmatprep.subr.mxu0 0.0
    %4828 = vmatpush1.xpose.msra.mxu0 0.0
    %4829 = vmatprep.subr.mxu0 0.0
    %4830 = vmatpush1.xpose.msra.mxu0 0.0
    %4831 = vmatprep.subr.mxu0 0.0
    %4832 = vmatpush1.xpose.msra.mxu0 0.0
    %4833 = vmatprep.subr.mxu0 0.0
    %4834 = vmatpush1.xpose.msra.mxu0 0.0
    %4835 = vmatprep.subr.mxu0 0.0
    %4836 = vmatpush1.xpose.msra.mxu0 0.0
    %4837 = vmatprep.subr.mxu0 0.0
    %4838 = vmatpush1.xpose.msra.mxu0 0.0
    %4839 = vmatprep.subr.mxu0 0.0
    %4840 = vmatpush1.xpose.msra.mxu0 0.0
    %4841 = vmatprep.mubr.f32.mxu0 0.0
    %4842 = vmatmul.mubr.f32.gmra.mrb[0].mxu0 %v4772
    %v4843 = vpop.f32.mrb[0].mxu0
    %v4844 = vadd.f32 0.0, %v4843
    %v4845 = vpop.f32.mrb[0].mxu0
    %4846 = vdwg.mxu0
    %v4847 = vsel %vm1101, %v4844, -inf
    %4848 = vmax.xlane.f32.xlu0 %v4847
    %v4849 = vpop.xlane.xlu0 %4848
    %v4850 = vsub.f32 %v4844, %v4849
    %v4851 = vmul.f32 %v4850, 1.442695
    %v4852 = vpow.pop %v4851
    %v4853 = vsel %vm1101, %v4852, 0.0
    %4854 = vadd.xlane.f32.xlu0 %v4853
    %v4855 = vpop.xlane.xlu0 %4854
    %v4856 = vrcp.pop %v4855
    %v4857 = vmul.f32 %v4852, %v4856
    %v4859 = vsel %vm1101, %v4857, 0
    %4861 = vmatprep.subr.mxu0 0.0
    %4862 = vmatpush1.msra.mxu0 %v4038
    %4863 = vmatprep.subr.mxu0 0.0
    %4864 = vmatpush1.msra.mxu0 0.0
    %4865 = vmatprep.subr.mxu0 0.0
    %4866 = vmatpush1.msra.mxu0 0.0
    %4867 = vmatprep.subr.mxu0 0.0
    %4868 = vmatpush1.msra.mxu0 0.0
    %4869 = vmatprep.subr.mxu0 0.0
    %4870 = vmatpush1.msra.mxu0 0.0
    %4871 = vmatprep.subr.mxu0 0.0
    %4872 = vmatpush1.msra.mxu0 0.0
    %4873 = vmatprep.subr.mxu0 0.0
    %4874 = vmatpush1.msra.mxu0 0.0
    %4875 = vmatprep.subr.mxu0 0.0
    %4876 = vmatpush1.msra.mxu0 0.0
    %4877 = vmatprep.subr.mxu0 0.0
    %4878 = vmatpush1.msra.mxu0 0.0
    %4879 = vmatprep.subr.mxu0 0.0
    %4880 = vmatpush1.msra.mxu0 0.0
    %4881 = vmatprep.subr.mxu0 0.0
    %4882 = vmatpush1.msra.mxu0 0.0
    %4883 = vmatprep.subr.mxu0 0.0
    %4884 = vmatpush1.msra.mxu0 0.0
    %4885 = vmatprep.subr.mxu0 0.0
    %4886 = vmatpush1.msra.mxu0 0.0
    %4887 = vmatprep.subr.mxu0 0.0
    %4888 = vmatpush1.msra.mxu0 0.0
    %4889 = vmatprep.subr.mxu0 0.0
    %4890 = vmatpush1.msra.mxu0 0.0
    %4891 = vmatprep.subr.mxu0 0.0
    %4892 = vmatpush1.msra.mxu0 0.0
    %4893 = vmatprep.subr.mxu0 0.0
    %4894 = vmatpush1.msra.mxu0 0.0
    %4895 = vmatprep.subr.mxu0 0.0
    %4896 = vmatpush1.msra.mxu0 0.0
    %4897 = vmatprep.subr.mxu0 0.0
    %4898 = vmatpush1.msra.mxu0 0.0
    %4899 = vmatprep.subr.mxu0 0.0
    %4900 = vmatpush1.msra.mxu0 0.0
    %4901 = vmatprep.subr.mxu0 0.0
    %4902 = vmatpush1.msra.mxu0 0.0
    %4903 = vmatprep.subr.mxu0 0.0
    %4904 = vmatpush1.msra.mxu0 0.0
    %4905 = vmatprep.subr.mxu0 0.0
    %4906 = vmatpush1.msra.mxu0 0.0
    %4907 = vmatprep.subr.mxu0 0.0
    %4908 = vmatpush1.msra.mxu0 0.0
    %4909 = vmatprep.subr.mxu0 0.0
    %4910 = vmatpush1.msra.mxu0 0.0
    %4911 = vmatprep.subr.mxu0 0.0
    %4912 = vmatpush1.msra.mxu0 0.0
    %4913 = vmatprep.subr.mxu0 0.0
    %4914 = vmatpush1.msra.mxu0 0.0
    %4915 = vmatprep.subr.mxu0 0.0
    %4916 = vmatpush1.msra.mxu0 0.0
    %4917 = vmatprep.subr.mxu0 0.0
    %4918 = vmatpush1.msra.mxu0 0.0
    %4919 = vmatprep.subr.mxu0 0.0
    %4920 = vmatpush1.msra.mxu0 0.0
    %4921 = vmatprep.subr.mxu0 0.0
    %4922 = vmatpush1.msra.mxu0 0.0
    %4923 = vmatprep.subr.mxu0 0.0
    %4924 = vmatpush1.msra.mxu0 0.0
    %4925 = vmatprep.mubr.f32.mxu0 0.0
    %4926 = vmatmul.mubr.f32.gmra.mrb[0].mxu0 %v4859
    %v4927 = vpop.f32.mrb[0].mxu0
    %v4928 = vadd.f32 0.0, %v4927
    %v4929 = vpop.f32.mrb[0].mxu0
    %4930 = vdwg.mxu0
    %s4931 = scalar_lea.vmem %s7, 48
    %v4932 = vld [vmem:[%s4931] sm:$0xff]
    %v4934 = vsel %vm1101, %v4928, 0
    %4936 = vmatprep.subr.mxu0 0.0
    %4937 = vmatpush1.msra.mxu0 %v4932
    %4938 = vmatprep.subr.mxu0 0.0
    %4939 = vmatpush1.msra.mxu0 0.0
    %4940 = vmatprep.subr.mxu0 0.0
    %4941 = vmatpush1.msra.mxu0 0.0
    %4942 = vmatprep.subr.mxu0 0.0
    %4943 = vmatpush1.msra.mxu0 0.0
    %4944 = vmatprep.subr.mxu0 0.0
    %4945 = vmatpush1.msra.mxu0 0.0
    %4946 = vmatprep.subr.mxu0 0.0
    %4947 = vmatpush1.msra.mxu0 0.0
    %4948 = vmatprep.subr.mxu0 0.0
    %4949 = vmatpush1.msra.mxu0 0.0
    %4950 = vmatprep.subr.mxu0 0.0
    %4951 = vmatpush1.msra.mxu0 0.0
    %4952 = vmatprep.subr.mxu0 0.0
    %4953 = vmatpush1.msra.mxu0 0.0
    %4954 = vmatprep.subr.mxu0 0.0
    %4955 = vmatpush1.msra.mxu0 0.0
    %4956 = vmatprep.subr.mxu0 0.0
    %4957 = vmatpush1.msra.mxu0 0.0
    %4958 = vmatprep.subr.mxu0 0.0
    %4959 = vmatpush1.msra.mxu0 0.0
    %4960 = vmatprep.subr.mxu0 0.0
    %4961 = vmatpush1.msra.mxu0 0.0
    %4962 = vmatprep.subr.mxu0 0.0
    %4963 = vmatpush1.msra.mxu0 0.0
    %4964 = vmatprep.subr.mxu0 0.0
    %4965 = vmatpush1.msra.mxu0 0.0
    %4966 = vmatprep.subr.mxu0 0.0
    %4967 = vmatpush1.msra.mxu0 0.0
    %4968 = vmatprep.subr.mxu0 0.0
    %4969 = vmatpush1.msra.mxu0 0.0
    %4970 = vmatprep.subr.mxu0 0.0
    %4971 = vmatpush1.msra.mxu0 0.0
    %4972 = vmatprep.subr.mxu0 0.0
    %4973 = vmatpush1.msra.mxu0 0.0
    %4974 = vmatprep.subr.mxu0 0.0
    %4975 = vmatpush1.msra.mxu0 0.0
    %4976 = vmatprep.subr.mxu0 0.0
    %4977 = vmatpush1.msra.mxu0 0.0
    %4978 = vmatprep.subr.mxu0 0.0
    %4979 = vmatpush1.msra.mxu0 0.0
    %4980 = vmatprep.subr.mxu0 0.0
    %4981 = vmatpush1.msra.mxu0 0.0
    %4982 = vmatprep.subr.mxu0 0.0
    %4983 = vmatpush1.msra.mxu0 0.0
    %4984 = vmatprep.subr.mxu0 0.0
    %4985 = vmatpush1.msra.mxu0 0.0
    %4986 = vmatprep.subr.mxu0 0.0
    %4987 = vmatpush1.msra.mxu0 0.0
    %4988 = vmatprep.subr.mxu0 0.0
    %4989 = vmatpush1.msra.mxu0 0.0
    %4990 = vmatprep.subr.mxu0 0.0
    %4991 = vmatpush1.msra.mxu0 0.0
    %4992 = vmatprep.subr.mxu0 0.0
    %4993 = vmatpush1.msra.mxu0 0.0
    %4994 = vmatprep.subr.mxu0 0.0
    %4995 = vmatpush1.msra.mxu0 0.0
    %4996 = vmatprep.subr.mxu0 0.0
    %4997 = vmatpush1.msra.mxu0 0.0
    %4998 = vmatprep.subr.mxu0 0.0
    %4999 = vmatpush1.msra.mxu0 0.0
    %5000 = vmatprep.mubr.f32.mxu0 0.0
    %5001 = vmatmul.mubr.f32.gmra.mrb[0].mxu0 %v4934
    %v5002 = vpop.f32.mrb[0].mxu0
    %v5003 = vadd.f32 0.0, %v5002
    %v5004 = vpop.f32.mrb[0].mxu0
    %5005 = vdwg.mxu0
    %v5006 = vadd.f32 %v4768, %v5003
    %v5008 = vsel %vm1101, %v4123, 0
    %v5011 = vsel %vm1101, %v4208, 0
    %5013 = vmatprep.subr.mxu0 0.0
    %5014 = vmatpush1.xpose.msra.mxu0 %v5011
    %5015 = vmatprep.subr.mxu0 0.0
    %5016 = vmatpush1.xpose.msra.mxu0 0.0
    %5017 = vmatprep.subr.mxu0 0.0
    %5018 = vmatpush1.xpose.msra.mxu0 0.0
    %5019 = vmatprep.subr.mxu0 0.0
    %5020 = vmatpush1.xpose.msra.mxu0 0.0
    %5021 = vmatprep.subr.mxu0 0.0
    %5022 = vmatpush1.xpose.msra.mxu0 0.0
    %5023 = vmatprep.subr.mxu0 0.0
    %5024 = vmatpush1.xpose.msra.mxu0 0.0
    %5025 = vmatprep.subr.mxu0 0.0
    %5026 = vmatpush1.xpose.msra.mxu0 0.0
    %5027 = vmatprep.subr.mxu0 0.0
    %5028 = vmatpush1.xpose.msra.mxu0 0.0
    %5029 = vmatprep.subr.mxu0 0.0
    %5030 = vmatpush1.xpose.msra.mxu0 0.0
    %5031 = vmatprep.subr.mxu0 0.0
    %5032 = vmatpush1.xpose.msra.mxu0 0.0
    %5033 = vmatprep.subr.mxu0 0.0
    %5034 = vmatpush1.xpose.msra.mxu0 0.0
    %5035 = vmatprep.subr.mxu0 0.0
    %5036 = vmatpush1.xpose.msra.mxu0 0.0
    %5037 = vmatprep.subr.mxu0 0.0
    %5038 = vmatpush1.xpose.msra.mxu0 0.0
    %5039 = vmatprep.subr.mxu0 0.0
    %5040 = vmatpush1.xpose.msra.mxu0 0.0
    %5041 = vmatprep.subr.mxu0 0.0
    %5042 = vmatpush1.xpose.msra.mxu0 0.0
    %5043 = vmatprep.subr.mxu0 0.0
    %5044 = vmatpush1.xpose.msra.mxu0 0.0
    %5045 = vmatprep.subr.mxu0 0.0
    %5046 = vmatpush1.xpose.msra.mxu0 0.0
    %5047 = vmatprep.subr.mxu0 0.0
    %5048 = vmatpush1.xpose.msra.mxu0 0.0
    %5049 = vmatprep.subr.mxu0 0.0
    %5050 = vmatpush1.xpose.msra.mxu0 0.0
    %5051 = vmatprep.subr.mxu0 0.0
    %5052 = vmatpush1.xpose.msra.mxu0 0.0
    %5053 = vmatprep.subr.mxu0 0.0
    %5054 = vmatpush1.xpose.msra.mxu0 0.0
    %5055 = vmatprep.subr.mxu0 0.0
    %5056 = vmatpush1.xpose.msra.mxu0 0.0
    %5057 = vmatprep.subr.mxu0 0.0
    %5058 = vmatpush1.xpose.msra.mxu0 0.0
    %5059 = vmatprep.subr.mxu0 0.0
    %5060 = vmatpush1.xpose.msra.mxu0 0.0
    %5061 = vmatprep.subr.mxu0 0.0
    %5062 = vmatpush1.xpose.msra.mxu0 0.0
    %5063 = vmatprep.subr.mxu0 0.0
    %5064 = vmatpush1.xpose.msra.mxu0 0.0
    %5065 = vmatprep.subr.mxu0 0.0
    %5066 = vmatpush1.xpose.msra.mxu0 0.0
    %5067 = vmatprep.subr.mxu0 0.0
    %5068 = vmatpush1.xpose.msra.mxu0 0.0
    %5069 = vmatprep.subr.mxu0 0.0
    %5070 = vmatpush1.xpose.msra.mxu0 0.0
    %5071 = vmatprep.subr.mxu0 0.0
    %5072 = vmatpush1.xpose.msra.mxu0 0.0
    %5073 = vmatprep.subr.mxu0 0.0
    %5074 = vmatpush1.xpose.msra.mxu0 0.0
    %5075 = vmatprep.subr.mxu0 0.0
    %5076 = vmatpush1.xpose.msra.mxu0 0.0
    %5077 = vmatprep.mubr.f32.mxu0 0.0
    %5078 = vmatmul.mubr.f32.gmra.mrb[0].mxu0 %v5008
    %v5079 = vpop.f32.mrb[0].mxu0
    %v5080 = vadd.f32 0.0, %v5079
    %v5081 = vpop.f32.mrb[0].mxu0
    %5082 = vdwg.mxu0
    %v5083 = vsel %vm1101, %v5080, -inf
    %5084 = vmax.xlane.f32.xlu0 %v5083
    %v5085 = vpop.xlane.xlu0 %5084
    %v5086 = vsub.f32 %v5080, %v5085
    %v5087 = vmul.f32 %v5086, 1.442695
    %v5088 = vpow.pop %v5087
    %v5089 = vsel %vm1101, %v5088, 0.0
    %5090 = vadd.xlane.f32.xlu0 %v5089
    %v5091 = vpop.xlane.xlu0 %5090
    %v5092 = vrcp.pop %v5091
    %v5093 = vmul.f32 %v5088, %v5092
    %v5095 = vsel %vm1101, %v5093, 0
    %5097 = vmatprep.subr.mxu0 0.0
    %5098 = vmatpush1.msra.mxu0 %v4293
    %5099 = vmatprep.subr.mxu0 0.0
    %5100 = vmatpush1.msra.mxu0 0.0
    %5101 = vmatprep.subr.mxu0 0.0
    %5102 = vmatpush1.msra.mxu0 0.0
    %5103 = vmatprep.subr.mxu0 0.0
    %5104 = vmatpush1.msra.mxu0 0.0
    %5105 = vmatprep.subr.mxu0 0.0
    %5106 = vmatpush1.msra.mxu0 0.0
    %5107 = vmatprep.subr.mxu0 0.0
    %5108 = vmatpush1.msra.mxu0 0.0
    %5109 = vmatprep.subr.mxu0 0.0
    %5110 = vmatpush1.msra.mxu0 0.0
    %5111 = vmatprep.subr.mxu0 0.0
    %5112 = vmatpush1.msra.mxu0 0.0
    %5113 = vmatprep.subr.mxu0 0.0
    %5114 = vmatpush1.msra.mxu0 0.0
    %5115 = vmatprep.subr.mxu0 0.0
    %5116 = vmatpush1.msra.mxu0 0.0
    %5117 = vmatprep.subr.mxu0 0.0
    %5118 = vmatpush1.msra.mxu0 0.0
    %5119 = vmatprep.subr.mxu0 0.0
    %5120 = vmatpush1.msra.mxu0 0.0
    %5121 = vmatprep.subr.mxu0 0.0
    %5122 = vmatpush1.msra.mxu0 0.0
    %5123 = vmatprep.subr.mxu0 0.0
    %5124 = vmatpush1.msra.mxu0 0.0
    %5125 = vmatprep.subr.mxu0 0.0
    %5126 = vmatpush1.msra.mxu0 0.0
    %5127 = vmatprep.subr.mxu0 0.0
    %5128 = vmatpush1.msra.mxu0 0.0
    %5129 = vmatprep.subr.mxu0 0.0
    %5130 = vmatpush1.msra.mxu0 0.0
    %5131 = vmatprep.subr.mxu0 0.0
    %5132 = vmatpush1.msra.mxu0 0.0
    %5133 = vmatprep.subr.mxu0 0.0
    %5134 = vmatpush1.msra.mxu0 0.0
    %5135 = vmatprep.subr.mxu0 0.0
    %5136 = vmatpush1.msra.mxu0 0.0
    %5137 = vmatprep.subr.mxu0 0.0
    %5138 = vmatpush1.msra.mxu0 0.0
    %5139 = vmatprep.subr.mxu0 0.0
    %5140 = vmatpush1.msra.mxu0 0.0
    %5141 = vmatprep.subr.mxu0 0.0
    %5142 = vmatpush1.msra.mxu0 0.0
    %5143 = vmatprep.subr.mxu0 0.0
    %5144 = vmatpush1.msra.mxu0 0.0
    %5145 = vmatprep.subr.mxu0 0.0
    %5146 = vmatpush1.msra.mxu0 0.0
    %5147 = vmatprep.subr.mxu0 0.0
    %5148 = vmatpush1.msra.mxu0 0.0
    %5149 = vmatprep.subr.mxu0 0.0
    %5150 = vmatpush1.msra.mxu0 0.0
    %5151 = vmatprep.subr.mxu0 0.0
    %5152 = vmatpush1.msra.mxu0 0.0
    %5153 = vmatprep.subr.mxu0 0.0
    %5154 = vmatpush1.msra.mxu0 0.0
    %5155 = vmatprep.subr.mxu0 0.0
    %5156 = vmatpush1.msra.mxu0 0.0
    %5157 = vmatprep.subr.mxu0 0.0
    %5158 = vmatpush1.msra.mxu0 0.0
    %5159 = vmatprep.subr.mxu0 0.0
    %5160 = vmatpush1.msra.mxu0 0.0
    %5161 = vmatprep.mubr.f32.mxu0 0.0
    %5162 = vmatmul.mubr.f32.gmra.mrb[0].mxu0 %v5095
    %v5163 = vpop.f32.mrb[0].mxu0
    %v5164 = vadd.f32 0.0, %v5163
    %v5165 = vpop.f32.mrb[0].mxu0
    %5166 = vdwg.mxu0
    %s5167 = scalar_lea.vmem %s7, 56
    %v5168 = vld [vmem:[%s5167] sm:$0xff]
    %v5170 = vsel %vm1101, %v5164, 0
    %5172 = vmatprep.subr.mxu0 0.0
    %5173 = vmatpush1.msra.mxu0 %v5168
    %5174 = vmatprep.subr.mxu0 0.0
    %5175 = vmatpush1.msra.mxu0 0.0
    %5176 = vmatprep.subr.mxu0 0.0
    %5177 = vmatpush1.msra.mxu0 0.0
    %5178 = vmatprep.subr.mxu0 0.0
    %5179 = vmatpush1.msra.mxu0 0.0
    %5180 = vmatprep.subr.mxu0 0.0
    %5181 = vmatpush1.msra.mxu0 0.0
    %5182 = vmatprep.subr.mxu0 0.0
    %5183 = vmatpush1.msra.mxu0 0.0
    %5184 = vmatprep.subr.mxu0 0.0
    %5185 = vmatpush1.msra.mxu0 0.0
    %5186 = vmatprep.subr.mxu0 0.0
    %5187 = vmatpush1.msra.mxu0 0.0
    %5188 = vmatprep.subr.mxu0 0.0
    %5189 = vmatpush1.msra.mxu0 0.0
    %5190 = vmatprep.subr.mxu0 0.0
    %5191 = vmatpush1.msra.mxu0 0.0
    %5192 = vmatprep.subr.mxu0 0.0
    %5193 = vmatpush1.msra.mxu0 0.0
    %5194 = vmatprep.subr.mxu0 0.0
    %5195 = vmatpush1.msra.mxu0 0.0
    %5196 = vmatprep.subr.mxu0 0.0
    %5197 = vmatpush1.msra.mxu0 0.0
    %5198 = vmatprep.subr.mxu0 0.0
    %5199 = vmatpush1.msra.mxu0 0.0
    %5200 = vmatprep.subr.mxu0 0.0
    %5201 = vmatpush1.msra.mxu0 0.0
    %5202 = vmatprep.subr.mxu0 0.0
    %5203 = vmatpush1.msra.mxu0 0.0
    %5204 = vmatprep.subr.mxu0 0.0
    %5205 = vmatpush1.msra.mxu0 0.0
    %5206 = vmatprep.subr.mxu0 0.0
    %5207 = vmatpush1.msra.mxu0 0.0
    %5208 = vmatprep.subr.mxu0 0.0
    %5209 = vmatpush1.msra.mxu0 0.0
    %5210 = vmatprep.subr.mxu0 0.0
    %5211 = vmatpush1.msra.mxu0 0.0
    %5212 = vmatprep.subr.mxu0 0.0
    %5213 = vmatpush1.msra.mxu0 0.0
    %5214 = vmatprep.subr.mxu0 0.0
    %5215 = vmatpush1.msra.mxu0 0.0
    %5216 = vmatprep.subr.mxu0 0.0
    %5217 = vmatpush1.msra.mxu0 0.0
    %5218 = vmatprep.subr.mxu0 0.0
    %5219 = vmatpush1.msra.mxu0 0.0
    %5220 = vmatprep.subr.mxu0 0.0
    %5221 = vmatpush1.msra.mxu0 0.0
    %5222 = vmatprep.subr.mxu0 0.0
    %5223 = vmatpush1.msra.mxu0 0.0
    %5224 = vmatprep.subr.mxu0 0.0
    %5225 = vmatpush1.msra.mxu0 0.0
    %5226 = vmatprep.subr.mxu0 0.0
    %5227 = vmatpush1.msra.mxu0 0.0
    %5228 = vmatprep.subr.mxu0 0.0
    %5229 = vmatpush1.msra.mxu0 0.0
    %5230 = vmatprep.subr.mxu0 0.0
    %5231 = vmatpush1.msra.mxu0 0.0
    %5232 = vmatprep.subr.mxu0 0.0
    %5233 = vmatpush1.msra.mxu0 0.0
    %5234 = vmatprep.subr.mxu0 0.0
    %5235 = vmatpush1.msra.mxu0 0.0
    %5236 = vmatprep.mubr.f32.mxu0 0.0
    %5237 = vmatmul.mubr.f32.gmra.mrb[0].mxu0 %v5170
    %v5238 = vpop.f32.mrb[0].mxu0
    %v5239 = vadd.f32 0.0, %v5238
    %v5240 = vpop.f32.mrb[0].mxu0
    %5241 = vdwg.mxu0
    %v5242 = vadd.f32 %v5006, %v5239
    %v5244 = vsel %vm1101, %v3361, 0
    %v5247 = vsel %vm1101, %v3447, 0
    %5249 = vmatprep.subr.mxu0 0.0
    %5250 = vmatpush1.xpose.msra.mxu0 %v5247
    %5251 = vmatprep.subr.mxu0 0.0
    %5252 = vmatpush1.xpose.msra.mxu0 0.0
    %5253 = vmatprep.subr.mxu0 0.0
    %5254 = vmatpush1.xpose.msra.mxu0 0.0
    %5255 = vmatprep.subr.mxu0 0.0
    %5256 = vmatpush1.xpose.msra.mxu0 0.0
    %5257 = vmatprep.subr.mxu0 0.0
    %5258 = vmatpush1.xpose.msra.mxu0 0.0
    %5259 = vmatprep.subr.mxu0 0.0
    %5260 = vmatpush1.xpose.msra.mxu0 0.0
    %5261 = vmatprep.subr.mxu0 0.0
    %5262 = vmatpush1.xpose.msra.mxu0 0.0
    %5263 = vmatprep.subr.mxu0 0.0
    %5264 = vmatpush1.xpose.msra.mxu0 0.0
    %5265 = vmatprep.subr.mxu0 0.0
    %5266 = vmatpush1.xpose.msra.mxu0 0.0
    %5267 = vmatprep.subr.mxu0 0.0
    %5268 = vmatpush1.xpose.msra.mxu0 0.0
    %5269 = vmatprep.subr.mxu0 0.0
    %5270 = vmatpush1.xpose.msra.mxu0 0.0
    %5271 = vmatprep.subr.mxu0 0.0
    %5272 = vmatpush1.xpose.msra.mxu0 0.0
    %5273 = vmatprep.subr.mxu0 0.0
    %5274 = vmatpush1.xpose.msra.mxu0 0.0
    %5275 = vmatprep.subr.mxu0 0.0
    %5276 = vmatpush1.xpose.msra.mxu0 0.0
    %5277 = vmatprep.subr.mxu0 0.0
    %5278 = vmatpush1.xpose.msra.mxu0 0.0
    %5279 = vmatprep.subr.mxu0 0.0
    %5280 = vmatpush1.xpose.msra.mxu0 0.0
    %5281 = vmatprep.subr.mxu0 0.0
    %5282 = vmatpush1.xpose.msra.mxu0 0.0
    %5283 = vmatprep.subr.mxu0 0.0
    %5284 = vmatpush1.xpose.msra.mxu0 0.0
    %5285 = vmatprep.subr.mxu0 0.0
    %5286 = vmatpush1.xpose.msra.mxu0 0.0
    %5287 = vmatprep.subr.mxu0 0.0
    %5288 = vmatpush1.xpose.msra.mxu0 0.0
    %5289 = vmatprep.subr.mxu0 0.0
    %5290 = vmatpush1.xpose.msra.mxu0 0.0
    %5291 = vmatprep.subr.mxu0 0.0
    %5292 = vmatpush1.xpose.msra.mxu0 0.0
    %5293 = vmatprep.subr.mxu0 0.0
    %5294 = vmatpush1.xpose.msra.mxu0 0.0
    %5295 = vmatprep.subr.mxu0 0.0
    %5296 = vmatpush1.xpose.msra.mxu0 0.0
    %5297 = vmatprep.subr.mxu0 0.0
    %5298 = vmatpush1.xpose.msra.mxu0 0.0
    %5299 = vmatprep.subr.mxu0 0.0
    %5300 = vmatpush1.xpose.msra.mxu0 0.0
    %5301 = vmatprep.subr.mxu0 0.0
    %5302 = vmatpush1.xpose.msra.mxu0 0.0
    %5303 = vmatprep.subr.mxu0 0.0
    %5304 = vmatpush1.xpose.msra.mxu0 0.0
    %5305 = vmatprep.subr.mxu0 0.0
    %5306 = vmatpush1.xpose.msra.mxu0 0.0
    %5307 = vmatprep.subr.mxu0 0.0
    %5308 = vmatpush1.xpose.msra.mxu0 0.0
    %5309 = vmatprep.subr.mxu0 0.0
    %5310 = vmatpush1.xpose.msra.mxu0 0.0
    %5311 = vmatprep.subr.mxu0 0.0
    %5312 = vmatpush1.xpose.msra.mxu0 0.0
    %5313 = vmatprep.mubr.f32.mxu0 0.0
    %5314 = vmatmul.mubr.f32.gmra.mrb[0].mxu0 %v5244
    %v5315 = vpop.f32.mrb[0].mxu0
    %v5316 = vadd.f32 0.0, %v5315
    %v5317 = vpop.f32.mrb[0].mxu0
    %5318 = vdwg.mxu0
    %v5319 = vsel %vm1101, %v5316, -inf
    %5320 = vmax.xlane.f32.xlu0 %v5319
    %v5321 = vpop.xlane.xlu0 %5320
    %v5322 = vsub.f32 %v5316, %v5321
    %v5323 = vmul.f32 %v5322, 1.442695
    %v5324 = vpow.pop %v5323
    %v5325 = vsel %vm1101, %v5324, 0.0
    %5326 = vadd.xlane.f32.xlu0 %v5325
    %v5327 = vpop.xlane.xlu0 %5326
    %v5328 = vrcp.pop %v5327
    %v5329 = vmul.f32 %v5324, %v5328
    %v5331 = vsel %vm1101, %v5329, 0
    %5333 = vmatprep.subr.mxu0 0.0
    %5334 = vmatpush1.msra.mxu0 %v3533
    %5335 = vmatprep.subr.mxu0 0.0
    %5336 = vmatpush1.msra.mxu0 0.0
    %5337 = vmatprep.subr.mxu0 0.0
    %5338 = vmatpush1.msra.mxu0 0.0
    %5339 = vmatprep.subr.mxu0 0.0
    %5340 = vmatpush1.msra.mxu0 0.0
    %5341 = vmatprep.subr.mxu0 0.0
    %5342 = vmatpush1.msra.mxu0 0.0
    %5343 = vmatprep.subr.mxu0 0.0
    %5344 = vmatpush1.msra.mxu0 0.0
    %5345 = vmatprep.subr.mxu0 0.0
    %5346 = vmatpush1.msra.mxu0 0.0
    %5347 = vmatprep.subr.mxu0 0.0
    %5348 = vmatpush1.msra.mxu0 0.0
    %5349 = vmatprep.subr.mxu0 0.0
    %5350 = vmatpush1.msra.mxu0 0.0
    %5351 = vmatprep.subr.mxu0 0.0
    %5352 = vmatpush1.msra.mxu0 0.0
    %5353 = vmatprep.subr.mxu0 0.0
    %5354 = vmatpush1.msra.mxu0 0.0
    %5355 = vmatprep.subr.mxu0 0.0
    %5356 = vmatpush1.msra.mxu0 0.0
    %5357 = vmatprep.subr.mxu0 0.0
    %5358 = vmatpush1.msra.mxu0 0.0
    %5359 = vmatprep.subr.mxu0 0.0
    %5360 = vmatpush1.msra.mxu0 0.0
    %5361 = vmatprep.subr.mxu0 0.0
    %5362 = vmatpush1.msra.mxu0 0.0
    %5363 = vmatprep.subr.mxu0 0.0
    %5364 = vmatpush1.msra.mxu0 0.0
    %5365 = vmatprep.subr.mxu0 0.0
    %5366 = vmatpush1.msra.mxu0 0.0
    %5367 = vmatprep.subr.mxu0 0.0
    %5368 = vmatpush1.msra.mxu0 0.0
    %5369 = vmatprep.subr.mxu0 0.0
    %5370 = vmatpush1.msra.mxu0 0.0
    %5371 = vmatprep.subr.mxu0 0.0
    %5372 = vmatpush1.msra.mxu0 0.0
    %5373 = vmatprep.subr.mxu0 0.0
    %5374 = vmatpush1.msra.mxu0 0.0
    %5375 = vmatprep.subr.mxu0 0.0
    %5376 = vmatpush1.msra.mxu0 0.0
    %5377 = vmatprep.subr.mxu0 0.0
    %5378 = vmatpush1.msra.mxu0 0.0
    %5379 = vmatprep.subr.mxu0 0.0
    %5380 = vmatpush1.msra.mxu0 0.0
    %5381 = vmatprep.subr.mxu0 0.0
    %5382 = vmatpush1.msra.mxu0 0.0
    %5383 = vmatprep.subr.mxu0 0.0
    %5384 = vmatpush1.msra.mxu0 0.0
    %5385 = vmatprep.subr.mxu0 0.0
    %5386 = vmatpush1.msra.mxu0 0.0
    %5387 = vmatprep.subr.mxu0 0.0
    %5388 = vmatpush1.msra.mxu0 0.0
    %5389 = vmatprep.subr.mxu0 0.0
    %5390 = vmatpush1.msra.mxu0 0.0
    %5391 = vmatprep.subr.mxu0 0.0
    %5392 = vmatpush1.msra.mxu0 0.0
    %5393 = vmatprep.subr.mxu0 0.0
    %5394 = vmatpush1.msra.mxu0 0.0
    %5395 = vmatprep.subr.mxu0 0.0
    %5396 = vmatpush1.msra.mxu0 0.0
    %5397 = vmatprep.mubr.f32.mxu0 0.0
    %5398 = vmatmul.mubr.f32.gmra.mrb[0].mxu0 %v5331
    %v5399 = vpop.f32.mrb[0].mxu0
    %v5400 = vadd.f32 0.0, %v5399
    %v5401 = vpop.f32.mrb[0].mxu0
    %5402 = vdwg.mxu0
    %v5404 = vsel %vm1101, %v3618, 0
    %v5407 = vsel %vm1101, %v3703, 0
    %5409 = vmatprep.subr.mxu0 0.0
    %5410 = vmatpush1.xpose.msra.mxu0 %v5407
    %5411 = vmatprep.subr.mxu0 0.0
    %5412 = vmatpush1.xpose.msra.mxu0 0.0
    %5413 = vmatprep.subr.mxu0 0.0
    %5414 = vmatpush1.xpose.msra.mxu0 0.0
    %5415 = vmatprep.subr.mxu0 0.0
    %5416 = vmatpush1.xpose.msra.mxu0 0.0
    %5417 = vmatprep.subr.mxu0 0.0
    %5418 = vmatpush1.xpose.msra.mxu0 0.0
    %5419 = vmatprep.subr.mxu0 0.0
    %5420 = vmatpush1.xpose.msra.mxu0 0.0
    %5421 = vmatprep.subr.mxu0 0.0
    %5422 = vmatpush1.xpose.msra.mxu0 0.0
    %5423 = vmatprep.subr.mxu0 0.0
    %5424 = vmatpush1.xpose.msra.mxu0 0.0
    %5425 = vmatprep.subr.mxu0 0.0
    %5426 = vmatpush1.xpose.msra.mxu0 0.0
    %5427 = vmatprep.subr.mxu0 0.0
    %5428 = vmatpush1.xpose.msra.mxu0 0.0
    %5429 = vmatprep.subr.mxu0 0.0
    %5430 = vmatpush1.xpose.msra.mxu0 0.0
    %5431 = vmatprep.subr.mxu0 0.0
    %5432 = vmatpush1.xpose.msra.mxu0 0.0
    %5433 = vmatprep.subr.mxu0 0.0
    %5434 = vmatpush1.xpose.msra.mxu0 0.0
    %5435 = vmatprep.subr.mxu0 0.0
    %5436 = vmatpush1.xpose.msra.mxu0 0.0
    %5437 = vmatprep.subr.mxu0 0.0
    %5438 = vmatpush1.xpose.msra.mxu0 0.0
    %5439 = vmatprep.subr.mxu0 0.0
    %5440 = vmatpush1.xpose.msra.mxu0 0.0
    %5441 = vmatprep.subr.mxu0 0.0
    %5442 = vmatpush1.xpose.msra.mxu0 0.0
    %5443 = vmatprep.subr.mxu0 0.0
    %5444 = vmatpush1.xpose.msra.mxu0 0.0
    %5445 = vmatprep.subr.mxu0 0.0
    %5446 = vmatpush1.xpose.msra.mxu0 0.0
    %5447 = vmatprep.subr.mxu0 0.0
    %5448 = vmatpush1.xpose.msra.mxu0 0.0
    %5449 = vmatprep.subr.mxu0 0.0
    %5450 = vmatpush1.xpose.msra.mxu0 0.0
    %5451 = vmatprep.subr.mxu0 0.0
    %5452 = vmatpush1.xpose.msra.mxu0 0.0
    %5453 = vmatprep.subr.mxu0 0.0
    %5454 = vmatpush1.xpose.msra.mxu0 0.0
    %5455 = vmatprep.subr.mxu0 0.0
    %5456 = vmatpush1.xpose.msra.mxu0 0.0
    %5457 = vmatprep.subr.mxu0 0.0
    %5458 = vmatpush1.xpose.msra.mxu0 0.0
    %5459 = vmatprep.subr.mxu0 0.0
    %5460 = vmatpush1.xpose.msra.mxu0 0.0
    %5461 = vmatprep.subr.mxu0 0.0
    %5462 = vmatpush1.xpose.msra.mxu0 0.0
    %5463 = vmatprep.subr.mxu0 0.0
    %5464 = vmatpush1.xpose.msra.mxu0 0.0
    %5465 = vmatprep.subr.mxu0 0.0
    %5466 = vmatpush1.xpose.msra.mxu0 0.0
    %5467 = vmatprep.subr.mxu0 0.0
    %5468 = vmatpush1.xpose.msra.mxu0 0.0
    %5469 = vmatprep.subr.mxu0 0.0
    %5470 = vmatpush1.xpose.msra.mxu0 0.0
    %5471 = vmatprep.subr.mxu0 0.0
    %5472 = vmatpush1.xpose.msra.mxu0 0.0
    %5473 = vmatprep.mubr.f32.mxu0 0.0
    %5474 = vmatmul.mubr.f32.gmra.mrb[0].mxu0 %v5404
    %v5475 = vpop.f32.mrb[0].mxu0
    %v5476 = vadd.f32 0.0, %v5475
    %v5477 = vpop.f32.mrb[0].mxu0
    %5478 = vdwg.mxu0
    %v5479 = vsel %vm1101, %v5476, -inf
    %5480 = vmax.xlane.f32.xlu0 %v5479
    %v5481 = vpop.xlane.xlu0 %5480
    %v5482 = vsub.f32 %v5476, %v5481
    %v5483 = vmul.f32 %v5482, 1.442695
    %v5484 = vpow.pop %v5483
    %v5485 = vsel %vm1101, %v5484, 0.0
    %5486 = vadd.xlane.f32.xlu0 %v5485
    %v5487 = vpop.xlane.xlu0 %5486
    %v5488 = vrcp.pop %v5487
    %v5489 = vmul.f32 %v5484, %v5488
    %v5491 = vsel %vm1101, %v5489, 0
    %5493 = vmatprep.subr.mxu0 0.0
    %5494 = vmatpush1.msra.mxu0 %v3788
    %5495 = vmatprep.subr.mxu0 0.0
    %5496 = vmatpush1.msra.mxu0 0.0
    %5497 = vmatprep.subr.mxu0 0.0
    %5498 = vmatpush1.msra.mxu0 0.0
    %5499 = vmatprep.subr.mxu0 0.0
    %5500 = vmatpush1.msra.mxu0 0.0
    %5501 = vmatprep.subr.mxu0 0.0
    %5502 = vmatpush1.msra.mxu0 0.0
    %5503 = vmatprep.subr.mxu0 0.0
    %5504 = vmatpush1.msra.mxu0 0.0
    %5505 = vmatprep.subr.mxu0 0.0
    %5506 = vmatpush1.msra.mxu0 0.0
    %5507 = vmatprep.subr.mxu0 0.0
    %5508 = vmatpush1.msra.mxu0 0.0
    %5509 = vmatprep.subr.mxu0 0.0
    %5510 = vmatpush1.msra.mxu0 0.0
    %5511 = vmatprep.subr.mxu0 0.0
    %5512 = vmatpush1.msra.mxu0 0.0
    %5513 = vmatprep.subr.mxu0 0.0
    %5514 = vmatpush1.msra.mxu0 0.0
    %5515 = vmatprep.subr.mxu0 0.0
    %5516 = vmatpush1.msra.mxu0 0.0
    %5517 = vmatprep.subr.mxu0 0.0
    %5518 = vmatpush1.msra.mxu0 0.0
    %5519 = vmatprep.subr.mxu0 0.0
    %5520 = vmatpush1.msra.mxu0 0.0
    %5521 = vmatprep.subr.mxu0 0.0
    %5522 = vmatpush1.msra.mxu0 0.0
    %5523 = vmatprep.subr.mxu0 0.0
    %5524 = vmatpush1.msra.mxu0 0.0
    %5525 = vmatprep.subr.mxu0 0.0
    %5526 = vmatpush1.msra.mxu0 0.0
    %5527 = vmatprep.subr.mxu0 0.0
    %5528 = vmatpush1.msra.mxu0 0.0
    %5529 = vmatprep.subr.mxu0 0.0
    %5530 = vmatpush1.msra.mxu0 0.0
    %5531 = vmatprep.subr.mxu0 0.0
    %5532 = vmatpush1.msra.mxu0 0.0
    %5533 = vmatprep.subr.mxu0 0.0
    %5534 = vmatpush1.msra.mxu0 0.0
    %5535 = vmatprep.subr.mxu0 0.0
    %5536 = vmatpush1.msra.mxu0 0.0
    %5537 = vmatprep.subr.mxu0 0.0
    %5538 = vmatpush1.msra.mxu0 0.0
    %5539 = vmatprep.subr.mxu0 0.0
    %5540 = vmatpush1.msra.mxu0 0.0
    %5541 = vmatprep.subr.mxu0 0.0
    %5542 = vmatpush1.msra.mxu0 0.0
    %5543 = vmatprep.subr.mxu0 0.0
    %5544 = vmatpush1.msra.mxu0 0.0
    %5545 = vmatprep.subr.mxu0 0.0
    %5546 = vmatpush1.msra.mxu0 0.0
    %5547 = vmatprep.subr.mxu0 0.0
    %5548 = vmatpush1.msra.mxu0 0.0
    %5549 = vmatprep.subr.mxu0 0.0
    %5550 = vmatpush1.msra.mxu0 0.0
    %5551 = vmatprep.subr.mxu0 0.0
    %5552 = vmatpush1.msra.mxu0 0.0
    %5553 = vmatprep.subr.mxu0 0.0
    %5554 = vmatpush1.msra.mxu0 0.0
    %5555 = vmatprep.subr.mxu0 0.0
    %5556 = vmatpush1.msra.mxu0 0.0
    %5557 = vmatprep.mubr.f32.mxu0 0.0
    %5558 = vmatmul.mubr.f32.gmra.mrb[0].mxu0 %v5491
    %v5559 = vpop.f32.mrb[0].mxu0
    %v5560 = vadd.f32 0.0, %v5559
    %v5561 = vpop.f32.mrb[0].mxu0
    %5562 = vdwg.mxu0
    %v5564 = vsel %vm1101, %v5560, 0
    %5566 = vmatprep.subr.mxu0 0.0
    %5567 = vmatpush1.msra.mxu0 %v4624
    %5568 = vmatprep.subr.mxu0 0.0
    %5569 = vmatpush1.msra.mxu0 0.0
    %5570 = vmatprep.subr.mxu0 0.0
    %5571 = vmatpush1.msra.mxu0 0.0
    %5572 = vmatprep.subr.mxu0 0.0
    %5573 = vmatpush1.msra.mxu0 0.0
    %5574 = vmatprep.subr.mxu0 0.0
    %5575 = vmatpush1.msra.mxu0 0.0
    %5576 = vmatprep.subr.mxu0 0.0
    %5577 = vmatpush1.msra.mxu0 0.0
    %5578 = vmatprep.subr.mxu0 0.0
    %5579 = vmatpush1.msra.mxu0 0.0
    %5580 = vmatprep.subr.mxu0 0.0
    %5581 = vmatpush1.msra.mxu0 0.0
    %5582 = vmatprep.subr.mxu0 0.0
    %5583 = vmatpush1.msra.mxu0 0.0
    %5584 = vmatprep.subr.mxu0 0.0
    %5585 = vmatpush1.msra.mxu0 0.0
    %5586 = vmatprep.subr.mxu0 0.0
    %5587 = vmatpush1.msra.mxu0 0.0
    %5588 = vmatprep.subr.mxu0 0.0
    %5589 = vmatpush1.msra.mxu0 0.0
    %5590 = vmatprep.subr.mxu0 0.0
    %5591 = vmatpush1.msra.mxu0 0.0
    %5592 = vmatprep.subr.mxu0 0.0
    %5593 = vmatpush1.msra.mxu0 0.0
    %5594 = vmatprep.subr.mxu0 0.0
    %5595 = vmatpush1.msra.mxu0 0.0
    %5596 = vmatprep.subr.mxu0 0.0
    %5597 = vmatpush1.msra.mxu0 0.0
    %5598 = vmatprep.subr.mxu0 0.0
    %5599 = vmatpush1.msra.mxu0 0.0
    %5600 = vmatprep.subr.mxu0 0.0
    %5601 = vmatpush1.msra.mxu0 0.0
    %5602 = vmatprep.subr.mxu0 0.0
    %5603 = vmatpush1.msra.mxu0 0.0
    %5604 = vmatprep.subr.mxu0 0.0
    %5605 = vmatpush1.msra.mxu0 0.0
    %5606 = vmatprep.subr.mxu0 0.0
    %5607 = vmatpush1.msra.mxu0 0.0
    %5608 = vmatprep.subr.mxu0 0.0
    %5609 = vmatpush1.msra.mxu0 0.0
    %5610 = vmatprep.subr.mxu0 0.0
    %5611 = vmatpush1.msra.mxu0 0.0
    %5612 = vmatprep.subr.mxu0 0.0
    %5613 = vmatpush1.msra.mxu0 0.0
    %5614 = vmatprep.subr.mxu0 0.0
    %5615 = vmatpush1.msra.mxu0 0.0
    %5616 = vmatprep.subr.mxu0 0.0
    %5617 = vmatpush1.msra.mxu0 0.0
    %5618 = vmatprep.subr.mxu0 0.0
    %5619 = vmatpush1.msra.mxu0 0.0
    %5620 = vmatprep.subr.mxu0 0.0
    %5621 = vmatpush1.msra.mxu0 0.0
    %5622 = vmatprep.subr.mxu0 0.0
    %5623 = vmatpush1.msra.mxu0 0.0
    %5624 = vmatprep.subr.mxu0 0.0
    %5625 = vmatpush1.msra.mxu0 0.0
    %5626 = vmatprep.subr.mxu0 0.0
    %5627 = vmatpush1.msra.mxu0 0.0
    %5628 = vmatprep.subr.mxu0 0.0
    %5629 = vmatpush1.msra.mxu0 0.0
    %5630 = vmatprep.mubr.f32.mxu0 0.0
    %5631 = vmatmul.mubr.f32.gmra.mrb[0].mxu0 %v5564
    %v5632 = vpop.f32.mrb[0].mxu0
    %v5633 = vadd.f32 0.0, %v5632
    %v5634 = vpop.f32.mrb[0].mxu0
    %5635 = vdwg.mxu0
    %v5637 = vsel %vm1101, %v5400, 0
    %5639 = vmatprep.subr.mxu0 0.0
    %5640 = vmatpush1.msra.mxu0 %v4462
    %5641 = vmatprep.subr.mxu0 0.0
    %5642 = vmatpush1.msra.mxu0 0.0
    %5643 = vmatprep.subr.mxu0 0.0
    %5644 = vmatpush1.msra.mxu0 0.0
    %5645 = vmatprep.subr.mxu0 0.0
    %5646 = vmatpush1.msra.mxu0 0.0
    %5647 = vmatprep.subr.mxu0 0.0
    %5648 = vmatpush1.msra.mxu0 0.0
    %5649 = vmatprep.subr.mxu0 0.0
    %5650 = vmatpush1.msra.mxu0 0.0
    %5651 = vmatprep.subr.mxu0 0.0
    %5652 = vmatpush1.msra.mxu0 0.0
    %5653 = vmatprep.subr.mxu0 0.0
    %5654 = vmatpush1.msra.mxu0 0.0
    %5655 = vmatprep.subr.mxu0 0.0
    %5656 = vmatpush1.msra.mxu0 0.0
    %5657 = vmatprep.subr.mxu0 0.0
    %5658 = vmatpush1.msra.mxu0 0.0
    %5659 = vmatprep.subr.mxu0 0.0
    %5660 = vmatpush1.msra.mxu0 0.0
    %5661 = vmatprep.subr.mxu0 0.0
    %5662 = vmatpush1.msra.mxu0 0.0
    %5663 = vmatprep.subr.mxu0 0.0
    %5664 = vmatpush1.msra.mxu0 0.0
    %5665 = vmatprep.subr.mxu0 0.0
    %5666 = vmatpush1.msra.mxu0 0.0
    %5667 = vmatprep.subr.mxu0 0.0
    %5668 = vmatpush1.msra.mxu0 0.0
    %5669 = vmatprep.subr.mxu0 0.0
    %5670 = vmatpush1.msra.mxu0 0.0
    %5671 = vmatprep.subr.mxu0 0.0
    %5672 = vmatpush1.msra.mxu0 0.0
    %5673 = vmatprep.subr.mxu0 0.0
    %5674 = vmatpush1.msra.mxu0 0.0
    %5675 = vmatprep.subr.mxu0 0.0
    %5676 = vmatpush1.msra.mxu0 0.0
    %5677 = vmatprep.subr.mxu0 0.0
    %5678 = vmatpush1.msra.mxu0 0.0
    %5679 = vmatprep.subr.mxu0 0.0
    %5680 = vmatpush1.msra.mxu0 0.0
    %5681 = vmatprep.subr.mxu0 0.0
    %5682 = vmatpush1.msra.mxu0 0.0
    %5683 = vmatprep.subr.mxu0 0.0
    %5684 = vmatpush1.msra.mxu0 0.0
    %5685 = vmatprep.subr.mxu0 0.0
    %5686 = vmatpush1.msra.mxu0 0.0
    %5687 = vmatprep.subr.mxu0 0.0
    %5688 = vmatpush1.msra.mxu0 0.0
    %5689 = vmatprep.subr.mxu0 0.0
    %5690 = vmatpush1.msra.mxu0 0.0
    %5691 = vmatprep.subr.mxu0 0.0
    %5692 = vmatpush1.msra.mxu0 0.0
    %5693 = vmatprep.subr.mxu0 0.0
    %5694 = vmatpush1.msra.mxu0 0.0
    %5695 = vmatprep.subr.mxu0 0.0
    %5696 = vmatpush1.msra.mxu0 0.0
    %5697 = vmatprep.subr.mxu0 0.0
    %5698 = vmatpush1.msra.mxu0 0.0
    %5699 = vmatprep.subr.mxu0 0.0
    %5700 = vmatpush1.msra.mxu0 0.0
    %5701 = vmatprep.subr.mxu0 0.0
    %5702 = vmatpush1.msra.mxu0 0.0
    %5703 = vmatprep.mubr.f32.mxu0 0.0
    %5704 = vmatmul.mubr.f32.gmra.mrb[0].mxu0 %v5637
    %v5705 = vpop.f32.mrb[0].mxu0
    %v5706 = vadd.f32 %v5633, %v5705
    %v5707 = vpop.f32.mrb[0].mxu0
    %5708 = vdwg.mxu0
    %v5710 = vsel %vm1101, %v3873, 0
    %v5713 = vsel %vm1101, %v3958, 0
    %5715 = vmatprep.subr.mxu0 0.0
    %5716 = vmatpush1.xpose.msra.mxu0 %v5713
    %5717 = vmatprep.subr.mxu0 0.0
    %5718 = vmatpush1.xpose.msra.mxu0 0.0
    %5719 = vmatprep.subr.mxu0 0.0
    %5720 = vmatpush1.xpose.msra.mxu0 0.0
    %5721 = vmatprep.subr.mxu0 0.0
    %5722 = vmatpush1.xpose.msra.mxu0 0.0
    %5723 = vmatprep.subr.mxu0 0.0
    %5724 = vmatpush1.xpose.msra.mxu0 0.0
    %5725 = vmatprep.subr.mxu0 0.0
    %5726 = vmatpush1.xpose.msra.mxu0 0.0
    %5727 = vmatprep.subr.mxu0 0.0
    %5728 = vmatpush1.xpose.msra.mxu0 0.0
    %5729 = vmatprep.subr.mxu0 0.0
    %5730 = vmatpush1.xpose.msra.mxu0 0.0
    %5731 = vmatprep.subr.mxu0 0.0
    %5732 = vmatpush1.xpose.msra.mxu0 0.0
    %5733 = vmatprep.subr.mxu0 0.0
    %5734 = vmatpush1.xpose.msra.mxu0 0.0
    %5735 = vmatprep.subr.mxu0 0.0
    %5736 = vmatpush1.xpose.msra.mxu0 0.0
    %5737 = vmatprep.subr.mxu0 0.0
    %5738 = vmatpush1.xpose.msra.mxu0 0.0
    %5739 = vmatprep.subr.mxu0 0.0
    %5740 = vmatpush1.xpose.msra.mxu0 0.0
    %5741 = vmatprep.subr.mxu0 0.0
    %5742 = vmatpush1.xpose.msra.mxu0 0.0
    %5743 = vmatprep.subr.mxu0 0.0
    %5744 = vmatpush1.xpose.msra.mxu0 0.0
    %5745 = vmatprep.subr.mxu0 0.0
    %5746 = vmatpush1.xpose.msra.mxu0 0.0
    %5747 = vmatprep.subr.mxu0 0.0
    %5748 = vmatpush1.xpose.msra.mxu0 0.0
    %5749 = vmatprep.subr.mxu0 0.0
    %5750 = vmatpush1.xpose.msra.mxu0 0.0
    %5751 = vmatprep.subr.mxu0 0.0
    %5752 = vmatpush1.xpose.msra.mxu0 0.0
    %5753 = vmatprep.subr.mxu0 0.0
    %5754 = vmatpush1.xpose.msra.mxu0 0.0
    %5755 = vmatprep.subr.mxu0 0.0
    %5756 = vmatpush1.xpose.msra.mxu0 0.0
    %5757 = vmatprep.subr.mxu0 0.0
    %5758 = vmatpush1.xpose.msra.mxu0 0.0
    %5759 = vmatprep.subr.mxu0 0.0
    %5760 = vmatpush1.xpose.msra.mxu0 0.0
    %5761 = vmatprep.subr.mxu0 0.0
    %5762 = vmatpush1.xpose.msra.mxu0 0.0
    %5763 = vmatprep.subr.mxu0 0.0
    %5764 = vmatpush1.xpose.msra.mxu0 0.0
    %5765 = vmatprep.subr.mxu0 0.0
    %5766 = vmatpush1.xpose.msra.mxu0 0.0
    %5767 = vmatprep.subr.mxu0 0.0
    %5768 = vmatpush1.xpose.msra.mxu0 0.0
    %5769 = vmatprep.subr.mxu0 0.0
    %5770 = vmatpush1.xpose.msra.mxu0 0.0
    %5771 = vmatprep.subr.mxu0 0.0
    %5772 = vmatpush1.xpose.msra.mxu0 0.0
    %5773 = vmatprep.subr.mxu0 0.0
    %5774 = vmatpush1.xpose.msra.mxu0 0.0
    %5775 = vmatprep.subr.mxu0 0.0
    %5776 = vmatpush1.xpose.msra.mxu0 0.0
    %5777 = vmatprep.subr.mxu0 0.0
    %5778 = vmatpush1.xpose.msra.mxu0 0.0
    %5779 = vmatprep.mubr.f32.mxu0 0.0
    %5780 = vmatmul.mubr.f32.gmra.mrb[0].mxu0 %v5710
    %v5781 = vpop.f32.mrb[0].mxu0
    %v5782 = vadd.f32 0.0, %v5781
    %v5783 = vpop.f32.mrb[0].mxu0
    %5784 = vdwg.mxu0
    %v5785 = vsel %vm1101, %v5782, -inf
    %5786 = vmax.xlane.f32.xlu0 %v5785
    %v5787 = vpop.xlane.xlu0 %5786
    %v5788 = vsub.f32 %v5782, %v5787
    %v5789 = vmul.f32 %v5788, 1.442695
    %v5790 = vpow.pop %v5789
    %v5791 = vsel %vm1101, %v5790, 0.0
    %5792 = vadd.xlane.f32.xlu0 %v5791
    %v5793 = vpop.xlane.xlu0 %5792
    %v5794 = vrcp.pop %v5793
    %v5795 = vmul.f32 %v5790, %v5794
    %v5797 = vsel %vm1101, %v5795, 0
    %5799 = vmatprep.subr.mxu0 0.0
    %5800 = vmatpush1.msra.mxu0 %v4043
    %5801 = vmatprep.subr.mxu0 0.0
    %5802 = vmatpush1.msra.mxu0 0.0
    %5803 = vmatprep.subr.mxu0 0.0
    %5804 = vmatpush1.msra.mxu0 0.0
    %5805 = vmatprep.subr.mxu0 0.0
    %5806 = vmatpush1.msra.mxu0 0.0
    %5807 = vmatprep.subr.mxu0 0.0
    %5808 = vmatpush1.msra.mxu0 0.0
    %5809 = vmatprep.subr.mxu0 0.0
    %5810 = vmatpush1.msra.mxu0 0.0
    %5811 = vmatprep.subr.mxu0 0.0
    %5812 = vmatpush1.msra.mxu0 0.0
    %5813 = vmatprep.subr.mxu0 0.0
    %5814 = vmatpush1.msra.mxu0 0.0
    %5815 = vmatprep.subr.mxu0 0.0
    %5816 = vmatpush1.msra.mxu0 0.0
    %5817 = vmatprep.subr.mxu0 0.0
    %5818 = vmatpush1.msra.mxu0 0.0
    %5819 = vmatprep.subr.mxu0 0.0
    %5820 = vmatpush1.msra.mxu0 0.0
    %5821 = vmatprep.subr.mxu0 0.0
    %5822 = vmatpush1.msra.mxu0 0.0
    %5823 = vmatprep.subr.mxu0 0.0
    %5824 = vmatpush1.msra.mxu0 0.0
    %5825 = vmatprep.subr.mxu0 0.0
    %5826 = vmatpush1.msra.mxu0 0.0
    %5827 = vmatprep.subr.mxu0 0.0
    %5828 = vmatpush1.msra.mxu0 0.0
    %5829 = vmatprep.subr.mxu0 0.0
    %5830 = vmatpush1.msra.mxu0 0.0
    %5831 = vmatprep.subr.mxu0 0.0
    %5832 = vmatpush1.msra.mxu0 0.0
    %5833 = vmatprep.subr.mxu0 0.0
    %5834 = vmatpush1.msra.mxu0 0.0
    %5835 = vmatprep.subr.mxu0 0.0
    %5836 = vmatpush1.msra.mxu0 0.0
    %5837 = vmatprep.subr.mxu0 0.0
    %5838 = vmatpush1.msra.mxu0 0.0
    %5839 = vmatprep.subr.mxu0 0.0
    %5840 = vmatpush1.msra.mxu0 0.0
    %5841 = vmatprep.subr.mxu0 0.0
    %5842 = vmatpush1.msra.mxu0 0.0
    %5843 = vmatprep.subr.mxu0 0.0
    %5844 = vmatpush1.msra.mxu0 0.0
    %5845 = vmatprep.subr.mxu0 0.0
    %5846 = vmatpush1.msra.mxu0 0.0
    %5847 = vmatprep.subr.mxu0 0.0
    %5848 = vmatpush1.msra.mxu0 0.0
    %5849 = vmatprep.subr.mxu0 0.0
    %5850 = vmatpush1.msra.mxu0 0.0
    %5851 = vmatprep.subr.mxu0 0.0
    %5852 = vmatpush1.msra.mxu0 0.0
    %5853 = vmatprep.subr.mxu0 0.0
    %5854 = vmatpush1.msra.mxu0 0.0
    %5855 = vmatprep.subr.mxu0 0.0
    %5856 = vmatpush1.msra.mxu0 0.0
    %5857 = vmatprep.subr.mxu0 0.0
    %5858 = vmatpush1.msra.mxu0 0.0
    %5859 = vmatprep.subr.mxu0 0.0
    %5860 = vmatpush1.msra.mxu0 0.0
    %5861 = vmatprep.subr.mxu0 0.0
    %5862 = vmatpush1.msra.mxu0 0.0
    %5863 = vmatprep.mubr.f32.mxu0 0.0
    %5864 = vmatmul.mubr.f32.gmra.mrb[0].mxu0 %v5797
    %v5865 = vpop.f32.mrb[0].mxu0
    %v5866 = vadd.f32 0.0, %v5865
    %v5867 = vpop.f32.mrb[0].mxu0
    %5868 = vdwg.mxu0
    %v5870 = vsel %vm1101, %v5866, 0
    %5872 = vmatprep.subr.mxu0 0.0
    %5873 = vmatpush1.msra.mxu0 %v4932
    %5874 = vmatprep.subr.mxu0 0.0
    %5875 = vmatpush1.msra.mxu0 0.0
    %5876 = vmatprep.subr.mxu0 0.0
    %5877 = vmatpush1.msra.mxu0 0.0
    %5878 = vmatprep.subr.mxu0 0.0
    %5879 = vmatpush1.msra.mxu0 0.0
    %5880 = vmatprep.subr.mxu0 0.0
    %5881 = vmatpush1.msra.mxu0 0.0
    %5882 = vmatprep.subr.mxu0 0.0
    %5883 = vmatpush1.msra.mxu0 0.0
    %5884 = vmatprep.subr.mxu0 0.0
    %5885 = vmatpush1.msra.mxu0 0.0
    %5886 = vmatprep.subr.mxu0 0.0
    %5887 = vmatpush1.msra.mxu0 0.0
    %5888 = vmatprep.subr.mxu0 0.0
    %5889 = vmatpush1.msra.mxu0 0.0
    %5890 = vmatprep.subr.mxu0 0.0
    %5891 = vmatpush1.msra.mxu0 0.0
    %5892 = vmatprep.subr.mxu0 0.0
    %5893 = vmatpush1.msra.mxu0 0.0
    %5894 = vmatprep.subr.mxu0 0.0
    %5895 = vmatpush1.msra.mxu0 0.0
    %5896 = vmatprep.subr.mxu0 0.0
    %5897 = vmatpush1.msra.mxu0 0.0
    %5898 = vmatprep.subr.mxu0 0.0
    %5899 = vmatpush1.msra.mxu0 0.0
    %5900 = vmatprep.subr.mxu0 0.0
    %5901 = vmatpush1.msra.mxu0 0.0
    %5902 = vmatprep.subr.mxu0 0.0
    %5903 = vmatpush1.msra.mxu0 0.0
    %5904 = vmatprep.subr.mxu0 0.0
    %5905 = vmatpush1.msra.mxu0 0.0
    %5906 = vmatprep.subr.mxu0 0.0
    %5907 = vmatpush1.msra.mxu0 0.0
    %5908 = vmatprep.subr.mxu0 0.0
    %5909 = vmatpush1.msra.mxu0 0.0
    %5910 = vmatprep.subr.mxu0 0.0
    %5911 = vmatpush1.msra.mxu0 0.0
    %5912 = vmatprep.subr.mxu0 0.0
    %5913 = vmatpush1.msra.mxu0 0.0
    %5914 = vmatprep.subr.mxu0 0.0
    %5915 = vmatpush1.msra.mxu0 0.0
    %5916 = vmatprep.subr.mxu0 0.0
    %5917 = vmatpush1.msra.mxu0 0.0
    %5918 = vmatprep.subr.mxu0 0.0
    %5919 = vmatpush1.msra.mxu0 0.0
    %5920 = vmatprep.subr.mxu0 0.0
    %5921 = vmatpush1.msra.mxu0 0.0
    %5922 = vmatprep.subr.mxu0 0.0
    %5923 = vmatpush1.msra.mxu0 0.0
    %5924 = vmatprep.subr.mxu0 0.0
    %5925 = vmatpush1.msra.mxu0 0.0
    %5926 = vmatprep.subr.mxu0 0.0
    %5927 = vmatpush1.msra.mxu0 0.0
    %5928 = vmatprep.subr.mxu0 0.0
    %5929 = vmatpush1.msra.mxu0 0.0
    %5930 = vmatprep.subr.mxu0 0.0
    %5931 = vmatpush1.msra.mxu0 0.0
    %5932 = vmatprep.subr.mxu0 0.0
    %5933 = vmatpush1.msra.mxu0 0.0
    %5934 = vmatprep.subr.mxu0 0.0
    %5935 = vmatpush1.msra.mxu0 0.0
    %5936 = vmatprep.mubr.f32.mxu0 0.0
    %5937 = vmatmul.mubr.f32.gmra.mrb[0].mxu0 %v5870
    %v5938 = vpop.f32.mrb[0].mxu0
    %v5939 = vadd.f32 0.0, %v5938
    %v5940 = vpop.f32.mrb[0].mxu0
    %5941 = vdwg.mxu0
    %v5942 = vadd.f32 %v5706, %v5939
    %v5944 = vsel %vm1101, %v4128, 0
    %v5947 = vsel %vm1101, %v4213, 0
    %5949 = vmatprep.subr.mxu0 0.0
    %5950 = vmatpush1.xpose.msra.mxu0 %v5947
    %5951 = vmatprep.subr.mxu0 0.0
    %5952 = vmatpush1.xpose.msra.mxu0 0.0
    %5953 = vmatprep.subr.mxu0 0.0
    %5954 = vmatpush1.xpose.msra.mxu0 0.0
    %5955 = vmatprep.subr.mxu0 0.0
    %5956 = vmatpush1.xpose.msra.mxu0 0.0
    %5957 = vmatprep.subr.mxu0 0.0
    %5958 = vmatpush1.xpose.msra.mxu0 0.0
    %5959 = vmatprep.subr.mxu0 0.0
    %5960 = vmatpush1.xpose.msra.mxu0 0.0
    %5961 = vmatprep.subr.mxu0 0.0
    %5962 = vmatpush1.xpose.msra.mxu0 0.0
    %5963 = vmatprep.subr.mxu0 0.0
    %5964 = vmatpush1.xpose.msra.mxu0 0.0
    %5965 = vmatprep.subr.mxu0 0.0
    %5966 = vmatpush1.xpose.msra.mxu0 0.0
    %5967 = vmatprep.subr.mxu0 0.0
    %5968 = vmatpush1.xpose.msra.mxu0 0.0
    %5969 = vmatprep.subr.mxu0 0.0
    %5970 = vmatpush1.xpose.msra.mxu0 0.0
    %5971 = vmatprep.subr.mxu0 0.0
    %5972 = vmatpush1.xpose.msra.mxu0 0.0
    %5973 = vmatprep.subr.mxu0 0.0
    %5974 = vmatpush1.xpose.msra.mxu0 0.0
    %5975 = vmatprep.subr.mxu0 0.0
    %5976 = vmatpush1.xpose.msra.mxu0 0.0
    %5977 = vmatprep.subr.mxu0 0.0
    %5978 = vmatpush1.xpose.msra.mxu0 0.0
    %5979 = vmatprep.subr.mxu0 0.0
    %5980 = vmatpush1.xpose.msra.mxu0 0.0
    %5981 = vmatprep.subr.mxu0 0.0
    %5982 = vmatpush1.xpose.msra.mxu0 0.0
    %5983 = vmatprep.subr.mxu0 0.0
    %5984 = vmatpush1.xpose.msra.mxu0 0.0
    %5985 = vmatprep.subr.mxu0 0.0
    %5986 = vmatpush1.xpose.msra.mxu0 0.0
    %5987 = vmatprep.subr.mxu0 0.0
    %5988 = vmatpush1.xpose.msra.mxu0 0.0
    %5989 = vmatprep.subr.mxu0 0.0
    %5990 = vmatpush1.xpose.msra.mxu0 0.0
    %5991 = vmatprep.subr.mxu0 0.0
    %5992 = vmatpush1.xpose.msra.mxu0 0.0
    %5993 = vmatprep.subr.mxu0 0.0
    %5994 = vmatpush1.xpose.msra.mxu0 0.0
    %5995 = vmatprep.subr.mxu0 0.0
    %5996 = vmatpush1.xpose.msra.mxu0 0.0
    %5997 = vmatprep.subr.mxu0 0.0
    %5998 = vmatpush1.xpose.msra.mxu0 0.0
    %5999 = vmatprep.subr.mxu0 0.0
    %6000 = vmatpush1.xpose.msra.mxu0 0.0
    %6001 = vmatprep.subr.mxu0 0.0
    %6002 = vmatpush1.xpose.msra.mxu0 0.0
    %6003 = vmatprep.subr.mxu0 0.0
    %6004 = vmatpush1.xpose.msra.mxu0 0.0
    %6005 = vmatprep.subr.mxu0 0.0
    %6006 = vmatpush1.xpose.msra.mxu0 0.0
    %6007 = vmatprep.subr.mxu0 0.0
    %6008 = vmatpush1.xpose.msra.mxu0 0.0
    %6009 = vmatprep.subr.mxu0 0.0
    %6010 = vmatpush1.xpose.msra.mxu0 0.0
    %6011 = vmatprep.subr.mxu0 0.0
    %6012 = vmatpush1.xpose.msra.mxu0 0.0
    %6013 = vmatprep.mubr.f32.mxu0 0.0
    %6014 = vmatmul.mubr.f32.gmra.mrb[0].mxu0 %v5944
    %v6015 = vpop.f32.mrb[0].mxu0
    %v6016 = vadd.f32 0.0, %v6015
    %v6017 = vpop.f32.mrb[0].mxu0
    %6018 = vdwg.mxu0
    %v6019 = vsel %vm1101, %v6016, -inf
    %6020 = vmax.xlane.f32.xlu0 %v6019
    %v6021 = vpop.xlane.xlu0 %6020
    %v6022 = vsub.f32 %v6016, %v6021
    %v6023 = vmul.f32 %v6022, 1.442695
    %v6024 = vpow.pop %v6023
    %v6025 = vsel %vm1101, %v6024, 0.0
    %6026 = vadd.xlane.f32.xlu0 %v6025
    %v6027 = vpop.xlane.xlu0 %6026
    %v6028 = vrcp.pop %v6027
    %v6029 = vmul.f32 %v6024, %v6028
    %v6031 = vsel %vm1101, %v6029, 0
    %6033 = vmatprep.subr.mxu0 0.0
    %6034 = vmatpush1.msra.mxu0 %v4298
    %6035 = vmatprep.subr.mxu0 0.0
    %6036 = vmatpush1.msra.mxu0 0.0
    %6037 = vmatprep.subr.mxu0 0.0
    %6038 = vmatpush1.msra.mxu0 0.0
    %6039 = vmatprep.subr.mxu0 0.0
    %6040 = vmatpush1.msra.mxu0 0.0
    %6041 = vmatprep.subr.mxu0 0.0
    %6042 = vmatpush1.msra.mxu0 0.0
    %6043 = vmatprep.subr.mxu0 0.0
    %6044 = vmatpush1.msra.mxu0 0.0
    %6045 = vmatprep.subr.mxu0 0.0
    %6046 = vmatpush1.msra.mxu0 0.0
    %6047 = vmatprep.subr.mxu0 0.0
    %6048 = vmatpush1.msra.mxu0 0.0
    %6049 = vmatprep.subr.mxu0 0.0
    %6050 = vmatpush1.msra.mxu0 0.0
    %6051 = vmatprep.subr.mxu0 0.0
    %6052 = vmatpush1.msra.mxu0 0.0
    %6053 = vmatprep.subr.mxu0 0.0
    %6054 = vmatpush1.msra.mxu0 0.0
    %6055 = vmatprep.subr.mxu0 0.0
    %6056 = vmatpush1.msra.mxu0 0.0
    %6057 = vmatprep.subr.mxu0 0.0
    %6058 = vmatpush1.msra.mxu0 0.0
    %6059 = vmatprep.subr.mxu0 0.0
    %6060 = vmatpush1.msra.mxu0 0.0
    %6061 = vmatprep.subr.mxu0 0.0
    %6062 = vmatpush1.msra.mxu0 0.0
    %6063 = vmatprep.subr.mxu0 0.0
    %6064 = vmatpush1.msra.mxu0 0.0
    %6065 = vmatprep.subr.mxu0 0.0
    %6066 = vmatpush1.msra.mxu0 0.0
    %6067 = vmatprep.subr.mxu0 0.0
    %6068 = vmatpush1.msra.mxu0 0.0
    %6069 = vmatprep.subr.mxu0 0.0
    %6070 = vmatpush1.msra.mxu0 0.0
    %6071 = vmatprep.subr.mxu0 0.0
    %6072 = vmatpush1.msra.mxu0 0.0
    %6073 = vmatprep.subr.mxu0 0.0
    %6074 = vmatpush1.msra.mxu0 0.0
    %6075 = vmatprep.subr.mxu0 0.0
    %6076 = vmatpush1.msra.mxu0 0.0
    %6077 = vmatprep.subr.mxu0 0.0
    %6078 = vmatpush1.msra.mxu0 0.0
    %6079 = vmatprep.subr.mxu0 0.0
    %6080 = vmatpush1.msra.mxu0 0.0
    %6081 = vmatprep.subr.mxu0 0.0
    %6082 = vmatpush1.msra.mxu0 0.0
    %6083 = vmatprep.subr.mxu0 0.0
    %6084 = vmatpush1.msra.mxu0 0.0
    %6085 = vmatprep.subr.mxu0 0.0
    %6086 = vmatpush1.msra.mxu0 0.0
    %6087 = vmatprep.subr.mxu0 0.0
    %6088 = vmatpush1.msra.mxu0 0.0
    %6089 = vmatprep.subr.mxu0 0.0
    %6090 = vmatpush1.msra.mxu0 0.0
    %6091 = vmatprep.subr.mxu0 0.0
    %6092 = vmatpush1.msra.mxu0 0.0
    %6093 = vmatprep.subr.mxu0 0.0
    %6094 = vmatpush1.msra.mxu0 0.0
    %6095 = vmatprep.subr.mxu0 0.0
    %6096 = vmatpush1.msra.mxu0 0.0
    %6097 = vmatprep.mubr.f32.mxu0 0.0
    %6098 = vmatmul.mubr.f32.gmra.mrb[0].mxu0 %v6031
    %v6099 = vpop.f32.mrb[0].mxu0
    %v6100 = vadd.f32 0.0, %v6099
    %v6101 = vpop.f32.mrb[0].mxu0
    %6102 = vdwg.mxu0
    %v6104 = vsel %vm1101, %v6100, 0
    %6106 = vmatprep.subr.mxu0 0.0
    %6107 = vmatpush1.msra.mxu0 %v5168
    %6108 = vmatprep.subr.mxu0 0.0
    %6109 = vmatpush1.msra.mxu0 0.0
    %6110 = vmatprep.subr.mxu0 0.0
    %6111 = vmatpush1.msra.mxu0 0.0
    %6112 = vmatprep.subr.mxu0 0.0
    %6113 = vmatpush1.msra.mxu0 0.0
    %6114 = vmatprep.subr.mxu0 0.0
    %6115 = vmatpush1.msra.mxu0 0.0
    %6116 = vmatprep.subr.mxu0 0.0
    %6117 = vmatpush1.msra.mxu0 0.0
    %6118 = vmatprep.subr.mxu0 0.0
    %6119 = vmatpush1.msra.mxu0 0.0
    %6120 = vmatprep.subr.mxu0 0.0
    %6121 = vmatpush1.msra.mxu0 0.0
    %6122 = vmatprep.subr.mxu0 0.0
    %6123 = vmatpush1.msra.mxu0 0.0
    %6124 = vmatprep.subr.mxu0 0.0
    %6125 = vmatpush1.msra.mxu0 0.0
    %6126 = vmatprep.subr.mxu0 0.0
    %6127 = vmatpush1.msra.mxu0 0.0
    %6128 = vmatprep.subr.mxu0 0.0
    %6129 = vmatpush1.msra.mxu0 0.0
    %6130 = vmatprep.subr.mxu0 0.0
    %6131 = vmatpush1.msra.mxu0 0.0
    %6132 = vmatprep.subr.mxu0 0.0
    %6133 = vmatpush1.msra.mxu0 0.0
    %6134 = vmatprep.subr.mxu0 0.0
    %6135 = vmatpush1.msra.mxu0 0.0
    %6136 = vmatprep.subr.mxu0 0.0
    %6137 = vmatpush1.msra.mxu0 0.0
    %6138 = vmatprep.subr.mxu0 0.0
    %6139 = vmatpush1.msra.mxu0 0.0
    %6140 = vmatprep.subr.mxu0 0.0
    %6141 = vmatpush1.msra.mxu0 0.0
    %6142 = vmatprep.subr.mxu0 0.0
    %6143 = vmatpush1.msra.mxu0 0.0
    %6144 = vmatprep.subr.mxu0 0.0
    %6145 = vmatpush1.msra.mxu0 0.0
    %6146 = vmatprep.subr.mxu0 0.0
    %6147 = vmatpush1.msra.mxu0 0.0
    %6148 = vmatprep.subr.mxu0 0.0
    %6149 = vmatpush1.msra.mxu0 0.0
    %6150 = vmatprep.subr.mxu0 0.0
    %6151 = vmatpush1.msra.mxu0 0.0
    %6152 = vmatprep.subr.mxu0 0.0
    %6153 = vmatpush1.msra.mxu0 0.0
    %6154 = vmatprep.subr.mxu0 0.0
    %6155 = vmatpush1.msra.mxu0 0.0
    %6156 = vmatprep.subr.mxu0 0.0
    %6157 = vmatpush1.msra.mxu0 0.0
    %6158 = vmatprep.subr.mxu0 0.0
    %6159 = vmatpush1.msra.mxu0 0.0
    %6160 = vmatprep.subr.mxu0 0.0
    %6161 = vmatpush1.msra.mxu0 0.0
    %6162 = vmatprep.subr.mxu0 0.0
    %6163 = vmatpush1.msra.mxu0 0.0
    %6164 = vmatprep.subr.mxu0 0.0
    %6165 = vmatpush1.msra.mxu0 0.0
    %6166 = vmatprep.subr.mxu0 0.0
    %6167 = vmatpush1.msra.mxu0 0.0
    %6168 = vmatprep.subr.mxu0 0.0
    %6169 = vmatpush1.msra.mxu0 0.0
    %6170 = vmatprep.mubr.f32.mxu0 0.0
    %6171 = vmatmul.mubr.f32.gmra.mrb[0].mxu0 %v6104
    %v6172 = vpop.f32.mrb[0].mxu0
    %v6173 = vadd.f32 0.0, %v6172
    %v6174 = vpop.f32.mrb[0].mxu0
    %6175 = vdwg.mxu0
    %v6176 = vadd.f32 %v5942, %v6173
    %v6177 = vld [vmem:[%s8 + $0x1] sm:$0x1]
    %v6178 = vlaneseq
    %v6179 = vshrl.u32 %v6178, 7
    %v6180 = vsub.s32 0, %v6179
    %v6181 = vrot.slane %v6177, %v6180
    %v6182 = vadd.f32 %v5242, %v6181
    %v6183 = vadd.f32 %v6176, %v6181
    %v6184 = vadd.f32 %v3270, %v6182
    %v6185 = vadd.f32 %v3271, %v6183
    %v6186 = vld [vmem:[%s9 + $0x1] sm:$0x1]
    %v6187 = vld [vmem:[%s10 + $0x1] sm:$0x1]
    %v6188 = vsel %vm86, %v6184, 0.0
    %6189 = vadd.xlane.f32.xlu0 %v6188
    %v6190 = vpop.xlane.xlu0 %6189
    %v6191 = vsel %vm86, %v6185, 0.0
    %6192 = vadd.xlane.f32.xlu0 %v6191
    %v6193 = vpop.xlane.xlu0 %6192
    %v6194 = vmul.f32 %v6190, %v2994
    %v6195 = vmul.f32 %v6193, %v2994
    %v6196 = vsub.f32 %v6184, %v6194
    %v6197 = vsub.f32 %v6185, %v6195
    %v6198 = vmul.f32 %v6196, %v6196
    %v6199 = vmul.f32 %v6197, %v6197
    %v6200 = vsel %vm86, %v6198, 0.0
    %6201 = vadd.xlane.f32.xlu0 %v6200
    %v6202 = vpop.xlane.xlu0 %6201
    %v6203 = vsel %vm86, %v6199, 0.0
    %6204 = vadd.xlane.f32.xlu0 %v6203
    %v6205 = vpop.xlane.xlu0 %6204
    %v6206 = vmul.f32 %v6202, %v2994
    %v6207 = vmul.f32 %v6205, %v2994
    %v6208 = vadd.f32 %v6206, 1e-05
    %v6209 = vadd.f32 %v6207, 1e-05
    %v6210 = vrsqrt.pop %v6208
    %v6211 = vrsqrt.pop %v6209
    %v6212 = vmul.f32 %v6196, %v6210
    %v6213 = vmul.f32 %v6197, %v6211
    %v6214 = vlaneseq
    %v6215 = vshrl.u32 %v6214, 7
    %v6216 = vsub.s32 0, %v6215
    %v6217 = vrot.slane %v6186, %v6216
    %v6218 = vmul.f32 %v6212, %v6217
    %v6219 = vmul.f32 %v6213, %v6217
    %v6220 = vlaneseq
    %v6221 = vshrl.u32 %v6220, 7
    %v6222 = vsub.s32 0, %v6221
    %v6223 = vrot.slane %v6187, %v6222
    %v6224 = vadd.f32 %v6218, %v6223
    %v6225 = vadd.f32 %v6219, %v6223
    %s6226 = scalar_lea.vmem %s13, 32
    %v6227 = vld [vmem:[%s6226] sm:$0xff]
    %v6228 = vld [vmem:[%s6226 + $0x8] sm:$0xff]
    %v6229 = vld [vmem:[%s6226 + $0x10] sm:$0xff]
    %v6230 = vld [vmem:[%s6226 + $0x18] sm:$0xff]
    %v6231 = vld [vmem:[%s14 + $0x1] sm:$0x1]
    %v6232 = vlaneseq
    %v6233 = vshrl.u32 %v6232, 7
    %v6234 = vsub.s32 0, %v6233
    %v6235 = vrot.slane %v6231, %v6234
    %v6237 = vsel %vm86, %v6224, 0
    %v6240 = vsel %vm86, %v6225, 0
    %6242 = vmatprep.subr.mxu0 0.0
    %6243 = vmatpush1.msra.mxu0 %v6227
    %6244 = vmatprep.subr.mxu0 0.0
    %6245 = vmatpush1.msra.mxu0 %v6228
    %6246 = vmatprep.subr.mxu0 0.0
    %6247 = vmatpush1.msra.mxu0 %v6229
    %6248 = vmatprep.subr.mxu0 0.0
    %6249 = vmatpush1.msra.mxu0 %v6230
    %6250 = vmatprep.subr.mxu0 0.0
    %6251 = vmatpush1.msra.mxu0 0.0
    %6252 = vmatprep.subr.mxu0 0.0
    %6253 = vmatpush1.msra.mxu0 0.0
    %6254 = vmatprep.subr.mxu0 0.0
    %6255 = vmatpush1.msra.mxu0 0.0
    %6256 = vmatprep.subr.mxu0 0.0
    %6257 = vmatpush1.msra.mxu0 0.0
    %6258 = vmatprep.subr.mxu0 0.0
    %6259 = vmatpush1.msra.mxu0 0.0
    %6260 = vmatprep.subr.mxu0 0.0
    %6261 = vmatpush1.msra.mxu0 0.0
    %6262 = vmatprep.subr.mxu0 0.0
    %6263 = vmatpush1.msra.mxu0 0.0
    %6264 = vmatprep.subr.mxu0 0.0
    %6265 = vmatpush1.msra.mxu0 0.0
    %6266 = vmatprep.subr.mxu0 0.0
    %6267 = vmatpush1.msra.mxu0 0.0
    %6268 = vmatprep.subr.mxu0 0.0
    %6269 = vmatpush1.msra.mxu0 0.0
    %6270 = vmatprep.subr.mxu0 0.0
    %6271 = vmatpush1.msra.mxu0 0.0
    %6272 = vmatprep.subr.mxu0 0.0
    %6273 = vmatpush1.msra.mxu0 0.0
    %6274 = vmatprep.subr.mxu0 0.0
    %6275 = vmatpush1.msra.mxu0 0.0
    %6276 = vmatprep.subr.mxu0 0.0
    %6277 = vmatpush1.msra.mxu0 0.0
    %6278 = vmatprep.subr.mxu0 0.0
    %6279 = vmatpush1.msra.mxu0 0.0
    %6280 = vmatprep.subr.mxu0 0.0
    %6281 = vmatpush1.msra.mxu0 0.0
    %6282 = vmatprep.subr.mxu0 0.0
    %6283 = vmatpush1.msra.mxu0 0.0
    %6284 = vmatprep.subr.mxu0 0.0
    %6285 = vmatpush1.msra.mxu0 0.0
    %6286 = vmatprep.subr.mxu0 0.0
    %6287 = vmatpush1.msra.mxu0 0.0
    %6288 = vmatprep.subr.mxu0 0.0
    %6289 = vmatpush1.msra.mxu0 0.0
    %6290 = vmatprep.subr.mxu0 0.0
    %6291 = vmatpush1.msra.mxu0 0.0
    %6292 = vmatprep.subr.mxu0 0.0
    %6293 = vmatpush1.msra.mxu0 0.0
    %6294 = vmatprep.subr.mxu0 0.0
    %6295 = vmatpush1.msra.mxu0 0.0
    %6296 = vmatprep.subr.mxu0 0.0
    %6297 = vmatpush1.msra.mxu0 0.0
    %6298 = vmatprep.subr.mxu0 0.0
    %6299 = vmatpush1.msra.mxu0 0.0
    %6300 = vmatprep.subr.mxu0 0.0
    %6301 = vmatpush1.msra.mxu0 0.0
    %6302 = vmatprep.subr.mxu0 0.0
    %6303 = vmatpush1.msra.mxu0 0.0
    %6304 = vmatprep.subr.mxu0 0.0
    %6305 = vmatpush1.msra.mxu0 0.0
    %6306 = vmatprep.mubr.f32.mxu0 0.0
    %6307 = vmatmul.mubr.f32.gmra.mrb[0].mxu0 %v6237
    %v6308 = vpop.f32.mrb[0].mxu0
    %v6309 = vadd.f32 %v6235, %v6308
    %v6310 = vpop.f32.mrb[0].mxu0
    %6311 = vmatprep.mubr.f32.mxu0 0.0
    %6312 = vmatmul.mubr.f32.gmra.mrb[0].mxu0 %v6240
    %v6313 = vpop.f32.mrb[0].mxu0
    %v6314 = vadd.f32 %v6235, %v6313
    %v6315 = vpop.f32.mrb[0].mxu0
    %6316 = vdwg.mxu0
    %v6317 = vmul.f32 %v6309, %v6309
    %v6318 = vmul.f32 %v6314, %v6314
    %v6319 = vmul.f32 %v6309, %v6317
    %v6320 = vmul.f32 %v6314, %v6318
    %v6321 = vmul.f32 %v6319, 0.044715
    %v6322 = vmul.f32 %v6320, 0.044715
    %v6323 = vadd.f32 %v6309, %v6321
    %v6324 = vadd.f32 %v6314, %v6322
    %v6325 = vmul.f32 %v6323, 0.7978846
    %v6326 = vmul.f32 %v6324, 0.7978846
    %v6327 = vtanh.pop %v6325
    %v6328 = vtanh.pop %v6326
    %v6329 = vadd.f32 %v6327, 1.0
    %v6330 = vadd.f32 %v6328, 1.0
    %v6331 = vmul.f32 %v6329, 0.5
    %v6332 = vmul.f32 %v6330, 0.5
    %v6333 = vmul.f32 %v6309, %v6331
    %v6334 = vmul.f32 %v6314, %v6332
    %s6335 = scalar_lea.vmem %s15, 64
    %v6336 = vld [vmem:[%s6335] sm:$0xff]
    %v6337 = vld [vmem:[%s6335 + $0x8] sm:$0xff]
    %v6338 = vld [vmem:[%s6335 + $0x10] sm:$0xff]
    %v6339 = vld [vmem:[%s6335 + $0x18] sm:$0xff]
    %v6340 = vld [vmem:[%s6335 + $0x20] sm:$0xff]
    %v6341 = vld [vmem:[%s6335 + $0x28] sm:$0xff]
    %v6342 = vld [vmem:[%s6335 + $0x30] sm:$0xff]
    %v6343 = vld [vmem:[%s6335 + $0x38] sm:$0xff]
    %v6344 = vld [vmem:[%s16 + $0x1] sm:$0x1]
    %v6345 = vlaneseq
    %v6346 = vshrl.u32 %v6345, 7
    %v6347 = vsub.s32 0, %v6346
    %v6348 = vrot.slane %v6344, %v6347
    %v6350 = vsel %vm3148, %v6333, 0
    %v6353 = vsel %vm3148, %v6334, 0
    %6355 = vmatprep.subr.mxu0 0.0
    %6356 = vmatpush1.msra.mxu0 %v6336
    %6357 = vmatprep.subr.mxu0 0.0
    %6358 = vmatpush1.msra.mxu0 %v6337
    %6359 = vmatprep.subr.mxu0 0.0
    %6360 = vmatpush1.msra.mxu0 %v6338
    %6361 = vmatprep.subr.mxu0 0.0
    %6362 = vmatpush1.msra.mxu0 %v6339
    %6363 = vmatprep.subr.mxu0 0.0
    %6364 = vmatpush1.msra.mxu0 %v6340
    %6365 = vmatprep.subr.mxu0 0.0
    %6366 = vmatpush1.msra.mxu0 %v6341
    %6367 = vmatprep.subr.mxu0 0.0
    %6368 = vmatpush1.msra.mxu0 %v6342
    %6369 = vmatprep.subr.mxu0 0.0
    %6370 = vmatpush1.msra.mxu0 %v6343
    %6371 = vmatprep.subr.mxu0 0.0
    %6372 = vmatpush1.msra.mxu0 0.0
    %6373 = vmatprep.subr.mxu0 0.0
    %6374 = vmatpush1.msra.mxu0 0.0
    %6375 = vmatprep.subr.mxu0 0.0
    %6376 = vmatpush1.msra.mxu0 0.0
    %6377 = vmatprep.subr.mxu0 0.0
    %6378 = vmatpush1.msra.mxu0 0.0
    %6379 = vmatprep.subr.mxu0 0.0
    %6380 = vmatpush1.msra.mxu0 0.0
    %6381 = vmatprep.subr.mxu0 0.0
    %6382 = vmatpush1.msra.mxu0 0.0
    %6383 = vmatprep.subr.mxu0 0.0
    %6384 = vmatpush1.msra.mxu0 0.0
    %6385 = vmatprep.subr.mxu0 0.0
    %6386 = vmatpush1.msra.mxu0 0.0
    %6387 = vmatprep.subr.mxu0 0.0
    %6388 = vmatpush1.msra.mxu0 0.0
    %6389 = vmatprep.subr.mxu0 0.0
    %6390 = vmatpush1.msra.mxu0 0.0
    %6391 = vmatprep.subr.mxu0 0.0
    %6392 = vmatpush1.msra.mxu0 0.0
    %6393 = vmatprep.subr.mxu0 0.0
    %6394 = vmatpush1.msra.mxu0 0.0
    %6395 = vmatprep.subr.mxu0 0.0
    %6396 = vmatpush1.msra.mxu0 0.0
    %6397 = vmatprep.subr.mxu0 0.0
    %6398 = vmatpush1.msra.mxu0 0.0
    %6399 = vmatprep.subr.mxu0 0.0
    %6400 = vmatpush1.msra.mxu0 0.0
    %6401 = vmatprep.subr.mxu0 0.0
    %6402 = vmatpush1.msra.mxu0 0.0
    %6403 = vmatprep.subr.mxu0 0.0
    %6404 = vmatpush1.msra.mxu0 0.0
    %6405 = vmatprep.subr.mxu0 0.0
    %6406 = vmatpush1.msra.mxu0 0.0
    %6407 = vmatprep.subr.mxu0 0.0
    %6408 = vmatpush1.msra.mxu0 0.0
    %6409 = vmatprep.subr.mxu0 0.0
    %6410 = vmatpush1.msra.mxu0 0.0
    %6411 = vmatprep.subr.mxu0 0.0
    %6412 = vmatpush1.msra.mxu0 0.0
    %6413 = vmatprep.subr.mxu0 0.0
    %6414 = vmatpush1.msra.mxu0 0.0
    %6415 = vmatprep.subr.mxu0 0.0
    %6416 = vmatpush1.msra.mxu0 0.0
    %6417 = vmatprep.subr.mxu0 0.0
    %6418 = vmatpush1.msra.mxu0 0.0
    %6419 = vmatprep.mubr.f32.mxu0 0.0
    %6420 = vmatmul.mubr.f32.gmra.mrb[0].mxu0 %v6350
    %v6421 = vpop.f32.mrb[0].mxu0
    %v6422 = vadd.f32 %v6348, %v6421
    %v6423 = vpop.f32.mrb[0].mxu0
    %6424 = vmatprep.mubr.f32.mxu0 0.0
    %6425 = vmatmul.mubr.f32.gmra.mrb[0].mxu0 %v6353
    %v6426 = vpop.f32.mrb[0].mxu0
    %v6427 = vadd.f32 %v6348, %v6426
    %v6428 = vpop.f32.mrb[0].mxu0
    %6429 = vdwg.mxu0
    %v6430 = vadd.f32 %v6224, %v6422
    %v6431 = vadd.f32 %v6225, %v6427
    %v6432 = vld [vmem:[%s11 + $0x1] sm:$0x1]
    %v6433 = vld [vmem:[%s12 + $0x1] sm:$0x1]
    %v6434 = vsel %vm86, %v6430, 0.0
    %6435 = vadd.xlane.f32.xlu0 %v6434
    %v6436 = vpop.xlane.xlu0 %6435
    %v6437 = vsel %vm86, %v6431, 0.0
    %6438 = vadd.xlane.f32.xlu0 %v6437
    %v6439 = vpop.xlane.xlu0 %6438
    %v6440 = vmul.f32 %v6436, %v2994
    %v6441 = vmul.f32 %v6439, %v2994
    %v6442 = vsub.f32 %v6430, %v6440
    %v6443 = vsub.f32 %v6431, %v6441
    %v6444 = vmul.f32 %v6442, %v6442
    %v6445 = vmul.f32 %v6443, %v6443
    %v6446 = vsel %vm86, %v6444, 0.0
    %6447 = vadd.xlane.f32.xlu0 %v6446
    %v6448 = vpop.xlane.xlu0 %6447
    %v6449 = vsel %vm86, %v6445, 0.0
    %6450 = vadd.xlane.f32.xlu0 %v6449
    %v6451 = vpop.xlane.xlu0 %6450
    %v6452 = vmul.f32 %v6448, %v2994
    %v6453 = vmul.f32 %v6451, %v2994
    %v6454 = vadd.f32 %v6452, 1e-05
    %v6455 = vadd.f32 %v6453, 1e-05
    %v6456 = vrsqrt.pop %v6454
    %v6457 = vrsqrt.pop %v6455
    %v6458 = vmul.f32 %v6442, %v6456
    %v6459 = vmul.f32 %v6443, %v6457
    %v6460 = vlaneseq
    %v6461 = vshrl.u32 %v6460, 7
    %v6462 = vsub.s32 0, %v6461
    %v6463 = vrot.slane %v6432, %v6462
    %v6464 = vmul.f32 %v6458, %v6463
    %v6465 = vmul.f32 %v6459, %v6463
    %v6466 = vlaneseq
    %v6467 = vshrl.u32 %v6466, 7
    %v6468 = vsub.s32 0, %v6467
    %v6469 = vrot.slane %v6433, %v6468
    %v6470 = vadd.f32 %v6464, %v6469
    %v6471 = vadd.f32 %v6465, %v6469
    %v6472 = vld [vmem:[%s17] sm:$0xff]
    %v6473 = vld [vmem:[%s17 + $0x8] sm:$0xff]
    %v6474 = vld [vmem:[%s17 + $0x10] sm:$0xff]
    %v6475 = vld [vmem:[%s17 + $0x18] sm:$0xff]
    %v6476 = vld [vmem:[%s18] sm:$0x1]
    %v6478 = vlaneseq
    %v6479 = vshrl.u32 %v6478, 7
    %v6480 = vsub.s32 0, %v6479
    %v6481 = vrot.slane %v6476, %v6480
    %v6484 = vsel %vm86, %v6470, 0
    %v6487 = vsel %vm86, %v6471, 0
    %6489 = vmatprep.subr.mxu0 0.0
    %6490 = vmatpush1.msra.mxu0 %v6472
    %6491 = vmatprep.subr.mxu0 0.0
    %6492 = vmatpush1.msra.mxu0 %v6473
    %6493 = vmatprep.subr.mxu0 0.0
    %6494 = vmatpush1.msra.mxu0 %v6474
    %6495 = vmatprep.subr.mxu0 0.0
    %6496 = vmatpush1.msra.mxu0 %v6475
    %6497 = vmatprep.subr.mxu0 0.0
    %6498 = vmatpush1.msra.mxu0 0.0
    %6499 = vmatprep.subr.mxu0 0.0
    %6500 = vmatpush1.msra.mxu0 0.0
    %6501 = vmatprep.subr.mxu0 0.0
    %6502 = vmatpush1.msra.mxu0 0.0
    %6503 = vmatprep.subr.mxu0 0.0
    %6504 = vmatpush1.msra.mxu0 0.0
    %6505 = vmatprep.subr.mxu0 0.0
    %6506 = vmatpush1.msra.mxu0 0.0
    %6507 = vmatprep.subr.mxu0 0.0
    %6508 = vmatpush1.msra.mxu0 0.0
    %6509 = vmatprep.subr.mxu0 0.0
    %6510 = vmatpush1.msra.mxu0 0.0
    %6511 = vmatprep.subr.mxu0 0.0
    %6512 = vmatpush1.msra.mxu0 0.0
    %6513 = vmatprep.subr.mxu0 0.0
    %6514 = vmatpush1.msra.mxu0 0.0
    %6515 = vmatprep.subr.mxu0 0.0
    %6516 = vmatpush1.msra.mxu0 0.0
    %6517 = vmatprep.subr.mxu0 0.0
    %6518 = vmatpush1.msra.mxu0 0.0
    %6519 = vmatprep.subr.mxu0 0.0
    %6520 = vmatpush1.msra.mxu0 0.0
    %6521 = vmatprep.subr.mxu0 0.0
    %6522 = vmatpush1.msra.mxu0 0.0
    %6523 = vmatprep.subr.mxu0 0.0
    %6524 = vmatpush1.msra.mxu0 0.0
    %6525 = vmatprep.subr.mxu0 0.0
    %6526 = vmatpush1.msra.mxu0 0.0
    %6527 = vmatprep.subr.mxu0 0.0
    %6528 = vmatpush1.msra.mxu0 0.0
    %6529 = vmatprep.subr.mxu0 0.0
    %6530 = vmatpush1.msra.mxu0 0.0
    %6531 = vmatprep.subr.mxu0 0.0
    %6532 = vmatpush1.msra.mxu0 0.0
    %6533 = vmatprep.subr.mxu0 0.0
    %6534 = vmatpush1.msra.mxu0 0.0
    %6535 = vmatprep.subr.mxu0 0.0
    %6536 = vmatpush1.msra.mxu0 0.0
    %6537 = vmatprep.subr.mxu0 0.0
    %6538 = vmatpush1.msra.mxu0 0.0
    %6539 = vmatprep.subr.mxu0 0.0
    %6540 = vmatpush1.msra.mxu0 0.0
    %6541 = vmatprep.subr.mxu0 0.0
    %6542 = vmatpush1.msra.mxu0 0.0
    %6543 = vmatprep.subr.mxu0 0.0
    %6544 = vmatpush1.msra.mxu0 0.0
    %6545 = vmatprep.subr.mxu0 0.0
    %6546 = vmatpush1.msra.mxu0 0.0
    %6547 = vmatprep.subr.mxu0 0.0
    %6548 = vmatpush1.msra.mxu0 0.0
    %6549 = vmatprep.subr.mxu0 0.0
    %6550 = vmatpush1.msra.mxu0 0.0
    %6551 = vmatprep.subr.mxu0 0.0
    %6552 = vmatpush1.msra.mxu0 0.0
    %6553 = vmatprep.mubr.f32.mxu0 0.0
    %6554 = vmatmul.mubr.f32.gmra.mrb[0].mxu0 %v6484
    %v6555 = vpop.f32.mrb[0].mxu0
    %v6556 = vadd.f32 %v6481, %v6555
    %v6557 = vpop.f32.mrb[0].mxu0
    %6558 = vmatprep.mubr.f32.mxu0 0.0
    %6559 = vmatmul.mubr.f32.gmra.mrb[0].mxu0 %v6487
    %v6560 = vpop.f32.mrb[0].mxu0
    %v6561 = vadd.f32 %v6481, %v6560
    %v6562 = vpop.f32.mrb[0].mxu0
    %6563 = vdwg.mxu0
    %v6564 = vld [vmem:[%s19] sm:$0x1]
    %v6565 = vld [vmem:[%s20] sm:$0x1]
    %v6566 = vsel %vm3148, %v6556, 0.0
    %6567 = vadd.xlane.f32.xlu0 %v6566
    %v6568 = vpop.xlane.xlu0 %6567
    %v6569 = vsel %vm3148, %v6561, 0.0
    %6570 = vadd.xlane.f32.xlu0 %v6569
    %v6571 = vpop.xlane.xlu0 %6570
    %v6572 = vrcp.pop 64.0
    %v6573 = vmul.f32 %v6568, %v6572
    %v6574 = vmul.f32 %v6571, %v6572
    %v6575 = vsub.f32 %v6556, %v6573
    %v6576 = vsub.f32 %v6561, %v6574
    %v6577 = vmul.f32 %v6575, %v6575
    %v6578 = vmul.f32 %v6576, %v6576
    %v6579 = vsel %vm3148, %v6577, 0.0
    %6580 = vadd.xlane.f32.xlu0 %v6579
    %v6581 = vpop.xlane.xlu0 %6580
    %v6582 = vsel %vm3148, %v6578, 0.0
    %6583 = vadd.xlane.f32.xlu0 %v6582
    %v6584 = vpop.xlane.xlu0 %6583
    %v6585 = vmul.f32 %v6581, %v6572
    %v6586 = vmul.f32 %v6584, %v6572
    %v6587 = vadd.f32 %v6585, 1e-05
    %v6588 = vadd.f32 %v6586, 1e-05
    %v6589 = vrsqrt.pop %v6587
    %v6590 = vrsqrt.pop %v6588
    %v6591 = vmul.f32 %v6575, %v6589
    %v6592 = vmul.f32 %v6576, %v6590
    %v6594 = vlaneseq
    %v6595 = vshrl.u32 %v6594, 7
    %v6596 = vsub.s32 0, %v6595
    %v6597 = vrot.slane %v6564, %v6596
    %v6599 = vmul.f32 %v6591, %v6597
    %v6600 = vmul.f32 %v6592, %v6597
    %v6602 = vlaneseq
    %v6603 = vshrl.u32 %v6602, 7
    %v6604 = vsub.s32 0, %v6603
    %v6605 = vrot.slane %v6565, %v6604
    %v6607 = vadd.f32 %v6599, %v6605
    %v6608 = vadd.f32 %v6600, %v6605
    %v6609 = vmul.f32 %v6607, %v6607
    %v6610 = vmul.f32 %v6608, %v6608
    %v6611 = vmul.f32 %v6607, %v6609
    %v6612 = vmul.f32 %v6608, %v6610
    %v6613 = vmul.f32 %v6611, 0.044715
    %v6614 = vmul.f32 %v6612, 0.044715
    %v6615 = vadd.f32 %v6607, %v6613
    %v6616 = vadd.f32 %v6608, %v6614
    %v6617 = vmul.f32 %v6615, 0.7978846
    %v6618 = vmul.f32 %v6616, 0.7978846
    %v6619 = vtanh.pop %v6617
    %v6620 = vtanh.pop %v6618
    %v6621 = vadd.f32 %v6619, 1.0
    %v6622 = vadd.f32 %v6620, 1.0
    %v6623 = vmul.f32 %v6621, 0.5
    %v6624 = vmul.f32 %v6622, 0.5
    %v6625 = vmul.f32 %v6607, %v6623
    %v6626 = vmul.f32 %v6608, %v6624
    %v6627 = vld [vmem:[%s21] sm:$0xff]
    %v6628 = vld [vmem:[%s21 + $0x8] sm:$0xff]
    %v6629 = vld [vmem:[%s21 + $0x10] sm:$0xff]
    %v6630 = vld [vmem:[%s21 + $0x18] sm:$0xff]
    %v6631 = vld [vmem:[%s21 + $0x20] sm:$0xff]
    %v6632 = vld [vmem:[%s21 + $0x28] sm:$0xff]
    %v6633 = vld [vmem:[%s21 + $0x30] sm:$0xff]
    %v6634 = vld [vmem:[%s21 + $0x38] sm:$0xff]
    %v6635 = vld [vmem:[%s22] sm:$0x1]
    %v6637 = vlaneseq
    %v6638 = vshrl.u32 %v6637, 7
    %v6639 = vsub.s32 0, %v6638
    %v6640 = vrot.slane %v6635, %v6639
    %v6643 = vsel %vm3148, %v6625, 0
    %v6646 = vsel %vm3148, %v6626, 0
    %6648 = vmatprep.subr.mxu0 0.0
    %6649 = vmatpush1.msra.mxu0 %v6627
    %6650 = vmatprep.subr.mxu0 0.0
    %6651 = vmatpush1.msra.mxu0 %v6628
    %6652 = vmatprep.subr.mxu0 0.0
    %6653 = vmatpush1.msra.mxu0 %v6629
    %6654 = vmatprep.subr.mxu0 0.0
    %6655 = vmatpush1.msra.mxu0 %v6630
    %6656 = vmatprep.subr.mxu0 0.0
    %6657 = vmatpush1.msra.mxu0 %v6631
    %6658 = vmatprep.subr.mxu0 0.0
    %6659 = vmatpush1.msra.mxu0 %v6632
    %6660 = vmatprep.subr.mxu0 0.0
    %6661 = vmatpush1.msra.mxu0 %v6633
    %6662 = vmatprep.subr.mxu0 0.0
    %6663 = vmatpush1.msra.mxu0 %v6634
    %6664 = vmatprep.subr.mxu0 0.0
    %6665 = vmatpush1.msra.mxu0 0.0
    %6666 = vmatprep.subr.mxu0 0.0
    %6667 = vmatpush1.msra.mxu0 0.0
    %6668 = vmatprep.subr.mxu0 0.0
    %6669 = vmatpush1.msra.mxu0 0.0
    %6670 = vmatprep.subr.mxu0 0.0
    %6671 = vmatpush1.msra.mxu0 0.0
    %6672 = vmatprep.subr.mxu0 0.0
    %6673 = vmatpush1.msra.mxu0 0.0
    %6674 = vmatprep.subr.mxu0 0.0
    %6675 = vmatpush1.msra.mxu0 0.0
    %6676 = vmatprep.subr.mxu0 0.0
    %6677 = vmatpush1.msra.mxu0 0.0
    %6678 = vmatprep.subr.mxu0 0.0
    %6679 = vmatpush1.msra.mxu0 0.0
    %6680 = vmatprep.subr.mxu0 0.0
    %6681 = vmatpush1.msra.mxu0 0.0
    %6682 = vmatprep.subr.mxu0 0.0
    %6683 = vmatpush1.msra.mxu0 0.0
    %6684 = vmatprep.subr.mxu0 0.0
    %6685 = vmatpush1.msra.mxu0 0.0
    %6686 = vmatprep.subr.mxu0 0.0
    %6687 = vmatpush1.msra.mxu0 0.0
    %6688 = vmatprep.subr.mxu0 0.0
    %6689 = vmatpush1.msra.mxu0 0.0
    %6690 = vmatprep.subr.mxu0 0.0
    %6691 = vmatpush1.msra.mxu0 0.0
    %6692 = vmatprep.subr.mxu0 0.0
    %6693 = vmatpush1.msra.mxu0 0.0
    %6694 = vmatprep.subr.mxu0 0.0
    %6695 = vmatpush1.msra.mxu0 0.0
    %6696 = vmatprep.subr.mxu0 0.0
    %6697 = vmatpush1.msra.mxu0 0.0
    %6698 = vmatprep.subr.mxu0 0.0
    %6699 = vmatpush1.msra.mxu0 0.0
    %6700 = vmatprep.subr.mxu0 0.0
    %6701 = vmatpush1.msra.mxu0 0.0
    %6702 = vmatprep.subr.mxu0 0.0
    %6703 = vmatpush1.msra.mxu0 0.0
    %6704 = vmatprep.subr.mxu0 0.0
    %6705 = vmatpush1.msra.mxu0 0.0
    %6706 = vmatprep.subr.mxu0 0.0
    %6707 = vmatpush1.msra.mxu0 0.0
    %6708 = vmatprep.subr.mxu0 0.0
    %6709 = vmatpush1.msra.mxu0 0.0
    %6710 = vmatprep.subr.mxu0 0.0
    %6711 = vmatpush1.msra.mxu0 0.0
    %6712 = vmatprep.mubr.f32.mxu0 0.0
    %6713 = vmatmul.mubr.f32.gmra.mrb[0].mxu0 %v6643
    %v6714 = vpop.f32.mrb[0].mxu0
    %v6715 = vadd.f32 %v6640, %v6714
    %v6716 = vpop.f32.mrb[0].mxu0
    %6717 = vmatprep.mubr.f32.mxu0 0.0
    %6718 = vmatmul.mubr.f32.gmra.mrb[0].mxu0 %v6646
    %v6719 = vpop.f32.mrb[0].mxu0
    %v6720 = vadd.f32 %v6640, %v6719
    %v6721 = vpop.f32.mrb[0].mxu0
    %6722 = vdwg.mxu0
    %6723 = vst.msk [vmem:[#allocation2] sm:$0xff] %vm86, %v6715
    %6724 = vst.msk [vmem:[#allocation2 + $0x8] sm:$0xff] %vm86, %v6720
    // Predicated region
    $region94: #{tpu_custom_call.1} parent=1 // pred_check
      _
    $region95: #{tpu_custom_call.1} parent=1 // pred_check_branch
      %6726 = sbr.rel (0) target = $region97
    $region96: #{tpu_custom_call.1} parent=1 // pred_region
      %s6728 = ssub.s32 256, 256
      %6729 = vsyncadd [#allocation3], %s6728
      %s6730 = sshll.u32 [#allocation2], 4
      %s6731 = int_to_ptr.vmem [resolvable:$true] %s6730
      %6736 = dma.vmem_to_hbm [thread:$0]  %s6731, 256, %s23, [#allocation3], 128, 128, 8
    $region97: #{tpu_custom_call.1} parent=1 // pred_fallthru
      _
    // Predicated region
    $region98: #{tpu_custom_call.1} parent=1 // pred_check
      _
    $region99: #{tpu_custom_call.1} parent=1 // pred_check_branch
      %6738 = sbr.rel (0) target = $region101
    $region100: #{tpu_custom_call.1} parent=1 // pred_region
      %6739 = dma.done [#allocation3], 256
    $region101: #{tpu_custom_call.1} parent=1 // pred_fallthru
      _
    %6740 = vsyncpa [#allocation3], 1

</llo_original>
